<compile_context>
chip_gen: v7x
topology: tpu7x:2x2x1
jax: 0.10.0
libtpu: 0.0.40
codegen_flags: <defaults>
</compile_context>

<pallas_src>
import jax
import jax.numpy as jnp
from jax import lax
from jax.experimental import pallas as pl
from jax.experimental.pallas import tpu as pltpu


def bottleneck_kernel(x_ref, w1_ref, b1_ref, w2_ref, b2_ref, w3_ref, b3_ref,
                      out_ref, pad_ref):
    """One grid step = NB batch images, block (NB, H, W, Cin), bf16 in/out."""
    NB, H, W, Cin = x_ref.shape
    P = w1_ref.shape[1]
    M = NB * H * W

    # ---- conv1 (1x1) + bn1 (scale folded into w1) + relu --------------------
    xb = x_ref[...].reshape(M, Cin)                        # bf16 (M, Cin)
    o1 = jnp.dot(xb, w1_ref[...], preferred_element_type=jnp.float32)
    o1 = jnp.maximum(o1 + b1_ref[...], 0.0)                # (M, P) f32
    o1b = o1.astype(jnp.bfloat16).reshape(NB, H, W, P)     # bf16 once, reused below

    # ---- conv2 (3x3, stride 1, pad 1) + bn2 + relu via inverted im2col ------
    # Zero ONLY the 1-cell halo strips (never touched by the interior store);
    # done every step so grid steps stay independent under "parallel".
    pad_ref[:, 0:1, :, :] = jnp.zeros((NB, 1, W + 2, P), jnp.bfloat16)
    pad_ref[:, H + 1:H + 2, :, :] = jnp.zeros((NB, 1, W + 2, P), jnp.bfloat16)
    pad_ref[:, :, 0:1, :] = jnp.zeros((NB, H + 2, 1, P), jnp.bfloat16)
    pad_ref[:, :, W + 1:W + 2, :] = jnp.zeros((NB, H + 2, 1, P), jnp.bfloat16)
    # Single interior write of o1 into the zero-halo pad buffer.
    pad_ref[:, 1:H + 1, 1:W + 1, :] = o1b
    # Assemble the (M, 9P) im2col LHS from 9 shifted window READS (3 load
    # slots/bundle vs 1 store slot), then ONE matmul with K = 9*P.
    taps = []
    for kh in range(3):
        for kw in range(3):
            taps.append(pad_ref[:, kh:kh + H, kw:kw + W, :].reshape(M, P))
    patches = jnp.concatenate(taps, axis=-1)               # (M, 9P) bf16
    o2 = jnp.dot(patches, w2_ref[...], preferred_element_type=jnp.float32)
    o2 = jnp.maximum(o2 + b2_ref[...], 0.0)                # (M, P) f32

    # ---- conv3 (1x1) + bn3 + residual + relu --------------------------------
    o3 = jnp.dot(o2.astype(jnp.bfloat16), w3_ref[...],
                 preferred_element_type=jnp.float32)       # (M, 4P) f32
    # Re-read the VMEM-resident input block for the residual (not hoisted).
    res = x_ref[...].reshape(M, Cin).astype(jnp.float32)
    out = jnp.maximum(o3 + b3_ref[...] + res, 0.0)
    out_ref[...] = out.reshape(NB, H, W, Cin).astype(out_ref.dtype)


def bottleneck_pallas(x_nhwc, params, *, nb=2):
    """x_nhwc: (N, H, W, Cin) bf16.  params: bf16 scale-folded weights + f32 biases."""
    w1, b1, w2, b2, w3, b3 = params
    N, H, W, Cin = x_nhwc.shape
    P = w1.shape[1]
    # Identity residual is only valid for the expansion path of the module.
    assert Cin == 4 * P, "Bottleneck identity residual requires inplanes == 4*planes"
    assert N % nb == 0
    grid = (N // nb,)

    grid_spec = pltpu.PrefetchScalarGridSpec(
        num_scalar_prefetch=0,
        grid=grid,
        in_specs=[
            pl.BlockSpec((nb, H, W, Cin), lambda n: (n, 0, 0, 0)),   # x (bf16)
            pl.BlockSpec((Cin, P),        lambda n: (0, 0)),         # w1 (bf16)
            pl.BlockSpec((1, P),          lambda n: (0, 0)),         # b1 (f32)
            pl.BlockSpec((9 * P, P),      lambda n: (0, 0)),         # w2 (bf16, im2col)
            pl.BlockSpec((1, P),          lambda n: (0, 0)),         # b2 (f32)
            pl.BlockSpec((P, Cin),        lambda n: (0, 0)),         # w3 (bf16)
            pl.BlockSpec((1, Cin),        lambda n: (0, 0)),         # b3 (f32)
        ],
        out_specs=pl.BlockSpec((nb, H, W, Cin), lambda n: (n, 0, 0, 0)),
        scratch_shapes=[
            # Zero-halo pad buffer for inverted im2col: (nb, H+2, W+2, P) bf16.
            pltpu.VMEM((nb, H + 2, W + 2, P), jnp.bfloat16),
        ],
    )
    return pl.pallas_call(
        bottleneck_kernel,
        out_shape=jax.ShapeDtypeStruct((N, H, W, Cin), jnp.bfloat16),
        grid_spec=grid_spec,
        compiler_params=pltpu.CompilerParams(
            dimension_semantics=("parallel",),
            vmem_limit_bytes=48 * 1024 * 1024),
    )(x_nhwc, w1, b1, w2, b2, w3, b3)


def make_params(key, inplanes, planes):
    """Synthetic weights/BN stats (PyTorch shapes), BN-scale folded, bf16 weights."""
    ks = jax.random.split(key, 6)
    P, Cin = planes, inplanes
    w1_oihw = 0.1 * jax.random.normal(ks[0], (P, Cin, 1, 1), jnp.float32)
    w2_oihw = 0.1 * jax.random.normal(ks[1], (P, P, 3, 3), jnp.float32)
    w3_oihw = 0.1 * jax.random.normal(ks[2], (4 * P, P, 1, 1), jnp.float32)

    def bn(k, c, eps=1e-5):
        kg, kb, km, kv = jax.random.split(k, 4)
        gamma = 1.0 + 0.1 * jax.random.normal(kg, (c,), jnp.float32)
        beta = 0.1 * jax.random.normal(kb, (c,), jnp.float32)
        mean = 0.1 * jax.random.normal(km, (c,), jnp.float32)
        var = jnp.abs(1.0 + 0.1 * jax.random.normal(kv, (c,), jnp.float32))
        scale = gamma / jnp.sqrt(var + eps)
        bias = beta - mean * scale
        return scale, bias

    s1, b1 = bn(ks[3], P)
    s2, b2 = bn(ks[4], P)
    s3, b3 = bn(ks[5], 4 * P)

    # Convert to kernel layouts and fold BN scales into the conv weights.
    w1 = jnp.transpose(w1_oihw[:, :, 0, 0], (1, 0)) * s1                 # (Cin, P)
    w2 = (jnp.transpose(w2_oihw, (2, 3, 1, 0)) * s2).reshape(9 * P, P)   # (9P, P)
    w3 = jnp.transpose(w3_oihw[:, :, 0, 0], (1, 0)) * s3                 # (P, 4P)
    return (w1.astype(jnp.bfloat16), b1.reshape(1, P),
            w2.astype(jnp.bfloat16), b2.reshape(1, P),
            w3.astype(jnp.bfloat16), b3.reshape(1, 4 * P))


def bottleneck_reference(x_nhwc, params):
    """Pure-JAX reference (lax.conv), same precision recipe: bf16 operands, f32 acc."""
    w1, b1, w2, b2, w3, b3 = params
    Cin, P = w1.shape
    dn = ('NHWC', 'HWIO', 'NHWC')
    xb = x_nhwc.astype(jnp.bfloat16)
    o = lax.conv_general_dilated(xb, w1.reshape(1, 1, Cin, P), (1, 1), 'VALID',
                                 dimension_numbers=dn,
                                 preferred_element_type=jnp.float32)
    o = jnp.maximum(o + b1, 0.0)
    o = lax.conv_general_dilated(o.astype(jnp.bfloat16), w2.reshape(3, 3, P, P),
                                 (1, 1), 'SAME', dimension_numbers=dn,
                                 preferred_element_type=jnp.float32)
    o = jnp.maximum(o + b2, 0.0)
    o = lax.conv_general_dilated(o.astype(jnp.bfloat16), w3.reshape(1, 1, P, Cin),
                                 (1, 1), 'VALID', dimension_numbers=dn,
                                 preferred_element_type=jnp.float32)
    return jnp.maximum(o + b3 + x_nhwc.astype(jnp.float32), 0.0)   # f32 output


if __name__ == "__main__":
    # Small Bottleneck config with identity residual: inplanes == expansion*planes.
    # Cin = 128 keeps the channel (lane) axis fully dense on TPU.
    # N=8, nb=2 -> grid=(4,): >=2 steps per TensorCore on v7x for DMA/compute overlap.
    N, inplanes, planes, H, W = 8, 128, 32, 16, 16

    key = jax.random.PRNGKey(0)
    kx, kp = jax.random.split(key)
    x_nchw = jax.random.normal(kx, (N, inplanes, H, W), jnp.float32)
    params = make_params(kp, inplanes, planes)

    # Layout plumbing outside the kernel (the PyTorch module is NCHW); activations
    # cross the kernel boundary as bf16 NHWC (halves the dominant HBM stream).
    x_nhwc = jnp.transpose(x_nchw, (0, 2, 3, 1)).astype(jnp.bfloat16)

    out_nhwc = bottleneck_pallas(x_nhwc, params, nb=2)        # bf16 (N, H, W, Cin)
    out_nchw = jnp.transpose(out_nhwc, (0, 3, 1, 2))          # back to NCHW
    jax.block_until_ready(out_nchw)

    ref_nchw = jnp.transpose(bottleneck_reference(x_nhwc, params), (0, 3, 1, 2))
    # Mixed abs/rel tolerance: kernel output is bf16-quantized, reference is f32.
    err = jnp.max(jnp.abs(out_nchw.astype(jnp.float32) - ref_nchw)
                  / (1.0 + jnp.abs(ref_nchw)))
    assert err < 2e-2, f"mismatch vs reference, mixed abs/rel err = {err}"
    print("KERNEL_OK")
</pallas_src>

<mosaic_0001>
module attributes {stable_mosaic.version = 11 : i64} {
  func.func @bottleneck_kernel(%arg0: i32, %arg1: memref<2x16x16x128xbf16, #tpu.memory_space<vmem>>, %arg2: memref<128x32xbf16, #tpu.memory_space<vmem>>, %arg3: memref<1x32xf32, #tpu.memory_space<vmem>>, %arg4: memref<288x32xbf16, #tpu.memory_space<vmem>>, %arg5: memref<1x32xf32, #tpu.memory_space<vmem>>, %arg6: memref<32x128xbf16, #tpu.memory_space<vmem>>, %arg7: memref<1x128xf32, #tpu.memory_space<vmem>>, %arg8: memref<2x16x16x128xbf16, #tpu.memory_space<vmem>>, %arg9: memref<2x18x18x32xbf16, #tpu.memory_space<vmem>>) attributes {dimension_semantics = [#tpu.dimension_semantics<parallel>], iteration_bounds = array<i64: 4>, scalar_prefetch = 0 : i64, scratch_operands = 1 : i64, tpu.core_type = #tpu.core_type<tc>, window_params = [{transform_indices = @transform_0, window_bounds = array<i64: 2, 16, 16, 128>}, {pipeline_mode = #tpu.pipeline_mode<synchronous>, transform_indices = @transform_1, window_bounds = array<i64: 128, 32>}, {pipeline_mode = #tpu.pipeline_mode<synchronous>, transform_indices = @transform_2, window_bounds = array<i64: 1, 32>}, {pipeline_mode = #tpu.pipeline_mode<synchronous>, transform_indices = @transform_3, window_bounds = array<i64: 288, 32>}, {pipeline_mode = #tpu.pipeline_mode<synchronous>, transform_indices = @transform_4, window_bounds = array<i64: 1, 32>}, {pipeline_mode = #tpu.pipeline_mode<synchronous>, transform_indices = @transform_5, window_bounds = array<i64: 32, 128>}, {pipeline_mode = #tpu.pipeline_mode<synchronous>, transform_indices = @transform_6, window_bounds = array<i64: 1, 128>}, {transform_indices = @transform_7, window_bounds = array<i64: 2, 16, 16, 128>}]} {
    %c0 = arith.constant 0 : index
    %c0_0 = arith.constant 0 : index
    %c0_1 = arith.constant 0 : index
    %c0_2 = arith.constant 0 : index
    %0 = vector.load %arg1[%c0, %c0_0, %c0_1, %c0_2] : memref<2x16x16x128xbf16, #tpu.memory_space<vmem>>, vector<2x16x16x128xbf16>
    %1 = vector.shape_cast %0 : vector<2x16x16x128xbf16> to vector<512x128xbf16>
    %c0_3 = arith.constant 0 : index
    %c0_4 = arith.constant 0 : index
    %2 = vector.load %arg2[%c0_3, %c0_4] : memref<128x32xbf16, #tpu.memory_space<vmem>>, vector<128x32xbf16>
    %cst = arith.constant dense<0.000000e+00> : vector<512x32xf32>
    %3 = tpu.matmul %1, %2, %cst {dimension_numbers = #tpu.dot_dimension_numbers<[1], [0], [0], [1], [0, 0, 1, 1], [], []>} : vector<512x128xbf16>, vector<128x32xbf16>, vector<512x32xf32> -> vector<512x32xf32>
    %c0_5 = arith.constant 0 : index
    %c0_6 = arith.constant 0 : index
    %4 = vector.load %arg3[%c0_5, %c0_6] : memref<1x32xf32, #tpu.memory_space<vmem>>, vector<1x32xf32>
    %5 = vector.broadcast %4 : vector<1x32xf32> to vector<512x32xf32>
    %6 = arith.addf %3, %5 : vector<512x32xf32>
    %cst_7 = arith.constant 0.000000e+00 : f32
    %7 = vector.broadcast %cst_7 : f32 to vector<512x32xf32>
    %8 = arith.maximumf %6, %7 : vector<512x32xf32>
    %9 = arith.truncf %8 : vector<512x32xf32> to vector<512x32xbf16>
    %10 = vector.shape_cast %9 : vector<512x32xbf16> to vector<2x16x16x32xbf16>
    %cst_8 = arith.constant 0.000000e+00 : bf16
    %11 = vector.broadcast %cst_8 : bf16 to vector<2x1x18x32xbf16>
    %c0_9 = arith.constant 0 : index
    %c0_10 = arith.constant 0 : index
    %c0_11 = arith.constant 0 : index
    %c0_12 = arith.constant 0 : index
    %12 = vector.load %arg9[%c0_9, %c0_10, %c0_11, %c0_12] : memref<2x18x18x32xbf16, #tpu.memory_space<vmem>>, vector<2x1x18x32xbf16>
    tpu.vector_store %arg9[%c0_9, %c0_10, %c0_11, %c0_12], %11 {strides = array<i32>} : memref<2x18x18x32xbf16, #tpu.memory_space<vmem>>, vector<2x1x18x32xbf16>,
    %cst_13 = arith.constant 0.000000e+00 : bf16
    %13 = vector.broadcast %cst_13 : bf16 to vector<2x1x18x32xbf16>
    %c0_14 = arith.constant 0 : index
    %c17 = arith.constant 17 : index
    %c0_15 = arith.constant 0 : index
    %c0_16 = arith.constant 0 : index
    %14 = vector.load %arg9[%c0_14, %c17, %c0_15, %c0_16] : memref<2x18x18x32xbf16, #tpu.memory_space<vmem>>, vector<2x1x18x32xbf16>
    tpu.vector_store %arg9[%c0_14, %c17, %c0_15, %c0_16], %13 {strides = array<i32>} : memref<2x18x18x32xbf16, #tpu.memory_space<vmem>>, vector<2x1x18x32xbf16>,
    %cst_17 = arith.constant 0.000000e+00 : bf16
    %15 = vector.broadcast %cst_17 : bf16 to vector<2x18x1x32xbf16>
    %c0_18 = arith.constant 0 : index
    %c0_19 = arith.constant 0 : index
    %c0_20 = arith.constant 0 : index
    %c0_21 = arith.constant 0 : index
    %16 = vector.load %arg9[%c0_18, %c0_19, %c0_20, %c0_21] : memref<2x18x18x32xbf16, #tpu.memory_space<vmem>>, vector<2x18x1x32xbf16>
    tpu.vector_store %arg9[%c0_18, %c0_19, %c0_20, %c0_21], %15 {strides = array<i32>} : memref<2x18x18x32xbf16, #tpu.memory_space<vmem>>, vector<2x18x1x32xbf16>,
    %cst_22 = arith.constant 0.000000e+00 : bf16
    %17 = vector.broadcast %cst_22 : bf16 to vector<2x18x1x32xbf16>
    %c0_23 = arith.constant 0 : index
    %c0_24 = arith.constant 0 : index
    %c17_25 = arith.constant 17 : index
    %c0_26 = arith.constant 0 : index
    %18 = vector.load %arg9[%c0_23, %c0_24, %c17_25, %c0_26] : memref<2x18x18x32xbf16, #tpu.memory_space<vmem>>, vector<2x18x1x32xbf16>
    tpu.vector_store %arg9[%c0_23, %c0_24, %c17_25, %c0_26], %17 {strides = array<i32>} : memref<2x18x18x32xbf16, #tpu.memory_space<vmem>>, vector<2x18x1x32xbf16>,
    %c0_27 = arith.constant 0 : index
    %c1 = arith.constant 1 : index
    %c1_28 = arith.constant 1 : index
    %c0_29 = arith.constant 0 : index
    %19 = vector.load %arg9[%c0_27, %c1, %c1_28, %c0_29] : memref<2x18x18x32xbf16, #tpu.memory_space<vmem>>, vector<2x16x16x32xbf16>
    tpu.vector_store %arg9[%c0_27, %c1, %c1_28, %c0_29], %10 {strides = array<i32>} : memref<2x18x18x32xbf16, #tpu.memory_space<vmem>>, vector<2x16x16x32xbf16>,
    %c0_30 = arith.constant 0 : index
    %c0_31 = arith.constant 0 : index
    %c0_32 = arith.constant 0 : index
    %c0_33 = arith.constant 0 : index
    %20 = vector.load %arg9[%c0_30, %c0_31, %c0_32, %c0_33] : memref<2x18x18x32xbf16, #tpu.memory_space<vmem>>, vector<2x16x16x32xbf16>
    %21 = vector.shape_cast %20 : vector<2x16x16x32xbf16> to vector<512x32xbf16>
    %c0_34 = arith.constant 0 : index
    %c0_35 = arith.constant 0 : index
    %c1_36 = arith.constant 1 : index
    %c0_37 = arith.constant 0 : index
    %22 = vector.load %arg9[%c0_34, %c0_35, %c1_36, %c0_37] : memref<2x18x18x32xbf16, #tpu.memory_space<vmem>>, vector<2x16x16x32xbf16>
    %23 = vector.shape_cast %22 : vector<2x16x16x32xbf16> to vector<512x32xbf16>
    %c0_38 = arith.constant 0 : index
    %c0_39 = arith.constant 0 : index
    %c2 = arith.constant 2 : index
    %c0_40 = arith.constant 0 : index
    %24 = vector.load %arg9[%c0_38, %c0_39, %c2, %c0_40] : memref<2x18x18x32xbf16, #tpu.memory_space<vmem>>, vector<2x16x16x32xbf16>
    %25 = vector.shape_cast %24 : vector<2x16x16x32xbf16> to vector<512x32xbf16>
    %c0_41 = arith.constant 0 : index
    %c1_42 = arith.constant 1 : index
    %c0_43 = arith.constant 0 : index
    %c0_44 = arith.constant 0 : index
    %26 = vector.load %arg9[%c0_41, %c1_42, %c0_43, %c0_44] : memref<2x18x18x32xbf16, #tpu.memory_space<vmem>>, vector<2x16x16x32xbf16>
    %27 = vector.shape_cast %26 : vector<2x16x16x32xbf16> to vector<512x32xbf16>
    %c0_45 = arith.constant 0 : index
    %c1_46 = arith.constant 1 : index
    %c1_47 = arith.constant 1 : index
    %c0_48 = arith.constant 0 : index
    %28 = vector.load %arg9[%c0_45, %c1_46, %c1_47, %c0_48] : memref<2x18x18x32xbf16, #tpu.memory_space<vmem>>, vector<2x16x16x32xbf16>
    %29 = vector.shape_cast %28 : vector<2x16x16x32xbf16> to vector<512x32xbf16>
    %c0_49 = arith.constant 0 : index
    %c1_50 = arith.constant 1 : index
    %c2_51 = arith.constant 2 : index
    %c0_52 = arith.constant 0 : index
    %30 = vector.load %arg9[%c0_49, %c1_50, %c2_51, %c0_52] : memref<2x18x18x32xbf16, #tpu.memory_space<vmem>>, vector<2x16x16x32xbf16>
    %31 = vector.shape_cast %30 : vector<2x16x16x32xbf16> to vector<512x32xbf16>
    %c0_53 = arith.constant 0 : index
    %c2_54 = arith.constant 2 : index
    %c0_55 = arith.constant 0 : index
    %c0_56 = arith.constant 0 : index
    %32 = vector.load %arg9[%c0_53, %c2_54, %c0_55, %c0_56] : memref<2x18x18x32xbf16, #tpu.memory_space<vmem>>, vector<2x16x16x32xbf16>
    %33 = vector.shape_cast %32 : vector<2x16x16x32xbf16> to vector<512x32xbf16>
    %c0_57 = arith.constant 0 : index
    %c2_58 = arith.constant 2 : index
    %c1_59 = arith.constant 1 : index
    %c0_60 = arith.constant 0 : index
    %34 = vector.load %arg9[%c0_57, %c2_58, %c1_59, %c0_60] : memref<2x18x18x32xbf16, #tpu.memory_space<vmem>>, vector<2x16x16x32xbf16>
    %35 = vector.shape_cast %34 : vector<2x16x16x32xbf16> to vector<512x32xbf16>
    %c0_61 = arith.constant 0 : index
    %c2_62 = arith.constant 2 : index
    %c2_63 = arith.constant 2 : index
    %c0_64 = arith.constant 0 : index
    %36 = vector.load %arg9[%c0_61, %c2_62, %c2_63, %c0_64] : memref<2x18x18x32xbf16, #tpu.memory_space<vmem>>, vector<2x16x16x32xbf16>
    %37 = vector.shape_cast %36 : vector<2x16x16x32xbf16> to vector<512x32xbf16>
    %38 = tpu.concatenate %21, %23, %25, %27, %29, %31, %33, %35, %37 in 1 : vector<512x32xbf16>, vector<512x32xbf16>, vector<512x32xbf16>, vector<512x32xbf16>, vector<512x32xbf16>, vector<512x32xbf16>, vector<512x32xbf16>, vector<512x32xbf16>, vector<512x32xbf16> -> vector<512x288xbf16>
    %c0_65 = arith.constant 0 : index
    %c0_66 = arith.constant 0 : index
    %39 = vector.load %arg4[%c0_65, %c0_66] : memref<288x32xbf16, #tpu.memory_space<vmem>>, vector<288x32xbf16>
    %cst_67 = arith.constant dense<0.000000e+00> : vector<512x32xf32>
    %40 = tpu.matmul %38, %39, %cst_67 {dimension_numbers = #tpu.dot_dimension_numbers<[1], [0], [0], [1], [0, 0, 1, 1], [], []>} : vector<512x288xbf16>, vector<288x32xbf16>, vector<512x32xf32> -> vector<512x32xf32>
    %c0_68 = arith.constant 0 : index
    %c0_69 = arith.constant 0 : index
    %41 = vector.load %arg5[%c0_68, %c0_69] : memref<1x32xf32, #tpu.memory_space<vmem>>, vector<1x32xf32>
    %42 = vector.broadcast %41 : vector<1x32xf32> to vector<512x32xf32>
    %43 = arith.addf %40, %42 : vector<512x32xf32>
    %cst_70 = arith.constant 0.000000e+00 : f32
    %44 = vector.broadcast %cst_70 : f32 to vector<512x32xf32>
    %45 = arith.maximumf %43, %44 : vector<512x32xf32>
    %46 = arith.truncf %45 : vector<512x32xf32> to vector<512x32xbf16>
    %c0_71 = arith.constant 0 : index
    %c0_72 = arith.constant 0 : index
    %47 = vector.load %arg6[%c0_71, %c0_72] : memref<32x128xbf16, #tpu.memory_space<vmem>>, vector<32x128xbf16>
    %cst_73 = arith.constant dense<0.000000e+00> : vector<512x128xf32>
    %48 = tpu.matmul %46, %47, %cst_73 {dimension_numbers = #tpu.dot_dimension_numbers<[1], [0], [0], [1], [0, 0, 1, 1], [], []>} : vector<512x32xbf16>, vector<32x128xbf16>, vector<512x128xf32> -> vector<512x128xf32>
    %c0_74 = arith.constant 0 : index
    %c0_75 = arith.constant 0 : index
    %c0_76 = arith.constant 0 : index
    %c0_77 = arith.constant 0 : index
    %49 = vector.load %arg1[%c0_74, %c0_75, %c0_76, %c0_77] : memref<2x16x16x128xbf16, #tpu.memory_space<vmem>>, vector<2x16x16x128xbf16>
    %50 = vector.shape_cast %49 : vector<2x16x16x128xbf16> to vector<512x128xbf16>
    %51 = arith.extf %50 : vector<512x128xbf16> to vector<512x128xf32>
    %c0_78 = arith.constant 0 : index
    %c0_79 = arith.constant 0 : index
    %52 = vector.load %arg7[%c0_78, %c0_79] : memref<1x128xf32, #tpu.memory_space<vmem>>, vector<1x128xf32>
    %53 = vector.broadcast %52 : vector<1x128xf32> to vector<512x128xf32>
    %54 = arith.addf %48, %53 : vector<512x128xf32>
    %55 = arith.addf %54, %51 : vector<512x128xf32>
    %cst_80 = arith.constant 0.000000e+00 : f32
    %56 = vector.broadcast %cst_80 : f32 to vector<512x128xf32>
    %57 = arith.maximumf %55, %56 : vector<512x128xf32>
    %58 = vector.shape_cast %57 : vector<512x128xf32> to vector<2x16x16x128xf32>
    %59 = arith.truncf %58 : vector<2x16x16x128xf32> to vector<2x16x16x128xbf16>
    %c0_81 = arith.constant 0 : index
    %c0_82 = arith.constant 0 : index
    %c0_83 = arith.constant 0 : index
    %c0_84 = arith.constant 0 : index
    %60 = vector.load %arg8[%c0_81, %c0_82, %c0_83, %c0_84] : memref<2x16x16x128xbf16, #tpu.memory_space<vmem>>, vector<2x16x16x128xbf16>
    tpu.vector_store %arg8[%c0_81, %c0_82, %c0_83, %c0_84], %59 {strides = array<i32>} : memref<2x16x16x128xbf16, #tpu.memory_space<vmem>>, vector<2x16x16x128xbf16>,
    return
  }
  func.func @transform_0(%arg0: i32) -> (i32, i32, i32, i32) {
    %c0_i32 = arith.constant 0 : i32
    %c0_i32_0 = arith.constant 0 : i32
    %c0_i32_1 = arith.constant 0 : i32
    %c0_i32_2 = arith.constant 0 : i32
    return %arg0, %c0_i32, %c0_i32_0, %c0_i32_1 : i32, i32, i32, i32
  }
  func.func @transform_1(%arg0: i32) -> (i32, i32) {
    %c0_i32 = arith.constant 0 : i32
    %c0_i32_0 = arith.constant 0 : i32
    %c0_i32_1 = arith.constant 0 : i32
    return %c0_i32, %c0_i32_0 : i32, i32
  }
  func.func @transform_2(%arg0: i32) -> (i32, i32) {
    %c0_i32 = arith.constant 0 : i32
    %c0_i32_0 = arith.constant 0 : i32
    %c0_i32_1 = arith.constant 0 : i32
    return %c0_i32, %c0_i32_0 : i32, i32
  }
  func.func @transform_3(%arg0: i32) -> (i32, i32) {
    %c0_i32 = arith.constant 0 : i32
    %c0_i32_0 = arith.constant 0 : i32
    %c0_i32_1 = arith.constant 0 : i32
    return %c0_i32, %c0_i32_0 : i32, i32
  }
  func.func @transform_4(%arg0: i32) -> (i32, i32) {
    %c0_i32 = arith.constant 0 : i32
    %c0_i32_0 = arith.constant 0 : i32
    %c0_i32_1 = arith.constant 0 : i32
    return %c0_i32, %c0_i32_0 : i32, i32
  }
  func.func @transform_5(%arg0: i32) -> (i32, i32) {
    %c0_i32 = arith.constant 0 : i32
    %c0_i32_0 = arith.constant 0 : i32
    %c0_i32_1 = arith.constant 0 : i32
    return %c0_i32, %c0_i32_0 : i32, i32
  }
  func.func @transform_6(%arg0: i32) -> (i32, i32) {
    %c0_i32 = arith.constant 0 : i32
    %c0_i32_0 = arith.constant 0 : i32
    %c0_i32_1 = arith.constant 0 : i32
    return %c0_i32, %c0_i32_0 : i32, i32
  }
  func.func @transform_7(%arg0: i32) -> (i32, i32, i32, i32) {
    %c0_i32 = arith.constant 0 : i32
    %c0_i32_0 = arith.constant 0 : i32
    %c0_i32_1 = arith.constant 0 : i32
    %c0_i32_2 = arith.constant 0 : i32
    return %arg0, %c0_i32, %c0_i32_0, %c0_i32_1 : i32, i32, i32, i32
  }
}

</mosaic_0001>

<llo_original>
// kernel: tpu_custom_call.1
$region0: #{tpu_custom_call.1}
  #allocation0 [shape = 'u32[]', space=smem, size = 0x4, offset = 0x4, fixed_abs, tag = 'smem constant byte address 0x4 - core index']
  #allocation1 [shape = 'u32[144,128]{1,0:T(1,128)}', space=vmem, size = 0x12000, scoped, tag = 'internal scratch']
  #allocation2 [shape = 'bf16[2,18,18,32]{3,2,1,0:T(8,128)(2,1)}', space=vmem, size = 0x36000, scoped, tag = 'scratch operand']
  %s0 = inlined_call_operand.hbm [shape: bf16[8,16,16,128], index: 0, kind: input, shape index: {}]
  %s1 = inlined_call_operand.vmem [shape: bf16[128,32], index: 1, kind: input, shape index: {}]
  %s2 = inlined_call_operand.vmem [shape: f32[1,32], index: 2, kind: input, shape index: {}]
  %s3 = inlined_call_operand.vmem [shape: bf16[288,32], index: 3, kind: input, shape index: {}]
  %s4 = inlined_call_operand.vmem [shape: f32[1,32], index: 4, kind: input, shape index: {}]
  %s5 = inlined_call_operand.vmem [shape: bf16[32,128], index: 5, kind: input, shape index: {}]
  %s6 = inlined_call_operand.vmem [shape: f32[1,128], index: 6, kind: input, shape index: {}]
  %s7 = inlined_call_operand.hbm [shape: bf16[8,16,16,128], index: 7, kind: output, shape index: {}]
  %s8 = sld [smem:[#allocation0]]
  $region65: #{tpu_custom_call.1} parent=0
    _
  %s10 = ssub.s32 1, %s8
  %s11 = scalar_select 0, %s10, %s8
  $region1: #{tpu_custom_call.1} parent=0
    #allocation3 [shape = 'u8[262144]{0}', space=vmem, size = 0x40000, scoped, tag = 'input window, operand 0']
    #allocation4 [shape = 's32[2]{0}', space=sflag, size = 0x8, scoped, tag = 'scoped memory for tpu_custom_call.1']
    #allocation5 [shape = 's32[2]{0}', space=sflag, size = 0x8, scoped, tag = 'scoped memory for tpu_custom_call.1']
    #allocation6 [shape = 'u8[262144]{0}', space=vmem, size = 0x40000, scoped, tag = 'output window, operand 0']
    %12 = vsyncpa [#allocation4], 0
    %s13 = scalar_lea.sflag [#allocation4], 1
    %14 = vsyncpa %s13, 0
    %15 = vsyncpa [#allocation5], 0
    %s16 = scalar_lea.sflag [#allocation5], 1
    %17 = vsyncpa %s16, 0
    loop: start=0, step=1, limit=6
    $region2: #{tpu_custom_call.1} parent=1 // loop_pre_header
      _
    $region3: #{tpu_custom_call.1} parent=1 // loop_header
      %s19 = sphi 0, %s23
      %p20 = scmp.ge.s32.totalorder %s19, 6
      %s29 = sphi 0, %s31
      %s32 = sphi 0, %s29
      %s33 = sphi 0, %s32
      %s49 = sphi 0, %s33
      %s53 = sphi 0, %s53
      %s55 = sphi 0, %s53
      %s56 = sphi 0, %s55
      %s70 = sphi 0, %s56
      %s74 = sphi 0, %s74
      %s76 = sphi 0, %s74
      %s77 = sphi 0, %s76
      %s91 = sphi 0, %s77
      %s95 = sphi 0, %s95
      %s97 = sphi 0, %s95
      %s98 = sphi 0, %s97
      %s112 = sphi 0, %s98
      %s116 = sphi 0, %s116
      %s118 = sphi 0, %s116
      %s119 = sphi 0, %s118
      %s133 = sphi 0, %s119
      %s137 = sphi 0, %s137
      %s139 = sphi 0, %s137
      %s140 = sphi 0, %s139
      %s154 = sphi 0, %s140
      %s158 = sphi 0, %s158
      %s160 = sphi 0, %s158
      %s161 = sphi 0, %s160
      %s175 = sphi 0, %s161
      %s181 = sphi 0, %s183
      %s184 = sphi 0, %s181
      %s185 = sphi 0, %s184
      %s201 = sphi 0, %s185
    $region4: #{tpu_custom_call.1} parent=1 // loop_header_branch
      %22 = sbr.rel (%p20) target = $region8
    $region5: #{tpu_custom_call.1} parent=1 // loop_body
      %s24 = ssub.s32 %s19, 1
      %s25 = ssub.s32 %s19, 2
      %s26 = sadd.s32 %s19, 1
      %s27 = ssub.s32 %s19, %s26
      %p28 = scmp.eq.s32.totalorder %s27, 0
      %s30 = sadd.s32 %s29, 1
      %s31 = scalar_select %p28, %s29, %s30
      %p34 = pneg %p28
      %p35 = scmp.eq.s32.totalorder %s19, 3
      %p36 = por %p34, %p35
      %p37 = scmp.ne.s32.totalorder %s29, %s32
      %p38 = scmp.eq.s32.totalorder %s19, 0
      %p39 = por %p37, %p38
      %p40 = scmp.ne.s32.totalorder %s29, %s32
      %p41 = scmp.eq.s32.totalorder %s24, 3
      %p42 = por %p40, %p41
      %p43 = scmp.ne.s32.totalorder %s32, %s33
      %p44 = scmp.eq.s32.totalorder %s24, 0
      %p45 = por %p43, %p44
      %p46 = scmp.ne.s32.totalorder %s32, %s33
      %p47 = scmp.eq.s32.totalorder %s25, 3
      %p48 = por %p46, %p47
      %p50 = scmp.ne.s32.totalorder %s33, %s49
      %p51 = scmp.eq.s32.totalorder %s25, 0
      %p52 = por %p50, %p51
      %s54 = sadd.s32 %s53, 1
      %p57 = scmp.eq.s32.totalorder %s19, 3
      %p58 = scmp.ne.s32.totalorder %s53, %s55
      %p59 = scmp.eq.s32.totalorder %s19, 0
      %p60 = por %p58, %p59
      %p61 = scmp.ne.s32.totalorder %s53, %s55
      %p62 = scmp.eq.s32.totalorder %s24, 3
      %p63 = por %p61, %p62
      %p64 = scmp.ne.s32.totalorder %s55, %s56
      %p65 = scmp.eq.s32.totalorder %s24, 0
      %p66 = por %p64, %p65
      %p67 = scmp.ne.s32.totalorder %s55, %s56
      %p68 = scmp.eq.s32.totalorder %s25, 3
      %p69 = por %p67, %p68
      %p71 = scmp.ne.s32.totalorder %s56, %s70
      %p72 = scmp.eq.s32.totalorder %s25, 0
      %p73 = por %p71, %p72
      %s75 = sadd.s32 %s74, 1
      %p78 = scmp.eq.s32.totalorder %s19, 3
      %p79 = scmp.ne.s32.totalorder %s74, %s76
      %p80 = scmp.eq.s32.totalorder %s19, 0
      %p81 = por %p79, %p80
      %p82 = scmp.ne.s32.totalorder %s74, %s76
      %p83 = scmp.eq.s32.totalorder %s24, 3
      %p84 = por %p82, %p83
      %p85 = scmp.ne.s32.totalorder %s76, %s77
      %p86 = scmp.eq.s32.totalorder %s24, 0
      %p87 = por %p85, %p86
      %p88 = scmp.ne.s32.totalorder %s76, %s77
      %p89 = scmp.eq.s32.totalorder %s25, 3
      %p90 = por %p88, %p89
      %p92 = scmp.ne.s32.totalorder %s77, %s91
      %p93 = scmp.eq.s32.totalorder %s25, 0
      %p94 = por %p92, %p93
      %s96 = sadd.s32 %s95, 1
      %p99 = scmp.eq.s32.totalorder %s19, 3
      %p100 = scmp.ne.s32.totalorder %s95, %s97
      %p101 = scmp.eq.s32.totalorder %s19, 0
      %p102 = por %p100, %p101
      %p103 = scmp.ne.s32.totalorder %s95, %s97
      %p104 = scmp.eq.s32.totalorder %s24, 3
      %p105 = por %p103, %p104
      %p106 = scmp.ne.s32.totalorder %s97, %s98
      %p107 = scmp.eq.s32.totalorder %s24, 0
      %p108 = por %p106, %p107
      %p109 = scmp.ne.s32.totalorder %s97, %s98
      %p110 = scmp.eq.s32.totalorder %s25, 3
      %p111 = por %p109, %p110
      %p113 = scmp.ne.s32.totalorder %s98, %s112
      %p114 = scmp.eq.s32.totalorder %s25, 0
      %p115 = por %p113, %p114
      %s117 = sadd.s32 %s116, 1
      %p120 = scmp.eq.s32.totalorder %s19, 3
      %p121 = scmp.ne.s32.totalorder %s116, %s118
      %p122 = scmp.eq.s32.totalorder %s19, 0
      %p123 = por %p121, %p122
      %p124 = scmp.ne.s32.totalorder %s116, %s118
      %p125 = scmp.eq.s32.totalorder %s24, 3
      %p126 = por %p124, %p125
      %p127 = scmp.ne.s32.totalorder %s118, %s119
      %p128 = scmp.eq.s32.totalorder %s24, 0
      %p129 = por %p127, %p128
      %p130 = scmp.ne.s32.totalorder %s118, %s119
      %p131 = scmp.eq.s32.totalorder %s25, 3
      %p132 = por %p130, %p131
      %p134 = scmp.ne.s32.totalorder %s119, %s133
      %p135 = scmp.eq.s32.totalorder %s25, 0
      %p136 = por %p134, %p135
      %s138 = sadd.s32 %s137, 1
      %p141 = scmp.eq.s32.totalorder %s19, 3
      %p142 = scmp.ne.s32.totalorder %s137, %s139
      %p143 = scmp.eq.s32.totalorder %s19, 0
      %p144 = por %p142, %p143
      %p145 = scmp.ne.s32.totalorder %s137, %s139
      %p146 = scmp.eq.s32.totalorder %s24, 3
      %p147 = por %p145, %p146
      %p148 = scmp.ne.s32.totalorder %s139, %s140
      %p149 = scmp.eq.s32.totalorder %s24, 0
      %p150 = por %p148, %p149
      %p151 = scmp.ne.s32.totalorder %s139, %s140
      %p152 = scmp.eq.s32.totalorder %s25, 3
      %p153 = por %p151, %p152
      %p155 = scmp.ne.s32.totalorder %s140, %s154
      %p156 = scmp.eq.s32.totalorder %s25, 0
      %p157 = por %p155, %p156
      %s159 = sadd.s32 %s158, 1
      %p162 = scmp.eq.s32.totalorder %s19, 3
      %p163 = scmp.ne.s32.totalorder %s158, %s160
      %p164 = scmp.eq.s32.totalorder %s19, 0
      %p165 = por %p163, %p164
      %p166 = scmp.ne.s32.totalorder %s158, %s160
      %p167 = scmp.eq.s32.totalorder %s24, 3
      %p168 = por %p166, %p167
      %p169 = scmp.ne.s32.totalorder %s160, %s161
      %p170 = scmp.eq.s32.totalorder %s24, 0
      %p171 = por %p169, %p170
      %p172 = scmp.ne.s32.totalorder %s160, %s161
      %p173 = scmp.eq.s32.totalorder %s25, 3
      %p174 = por %p172, %p173
      %p176 = scmp.ne.s32.totalorder %s161, %s175
      %p177 = scmp.eq.s32.totalorder %s25, 0
      %p178 = por %p176, %p177
      %s179 = ssub.s32 %s19, %s26
      %p180 = scmp.eq.s32.totalorder %s179, 0
      %s182 = sadd.s32 %s181, 1
      %s183 = scalar_select %p180, %s181, %s182
      %p186 = pneg %p180
      %p187 = scmp.eq.s32.totalorder %s19, 3
      %p188 = por %p186, %p187
      %p189 = scmp.ne.s32.totalorder %s181, %s184
      %p190 = scmp.eq.s32.totalorder %s19, 0
      %p191 = por %p189, %p190
      %p192 = scmp.ne.s32.totalorder %s181, %s184
      %p193 = scmp.eq.s32.totalorder %s24, 3
      %p194 = por %p192, %p193
      %p195 = scmp.ne.s32.totalorder %s184, %s185
      %p196 = scmp.eq.s32.totalorder %s24, 0
      %p197 = por %p195, %p196
      %p198 = scmp.ne.s32.totalorder %s184, %s185
      %p199 = scmp.eq.s32.totalorder %s25, 3
      %p200 = por %p198, %p199
      %p202 = scmp.ne.s32.totalorder %s185, %s201
      %p203 = scmp.eq.s32.totalorder %s25, 0
      %p204 = por %p202, %p203
      %p205 = scmp.le.s32.totalorder 1, %s19
      %p206 = scmp.lt.s32.totalorder %s19, 5
      %p207 = pnand %p205, %p206
      %p208 = pneg %p207
      // Predicated region
      $region9: #{tpu_custom_call.1} parent=5 // pred_check
        _
      $region10: #{tpu_custom_call.1} parent=5 // pred_check_branch
        %210 = sbr.rel (%p207) target = $region12
      $region11: #{tpu_custom_call.1} parent=5 // pred_region
        %s211 = ssub.s32 %s19, 1
        // Predicated region
        $region13: #{tpu_custom_call.1} parent=11 // pred_check
          %p212 = pneg %p66
        $region14: #{tpu_custom_call.1} parent=11 // pred_check_branch
          %214 = sbr.rel (%p212) target = $region16
        $region15: #{tpu_custom_call.1} parent=11 // pred_region
          _
        $region16: #{tpu_custom_call.1} parent=11 // pred_fallthru
          _
        // Predicated region
        $region17: #{tpu_custom_call.1} parent=11 // pred_check
          %p215 = pneg %p87
        $region18: #{tpu_custom_call.1} parent=11 // pred_check_branch
          %217 = sbr.rel (%p215) target = $region20
        $region19: #{tpu_custom_call.1} parent=11 // pred_region
          _
        $region20: #{tpu_custom_call.1} parent=11 // pred_fallthru
          _
        // Predicated region
        $region21: #{tpu_custom_call.1} parent=11 // pred_check
          %p218 = pneg %p108
        $region22: #{tpu_custom_call.1} parent=11 // pred_check_branch
          %220 = sbr.rel (%p218) target = $region24
        $region23: #{tpu_custom_call.1} parent=11 // pred_region
          _
        $region24: #{tpu_custom_call.1} parent=11 // pred_fallthru
          _
        // Predicated region
        $region25: #{tpu_custom_call.1} parent=11 // pred_check
          %p221 = pneg %p129
        $region26: #{tpu_custom_call.1} parent=11 // pred_check_branch
          %223 = sbr.rel (%p221) target = $region28
        $region27: #{tpu_custom_call.1} parent=11 // pred_region
          _
        $region28: #{tpu_custom_call.1} parent=11 // pred_fallthru
          _
        // Predicated region
        $region29: #{tpu_custom_call.1} parent=11 // pred_check
          %p224 = pneg %p150
        $region30: #{tpu_custom_call.1} parent=11 // pred_check_branch
          %226 = sbr.rel (%p224) target = $region32
        $region31: #{tpu_custom_call.1} parent=11 // pred_region
          _
        $region32: #{tpu_custom_call.1} parent=11 // pred_fallthru
          _
        // Predicated region
        $region33: #{tpu_custom_call.1} parent=11 // pred_check
          %p227 = pneg %p171
        $region34: #{tpu_custom_call.1} parent=11 // pred_check_branch
          %229 = sbr.rel (%p227) target = $region36
        $region35: #{tpu_custom_call.1} parent=11 // pred_region
          _
        $region36: #{tpu_custom_call.1} parent=11 // pred_fallthru
          _
      $region12: #{tpu_custom_call.1} parent=5 // pred_fallthru
        _
      %p230 = scmp.lt.s32.totalorder %s19, 4
      // Predicated region
      $region37: #{tpu_custom_call.1} parent=5 // pred_check
        %p231 = pneg %p230
      $region38: #{tpu_custom_call.1} parent=5 // pred_check_branch
        %233 = sbr.rel (%p231) target = $region40
      $region39: #{tpu_custom_call.1} parent=5 // pred_region
        // Predicated region
        $region41: #{tpu_custom_call.1} parent=39 // pred_check
          %p234 = pneg %p39
        $region42: #{tpu_custom_call.1} parent=39 // pred_check_branch
          %236 = sbr.rel (%p234) target = $region44
        $region43: #{tpu_custom_call.1} parent=39 // pred_region
          %s237 = sand.u32 %s29, 1
          %s238 = scalar_lea.sflag [#allocation4], %s237
          %s239 = sand.u32 %s29, 1
          %s240 = smul.addr %s239, 256
          %s241 = scalar_lea.vmem [#allocation3], %s240
          %s242 = smul.u32 2, %s19
          %s244 = ssub.s32 4096, 4096
          %245 = vsyncadd %s238, %s244
          %s246 = smul.addr %s242, 32
          %s247 = smul.addr %s246, 64
          %s248 = scalar_lea.hbm %s0, %s247
          %s249 = sshll.u32 %s241, 4
          %s250 = int_to_ptr.vmem [resolvable:$true] %s249
          %255 = dma.hbm_to_vmem [thread:$0]  %s248, 4096, %s250, %s238, 64, 64, 4
        $region44: #{tpu_custom_call.1} parent=39 // pred_fallthru
          _
      $region40: #{tpu_custom_call.1} parent=5 // pred_fallthru
        _
      %p256 = scmp.le.s32.totalorder 1, %s19
      %p257 = scmp.lt.s32.totalorder %s19, 5
      %p258 = pnand %p256, %p257
      %p259 = pneg %p258
      // Predicated region
      $region45: #{tpu_custom_call.1} parent=5 // pred_check
        _
      $region46: #{tpu_custom_call.1} parent=5 // pred_check_branch
        %261 = sbr.rel (%p258) target = $region48
      $region47: #{tpu_custom_call.1} parent=5 // pred_region
        %s262 = ssub.s32 %s19, 1
        %s263 = sand.u32 %s32, 1
        %s264 = scalar_lea.sflag [#allocation4], %s263
        %s265 = sand.u32 %s32, 1
        %s266 = smul.addr %s265, 256
        %s267 = scalar_lea.vmem [#allocation3], %s266
        // Predicated region
        $region49: #{tpu_custom_call.1} parent=47 // pred_check
          %p268 = pneg %p45
        $region50: #{tpu_custom_call.1} parent=47 // pred_check_branch
          %270 = sbr.rel (%p268) target = $region52
        $region51: #{tpu_custom_call.1} parent=47 // pred_region
          %271 = dma.done %s264, 4096
        $region52: #{tpu_custom_call.1} parent=47 // pred_fallthru
          _
        %s272 = sand.u32 %s32, 1
        %s273 = scalar_lea.sflag [#allocation4], %s272
        %s274 = sand.u32 %s32, 1
        %s275 = smul.addr %s274, 256
        %s276 = scalar_lea.vmem [#allocation3], %s275
        %p277 = pneg %p45
        %p278 = pneg %p42
        %p279 = pneg %p66
        %p280 = pneg %p63
        %p281 = pneg %p87
        %p282 = pneg %p84
        %p283 = pneg %p108
        %p284 = pneg %p105
        %p285 = pneg %p129
        %p286 = pneg %p126
        %p287 = pneg %p150
        %p288 = pneg %p147
        %p289 = pneg %p171
        %p290 = pneg %p168
        %p291 = pneg %p197
        %p292 = pneg %p194
        %s293 = sand.u32 %s184, 1
        %s294 = scalar_lea.sflag [#allocation5], %s293
        %s295 = sand.u32 %s184, 1
        %s296 = smul.addr %s295, 256
        %s297 = scalar_lea.vmem [#allocation6], %s296
        %s298 = smul.u32 2, %s24
        %s299 = smul.u32 2, %s24
        %v301 = vld [vmem:[%s267] sm:$0xf]
        %v302 = vld [vmem:[%s267 + $0x4] sm:$0xf]
        %v303 = vld [vmem:[%s267 + $0x8] sm:$0xf]
        %v304 = vld [vmem:[%s267 + $0xc] sm:$0xf]
        %v305 = vld [vmem:[%s267 + $0x10] sm:$0xf]
        %v306 = vld [vmem:[%s267 + $0x14] sm:$0xf]
        %v307 = vld [vmem:[%s267 + $0x18] sm:$0xf]
        %v308 = vld [vmem:[%s267 + $0x1c] sm:$0xf]
        %v309 = vld [vmem:[%s267 + $0x20] sm:$0xf]
        %v310 = vld [vmem:[%s267 + $0x24] sm:$0xf]
        %v311 = vld [vmem:[%s267 + $0x28] sm:$0xf]
        %v312 = vld [vmem:[%s267 + $0x2c] sm:$0xf]
        %v313 = vld [vmem:[%s267 + $0x30] sm:$0xf]
        %v314 = vld [vmem:[%s267 + $0x34] sm:$0xf]
        %v315 = vld [vmem:[%s267 + $0x38] sm:$0xf]
        %v316 = vld [vmem:[%s267 + $0x3c] sm:$0xf]
        %v317 = vld [vmem:[%s267 + $0x40] sm:$0xf]
        %v318 = vld [vmem:[%s267 + $0x44] sm:$0xf]
        %v319 = vld [vmem:[%s267 + $0x48] sm:$0xf]
        %v320 = vld [vmem:[%s267 + $0x4c] sm:$0xf]
        %v321 = vld [vmem:[%s267 + $0x50] sm:$0xf]
        %v322 = vld [vmem:[%s267 + $0x54] sm:$0xf]
        %v323 = vld [vmem:[%s267 + $0x58] sm:$0xf]
        %v324 = vld [vmem:[%s267 + $0x5c] sm:$0xf]
        %v325 = vld [vmem:[%s267 + $0x60] sm:$0xf]
        %v326 = vld [vmem:[%s267 + $0x64] sm:$0xf]
        %v327 = vld [vmem:[%s267 + $0x68] sm:$0xf]
        %v328 = vld [vmem:[%s267 + $0x6c] sm:$0xf]
        %v329 = vld [vmem:[%s267 + $0x70] sm:$0xf]
        %v330 = vld [vmem:[%s267 + $0x74] sm:$0xf]
        %v331 = vld [vmem:[%s267 + $0x78] sm:$0xf]
        %v332 = vld [vmem:[%s267 + $0x7c] sm:$0xf]
        %v333 = vld [vmem:[%s267 + $0x80] sm:$0xf]
        %v334 = vld [vmem:[%s267 + $0x84] sm:$0xf]
        %v335 = vld [vmem:[%s267 + $0x88] sm:$0xf]
        %v336 = vld [vmem:[%s267 + $0x8c] sm:$0xf]
        %v337 = vld [vmem:[%s267 + $0x90] sm:$0xf]
        %v338 = vld [vmem:[%s267 + $0x94] sm:$0xf]
        %v339 = vld [vmem:[%s267 + $0x98] sm:$0xf]
        %v340 = vld [vmem:[%s267 + $0x9c] sm:$0xf]
        %v341 = vld [vmem:[%s267 + $0xa0] sm:$0xf]
        %v342 = vld [vmem:[%s267 + $0xa4] sm:$0xf]
        %v343 = vld [vmem:[%s267 + $0xa8] sm:$0xf]
        %v344 = vld [vmem:[%s267 + $0xac] sm:$0xf]
        %v345 = vld [vmem:[%s267 + $0xb0] sm:$0xf]
        %v346 = vld [vmem:[%s267 + $0xb4] sm:$0xf]
        %v347 = vld [vmem:[%s267 + $0xb8] sm:$0xf]
        %v348 = vld [vmem:[%s267 + $0xbc] sm:$0xf]
        %v349 = vld [vmem:[%s267 + $0xc0] sm:$0xf]
        %v350 = vld [vmem:[%s267 + $0xc4] sm:$0xf]
        %v351 = vld [vmem:[%s267 + $0xc8] sm:$0xf]
        %v352 = vld [vmem:[%s267 + $0xcc] sm:$0xf]
        %v353 = vld [vmem:[%s267 + $0xd0] sm:$0xf]
        %v354 = vld [vmem:[%s267 + $0xd4] sm:$0xf]
        %v355 = vld [vmem:[%s267 + $0xd8] sm:$0xf]
        %v356 = vld [vmem:[%s267 + $0xdc] sm:$0xf]
        %v357 = vld [vmem:[%s267 + $0xe0] sm:$0xf]
        %v358 = vld [vmem:[%s267 + $0xe4] sm:$0xf]
        %v359 = vld [vmem:[%s267 + $0xe8] sm:$0xf]
        %v360 = vld [vmem:[%s267 + $0xec] sm:$0xf]
        %v361 = vld [vmem:[%s267 + $0xf0] sm:$0xf]
        %v362 = vld [vmem:[%s267 + $0xf4] sm:$0xf]
        %v363 = vld [vmem:[%s267 + $0xf8] sm:$0xf]
        %v364 = vld [vmem:[%s267 + $0xfc] sm:$0xf]
        %v365 = vld [vmem:[%s1] sm:$0xf]
        %v366 = vld [vmem:[%s1 + $0x4] sm:$0xf]
        %v367 = vld [vmem:[%s1 + $0x8] sm:$0xf]
        %v368 = vld [vmem:[%s1 + $0xc] sm:$0xf]
        %v369 = vld [vmem:[%s1 + $0x10] sm:$0xf]
        %v370 = vld [vmem:[%s1 + $0x14] sm:$0xf]
        %v371 = vld [vmem:[%s1 + $0x18] sm:$0xf]
        %v372 = vld [vmem:[%s1 + $0x1c] sm:$0xf]
        %v373 = vld [vmem:[%s1 + $0x20] sm:$0xf]
        %v374 = vld [vmem:[%s1 + $0x24] sm:$0xf]
        %v375 = vld [vmem:[%s1 + $0x28] sm:$0xf]
        %v376 = vld [vmem:[%s1 + $0x2c] sm:$0xf]
        %v377 = vld [vmem:[%s1 + $0x30] sm:$0xf]
        %v378 = vld [vmem:[%s1 + $0x34] sm:$0xf]
        %v379 = vld [vmem:[%s1 + $0x38] sm:$0xf]
        %v380 = vld [vmem:[%s1 + $0x3c] sm:$0xf]
        %v381 = vld [vmem:[%s2] sm:$0x1]
        %v383 = vlaneseq
        %v384 = vshrl.u32 %v383, 7
        %v385 = vsub.s32 0, %v384
        %v386 = vrot.slane %v381, %v385
        %v452 = vunpack.c.l.b16 %v301
        %v453 = vunpack.c.l.b16 %v302
        %v454 = vunpack.c.l.b16 %v303
        %v455 = vunpack.c.l.b16 %v304
        %v456 = vunpack.c.l.b16 %v305
        %v457 = vunpack.c.l.b16 %v306
        %v458 = vunpack.c.l.b16 %v307
        %v459 = vunpack.c.l.b16 %v308
        %v460 = vunpack.c.l.b16 %v309
        %v461 = vunpack.c.l.b16 %v310
        %v462 = vunpack.c.l.b16 %v311
        %v463 = vunpack.c.l.b16 %v312
        %v464 = vunpack.c.l.b16 %v313
        %v465 = vunpack.c.l.b16 %v314
        %v466 = vunpack.c.l.b16 %v315
        %v467 = vunpack.c.l.b16 %v316
        %v468 = vunpack.c.l.b16 %v317
        %v469 = vunpack.c.l.b16 %v318
        %v470 = vunpack.c.l.b16 %v319
        %v471 = vunpack.c.l.b16 %v320
        %v472 = vunpack.c.l.b16 %v321
        %v473 = vunpack.c.l.b16 %v322
        %v474 = vunpack.c.l.b16 %v323
        %v475 = vunpack.c.l.b16 %v324
        %v476 = vunpack.c.l.b16 %v325
        %v477 = vunpack.c.l.b16 %v326
        %v478 = vunpack.c.l.b16 %v327
        %v479 = vunpack.c.l.b16 %v328
        %v480 = vunpack.c.l.b16 %v329
        %v481 = vunpack.c.l.b16 %v330
        %v482 = vunpack.c.l.b16 %v331
        %v483 = vunpack.c.l.b16 %v332
        %v484 = vunpack.c.l.b16 %v333
        %v485 = vunpack.c.l.b16 %v334
        %v486 = vunpack.c.l.b16 %v335
        %v487 = vunpack.c.l.b16 %v336
        %v488 = vunpack.c.l.b16 %v337
        %v489 = vunpack.c.l.b16 %v338
        %v490 = vunpack.c.l.b16 %v339
        %v491 = vunpack.c.l.b16 %v340
        %v492 = vunpack.c.l.b16 %v341
        %v493 = vunpack.c.l.b16 %v342
        %v494 = vunpack.c.l.b16 %v343
        %v495 = vunpack.c.l.b16 %v344
        %v496 = vunpack.c.l.b16 %v345
        %v497 = vunpack.c.l.b16 %v346
        %v498 = vunpack.c.l.b16 %v347
        %v499 = vunpack.c.l.b16 %v348
        %v500 = vunpack.c.l.b16 %v349
        %v501 = vunpack.c.l.b16 %v350
        %v502 = vunpack.c.l.b16 %v351
        %v503 = vunpack.c.l.b16 %v352
        %v504 = vunpack.c.l.b16 %v353
        %v505 = vunpack.c.l.b16 %v354
        %v506 = vunpack.c.l.b16 %v355
        %v507 = vunpack.c.l.b16 %v356
        %v508 = vunpack.c.l.b16 %v357
        %v509 = vunpack.c.l.b16 %v358
        %v510 = vunpack.c.l.b16 %v359
        %v511 = vunpack.c.l.b16 %v360
        %v512 = vunpack.c.l.b16 %v361
        %v513 = vunpack.c.l.b16 %v362
        %v514 = vunpack.c.l.b16 %v363
        %v515 = vunpack.c.l.b16 %v364
        %v516 = vpack.c.b16 %v453, %v452
        %v517 = vpack.c.b16 %v455, %v454
        %v518 = vpack.c.b16 %v457, %v456
        %v519 = vpack.c.b16 %v459, %v458
        %v520 = vpack.c.b16 %v461, %v460
        %v521 = vpack.c.b16 %v463, %v462
        %v522 = vpack.c.b16 %v465, %v464
        %v523 = vpack.c.b16 %v467, %v466
        %v524 = vpack.c.b16 %v469, %v468
        %v525 = vpack.c.b16 %v471, %v470
        %v526 = vpack.c.b16 %v473, %v472
        %v527 = vpack.c.b16 %v475, %v474
        %v528 = vpack.c.b16 %v477, %v476
        %v529 = vpack.c.b16 %v479, %v478
        %v530 = vpack.c.b16 %v481, %v480
        %v531 = vpack.c.b16 %v483, %v482
        %v532 = vpack.c.b16 %v485, %v484
        %v533 = vpack.c.b16 %v487, %v486
        %v534 = vpack.c.b16 %v489, %v488
        %v535 = vpack.c.b16 %v491, %v490
        %v536 = vpack.c.b16 %v493, %v492
        %v537 = vpack.c.b16 %v495, %v494
        %v538 = vpack.c.b16 %v497, %v496
        %v539 = vpack.c.b16 %v499, %v498
        %v540 = vpack.c.b16 %v501, %v500
        %v541 = vpack.c.b16 %v503, %v502
        %v542 = vpack.c.b16 %v505, %v504
        %v543 = vpack.c.b16 %v507, %v506
        %v544 = vpack.c.b16 %v509, %v508
        %v545 = vpack.c.b16 %v511, %v510
        %v546 = vpack.c.b16 %v513, %v512
        %v547 = vpack.c.b16 %v515, %v514
        %v596 = vunpack.c.l.b16 %v365
        %v597 = vunpack.c.l.b16 %v366
        %v598 = vunpack.c.l.b16 %v367
        %v599 = vunpack.c.l.b16 %v368
        %v600 = vunpack.c.l.b16 %v369
        %v601 = vunpack.c.l.b16 %v370
        %v602 = vunpack.c.l.b16 %v371
        %v603 = vunpack.c.l.b16 %v372
        %v604 = vunpack.c.l.b16 %v373
        %v605 = vunpack.c.l.b16 %v374
        %v606 = vunpack.c.l.b16 %v375
        %v607 = vunpack.c.l.b16 %v376
        %v608 = vunpack.c.l.b16 %v377
        %v609 = vunpack.c.l.b16 %v378
        %v610 = vunpack.c.l.b16 %v379
        %v611 = vunpack.c.l.b16 %v380
        %v612 = vpack.c.b16 %v597, %v596
        %v613 = vpack.c.b16 %v599, %v598
        %v614 = vpack.c.b16 %v601, %v600
        %v615 = vpack.c.b16 %v603, %v602
        %v616 = vpack.c.b16 %v605, %v604
        %v617 = vpack.c.b16 %v607, %v606
        %v618 = vpack.c.b16 %v609, %v608
        %v619 = vpack.c.b16 %v611, %v610
        %628 = vmatprep.subr.bf16.mxu0 0
        %629 = vmatpush1.bf16.msra.mxu0 %v612
        %630 = vmatprep.subr.bf16.mxu0 0
        %631 = vmatpush1.bf16.msra.mxu0 %v613
        %632 = vmatprep.subr.bf16.mxu0 0
        %633 = vmatpush1.bf16.msra.mxu0 %v614
        %634 = vmatprep.subr.bf16.mxu0 0
        %635 = vmatpush1.bf16.msra.mxu0 %v615
        %636 = vmatprep.subr.bf16.mxu0 0
        %637 = vmatpush1.bf16.msra.mxu0 %v616
        %638 = vmatprep.subr.bf16.mxu0 0
        %639 = vmatpush1.bf16.msra.mxu0 %v617
        %640 = vmatprep.subr.bf16.mxu0 0
        %641 = vmatpush1.bf16.msra.mxu0 %v618
        %642 = vmatprep.subr.bf16.mxu0 0
        %643 = vmatpush1.bf16.msra.mxu0 %v619
        %644 = vmatprep.subr.bf16.mxu0 0
        %645 = vmatpush1.bf16.msra.mxu0 0
        %646 = vmatprep.subr.bf16.mxu0 0
        %647 = vmatpush1.bf16.msra.mxu0 0
        %648 = vmatprep.subr.bf16.mxu0 0
        %649 = vmatpush1.bf16.msra.mxu0 0
        %650 = vmatprep.subr.bf16.mxu0 0
        %651 = vmatpush1.bf16.msra.mxu0 0
        %652 = vmatprep.subr.bf16.mxu0 0
        %653 = vmatpush1.bf16.msra.mxu0 0
        %654 = vmatprep.subr.bf16.mxu0 0
        %655 = vmatpush1.bf16.msra.mxu0 0
        %656 = vmatprep.subr.bf16.mxu0 0
        %657 = vmatpush1.bf16.msra.mxu0 0
        %658 = vmatprep.subr.bf16.mxu0 0
        %659 = vmatpush1.bf16.msra.mxu0 0
        %660 = vmatprep.mubr.bf16.mxu0 0
        %661 = vmatmul.mubr.bf16.gmra.mrb[0].mxu0 %v516
        %v662 = vpop.f32.mrb[0].mxu0
        %v663 = vadd.f32 %v386, %v662
        %v664 = vpop.f32.mrb[0].mxu0
        %v665 = vpop.f32.mrb[0].mxu0
        %v666 = vadd.f32 %v386, %v665
        %v667 = vpop.f32.mrb[0].mxu0
        %668 = vmatprep.mubr.bf16.mxu0 0
        %669 = vmatmul.mubr.bf16.gmra.mrb[0].mxu0 %v517
        %v670 = vpop.f32.mrb[0].mxu0
        %v671 = vadd.f32 %v386, %v670
        %v672 = vpop.f32.mrb[0].mxu0
        %v673 = vpop.f32.mrb[0].mxu0
        %v674 = vadd.f32 %v386, %v673
        %v675 = vpop.f32.mrb[0].mxu0
        %676 = vmatprep.mubr.bf16.mxu0 0
        %677 = vmatmul.mubr.bf16.gmra.mrb[0].mxu0 %v518
        %v678 = vpop.f32.mrb[0].mxu0
        %v679 = vadd.f32 %v386, %v678
        %v680 = vpop.f32.mrb[0].mxu0
        %v681 = vpop.f32.mrb[0].mxu0
        %v682 = vadd.f32 %v386, %v681
        %v683 = vpop.f32.mrb[0].mxu0
        %684 = vmatprep.mubr.bf16.mxu0 0
        %685 = vmatmul.mubr.bf16.gmra.mrb[0].mxu0 %v519
        %v686 = vpop.f32.mrb[0].mxu0
        %v687 = vadd.f32 %v386, %v686
        %v688 = vpop.f32.mrb[0].mxu0
        %v689 = vpop.f32.mrb[0].mxu0
        %v690 = vadd.f32 %v386, %v689
        %v691 = vpop.f32.mrb[0].mxu0
        %692 = vmatprep.mubr.bf16.mxu0 0
        %693 = vmatmul.mubr.bf16.gmra.mrb[0].mxu0 %v520
        %v694 = vpop.f32.mrb[0].mxu0
        %v695 = vadd.f32 %v386, %v694
        %v696 = vpop.f32.mrb[0].mxu0
        %v697 = vpop.f32.mrb[0].mxu0
        %v698 = vadd.f32 %v386, %v697
        %v699 = vpop.f32.mrb[0].mxu0
        %700 = vmatprep.mubr.bf16.mxu0 0
        %701 = vmatmul.mubr.bf16.gmra.mrb[0].mxu0 %v521
        %v702 = vpop.f32.mrb[0].mxu0
        %v703 = vadd.f32 %v386, %v702
        %v704 = vpop.f32.mrb[0].mxu0
        %v705 = vpop.f32.mrb[0].mxu0
        %v706 = vadd.f32 %v386, %v705
        %v707 = vpop.f32.mrb[0].mxu0
        %708 = vmatprep.mubr.bf16.mxu0 0
        %709 = vmatmul.mubr.bf16.gmra.mrb[0].mxu0 %v522
        %v710 = vpop.f32.mrb[0].mxu0
        %v711 = vadd.f32 %v386, %v710
        %v712 = vpop.f32.mrb[0].mxu0
        %v713 = vpop.f32.mrb[0].mxu0
        %v714 = vadd.f32 %v386, %v713
        %v715 = vpop.f32.mrb[0].mxu0
        %716 = vmatprep.mubr.bf16.mxu0 0
        %717 = vmatmul.mubr.bf16.gmra.mrb[0].mxu0 %v523
        %v718 = vpop.f32.mrb[0].mxu0
        %v719 = vadd.f32 %v386, %v718
        %v720 = vpop.f32.mrb[0].mxu0
        %v721 = vpop.f32.mrb[0].mxu0
        %v722 = vadd.f32 %v386, %v721
        %v723 = vpop.f32.mrb[0].mxu0
        %724 = vmatprep.mubr.bf16.mxu0 0
        %725 = vmatmul.mubr.bf16.gmra.mrb[0].mxu0 %v524
        %v726 = vpop.f32.mrb[0].mxu0
        %v727 = vadd.f32 %v386, %v726
        %v728 = vpop.f32.mrb[0].mxu0
        %v729 = vpop.f32.mrb[0].mxu0
        %v730 = vadd.f32 %v386, %v729
        %v731 = vpop.f32.mrb[0].mxu0
        %732 = vmatprep.mubr.bf16.mxu0 0
        %733 = vmatmul.mubr.bf16.gmra.mrb[0].mxu0 %v525
        %v734 = vpop.f32.mrb[0].mxu0
        %v735 = vadd.f32 %v386, %v734
        %v736 = vpop.f32.mrb[0].mxu0
        %v737 = vpop.f32.mrb[0].mxu0
        %v738 = vadd.f32 %v386, %v737
        %v739 = vpop.f32.mrb[0].mxu0
        %740 = vmatprep.mubr.bf16.mxu0 0
        %741 = vmatmul.mubr.bf16.gmra.mrb[0].mxu0 %v526
        %v742 = vpop.f32.mrb[0].mxu0
        %v743 = vadd.f32 %v386, %v742
        %v744 = vpop.f32.mrb[0].mxu0
        %v745 = vpop.f32.mrb[0].mxu0
        %v746 = vadd.f32 %v386, %v745
        %v747 = vpop.f32.mrb[0].mxu0
        %748 = vmatprep.mubr.bf16.mxu0 0
        %749 = vmatmul.mubr.bf16.gmra.mrb[0].mxu0 %v527
        %v750 = vpop.f32.mrb[0].mxu0
        %v751 = vadd.f32 %v386, %v750
        %v752 = vpop.f32.mrb[0].mxu0
        %v753 = vpop.f32.mrb[0].mxu0
        %v754 = vadd.f32 %v386, %v753
        %v755 = vpop.f32.mrb[0].mxu0
        %756 = vmatprep.mubr.bf16.mxu0 0
        %757 = vmatmul.mubr.bf16.gmra.mrb[0].mxu0 %v528
        %v758 = vpop.f32.mrb[0].mxu0
        %v759 = vadd.f32 %v386, %v758
        %v760 = vpop.f32.mrb[0].mxu0
        %v761 = vpop.f32.mrb[0].mxu0
        %v762 = vadd.f32 %v386, %v761
        %v763 = vpop.f32.mrb[0].mxu0
        %764 = vmatprep.mubr.bf16.mxu0 0
        %765 = vmatmul.mubr.bf16.gmra.mrb[0].mxu0 %v529
        %v766 = vpop.f32.mrb[0].mxu0
        %v767 = vadd.f32 %v386, %v766
        %v768 = vpop.f32.mrb[0].mxu0
        %v769 = vpop.f32.mrb[0].mxu0
        %v770 = vadd.f32 %v386, %v769
        %v771 = vpop.f32.mrb[0].mxu0
        %772 = vmatprep.mubr.bf16.mxu0 0
        %773 = vmatmul.mubr.bf16.gmra.mrb[0].mxu0 %v530
        %v774 = vpop.f32.mrb[0].mxu0
        %v775 = vadd.f32 %v386, %v774
        %v776 = vpop.f32.mrb[0].mxu0
        %v777 = vpop.f32.mrb[0].mxu0
        %v778 = vadd.f32 %v386, %v777
        %v779 = vpop.f32.mrb[0].mxu0
        %780 = vmatprep.mubr.bf16.mxu0 0
        %781 = vmatmul.mubr.bf16.gmra.mrb[0].mxu0 %v531
        %v782 = vpop.f32.mrb[0].mxu0
        %v783 = vadd.f32 %v386, %v782
        %v784 = vpop.f32.mrb[0].mxu0
        %v785 = vpop.f32.mrb[0].mxu0
        %v786 = vadd.f32 %v386, %v785
        %v787 = vpop.f32.mrb[0].mxu0
        %788 = vmatprep.mubr.bf16.mxu0 0
        %789 = vmatmul.mubr.bf16.gmra.mrb[0].mxu0 %v532
        %v790 = vpop.f32.mrb[0].mxu0
        %v791 = vadd.f32 %v386, %v790
        %v792 = vpop.f32.mrb[0].mxu0
        %v793 = vpop.f32.mrb[0].mxu0
        %v794 = vadd.f32 %v386, %v793
        %v795 = vpop.f32.mrb[0].mxu0
        %796 = vmatprep.mubr.bf16.mxu0 0
        %797 = vmatmul.mubr.bf16.gmra.mrb[0].mxu0 %v533
        %v798 = vpop.f32.mrb[0].mxu0
        %v799 = vadd.f32 %v386, %v798
        %v800 = vpop.f32.mrb[0].mxu0
        %v801 = vpop.f32.mrb[0].mxu0
        %v802 = vadd.f32 %v386, %v801
        %v803 = vpop.f32.mrb[0].mxu0
        %804 = vmatprep.mubr.bf16.mxu0 0
        %805 = vmatmul.mubr.bf16.gmra.mrb[0].mxu0 %v534
        %v806 = vpop.f32.mrb[0].mxu0
        %v807 = vadd.f32 %v386, %v806
        %v808 = vpop.f32.mrb[0].mxu0
        %v809 = vpop.f32.mrb[0].mxu0
        %v810 = vadd.f32 %v386, %v809
        %v811 = vpop.f32.mrb[0].mxu0
        %812 = vmatprep.mubr.bf16.mxu0 0
        %813 = vmatmul.mubr.bf16.gmra.mrb[0].mxu0 %v535
        %v814 = vpop.f32.mrb[0].mxu0
        %v815 = vadd.f32 %v386, %v814
        %v816 = vpop.f32.mrb[0].mxu0
        %v817 = vpop.f32.mrb[0].mxu0
        %v818 = vadd.f32 %v386, %v817
        %v819 = vpop.f32.mrb[0].mxu0
        %820 = vmatprep.mubr.bf16.mxu0 0
        %821 = vmatmul.mubr.bf16.gmra.mrb[0].mxu0 %v536
        %v822 = vpop.f32.mrb[0].mxu0
        %v823 = vadd.f32 %v386, %v822
        %v824 = vpop.f32.mrb[0].mxu0
        %v825 = vpop.f32.mrb[0].mxu0
        %v826 = vadd.f32 %v386, %v825
        %v827 = vpop.f32.mrb[0].mxu0
        %828 = vmatprep.mubr.bf16.mxu0 0
        %829 = vmatmul.mubr.bf16.gmra.mrb[0].mxu0 %v537
        %v830 = vpop.f32.mrb[0].mxu0
        %v831 = vadd.f32 %v386, %v830
        %v832 = vpop.f32.mrb[0].mxu0
        %v833 = vpop.f32.mrb[0].mxu0
        %v834 = vadd.f32 %v386, %v833
        %v835 = vpop.f32.mrb[0].mxu0
        %836 = vmatprep.mubr.bf16.mxu0 0
        %837 = vmatmul.mubr.bf16.gmra.mrb[0].mxu0 %v538
        %v838 = vpop.f32.mrb[0].mxu0
        %v839 = vadd.f32 %v386, %v838
        %v840 = vpop.f32.mrb[0].mxu0
        %v841 = vpop.f32.mrb[0].mxu0
        %v842 = vadd.f32 %v386, %v841
        %v843 = vpop.f32.mrb[0].mxu0
        %844 = vmatprep.mubr.bf16.mxu0 0
        %845 = vmatmul.mubr.bf16.gmra.mrb[0].mxu0 %v539
        %v846 = vpop.f32.mrb[0].mxu0
        %v847 = vadd.f32 %v386, %v846
        %v848 = vpop.f32.mrb[0].mxu0
        %v849 = vpop.f32.mrb[0].mxu0
        %v850 = vadd.f32 %v386, %v849
        %v851 = vpop.f32.mrb[0].mxu0
        %852 = vmatprep.mubr.bf16.mxu0 0
        %853 = vmatmul.mubr.bf16.gmra.mrb[0].mxu0 %v540
        %v854 = vpop.f32.mrb[0].mxu0
        %v855 = vadd.f32 %v386, %v854
        %v856 = vpop.f32.mrb[0].mxu0
        %v857 = vpop.f32.mrb[0].mxu0
        %v858 = vadd.f32 %v386, %v857
        %v859 = vpop.f32.mrb[0].mxu0
        %860 = vmatprep.mubr.bf16.mxu0 0
        %861 = vmatmul.mubr.bf16.gmra.mrb[0].mxu0 %v541
        %v862 = vpop.f32.mrb[0].mxu0
        %v863 = vadd.f32 %v386, %v862
        %v864 = vpop.f32.mrb[0].mxu0
        %v865 = vpop.f32.mrb[0].mxu0
        %v866 = vadd.f32 %v386, %v865
        %v867 = vpop.f32.mrb[0].mxu0
        %868 = vmatprep.mubr.bf16.mxu0 0
        %869 = vmatmul.mubr.bf16.gmra.mrb[0].mxu0 %v542
        %v870 = vpop.f32.mrb[0].mxu0
        %v871 = vadd.f32 %v386, %v870
        %v872 = vpop.f32.mrb[0].mxu0
        %v873 = vpop.f32.mrb[0].mxu0
        %v874 = vadd.f32 %v386, %v873
        %v875 = vpop.f32.mrb[0].mxu0
        %876 = vmatprep.mubr.bf16.mxu0 0
        %877 = vmatmul.mubr.bf16.gmra.mrb[0].mxu0 %v543
        %v878 = vpop.f32.mrb[0].mxu0
        %v879 = vadd.f32 %v386, %v878
        %v880 = vpop.f32.mrb[0].mxu0
        %v881 = vpop.f32.mrb[0].mxu0
        %v882 = vadd.f32 %v386, %v881
        %v883 = vpop.f32.mrb[0].mxu0
        %884 = vmatprep.mubr.bf16.mxu0 0
        %885 = vmatmul.mubr.bf16.gmra.mrb[0].mxu0 %v544
        %v886 = vpop.f32.mrb[0].mxu0
        %v887 = vadd.f32 %v386, %v886
        %v888 = vpop.f32.mrb[0].mxu0
        %v889 = vpop.f32.mrb[0].mxu0
        %v890 = vadd.f32 %v386, %v889
        %v891 = vpop.f32.mrb[0].mxu0
        %892 = vmatprep.mubr.bf16.mxu0 0
        %893 = vmatmul.mubr.bf16.gmra.mrb[0].mxu0 %v545
        %v894 = vpop.f32.mrb[0].mxu0
        %v895 = vadd.f32 %v386, %v894
        %v896 = vpop.f32.mrb[0].mxu0
        %v897 = vpop.f32.mrb[0].mxu0
        %v898 = vadd.f32 %v386, %v897
        %v899 = vpop.f32.mrb[0].mxu0
        %900 = vmatprep.mubr.bf16.mxu0 0
        %901 = vmatmul.mubr.bf16.gmra.mrb[0].mxu0 %v546
        %v902 = vpop.f32.mrb[0].mxu0
        %v903 = vadd.f32 %v386, %v902
        %v904 = vpop.f32.mrb[0].mxu0
        %v905 = vpop.f32.mrb[0].mxu0
        %v906 = vadd.f32 %v386, %v905
        %v907 = vpop.f32.mrb[0].mxu0
        %908 = vmatprep.mubr.bf16.mxu0 0
        %909 = vmatmul.mubr.bf16.gmra.mrb[0].mxu0 %v547
        %v910 = vpop.f32.mrb[0].mxu0
        %v911 = vadd.f32 %v386, %v910
        %v912 = vpop.f32.mrb[0].mxu0
        %v913 = vpop.f32.mrb[0].mxu0
        %v914 = vadd.f32 %v386, %v913
        %v915 = vpop.f32.mrb[0].mxu0
        %916 = vdwg.mxu0
        %v917 = vmax.f32 %v663, 0.0
        %v918 = vmax.f32 %v666, 0.0
        %v919 = vmax.f32 %v671, 0.0
        %v920 = vmax.f32 %v674, 0.0
        %v921 = vmax.f32 %v679, 0.0
        %v922 = vmax.f32 %v682, 0.0
        %v923 = vmax.f32 %v687, 0.0
        %v924 = vmax.f32 %v690, 0.0
        %v925 = vmax.f32 %v695, 0.0
        %v926 = vmax.f32 %v698, 0.0
        %v927 = vmax.f32 %v703, 0.0
        %v928 = vmax.f32 %v706, 0.0
        %v929 = vmax.f32 %v711, 0.0
        %v930 = vmax.f32 %v714, 0.0
        %v931 = vmax.f32 %v719, 0.0
        %v932 = vmax.f32 %v722, 0.0
        %v933 = vmax.f32 %v727, 0.0
        %v934 = vmax.f32 %v730, 0.0
        %v935 = vmax.f32 %v735, 0.0
        %v936 = vmax.f32 %v738, 0.0
        %v937 = vmax.f32 %v743, 0.0
        %v938 = vmax.f32 %v746, 0.0
        %v939 = vmax.f32 %v751, 0.0
        %v940 = vmax.f32 %v754, 0.0
        %v941 = vmax.f32 %v759, 0.0
        %v942 = vmax.f32 %v762, 0.0
        %v943 = vmax.f32 %v767, 0.0
        %v944 = vmax.f32 %v770, 0.0
        %v945 = vmax.f32 %v775, 0.0
        %v946 = vmax.f32 %v778, 0.0
        %v947 = vmax.f32 %v783, 0.0
        %v948 = vmax.f32 %v786, 0.0
        %v949 = vmax.f32 %v791, 0.0
        %v950 = vmax.f32 %v794, 0.0
        %v951 = vmax.f32 %v799, 0.0
        %v952 = vmax.f32 %v802, 0.0
        %v953 = vmax.f32 %v807, 0.0
        %v954 = vmax.f32 %v810, 0.0
        %v955 = vmax.f32 %v815, 0.0
        %v956 = vmax.f32 %v818, 0.0
        %v957 = vmax.f32 %v823, 0.0
        %v958 = vmax.f32 %v826, 0.0
        %v959 = vmax.f32 %v831, 0.0
        %v960 = vmax.f32 %v834, 0.0
        %v961 = vmax.f32 %v839, 0.0
        %v962 = vmax.f32 %v842, 0.0
        %v963 = vmax.f32 %v847, 0.0
        %v964 = vmax.f32 %v850, 0.0
        %v965 = vmax.f32 %v855, 0.0
        %v966 = vmax.f32 %v858, 0.0
        %v967 = vmax.f32 %v863, 0.0
        %v968 = vmax.f32 %v866, 0.0
        %v969 = vmax.f32 %v871, 0.0
        %v970 = vmax.f32 %v874, 0.0
        %v971 = vmax.f32 %v879, 0.0
        %v972 = vmax.f32 %v882, 0.0
        %v973 = vmax.f32 %v887, 0.0
        %v974 = vmax.f32 %v890, 0.0
        %v975 = vmax.f32 %v895, 0.0
        %v976 = vmax.f32 %v898, 0.0
        %v977 = vmax.f32 %v903, 0.0
        %v978 = vmax.f32 %v906, 0.0
        %v979 = vmax.f32 %v911, 0.0
        %v980 = vmax.f32 %v914, 0.0
        %v981 = vpack.c.bf16 %v918, %v917
        %v982 = vpack.c.bf16 %v920, %v919
        %v983 = vpack.c.bf16 %v922, %v921
        %v984 = vpack.c.bf16 %v924, %v923
        %v985 = vpack.c.bf16 %v926, %v925
        %v986 = vpack.c.bf16 %v928, %v927
        %v987 = vpack.c.bf16 %v930, %v929
        %v988 = vpack.c.bf16 %v932, %v931
        %v989 = vpack.c.bf16 %v934, %v933
        %v990 = vpack.c.bf16 %v936, %v935
        %v991 = vpack.c.bf16 %v938, %v937
        %v992 = vpack.c.bf16 %v940, %v939
        %v993 = vpack.c.bf16 %v942, %v941
        %v994 = vpack.c.bf16 %v944, %v943
        %v995 = vpack.c.bf16 %v946, %v945
        %v996 = vpack.c.bf16 %v948, %v947
        %v997 = vpack.c.bf16 %v950, %v949
        %v998 = vpack.c.bf16 %v952, %v951
        %v999 = vpack.c.bf16 %v954, %v953
        %v1000 = vpack.c.bf16 %v956, %v955
        %v1001 = vpack.c.bf16 %v958, %v957
        %v1002 = vpack.c.bf16 %v960, %v959
        %v1003 = vpack.c.bf16 %v962, %v961
        %v1004 = vpack.c.bf16 %v964, %v963
        %v1005 = vpack.c.bf16 %v966, %v965
        %v1006 = vpack.c.bf16 %v968, %v967
        %v1007 = vpack.c.bf16 %v970, %v969
        %v1008 = vpack.c.bf16 %v972, %v971
        %v1009 = vpack.c.bf16 %v974, %v973
        %v1010 = vpack.c.bf16 %v976, %v975
        %v1011 = vpack.c.bf16 %v978, %v977
        %v1012 = vpack.c.bf16 %v980, %v979
        %vm1013 = vcmask 257024
        %1014 = vst.msk [vmem:[#allocation2] sm:$0xf] %vm1013, 0
        %1015 = vst.msk [vmem:[#allocation2 + $0x4] sm:$0xf] %vm1013, 0
        %vm1016 = vcmask 253952
        %1017 = vst.msk [vmem:[#allocation2 + $0x8] sm:$0x1] %vm1016, 0
        %1018 = vst.msk [vmem:[#allocation2 + $0xd8] sm:$0xf] %vm1013, 0
        %1019 = vst.msk [vmem:[#allocation2 + $0xdc] sm:$0xf] %vm1013, 0
        %1020 = vst.msk [vmem:[#allocation2 + $0xe0] sm:$0x1] %vm1016, 0
        %s1021 = scalar_lea.vmem [#allocation2], 204
        %1022 = vst.msk [vmem:[%s1021] sm:$0xf] %vm1013, 0
        %1023 = vst.msk [vmem:[%s1021 + $0x4] sm:$0xf] %vm1013, 0
        %1024 = vst.msk [vmem:[%s1021 + $0x8] sm:$0x1] %vm1016, 0
        %1025 = vst.msk [vmem:[%s1021 + $0xd8] sm:$0xf] %vm1013, 0
        %1026 = vst.msk [vmem:[%s1021 + $0xdc] sm:$0xf] %vm1013, 0
        %1027 = vst.msk [vmem:[%s1021 + $0xe0] sm:$0x1] %vm1016, 0
        %vm1028 = vcmask 253952
        %vm1029 = vsmask.f32 256
        %vm1030 = vmand %vm1028, %vm1029
        %v1031 = vld [vmem:[#allocation2] sm:$0x1]
        %v1032 = vsel %vm1030, 0, %v1031
        %1033 = vst [vmem:[#allocation2] sm:$0x1] %v1032
        %v1034 = vld [vmem:[#allocation2 + $0xc] sm:$0x1]
        %v1035 = vsel %vm1030, 0, %v1034
        %1036 = vst [vmem:[#allocation2 + $0xc] sm:$0x1] %v1035
        %v1037 = vld [vmem:[#allocation2 + $0x18] sm:$0x1]
        %v1038 = vsel %vm1030, 0, %v1037
        %1039 = vst [vmem:[#allocation2 + $0x18] sm:$0x1] %v1038
        %v1040 = vld [vmem:[#allocation2 + $0x24] sm:$0x1]
        %v1041 = vsel %vm1030, 0, %v1040
        %1042 = vst [vmem:[#allocation2 + $0x24] sm:$0x1] %v1041
        %v1043 = vld [vmem:[#allocation2 + $0x30] sm:$0x1]
        %v1044 = vsel %vm1030, 0, %v1043
        %1045 = vst [vmem:[#allocation2 + $0x30] sm:$0x1] %v1044
        %v1046 = vld [vmem:[#allocation2 + $0x3c] sm:$0x1]
        %v1047 = vsel %vm1030, 0, %v1046
        %1048 = vst [vmem:[#allocation2 + $0x3c] sm:$0x1] %v1047
        %v1049 = vld [vmem:[#allocation2 + $0x48] sm:$0x1]
        %v1050 = vsel %vm1030, 0, %v1049
        %1051 = vst [vmem:[#allocation2 + $0x48] sm:$0x1] %v1050
        %v1052 = vld [vmem:[#allocation2 + $0x54] sm:$0x1]
        %v1053 = vsel %vm1030, 0, %v1052
        %1054 = vst [vmem:[#allocation2 + $0x54] sm:$0x1] %v1053
        %v1055 = vld [vmem:[#allocation2 + $0x60] sm:$0x1]
        %v1056 = vsel %vm1030, 0, %v1055
        %1057 = vst [vmem:[#allocation2 + $0x60] sm:$0x1] %v1056
        %v1058 = vld [vmem:[#allocation2 + $0x6c] sm:$0x1]
        %v1059 = vsel %vm1030, 0, %v1058
        %1060 = vst [vmem:[#allocation2 + $0x6c] sm:$0x1] %v1059
        %v1061 = vld [vmem:[#allocation2 + $0x78] sm:$0x1]
        %v1062 = vsel %vm1030, 0, %v1061
        %1063 = vst [vmem:[#allocation2 + $0x78] sm:$0x1] %v1062
        %v1064 = vld [vmem:[#allocation2 + $0x84] sm:$0x1]
        %v1065 = vsel %vm1030, 0, %v1064
        %1066 = vst [vmem:[#allocation2 + $0x84] sm:$0x1] %v1065
        %v1067 = vld [vmem:[#allocation2 + $0x90] sm:$0x1]
        %v1068 = vsel %vm1030, 0, %v1067
        %1069 = vst [vmem:[#allocation2 + $0x90] sm:$0x1] %v1068
        %v1070 = vld [vmem:[#allocation2 + $0x9c] sm:$0x1]
        %v1071 = vsel %vm1030, 0, %v1070
        %1072 = vst [vmem:[#allocation2 + $0x9c] sm:$0x1] %v1071
        %v1073 = vld [vmem:[#allocation2 + $0xa8] sm:$0x1]
        %v1074 = vsel %vm1030, 0, %v1073
        %1075 = vst [vmem:[#allocation2 + $0xa8] sm:$0x1] %v1074
        %v1076 = vld [vmem:[#allocation2 + $0xb4] sm:$0x1]
        %v1077 = vsel %vm1030, 0, %v1076
        %1078 = vst [vmem:[#allocation2 + $0xb4] sm:$0x1] %v1077
        %v1079 = vld [vmem:[#allocation2 + $0xc0] sm:$0x1]
        %v1080 = vsel %vm1030, 0, %v1079
        %1081 = vst [vmem:[#allocation2 + $0xc0] sm:$0x1] %v1080
        %v1082 = vld [vmem:[#allocation2 + $0xcc] sm:$0x1]
        %v1083 = vsel %vm1030, 0, %v1082
        %1084 = vst [vmem:[#allocation2 + $0xcc] sm:$0x1] %v1083
        %v1085 = vld [vmem:[#allocation2 + $0xd8] sm:$0x1]
        %v1086 = vsel %vm1030, 0, %v1085
        %1087 = vst [vmem:[#allocation2 + $0xd8] sm:$0x1] %v1086
        %v1088 = vld [vmem:[#allocation2 + $0xe4] sm:$0x1]
        %v1089 = vsel %vm1030, 0, %v1088
        %1090 = vst [vmem:[#allocation2 + $0xe4] sm:$0x1] %v1089
        %v1091 = vld [vmem:[#allocation2 + $0xf0] sm:$0x1]
        %v1092 = vsel %vm1030, 0, %v1091
        %1093 = vst [vmem:[#allocation2 + $0xf0] sm:$0x1] %v1092
        %v1094 = vld [vmem:[#allocation2 + $0xfc] sm:$0x1]
        %v1095 = vsel %vm1030, 0, %v1094
        %1096 = vst [vmem:[#allocation2 + $0xfc] sm:$0x1] %v1095
        %v1097 = vld [vmem:[#allocation2 + $0x108] sm:$0x1]
        %v1098 = vsel %vm1030, 0, %v1097
        %1099 = vst [vmem:[#allocation2 + $0x108] sm:$0x1] %v1098
        %v1100 = vld [vmem:[#allocation2 + $0x114] sm:$0x1]
        %v1101 = vsel %vm1030, 0, %v1100
        %1102 = vst [vmem:[#allocation2 + $0x114] sm:$0x1] %v1101
        %v1103 = vld [vmem:[#allocation2 + $0x120] sm:$0x1]
        %v1104 = vsel %vm1030, 0, %v1103
        %1105 = vst [vmem:[#allocation2 + $0x120] sm:$0x1] %v1104
        %v1106 = vld [vmem:[#allocation2 + $0x12c] sm:$0x1]
        %v1107 = vsel %vm1030, 0, %v1106
        %1108 = vst [vmem:[#allocation2 + $0x12c] sm:$0x1] %v1107
        %v1109 = vld [vmem:[#allocation2 + $0x138] sm:$0x1]
        %v1110 = vsel %vm1030, 0, %v1109
        %1111 = vst [vmem:[#allocation2 + $0x138] sm:$0x1] %v1110
        %v1112 = vld [vmem:[#allocation2 + $0x144] sm:$0x1]
        %v1113 = vsel %vm1030, 0, %v1112
        %1114 = vst [vmem:[#allocation2 + $0x144] sm:$0x1] %v1113
        %v1115 = vld [vmem:[#allocation2 + $0x150] sm:$0x1]
        %v1116 = vsel %vm1030, 0, %v1115
        %1117 = vst [vmem:[#allocation2 + $0x150] sm:$0x1] %v1116
        %v1118 = vld [vmem:[#allocation2 + $0x15c] sm:$0x1]
        %v1119 = vsel %vm1030, 0, %v1118
        %1120 = vst [vmem:[#allocation2 + $0x15c] sm:$0x1] %v1119
        %v1121 = vld [vmem:[#allocation2 + $0x168] sm:$0x1]
        %v1122 = vsel %vm1030, 0, %v1121
        %1123 = vst [vmem:[#allocation2 + $0x168] sm:$0x1] %v1122
        %v1124 = vld [vmem:[#allocation2 + $0x174] sm:$0x1]
        %v1125 = vsel %vm1030, 0, %v1124
        %1126 = vst [vmem:[#allocation2 + $0x174] sm:$0x1] %v1125
        %v1127 = vld [vmem:[#allocation2 + $0x180] sm:$0x1]
        %v1128 = vsel %vm1030, 0, %v1127
        %1129 = vst [vmem:[#allocation2 + $0x180] sm:$0x1] %v1128
        %v1130 = vld [vmem:[#allocation2 + $0x18c] sm:$0x1]
        %v1131 = vsel %vm1030, 0, %v1130
        %1132 = vst [vmem:[#allocation2 + $0x18c] sm:$0x1] %v1131
        %v1133 = vld [vmem:[#allocation2 + $0x198] sm:$0x1]
        %v1134 = vsel %vm1030, 0, %v1133
        %1135 = vst [vmem:[#allocation2 + $0x198] sm:$0x1] %v1134
        %v1136 = vld [vmem:[#allocation2 + $0x1a4] sm:$0x1]
        %v1137 = vsel %vm1030, 0, %v1136
        %1138 = vst [vmem:[#allocation2 + $0x1a4] sm:$0x1] %v1137
        %vm1139 = vsmask.f32 7938
        %vm1140 = vmand %vm1028, %vm1139
        %v1141 = vld [vmem:[#allocation2 + $0x8] sm:$0x1]
        %v1142 = vsel %vm1140, 0, %v1141
        %1143 = vst [vmem:[#allocation2 + $0x8] sm:$0x1] %v1142
        %v1144 = vld [vmem:[#allocation2 + $0x14] sm:$0x1]
        %v1145 = vsel %vm1140, 0, %v1144
        %1146 = vst [vmem:[#allocation2 + $0x14] sm:$0x1] %v1145
        %v1147 = vld [vmem:[#allocation2 + $0x20] sm:$0x1]
        %v1148 = vsel %vm1140, 0, %v1147
        %1149 = vst [vmem:[#allocation2 + $0x20] sm:$0x1] %v1148
        %v1150 = vld [vmem:[#allocation2 + $0x2c] sm:$0x1]
        %v1151 = vsel %vm1140, 0, %v1150
        %1152 = vst [vmem:[#allocation2 + $0x2c] sm:$0x1] %v1151
        %v1153 = vld [vmem:[#allocation2 + $0x38] sm:$0x1]
        %v1154 = vsel %vm1140, 0, %v1153
        %1155 = vst [vmem:[#allocation2 + $0x38] sm:$0x1] %v1154
        %v1156 = vld [vmem:[#allocation2 + $0x44] sm:$0x1]
        %v1157 = vsel %vm1140, 0, %v1156
        %1158 = vst [vmem:[#allocation2 + $0x44] sm:$0x1] %v1157
        %v1159 = vld [vmem:[#allocation2 + $0x50] sm:$0x1]
        %v1160 = vsel %vm1140, 0, %v1159
        %1161 = vst [vmem:[#allocation2 + $0x50] sm:$0x1] %v1160
        %v1162 = vld [vmem:[#allocation2 + $0x5c] sm:$0x1]
        %v1163 = vsel %vm1140, 0, %v1162
        %1164 = vst [vmem:[#allocation2 + $0x5c] sm:$0x1] %v1163
        %v1165 = vld [vmem:[#allocation2 + $0x68] sm:$0x1]
        %v1166 = vsel %vm1140, 0, %v1165
        %1167 = vst [vmem:[#allocation2 + $0x68] sm:$0x1] %v1166
        %v1168 = vld [vmem:[#allocation2 + $0x74] sm:$0x1]
        %v1169 = vsel %vm1140, 0, %v1168
        %1170 = vst [vmem:[#allocation2 + $0x74] sm:$0x1] %v1169
        %v1171 = vld [vmem:[#allocation2 + $0x80] sm:$0x1]
        %v1172 = vsel %vm1140, 0, %v1171
        %1173 = vst [vmem:[#allocation2 + $0x80] sm:$0x1] %v1172
        %v1174 = vld [vmem:[#allocation2 + $0x8c] sm:$0x1]
        %v1175 = vsel %vm1140, 0, %v1174
        %1176 = vst [vmem:[#allocation2 + $0x8c] sm:$0x1] %v1175
        %v1177 = vld [vmem:[#allocation2 + $0x98] sm:$0x1]
        %v1178 = vsel %vm1140, 0, %v1177
        %1179 = vst [vmem:[#allocation2 + $0x98] sm:$0x1] %v1178
        %v1180 = vld [vmem:[#allocation2 + $0xa4] sm:$0x1]
        %v1181 = vsel %vm1140, 0, %v1180
        %1182 = vst [vmem:[#allocation2 + $0xa4] sm:$0x1] %v1181
        %v1183 = vld [vmem:[#allocation2 + $0xb0] sm:$0x1]
        %v1184 = vsel %vm1140, 0, %v1183
        %1185 = vst [vmem:[#allocation2 + $0xb0] sm:$0x1] %v1184
        %v1186 = vld [vmem:[#allocation2 + $0xbc] sm:$0x1]
        %v1187 = vsel %vm1140, 0, %v1186
        %1188 = vst [vmem:[#allocation2 + $0xbc] sm:$0x1] %v1187
        %v1189 = vld [vmem:[#allocation2 + $0xc8] sm:$0x1]
        %v1190 = vsel %vm1140, 0, %v1189
        %1191 = vst [vmem:[#allocation2 + $0xc8] sm:$0x1] %v1190
        %v1192 = vld [vmem:[#allocation2 + $0xd4] sm:$0x1]
        %v1193 = vsel %vm1140, 0, %v1192
        %1194 = vst [vmem:[#allocation2 + $0xd4] sm:$0x1] %v1193
        %v1195 = vld [vmem:[#allocation2 + $0xe0] sm:$0x1]
        %v1196 = vsel %vm1140, 0, %v1195
        %1197 = vst [vmem:[#allocation2 + $0xe0] sm:$0x1] %v1196
        %v1198 = vld [vmem:[#allocation2 + $0xec] sm:$0x1]
        %v1199 = vsel %vm1140, 0, %v1198
        %1200 = vst [vmem:[#allocation2 + $0xec] sm:$0x1] %v1199
        %v1201 = vld [vmem:[#allocation2 + $0xf8] sm:$0x1]
        %v1202 = vsel %vm1140, 0, %v1201
        %1203 = vst [vmem:[#allocation2 + $0xf8] sm:$0x1] %v1202
        %v1204 = vld [vmem:[#allocation2 + $0x104] sm:$0x1]
        %v1205 = vsel %vm1140, 0, %v1204
        %1206 = vst [vmem:[#allocation2 + $0x104] sm:$0x1] %v1205
        %v1207 = vld [vmem:[#allocation2 + $0x110] sm:$0x1]
        %v1208 = vsel %vm1140, 0, %v1207
        %1209 = vst [vmem:[#allocation2 + $0x110] sm:$0x1] %v1208
        %v1210 = vld [vmem:[#allocation2 + $0x11c] sm:$0x1]
        %v1211 = vsel %vm1140, 0, %v1210
        %1212 = vst [vmem:[#allocation2 + $0x11c] sm:$0x1] %v1211
        %v1213 = vld [vmem:[#allocation2 + $0x128] sm:$0x1]
        %v1214 = vsel %vm1140, 0, %v1213
        %1215 = vst [vmem:[#allocation2 + $0x128] sm:$0x1] %v1214
        %v1216 = vld [vmem:[#allocation2 + $0x134] sm:$0x1]
        %v1217 = vsel %vm1140, 0, %v1216
        %1218 = vst [vmem:[#allocation2 + $0x134] sm:$0x1] %v1217
        %v1219 = vld [vmem:[#allocation2 + $0x140] sm:$0x1]
        %v1220 = vsel %vm1140, 0, %v1219
        %1221 = vst [vmem:[#allocation2 + $0x140] sm:$0x1] %v1220
        %v1222 = vld [vmem:[#allocation2 + $0x14c] sm:$0x1]
        %v1223 = vsel %vm1140, 0, %v1222
        %1224 = vst [vmem:[#allocation2 + $0x14c] sm:$0x1] %v1223
        %v1225 = vld [vmem:[#allocation2 + $0x158] sm:$0x1]
        %v1226 = vsel %vm1140, 0, %v1225
        %1227 = vst [vmem:[#allocation2 + $0x158] sm:$0x1] %v1226
        %v1228 = vld [vmem:[#allocation2 + $0x164] sm:$0x1]
        %v1229 = vsel %vm1140, 0, %v1228
        %1230 = vst [vmem:[#allocation2 + $0x164] sm:$0x1] %v1229
        %v1231 = vld [vmem:[#allocation2 + $0x170] sm:$0x1]
        %v1232 = vsel %vm1140, 0, %v1231
        %1233 = vst [vmem:[#allocation2 + $0x170] sm:$0x1] %v1232
        %v1234 = vld [vmem:[#allocation2 + $0x17c] sm:$0x1]
        %v1235 = vsel %vm1140, 0, %v1234
        %1236 = vst [vmem:[#allocation2 + $0x17c] sm:$0x1] %v1235
        %v1237 = vld [vmem:[#allocation2 + $0x188] sm:$0x1]
        %v1238 = vsel %vm1140, 0, %v1237
        %1239 = vst [vmem:[#allocation2 + $0x188] sm:$0x1] %v1238
        %v1240 = vld [vmem:[#allocation2 + $0x194] sm:$0x1]
        %v1241 = vsel %vm1140, 0, %v1240
        %1242 = vst [vmem:[#allocation2 + $0x194] sm:$0x1] %v1241
        %v1243 = vld [vmem:[#allocation2 + $0x1a0] sm:$0x1]
        %v1244 = vsel %vm1140, 0, %v1243
        %1245 = vst [vmem:[#allocation2 + $0x1a0] sm:$0x1] %v1244
        %v1246 = vld [vmem:[#allocation2 + $0x1ac] sm:$0x1]
        %v1247 = vsel %vm1140, 0, %v1246
        %1248 = vst [vmem:[#allocation2 + $0x1ac] sm:$0x1] %v1247
        %v1281 = vunpack.c.l.b16 %v981
        %v1282 = vunpack.c.h.b16 %v981
        %v1283 = vunpack.c.l.b16 %v982
        %v1284 = vunpack.c.h.b16 %v982
        %v1285 = vunpack.c.l.b16 %v983
        %v1286 = vunpack.c.h.b16 %v983
        %v1287 = vunpack.c.l.b16 %v984
        %v1288 = vunpack.c.h.b16 %v984
        %v1289 = vunpack.c.l.b16 %v985
        %v1290 = vunpack.c.h.b16 %v985
        %v1291 = vunpack.c.l.b16 %v986
        %v1292 = vunpack.c.h.b16 %v986
        %v1293 = vunpack.c.l.b16 %v987
        %v1294 = vunpack.c.h.b16 %v987
        %v1295 = vunpack.c.l.b16 %v988
        %v1296 = vunpack.c.h.b16 %v988
        %v1297 = vunpack.c.l.b16 %v989
        %v1298 = vunpack.c.h.b16 %v989
        %v1299 = vunpack.c.l.b16 %v990
        %v1300 = vunpack.c.h.b16 %v990
        %v1301 = vunpack.c.l.b16 %v991
        %v1302 = vunpack.c.h.b16 %v991
        %v1303 = vunpack.c.l.b16 %v992
        %v1304 = vunpack.c.h.b16 %v992
        %v1305 = vunpack.c.l.b16 %v993
        %v1306 = vunpack.c.h.b16 %v993
        %v1307 = vunpack.c.l.b16 %v994
        %v1308 = vunpack.c.h.b16 %v994
        %v1309 = vunpack.c.l.b16 %v995
        %v1310 = vunpack.c.h.b16 %v995
        %v1311 = vunpack.c.l.b16 %v996
        %v1312 = vunpack.c.h.b16 %v996
        %v1313 = vunpack.c.l.b16 %v997
        %v1314 = vunpack.c.h.b16 %v997
        %v1315 = vunpack.c.l.b16 %v998
        %v1316 = vunpack.c.h.b16 %v998
        %v1317 = vunpack.c.l.b16 %v999
        %v1318 = vunpack.c.h.b16 %v999
        %v1319 = vunpack.c.l.b16 %v1000
        %v1320 = vunpack.c.h.b16 %v1000
        %v1321 = vunpack.c.l.b16 %v1001
        %v1322 = vunpack.c.h.b16 %v1001
        %v1323 = vunpack.c.l.b16 %v1002
        %v1324 = vunpack.c.h.b16 %v1002
        %v1325 = vunpack.c.l.b16 %v1003
        %v1326 = vunpack.c.h.b16 %v1003
        %v1327 = vunpack.c.l.b16 %v1004
        %v1328 = vunpack.c.h.b16 %v1004
        %v1329 = vunpack.c.l.b16 %v1005
        %v1330 = vunpack.c.h.b16 %v1005
        %v1331 = vunpack.c.l.b16 %v1006
        %v1332 = vunpack.c.h.b16 %v1006
        %v1333 = vunpack.c.l.b16 %v1007
        %v1334 = vunpack.c.h.b16 %v1007
        %v1335 = vunpack.c.l.b16 %v1008
        %v1336 = vunpack.c.h.b16 %v1008
        %v1337 = vunpack.c.l.b16 %v1009
        %v1338 = vunpack.c.h.b16 %v1009
        %v1339 = vunpack.c.l.b16 %v1010
        %v1340 = vunpack.c.h.b16 %v1010
        %v1341 = vunpack.c.l.b16 %v1011
        %v1342 = vunpack.c.h.b16 %v1011
        %v1343 = vunpack.c.l.b16 %v1012
        %v1344 = vunpack.c.h.b16 %v1012
        %v1345 = vpack.c.b16 %v1281, %v1281
        %v1346 = vpack.c.b16 %v1282, %v1282
        %v1347 = vpack.c.b16 %v1283, %v1283
        %v1348 = vpack.c.b16 %v1284, %v1284
        %v1349 = vpack.c.b16 %v1285, %v1285
        %v1350 = vpack.c.b16 %v1286, %v1286
        %v1351 = vpack.c.b16 %v1287, %v1287
        %v1352 = vpack.c.b16 %v1288, %v1288
        %v1353 = vpack.c.b16 %v1289, %v1289
        %v1354 = vpack.c.b16 %v1290, %v1290
        %v1355 = vpack.c.b16 %v1291, %v1291
        %v1356 = vpack.c.b16 %v1292, %v1292
        %v1357 = vpack.c.b16 %v1293, %v1293
        %v1358 = vpack.c.b16 %v1294, %v1294
        %v1359 = vpack.c.b16 %v1295, %v1295
        %v1360 = vpack.c.b16 %v1296, %v1296
        %v1361 = vpack.c.b16 %v1297, %v1297
        %v1362 = vpack.c.b16 %v1298, %v1298
        %v1363 = vpack.c.b16 %v1299, %v1299
        %v1364 = vpack.c.b16 %v1300, %v1300
        %v1365 = vpack.c.b16 %v1301, %v1301
        %v1366 = vpack.c.b16 %v1302, %v1302
        %v1367 = vpack.c.b16 %v1303, %v1303
        %v1368 = vpack.c.b16 %v1304, %v1304
        %v1369 = vpack.c.b16 %v1305, %v1305
        %v1370 = vpack.c.b16 %v1306, %v1306
        %v1371 = vpack.c.b16 %v1307, %v1307
        %v1372 = vpack.c.b16 %v1308, %v1308
        %v1373 = vpack.c.b16 %v1309, %v1309
        %v1374 = vpack.c.b16 %v1310, %v1310
        %v1375 = vpack.c.b16 %v1311, %v1311
        %v1376 = vpack.c.b16 %v1312, %v1312
        %v1377 = vpack.c.b16 %v1313, %v1313
        %v1378 = vpack.c.b16 %v1314, %v1314
        %v1379 = vpack.c.b16 %v1315, %v1315
        %v1380 = vpack.c.b16 %v1316, %v1316
        %v1381 = vpack.c.b16 %v1317, %v1317
        %v1382 = vpack.c.b16 %v1318, %v1318
        %v1383 = vpack.c.b16 %v1319, %v1319
        %v1384 = vpack.c.b16 %v1320, %v1320
        %v1385 = vpack.c.b16 %v1321, %v1321
        %v1386 = vpack.c.b16 %v1322, %v1322
        %v1387 = vpack.c.b16 %v1323, %v1323
        %v1388 = vpack.c.b16 %v1324, %v1324
        %v1389 = vpack.c.b16 %v1325, %v1325
        %v1390 = vpack.c.b16 %v1326, %v1326
        %v1391 = vpack.c.b16 %v1327, %v1327
        %v1392 = vpack.c.b16 %v1328, %v1328
        %v1393 = vpack.c.b16 %v1329, %v1329
        %v1394 = vpack.c.b16 %v1330, %v1330
        %v1395 = vpack.c.b16 %v1331, %v1331
        %v1396 = vpack.c.b16 %v1332, %v1332
        %v1397 = vpack.c.b16 %v1333, %v1333
        %v1398 = vpack.c.b16 %v1334, %v1334
        %v1399 = vpack.c.b16 %v1335, %v1335
        %v1400 = vpack.c.b16 %v1336, %v1336
        %v1401 = vpack.c.b16 %v1337, %v1337
        %v1402 = vpack.c.b16 %v1338, %v1338
        %v1403 = vpack.c.b16 %v1339, %v1339
        %v1404 = vpack.c.b16 %v1340, %v1340
        %v1405 = vpack.c.b16 %v1341, %v1341
        %v1406 = vpack.c.b16 %v1342, %v1342
        %v1407 = vpack.c.b16 %v1343, %v1343
        %v1408 = vpack.c.b16 %v1344, %v1344
        %vm1409 = vsmask.f32 4368
        %vm1410 = vmor %vm1029, %vm1409
        %v1412 = vshrl.u32 %v1345, 16
        %v1414 = vrot.slane %v1412, 7
        %v1415 = vshll.u32 %v1345, 16
        %v1417 = vor.u32 %v1414, %v1415
        %v1418 = vrot.slane %v1414, 4
        %v1420 = vshrl.u32 %v1346, 16
        %v1422 = vrot.slane %v1420, 7
        %v1423 = vshll.u32 %v1346, 16
        %v1425 = vor.u32 %v1422, %v1423
        %v1426 = vsel %vm1410, %v1418, %v1425
        %v1427 = vrot.slane %v1422, 4
        %v1429 = vshrl.u32 %v1347, 16
        %v1431 = vrot.slane %v1429, 7
        %v1432 = vshll.u32 %v1347, 16
        %v1434 = vor.u32 %v1431, %v1432
        %v1435 = vrot.slane %v1431, 4
        %v1437 = vshrl.u32 %v1348, 16
        %v1439 = vrot.slane %v1437, 7
        %v1440 = vshll.u32 %v1348, 16
        %v1442 = vor.u32 %v1439, %v1440
        %v1443 = vsel %vm1410, %v1435, %v1442
        %v1444 = vrot.slane %v1439, 4
        %v1446 = vshrl.u32 %v1349, 16
        %v1448 = vrot.slane %v1446, 7
        %v1449 = vshll.u32 %v1349, 16
        %v1451 = vor.u32 %v1448, %v1449
        %v1452 = vrot.slane %v1448, 4
        %v1454 = vshrl.u32 %v1350, 16
        %v1456 = vrot.slane %v1454, 7
        %v1457 = vshll.u32 %v1350, 16
        %v1459 = vor.u32 %v1456, %v1457
        %v1460 = vsel %vm1410, %v1452, %v1459
        %v1461 = vrot.slane %v1456, 4
        %v1463 = vshrl.u32 %v1351, 16
        %v1465 = vrot.slane %v1463, 7
        %v1466 = vshll.u32 %v1351, 16
        %v1468 = vor.u32 %v1465, %v1466
        %v1469 = vrot.slane %v1465, 4
        %v1471 = vshrl.u32 %v1352, 16
        %v1473 = vrot.slane %v1471, 7
        %v1474 = vshll.u32 %v1352, 16
        %v1476 = vor.u32 %v1473, %v1474
        %v1477 = vsel %vm1410, %v1469, %v1476
        %v1478 = vrot.slane %v1473, 4
        %v1480 = vshrl.u32 %v1353, 16
        %v1482 = vrot.slane %v1480, 7
        %v1483 = vshll.u32 %v1353, 16
        %v1485 = vor.u32 %v1482, %v1483
        %v1486 = vrot.slane %v1482, 4
        %v1488 = vshrl.u32 %v1354, 16
        %v1490 = vrot.slane %v1488, 7
        %v1491 = vshll.u32 %v1354, 16
        %v1493 = vor.u32 %v1490, %v1491
        %v1494 = vsel %vm1410, %v1486, %v1493
        %v1495 = vrot.slane %v1490, 4
        %v1497 = vshrl.u32 %v1355, 16
        %v1499 = vrot.slane %v1497, 7
        %v1500 = vshll.u32 %v1355, 16
        %v1502 = vor.u32 %v1499, %v1500
        %v1503 = vrot.slane %v1499, 4
        %v1505 = vshrl.u32 %v1356, 16
        %v1507 = vrot.slane %v1505, 7
        %v1508 = vshll.u32 %v1356, 16
        %v1510 = vor.u32 %v1507, %v1508
        %v1511 = vsel %vm1410, %v1503, %v1510
        %v1512 = vrot.slane %v1507, 4
        %v1514 = vshrl.u32 %v1357, 16
        %v1516 = vrot.slane %v1514, 7
        %v1517 = vshll.u32 %v1357, 16
        %v1519 = vor.u32 %v1516, %v1517
        %v1520 = vrot.slane %v1516, 4
        %v1522 = vshrl.u32 %v1358, 16
        %v1524 = vrot.slane %v1522, 7
        %v1525 = vshll.u32 %v1358, 16
        %v1527 = vor.u32 %v1524, %v1525
        %v1528 = vsel %vm1410, %v1520, %v1527
        %v1529 = vrot.slane %v1524, 4
        %v1531 = vshrl.u32 %v1359, 16
        %v1533 = vrot.slane %v1531, 7
        %v1534 = vshll.u32 %v1359, 16
        %v1536 = vor.u32 %v1533, %v1534
        %v1537 = vrot.slane %v1533, 4
        %v1539 = vshrl.u32 %v1360, 16
        %v1541 = vrot.slane %v1539, 7
        %v1542 = vshll.u32 %v1360, 16
        %v1544 = vor.u32 %v1541, %v1542
        %v1545 = vsel %vm1410, %v1537, %v1544
        %v1546 = vrot.slane %v1541, 4
        %v1548 = vshrl.u32 %v1361, 16
        %v1550 = vrot.slane %v1548, 7
        %v1551 = vshll.u32 %v1361, 16
        %v1553 = vor.u32 %v1550, %v1551
        %v1554 = vrot.slane %v1550, 4
        %v1556 = vshrl.u32 %v1362, 16
        %v1558 = vrot.slane %v1556, 7
        %v1559 = vshll.u32 %v1362, 16
        %v1561 = vor.u32 %v1558, %v1559
        %v1562 = vsel %vm1410, %v1554, %v1561
        %v1563 = vrot.slane %v1558, 4
        %v1565 = vshrl.u32 %v1363, 16
        %v1567 = vrot.slane %v1565, 7
        %v1568 = vshll.u32 %v1363, 16
        %v1570 = vor.u32 %v1567, %v1568
        %v1571 = vrot.slane %v1567, 4
        %v1573 = vshrl.u32 %v1364, 16
        %v1575 = vrot.slane %v1573, 7
        %v1576 = vshll.u32 %v1364, 16
        %v1578 = vor.u32 %v1575, %v1576
        %v1579 = vsel %vm1410, %v1571, %v1578
        %v1580 = vrot.slane %v1575, 4
        %v1582 = vshrl.u32 %v1365, 16
        %v1584 = vrot.slane %v1582, 7
        %v1585 = vshll.u32 %v1365, 16
        %v1587 = vor.u32 %v1584, %v1585
        %v1588 = vrot.slane %v1584, 4
        %v1590 = vshrl.u32 %v1366, 16
        %v1592 = vrot.slane %v1590, 7
        %v1593 = vshll.u32 %v1366, 16
        %v1595 = vor.u32 %v1592, %v1593
        %v1596 = vsel %vm1410, %v1588, %v1595
        %v1597 = vrot.slane %v1592, 4
        %v1599 = vshrl.u32 %v1367, 16
        %v1601 = vrot.slane %v1599, 7
        %v1602 = vshll.u32 %v1367, 16
        %v1604 = vor.u32 %v1601, %v1602
        %v1605 = vrot.slane %v1601, 4
        %v1607 = vshrl.u32 %v1368, 16
        %v1609 = vrot.slane %v1607, 7
        %v1610 = vshll.u32 %v1368, 16
        %v1612 = vor.u32 %v1609, %v1610
        %v1613 = vsel %vm1410, %v1605, %v1612
        %v1614 = vrot.slane %v1609, 4
        %v1616 = vshrl.u32 %v1369, 16
        %v1618 = vrot.slane %v1616, 7
        %v1619 = vshll.u32 %v1369, 16
        %v1621 = vor.u32 %v1618, %v1619
        %v1622 = vrot.slane %v1618, 4
        %v1624 = vshrl.u32 %v1370, 16
        %v1626 = vrot.slane %v1624, 7
        %v1627 = vshll.u32 %v1370, 16
        %v1629 = vor.u32 %v1626, %v1627
        %v1630 = vsel %vm1410, %v1622, %v1629
        %v1631 = vrot.slane %v1626, 4
        %v1633 = vshrl.u32 %v1371, 16
        %v1635 = vrot.slane %v1633, 7
        %v1636 = vshll.u32 %v1371, 16
        %v1638 = vor.u32 %v1635, %v1636
        %v1639 = vrot.slane %v1635, 4
        %v1641 = vshrl.u32 %v1372, 16
        %v1643 = vrot.slane %v1641, 7
        %v1644 = vshll.u32 %v1372, 16
        %v1646 = vor.u32 %v1643, %v1644
        %v1647 = vsel %vm1410, %v1639, %v1646
        %v1648 = vrot.slane %v1643, 4
        %v1650 = vshrl.u32 %v1373, 16
        %v1652 = vrot.slane %v1650, 7
        %v1653 = vshll.u32 %v1373, 16
        %v1655 = vor.u32 %v1652, %v1653
        %v1656 = vrot.slane %v1652, 4
        %v1658 = vshrl.u32 %v1374, 16
        %v1660 = vrot.slane %v1658, 7
        %v1661 = vshll.u32 %v1374, 16
        %v1663 = vor.u32 %v1660, %v1661
        %v1664 = vsel %vm1410, %v1656, %v1663
        %v1665 = vrot.slane %v1660, 4
        %v1667 = vshrl.u32 %v1375, 16
        %v1669 = vrot.slane %v1667, 7
        %v1670 = vshll.u32 %v1375, 16
        %v1672 = vor.u32 %v1669, %v1670
        %v1673 = vrot.slane %v1669, 4
        %v1675 = vshrl.u32 %v1376, 16
        %v1677 = vrot.slane %v1675, 7
        %v1678 = vshll.u32 %v1376, 16
        %v1680 = vor.u32 %v1677, %v1678
        %v1681 = vsel %vm1410, %v1673, %v1680
        %v1682 = vrot.slane %v1677, 4
        %v1684 = vshrl.u32 %v1377, 16
        %v1686 = vrot.slane %v1684, 7
        %v1687 = vshll.u32 %v1377, 16
        %v1689 = vor.u32 %v1686, %v1687
        %v1690 = vrot.slane %v1686, 4
        %v1692 = vshrl.u32 %v1378, 16
        %v1694 = vrot.slane %v1692, 7
        %v1695 = vshll.u32 %v1378, 16
        %v1697 = vor.u32 %v1694, %v1695
        %v1698 = vsel %vm1410, %v1690, %v1697
        %v1699 = vrot.slane %v1694, 4
        %v1701 = vshrl.u32 %v1379, 16
        %v1703 = vrot.slane %v1701, 7
        %v1704 = vshll.u32 %v1379, 16
        %v1706 = vor.u32 %v1703, %v1704
        %v1707 = vrot.slane %v1703, 4
        %v1709 = vshrl.u32 %v1380, 16
        %v1711 = vrot.slane %v1709, 7
        %v1712 = vshll.u32 %v1380, 16
        %v1714 = vor.u32 %v1711, %v1712
        %v1715 = vsel %vm1410, %v1707, %v1714
        %v1716 = vrot.slane %v1711, 4
        %v1718 = vshrl.u32 %v1381, 16
        %v1720 = vrot.slane %v1718, 7
        %v1721 = vshll.u32 %v1381, 16
        %v1723 = vor.u32 %v1720, %v1721
        %v1724 = vrot.slane %v1720, 4
        %v1726 = vshrl.u32 %v1382, 16
        %v1728 = vrot.slane %v1726, 7
        %v1729 = vshll.u32 %v1382, 16
        %v1731 = vor.u32 %v1728, %v1729
        %v1732 = vsel %vm1410, %v1724, %v1731
        %v1733 = vrot.slane %v1728, 4
        %v1735 = vshrl.u32 %v1383, 16
        %v1737 = vrot.slane %v1735, 7
        %v1738 = vshll.u32 %v1383, 16
        %v1740 = vor.u32 %v1737, %v1738
        %v1741 = vrot.slane %v1737, 4
        %v1743 = vshrl.u32 %v1384, 16
        %v1745 = vrot.slane %v1743, 7
        %v1746 = vshll.u32 %v1384, 16
        %v1748 = vor.u32 %v1745, %v1746
        %v1749 = vsel %vm1410, %v1741, %v1748
        %v1750 = vrot.slane %v1745, 4
        %v1752 = vshrl.u32 %v1385, 16
        %v1754 = vrot.slane %v1752, 7
        %v1755 = vshll.u32 %v1385, 16
        %v1757 = vor.u32 %v1754, %v1755
        %v1758 = vrot.slane %v1754, 4
        %v1760 = vshrl.u32 %v1386, 16
        %v1762 = vrot.slane %v1760, 7
        %v1763 = vshll.u32 %v1386, 16
        %v1765 = vor.u32 %v1762, %v1763
        %v1766 = vsel %vm1410, %v1758, %v1765
        %v1767 = vrot.slane %v1762, 4
        %v1769 = vshrl.u32 %v1387, 16
        %v1771 = vrot.slane %v1769, 7
        %v1772 = vshll.u32 %v1387, 16
        %v1774 = vor.u32 %v1771, %v1772
        %v1775 = vrot.slane %v1771, 4
        %v1777 = vshrl.u32 %v1388, 16
        %v1779 = vrot.slane %v1777, 7
        %v1780 = vshll.u32 %v1388, 16
        %v1782 = vor.u32 %v1779, %v1780
        %v1783 = vsel %vm1410, %v1775, %v1782
        %v1784 = vrot.slane %v1779, 4
        %v1786 = vshrl.u32 %v1389, 16
        %v1788 = vrot.slane %v1786, 7
        %v1789 = vshll.u32 %v1389, 16
        %v1791 = vor.u32 %v1788, %v1789
        %v1792 = vrot.slane %v1788, 4
        %v1794 = vshrl.u32 %v1390, 16
        %v1796 = vrot.slane %v1794, 7
        %v1797 = vshll.u32 %v1390, 16
        %v1799 = vor.u32 %v1796, %v1797
        %v1800 = vsel %vm1410, %v1792, %v1799
        %v1801 = vrot.slane %v1796, 4
        %v1803 = vshrl.u32 %v1391, 16
        %v1805 = vrot.slane %v1803, 7
        %v1806 = vshll.u32 %v1391, 16
        %v1808 = vor.u32 %v1805, %v1806
        %v1809 = vrot.slane %v1805, 4
        %v1811 = vshrl.u32 %v1392, 16
        %v1813 = vrot.slane %v1811, 7
        %v1814 = vshll.u32 %v1392, 16
        %v1816 = vor.u32 %v1813, %v1814
        %v1817 = vsel %vm1410, %v1809, %v1816
        %v1818 = vrot.slane %v1813, 4
        %v1820 = vshrl.u32 %v1393, 16
        %v1822 = vrot.slane %v1820, 7
        %v1823 = vshll.u32 %v1393, 16
        %v1825 = vor.u32 %v1822, %v1823
        %v1826 = vrot.slane %v1822, 4
        %v1828 = vshrl.u32 %v1394, 16
        %v1830 = vrot.slane %v1828, 7
        %v1831 = vshll.u32 %v1394, 16
        %v1833 = vor.u32 %v1830, %v1831
        %v1834 = vsel %vm1410, %v1826, %v1833
        %v1835 = vrot.slane %v1830, 4
        %v1837 = vshrl.u32 %v1395, 16
        %v1839 = vrot.slane %v1837, 7
        %v1840 = vshll.u32 %v1395, 16
        %v1842 = vor.u32 %v1839, %v1840
        %v1843 = vrot.slane %v1839, 4
        %v1845 = vshrl.u32 %v1396, 16
        %v1847 = vrot.slane %v1845, 7
        %v1848 = vshll.u32 %v1396, 16
        %v1850 = vor.u32 %v1847, %v1848
        %v1851 = vsel %vm1410, %v1843, %v1850
        %v1852 = vrot.slane %v1847, 4
        %v1854 = vshrl.u32 %v1397, 16
        %v1856 = vrot.slane %v1854, 7
        %v1857 = vshll.u32 %v1397, 16
        %v1859 = vor.u32 %v1856, %v1857
        %v1860 = vrot.slane %v1856, 4
        %v1862 = vshrl.u32 %v1398, 16
        %v1864 = vrot.slane %v1862, 7
        %v1865 = vshll.u32 %v1398, 16
        %v1867 = vor.u32 %v1864, %v1865
        %v1868 = vsel %vm1410, %v1860, %v1867
        %v1869 = vrot.slane %v1864, 4
        %v1871 = vshrl.u32 %v1399, 16
        %v1873 = vrot.slane %v1871, 7
        %v1874 = vshll.u32 %v1399, 16
        %v1876 = vor.u32 %v1873, %v1874
        %v1877 = vrot.slane %v1873, 4
        %v1879 = vshrl.u32 %v1400, 16
        %v1881 = vrot.slane %v1879, 7
        %v1882 = vshll.u32 %v1400, 16
        %v1884 = vor.u32 %v1881, %v1882
        %v1885 = vsel %vm1410, %v1877, %v1884
        %v1886 = vrot.slane %v1881, 4
        %v1888 = vshrl.u32 %v1401, 16
        %v1890 = vrot.slane %v1888, 7
        %v1891 = vshll.u32 %v1401, 16
        %v1893 = vor.u32 %v1890, %v1891
        %v1894 = vrot.slane %v1890, 4
        %v1896 = vshrl.u32 %v1402, 16
        %v1898 = vrot.slane %v1896, 7
        %v1899 = vshll.u32 %v1402, 16
        %v1901 = vor.u32 %v1898, %v1899
        %v1902 = vsel %vm1410, %v1894, %v1901
        %v1903 = vrot.slane %v1898, 4
        %v1905 = vshrl.u32 %v1403, 16
        %v1907 = vrot.slane %v1905, 7
        %v1908 = vshll.u32 %v1403, 16
        %v1910 = vor.u32 %v1907, %v1908
        %v1911 = vrot.slane %v1907, 4
        %v1913 = vshrl.u32 %v1404, 16
        %v1915 = vrot.slane %v1913, 7
        %v1916 = vshll.u32 %v1404, 16
        %v1918 = vor.u32 %v1915, %v1916
        %v1919 = vsel %vm1410, %v1911, %v1918
        %v1920 = vrot.slane %v1915, 4
        %v1922 = vshrl.u32 %v1405, 16
        %v1924 = vrot.slane %v1922, 7
        %v1925 = vshll.u32 %v1405, 16
        %v1927 = vor.u32 %v1924, %v1925
        %v1928 = vrot.slane %v1924, 4
        %v1930 = vshrl.u32 %v1406, 16
        %v1932 = vrot.slane %v1930, 7
        %v1933 = vshll.u32 %v1406, 16
        %v1935 = vor.u32 %v1932, %v1933
        %v1936 = vsel %vm1410, %v1928, %v1935
        %v1937 = vrot.slane %v1932, 4
        %v1939 = vshrl.u32 %v1407, 16
        %v1941 = vrot.slane %v1939, 7
        %v1942 = vshll.u32 %v1407, 16
        %v1944 = vor.u32 %v1941, %v1942
        %v1945 = vrot.slane %v1941, 4
        %v1947 = vshrl.u32 %v1408, 16
        %v1949 = vrot.slane %v1947, 7
        %v1950 = vshll.u32 %v1408, 16
        %v1952 = vor.u32 %v1949, %v1950
        %v1953 = vsel %vm1410, %v1945, %v1952
        %v1954 = vrot.slane %v1949, 4
        %s2051 = scalar_lea.vmem [#allocation2], 12
        %vm2052 = vcmask 257024
        %vm2053 = vmand %vm2052, %vm1139
        %v2054 = vld [vmem:[%s2051] sm:$0xf]
        %v2055 = vsel %vm2053, %v1417, %v2054
        %2056 = vst [vmem:[%s2051] sm:$0xf] %v2055
        %2057 = vst.msk [vmem:[%s2051 + $0x4] sm:$0xf] %vm1013, %v1426
        %v2058 = vld [vmem:[%s2051 + $0x8] sm:$0x1]
        %v2059 = vsel %vm1030, %v1427, %v2058
        %2060 = vst [vmem:[%s2051 + $0x8] sm:$0x1] %v2059
        %v2061 = vld [vmem:[%s2051 + $0xc] sm:$0xf]
        %v2062 = vsel %vm2053, %v1434, %v2061
        %2063 = vst [vmem:[%s2051 + $0xc] sm:$0xf] %v2062
        %2064 = vst.msk [vmem:[%s2051 + $0x10] sm:$0xf] %vm1013, %v1443
        %v2065 = vld [vmem:[%s2051 + $0x14] sm:$0x1]
        %v2066 = vsel %vm1030, %v1444, %v2065
        %2067 = vst [vmem:[%s2051 + $0x14] sm:$0x1] %v2066
        %v2068 = vld [vmem:[%s2051 + $0x18] sm:$0xf]
        %v2069 = vsel %vm2053, %v1451, %v2068
        %2070 = vst [vmem:[%s2051 + $0x18] sm:$0xf] %v2069
        %2071 = vst.msk [vmem:[%s2051 + $0x1c] sm:$0xf] %vm1013, %v1460
        %v2072 = vld [vmem:[%s2051 + $0x20] sm:$0x1]
        %v2073 = vsel %vm1030, %v1461, %v2072
        %2074 = vst [vmem:[%s2051 + $0x20] sm:$0x1] %v2073
        %v2075 = vld [vmem:[%s2051 + $0x24] sm:$0xf]
        %v2076 = vsel %vm2053, %v1468, %v2075
        %2077 = vst [vmem:[%s2051 + $0x24] sm:$0xf] %v2076
        %2078 = vst.msk [vmem:[%s2051 + $0x28] sm:$0xf] %vm1013, %v1477
        %v2079 = vld [vmem:[%s2051 + $0x2c] sm:$0x1]
        %v2080 = vsel %vm1030, %v1478, %v2079
        %2081 = vst [vmem:[%s2051 + $0x2c] sm:$0x1] %v2080
        %v2082 = vld [vmem:[%s2051 + $0x30] sm:$0xf]
        %v2083 = vsel %vm2053, %v1485, %v2082
        %2084 = vst [vmem:[%s2051 + $0x30] sm:$0xf] %v2083
        %2085 = vst.msk [vmem:[%s2051 + $0x34] sm:$0xf] %vm1013, %v1494
        %v2086 = vld [vmem:[%s2051 + $0x38] sm:$0x1]
        %v2087 = vsel %vm1030, %v1495, %v2086
        %2088 = vst [vmem:[%s2051 + $0x38] sm:$0x1] %v2087
        %v2089 = vld [vmem:[%s2051 + $0x3c] sm:$0xf]
        %v2090 = vsel %vm2053, %v1502, %v2089
        %2091 = vst [vmem:[%s2051 + $0x3c] sm:$0xf] %v2090
        %2092 = vst.msk [vmem:[%s2051 + $0x40] sm:$0xf] %vm1013, %v1511
        %v2093 = vld [vmem:[%s2051 + $0x44] sm:$0x1]
        %v2094 = vsel %vm1030, %v1512, %v2093
        %2095 = vst [vmem:[%s2051 + $0x44] sm:$0x1] %v2094
        %v2096 = vld [vmem:[%s2051 + $0x48] sm:$0xf]
        %v2097 = vsel %vm2053, %v1519, %v2096
        %2098 = vst [vmem:[%s2051 + $0x48] sm:$0xf] %v2097
        %2099 = vst.msk [vmem:[%s2051 + $0x4c] sm:$0xf] %vm1013, %v1528
        %v2100 = vld [vmem:[%s2051 + $0x50] sm:$0x1]
        %v2101 = vsel %vm1030, %v1529, %v2100
        %2102 = vst [vmem:[%s2051 + $0x50] sm:$0x1] %v2101
        %v2103 = vld [vmem:[%s2051 + $0x54] sm:$0xf]
        %v2104 = vsel %vm2053, %v1536, %v2103
        %2105 = vst [vmem:[%s2051 + $0x54] sm:$0xf] %v2104
        %2106 = vst.msk [vmem:[%s2051 + $0x58] sm:$0xf] %vm1013, %v1545
        %v2107 = vld [vmem:[%s2051 + $0x5c] sm:$0x1]
        %v2108 = vsel %vm1030, %v1546, %v2107
        %2109 = vst [vmem:[%s2051 + $0x5c] sm:$0x1] %v2108
        %v2110 = vld [vmem:[%s2051 + $0x60] sm:$0xf]
        %v2111 = vsel %vm2053, %v1553, %v2110
        %2112 = vst [vmem:[%s2051 + $0x60] sm:$0xf] %v2111
        %2113 = vst.msk [vmem:[%s2051 + $0x64] sm:$0xf] %vm1013, %v1562
        %v2114 = vld [vmem:[%s2051 + $0x68] sm:$0x1]
        %v2115 = vsel %vm1030, %v1563, %v2114
        %2116 = vst [vmem:[%s2051 + $0x68] sm:$0x1] %v2115
        %v2117 = vld [vmem:[%s2051 + $0x6c] sm:$0xf]
        %v2118 = vsel %vm2053, %v1570, %v2117
        %2119 = vst [vmem:[%s2051 + $0x6c] sm:$0xf] %v2118
        %2120 = vst.msk [vmem:[%s2051 + $0x70] sm:$0xf] %vm1013, %v1579
        %v2121 = vld [vmem:[%s2051 + $0x74] sm:$0x1]
        %v2122 = vsel %vm1030, %v1580, %v2121
        %2123 = vst [vmem:[%s2051 + $0x74] sm:$0x1] %v2122
        %v2124 = vld [vmem:[%s2051 + $0x78] sm:$0xf]
        %v2125 = vsel %vm2053, %v1587, %v2124
        %2126 = vst [vmem:[%s2051 + $0x78] sm:$0xf] %v2125
        %2127 = vst.msk [vmem:[%s2051 + $0x7c] sm:$0xf] %vm1013, %v1596
        %v2128 = vld [vmem:[%s2051 + $0x80] sm:$0x1]
        %v2129 = vsel %vm1030, %v1597, %v2128
        %2130 = vst [vmem:[%s2051 + $0x80] sm:$0x1] %v2129
        %v2131 = vld [vmem:[%s2051 + $0x84] sm:$0xf]
        %v2132 = vsel %vm2053, %v1604, %v2131
        %2133 = vst [vmem:[%s2051 + $0x84] sm:$0xf] %v2132
        %2134 = vst.msk [vmem:[%s2051 + $0x88] sm:$0xf] %vm1013, %v1613
        %v2135 = vld [vmem:[%s2051 + $0x8c] sm:$0x1]
        %v2136 = vsel %vm1030, %v1614, %v2135
        %2137 = vst [vmem:[%s2051 + $0x8c] sm:$0x1] %v2136
        %v2138 = vld [vmem:[%s2051 + $0x90] sm:$0xf]
        %v2139 = vsel %vm2053, %v1621, %v2138
        %2140 = vst [vmem:[%s2051 + $0x90] sm:$0xf] %v2139
        %2141 = vst.msk [vmem:[%s2051 + $0x94] sm:$0xf] %vm1013, %v1630
        %v2142 = vld [vmem:[%s2051 + $0x98] sm:$0x1]
        %v2143 = vsel %vm1030, %v1631, %v2142
        %2144 = vst [vmem:[%s2051 + $0x98] sm:$0x1] %v2143
        %v2145 = vld [vmem:[%s2051 + $0x9c] sm:$0xf]
        %v2146 = vsel %vm2053, %v1638, %v2145
        %2147 = vst [vmem:[%s2051 + $0x9c] sm:$0xf] %v2146
        %2148 = vst.msk [vmem:[%s2051 + $0xa0] sm:$0xf] %vm1013, %v1647
        %v2149 = vld [vmem:[%s2051 + $0xa4] sm:$0x1]
        %v2150 = vsel %vm1030, %v1648, %v2149
        %2151 = vst [vmem:[%s2051 + $0xa4] sm:$0x1] %v2150
        %v2152 = vld [vmem:[%s2051 + $0xa8] sm:$0xf]
        %v2153 = vsel %vm2053, %v1655, %v2152
        %2154 = vst [vmem:[%s2051 + $0xa8] sm:$0xf] %v2153
        %2155 = vst.msk [vmem:[%s2051 + $0xac] sm:$0xf] %vm1013, %v1664
        %v2156 = vld [vmem:[%s2051 + $0xb0] sm:$0x1]
        %v2157 = vsel %vm1030, %v1665, %v2156
        %2158 = vst [vmem:[%s2051 + $0xb0] sm:$0x1] %v2157
        %v2159 = vld [vmem:[%s2051 + $0xb4] sm:$0xf]
        %v2160 = vsel %vm2053, %v1672, %v2159
        %2161 = vst [vmem:[%s2051 + $0xb4] sm:$0xf] %v2160
        %2162 = vst.msk [vmem:[%s2051 + $0xb8] sm:$0xf] %vm1013, %v1681
        %v2163 = vld [vmem:[%s2051 + $0xbc] sm:$0x1]
        %v2164 = vsel %vm1030, %v1682, %v2163
        %2165 = vst [vmem:[%s2051 + $0xbc] sm:$0x1] %v2164
        %v2166 = vld [vmem:[%s2051 + $0xd8] sm:$0xf]
        %v2167 = vsel %vm2053, %v1689, %v2166
        %2168 = vst [vmem:[%s2051 + $0xd8] sm:$0xf] %v2167
        %2169 = vst.msk [vmem:[%s2051 + $0xdc] sm:$0xf] %vm1013, %v1698
        %v2170 = vld [vmem:[%s2051 + $0xe0] sm:$0x1]
        %v2171 = vsel %vm1030, %v1699, %v2170
        %2172 = vst [vmem:[%s2051 + $0xe0] sm:$0x1] %v2171
        %v2173 = vld [vmem:[%s2051 + $0xe4] sm:$0xf]
        %v2174 = vsel %vm2053, %v1706, %v2173
        %2175 = vst [vmem:[%s2051 + $0xe4] sm:$0xf] %v2174
        %2176 = vst.msk [vmem:[%s2051 + $0xe8] sm:$0xf] %vm1013, %v1715
        %v2177 = vld [vmem:[%s2051 + $0xec] sm:$0x1]
        %v2178 = vsel %vm1030, %v1716, %v2177
        %2179 = vst [vmem:[%s2051 + $0xec] sm:$0x1] %v2178
        %v2180 = vld [vmem:[%s2051 + $0xf0] sm:$0xf]
        %v2181 = vsel %vm2053, %v1723, %v2180
        %2182 = vst [vmem:[%s2051 + $0xf0] sm:$0xf] %v2181
        %2183 = vst.msk [vmem:[%s2051 + $0xf4] sm:$0xf] %vm1013, %v1732
        %v2184 = vld [vmem:[%s2051 + $0xf8] sm:$0x1]
        %v2185 = vsel %vm1030, %v1733, %v2184
        %2186 = vst [vmem:[%s2051 + $0xf8] sm:$0x1] %v2185
        %v2187 = vld [vmem:[%s2051 + $0xfc] sm:$0xf]
        %v2188 = vsel %vm2053, %v1740, %v2187
        %2189 = vst [vmem:[%s2051 + $0xfc] sm:$0xf] %v2188
        %2190 = vst.msk [vmem:[%s2051 + $0x100] sm:$0xf] %vm1013, %v1749
        %v2191 = vld [vmem:[%s2051 + $0x104] sm:$0x1]
        %v2192 = vsel %vm1030, %v1750, %v2191
        %2193 = vst [vmem:[%s2051 + $0x104] sm:$0x1] %v2192
        %v2194 = vld [vmem:[%s2051 + $0x108] sm:$0xf]
        %v2195 = vsel %vm2053, %v1757, %v2194
        %2196 = vst [vmem:[%s2051 + $0x108] sm:$0xf] %v2195
        %2197 = vst.msk [vmem:[%s2051 + $0x10c] sm:$0xf] %vm1013, %v1766
        %v2198 = vld [vmem:[%s2051 + $0x110] sm:$0x1]
        %v2199 = vsel %vm1030, %v1767, %v2198
        %2200 = vst [vmem:[%s2051 + $0x110] sm:$0x1] %v2199
        %v2201 = vld [vmem:[%s2051 + $0x114] sm:$0xf]
        %v2202 = vsel %vm2053, %v1774, %v2201
        %2203 = vst [vmem:[%s2051 + $0x114] sm:$0xf] %v2202
        %2204 = vst.msk [vmem:[%s2051 + $0x118] sm:$0xf] %vm1013, %v1783
        %v2205 = vld [vmem:[%s2051 + $0x11c] sm:$0x1]
        %v2206 = vsel %vm1030, %v1784, %v2205
        %2207 = vst [vmem:[%s2051 + $0x11c] sm:$0x1] %v2206
        %v2208 = vld [vmem:[%s2051 + $0x120] sm:$0xf]
        %v2209 = vsel %vm2053, %v1791, %v2208
        %2210 = vst [vmem:[%s2051 + $0x120] sm:$0xf] %v2209
        %2211 = vst.msk [vmem:[%s2051 + $0x124] sm:$0xf] %vm1013, %v1800
        %v2212 = vld [vmem:[%s2051 + $0x128] sm:$0x1]
        %v2213 = vsel %vm1030, %v1801, %v2212
        %2214 = vst [vmem:[%s2051 + $0x128] sm:$0x1] %v2213
        %v2215 = vld [vmem:[%s2051 + $0x12c] sm:$0xf]
        %v2216 = vsel %vm2053, %v1808, %v2215
        %2217 = vst [vmem:[%s2051 + $0x12c] sm:$0xf] %v2216
        %2218 = vst.msk [vmem:[%s2051 + $0x130] sm:$0xf] %vm1013, %v1817
        %v2219 = vld [vmem:[%s2051 + $0x134] sm:$0x1]
        %v2220 = vsel %vm1030, %v1818, %v2219
        %2221 = vst [vmem:[%s2051 + $0x134] sm:$0x1] %v2220
        %v2222 = vld [vmem:[%s2051 + $0x138] sm:$0xf]
        %v2223 = vsel %vm2053, %v1825, %v2222
        %2224 = vst [vmem:[%s2051 + $0x138] sm:$0xf] %v2223
        %2225 = vst.msk [vmem:[%s2051 + $0x13c] sm:$0xf] %vm1013, %v1834
        %v2226 = vld [vmem:[%s2051 + $0x140] sm:$0x1]
        %v2227 = vsel %vm1030, %v1835, %v2226
        %2228 = vst [vmem:[%s2051 + $0x140] sm:$0x1] %v2227
        %v2229 = vld [vmem:[%s2051 + $0x144] sm:$0xf]
        %v2230 = vsel %vm2053, %v1842, %v2229
        %2231 = vst [vmem:[%s2051 + $0x144] sm:$0xf] %v2230
        %2232 = vst.msk [vmem:[%s2051 + $0x148] sm:$0xf] %vm1013, %v1851
        %v2233 = vld [vmem:[%s2051 + $0x14c] sm:$0x1]
        %v2234 = vsel %vm1030, %v1852, %v2233
        %2235 = vst [vmem:[%s2051 + $0x14c] sm:$0x1] %v2234
        %v2236 = vld [vmem:[%s2051 + $0x150] sm:$0xf]
        %v2237 = vsel %vm2053, %v1859, %v2236
        %2238 = vst [vmem:[%s2051 + $0x150] sm:$0xf] %v2237
        %2239 = vst.msk [vmem:[%s2051 + $0x154] sm:$0xf] %vm1013, %v1868
        %v2240 = vld [vmem:[%s2051 + $0x158] sm:$0x1]
        %v2241 = vsel %vm1030, %v1869, %v2240
        %2242 = vst [vmem:[%s2051 + $0x158] sm:$0x1] %v2241
        %v2243 = vld [vmem:[%s2051 + $0x15c] sm:$0xf]
        %v2244 = vsel %vm2053, %v1876, %v2243
        %2245 = vst [vmem:[%s2051 + $0x15c] sm:$0xf] %v2244
        %2246 = vst.msk [vmem:[%s2051 + $0x160] sm:$0xf] %vm1013, %v1885
        %v2247 = vld [vmem:[%s2051 + $0x164] sm:$0x1]
        %v2248 = vsel %vm1030, %v1886, %v2247
        %2249 = vst [vmem:[%s2051 + $0x164] sm:$0x1] %v2248
        %v2250 = vld [vmem:[%s2051 + $0x168] sm:$0xf]
        %v2251 = vsel %vm2053, %v1893, %v2250
        %2252 = vst [vmem:[%s2051 + $0x168] sm:$0xf] %v2251
        %2253 = vst.msk [vmem:[%s2051 + $0x16c] sm:$0xf] %vm1013, %v1902
        %v2254 = vld [vmem:[%s2051 + $0x170] sm:$0x1]
        %v2255 = vsel %vm1030, %v1903, %v2254
        %2256 = vst [vmem:[%s2051 + $0x170] sm:$0x1] %v2255
        %v2257 = vld [vmem:[%s2051 + $0x174] sm:$0xf]
        %v2258 = vsel %vm2053, %v1910, %v2257
        %2259 = vst [vmem:[%s2051 + $0x174] sm:$0xf] %v2258
        %2260 = vst.msk [vmem:[%s2051 + $0x178] sm:$0xf] %vm1013, %v1919
        %v2261 = vld [vmem:[%s2051 + $0x17c] sm:$0x1]
        %v2262 = vsel %vm1030, %v1920, %v2261
        %2263 = vst [vmem:[%s2051 + $0x17c] sm:$0x1] %v2262
        %v2264 = vld [vmem:[%s2051 + $0x180] sm:$0xf]
        %v2265 = vsel %vm2053, %v1927, %v2264
        %2266 = vst [vmem:[%s2051 + $0x180] sm:$0xf] %v2265
        %2267 = vst.msk [vmem:[%s2051 + $0x184] sm:$0xf] %vm1013, %v1936
        %v2268 = vld [vmem:[%s2051 + $0x188] sm:$0x1]
        %v2269 = vsel %vm1030, %v1937, %v2268
        %2270 = vst [vmem:[%s2051 + $0x188] sm:$0x1] %v2269
        %v2271 = vld [vmem:[%s2051 + $0x18c] sm:$0xf]
        %v2272 = vsel %vm2053, %v1944, %v2271
        %2273 = vst [vmem:[%s2051 + $0x18c] sm:$0xf] %v2272
        %2274 = vst.msk [vmem:[%s2051 + $0x190] sm:$0xf] %vm1013, %v1953
        %v2275 = vld [vmem:[%s2051 + $0x194] sm:$0x1]
        %v2276 = vsel %vm1030, %v1954, %v2275
        %2277 = vst [vmem:[%s2051 + $0x194] sm:$0x1] %v2276
        %v2278 = vld [vmem:[#allocation2] sm:$0xf]
        %v2279 = vld [vmem:[#allocation2 + $0x4] sm:$0xf]
        %v2280 = vld [vmem:[#allocation2 + $0xc] sm:$0xf]
        %v2281 = vld [vmem:[#allocation2 + $0x10] sm:$0xf]
        %v2282 = vld [vmem:[#allocation2 + $0x18] sm:$0xf]
        %v2283 = vld [vmem:[#allocation2 + $0x1c] sm:$0xf]
        %v2284 = vld [vmem:[#allocation2 + $0x24] sm:$0xf]
        %v2285 = vld [vmem:[#allocation2 + $0x28] sm:$0xf]
        %v2286 = vld [vmem:[#allocation2 + $0x30] sm:$0xf]
        %v2287 = vld [vmem:[#allocation2 + $0x34] sm:$0xf]
        %v2288 = vld [vmem:[#allocation2 + $0x3c] sm:$0xf]
        %v2289 = vld [vmem:[#allocation2 + $0x40] sm:$0xf]
        %v2290 = vld [vmem:[#allocation2 + $0x48] sm:$0xf]
        %v2291 = vld [vmem:[#allocation2 + $0x4c] sm:$0xf]
        %v2292 = vld [vmem:[#allocation2 + $0x54] sm:$0xf]
        %v2293 = vld [vmem:[#allocation2 + $0x58] sm:$0xf]
        %v2294 = vld [vmem:[#allocation2 + $0x60] sm:$0xf]
        %v2295 = vld [vmem:[#allocation2 + $0x64] sm:$0xf]
        %v2296 = vld [vmem:[#allocation2 + $0x6c] sm:$0xf]
        %v2297 = vld [vmem:[#allocation2 + $0x70] sm:$0xf]
        %v2298 = vld [vmem:[#allocation2 + $0x78] sm:$0xf]
        %v2299 = vld [vmem:[#allocation2 + $0x7c] sm:$0xf]
        %v2300 = vld [vmem:[#allocation2 + $0x84] sm:$0xf]
        %v2301 = vld [vmem:[#allocation2 + $0x88] sm:$0xf]
        %v2302 = vld [vmem:[#allocation2 + $0x90] sm:$0xf]
        %v2303 = vld [vmem:[#allocation2 + $0x94] sm:$0xf]
        %v2304 = vld [vmem:[#allocation2 + $0x9c] sm:$0xf]
        %v2305 = vld [vmem:[#allocation2 + $0xa0] sm:$0xf]
        %v2306 = vld [vmem:[#allocation2 + $0xa8] sm:$0xf]
        %v2307 = vld [vmem:[#allocation2 + $0xac] sm:$0xf]
        %v2308 = vld [vmem:[#allocation2 + $0xb4] sm:$0xf]
        %v2309 = vld [vmem:[#allocation2 + $0xb8] sm:$0xf]
        %v2310 = vld [vmem:[#allocation2 + $0xd8] sm:$0xf]
        %v2311 = vld [vmem:[#allocation2 + $0xdc] sm:$0xf]
        %v2312 = vld [vmem:[#allocation2 + $0xe4] sm:$0xf]
        %v2313 = vld [vmem:[#allocation2 + $0xe8] sm:$0xf]
        %v2314 = vld [vmem:[#allocation2 + $0xf0] sm:$0xf]
        %v2315 = vld [vmem:[#allocation2 + $0xf4] sm:$0xf]
        %v2316 = vld [vmem:[#allocation2 + $0xfc] sm:$0xf]
        %v2317 = vld [vmem:[#allocation2 + $0x100] sm:$0xf]
        %v2318 = vld [vmem:[#allocation2 + $0x108] sm:$0xf]
        %v2319 = vld [vmem:[#allocation2 + $0x10c] sm:$0xf]
        %v2320 = vld [vmem:[#allocation2 + $0x114] sm:$0xf]
        %v2321 = vld [vmem:[#allocation2 + $0x118] sm:$0xf]
        %v2322 = vld [vmem:[#allocation2 + $0x120] sm:$0xf]
        %v2323 = vld [vmem:[#allocation2 + $0x124] sm:$0xf]
        %v2324 = vld [vmem:[#allocation2 + $0x12c] sm:$0xf]
        %v2325 = vld [vmem:[#allocation2 + $0x130] sm:$0xf]
        %v2326 = vld [vmem:[#allocation2 + $0x138] sm:$0xf]
        %v2327 = vld [vmem:[#allocation2 + $0x13c] sm:$0xf]
        %v2328 = vld [vmem:[#allocation2 + $0x144] sm:$0xf]
        %v2329 = vld [vmem:[#allocation2 + $0x148] sm:$0xf]
        %v2330 = vld [vmem:[#allocation2 + $0x150] sm:$0xf]
        %v2331 = vld [vmem:[#allocation2 + $0x154] sm:$0xf]
        %v2332 = vld [vmem:[#allocation2 + $0x15c] sm:$0xf]
        %v2333 = vld [vmem:[#allocation2 + $0x160] sm:$0xf]
        %v2334 = vld [vmem:[#allocation2 + $0x168] sm:$0xf]
        %v2335 = vld [vmem:[#allocation2 + $0x16c] sm:$0xf]
        %v2336 = vld [vmem:[#allocation2 + $0x174] sm:$0xf]
        %v2337 = vld [vmem:[#allocation2 + $0x178] sm:$0xf]
        %v2338 = vld [vmem:[#allocation2 + $0x180] sm:$0xf]
        %v2339 = vld [vmem:[#allocation2 + $0x184] sm:$0xf]
        %v2340 = vld [vmem:[#allocation2 + $0x18c] sm:$0xf]
        %v2341 = vld [vmem:[#allocation2 + $0x190] sm:$0xf]
        %v2342 = vld [vmem:[#allocation2 + $0x8] sm:$0x1]
        %v2343 = vld [vmem:[#allocation2 + $0x14] sm:$0x1]
        %v2344 = vld [vmem:[#allocation2 + $0x20] sm:$0x1]
        %v2345 = vld [vmem:[#allocation2 + $0x2c] sm:$0x1]
        %v2346 = vld [vmem:[#allocation2 + $0x38] sm:$0x1]
        %v2347 = vld [vmem:[#allocation2 + $0x44] sm:$0x1]
        %v2348 = vld [vmem:[#allocation2 + $0x50] sm:$0x1]
        %v2349 = vld [vmem:[#allocation2 + $0x5c] sm:$0x1]
        %v2350 = vld [vmem:[#allocation2 + $0x68] sm:$0x1]
        %v2351 = vld [vmem:[#allocation2 + $0x74] sm:$0x1]
        %v2352 = vld [vmem:[#allocation2 + $0x80] sm:$0x1]
        %v2353 = vld [vmem:[#allocation2 + $0x8c] sm:$0x1]
        %v2354 = vld [vmem:[#allocation2 + $0x98] sm:$0x1]
        %v2355 = vld [vmem:[#allocation2 + $0xa4] sm:$0x1]
        %v2356 = vld [vmem:[#allocation2 + $0xb0] sm:$0x1]
        %v2357 = vld [vmem:[#allocation2 + $0xbc] sm:$0x1]
        %v2358 = vld [vmem:[#allocation2 + $0xe0] sm:$0x1]
        %v2359 = vld [vmem:[#allocation2 + $0xec] sm:$0x1]
        %v2360 = vld [vmem:[#allocation2 + $0xf8] sm:$0x1]
        %v2361 = vld [vmem:[#allocation2 + $0x104] sm:$0x1]
        %v2362 = vld [vmem:[#allocation2 + $0x110] sm:$0x1]
        %v2363 = vld [vmem:[#allocation2 + $0x11c] sm:$0x1]
        %v2364 = vld [vmem:[#allocation2 + $0x128] sm:$0x1]
        %v2365 = vld [vmem:[#allocation2 + $0x134] sm:$0x1]
        %v2366 = vld [vmem:[#allocation2 + $0x140] sm:$0x1]
        %v2367 = vld [vmem:[#allocation2 + $0x14c] sm:$0x1]
        %v2368 = vld [vmem:[#allocation2 + $0x158] sm:$0x1]
        %v2369 = vld [vmem:[#allocation2 + $0x164] sm:$0x1]
        %v2370 = vld [vmem:[#allocation2 + $0x170] sm:$0x1]
        %v2371 = vld [vmem:[#allocation2 + $0x17c] sm:$0x1]
        %v2372 = vld [vmem:[#allocation2 + $0x188] sm:$0x1]
        %v2373 = vld [vmem:[#allocation2 + $0x194] sm:$0x1]
        %vm2374 = vsmask.f32 3328
        %vm2375 = vsmask.f32 7440
        %vm2376 = vmor %vm2374, %vm2375
        %v2378 = vshrl.u32 %v2278, 16
        %v2380 = vrot.slane %v2378, 4
        %v2381 = vshll.u32 %v2278, 16
        %v2383 = vrot.slane %v2381, 5
        %v2384 = vor.u32 %v2380, %v2383
        %v2385 = vrot.slane %v2384, 4
        %v2387 = vshll.u32 %v2279, 16
        %v2389 = vrot.slane %v2387, 5
        %v2390 = vsel %vm2376, %v2385, %v2389
        %v2391 = vshrl.u32 %v2279, 16
        %v2393 = vrot.slane %v2391, 4
        %v2394 = vor.u32 %v2393, %v2389
        %v2395 = vrot.slane %v2394, 4
        %v2397 = vshll.u32 %v2342, 16
        %v2399 = vrot.slane %v2397, 5
        %v2400 = vsel %vm2376, %v2395, %v2399
        %v2402 = vshrl.u32 %v2280, 16
        %v2404 = vrot.slane %v2402, 4
        %v2405 = vshll.u32 %v2280, 16
        %v2407 = vrot.slane %v2405, 5
        %v2408 = vor.u32 %v2404, %v2407
        %v2409 = vrot.slane %v2408, 4
        %v2411 = vshll.u32 %v2281, 16
        %v2413 = vrot.slane %v2411, 5
        %v2414 = vsel %vm2376, %v2409, %v2413
        %v2415 = vshrl.u32 %v2281, 16
        %v2417 = vrot.slane %v2415, 4
        %v2418 = vor.u32 %v2417, %v2413
        %v2419 = vrot.slane %v2418, 4
        %v2421 = vshll.u32 %v2343, 16
        %v2423 = vrot.slane %v2421, 5
        %v2424 = vsel %vm2376, %v2419, %v2423
        %v2426 = vshrl.u32 %v2282, 16
        %v2428 = vrot.slane %v2426, 4
        %v2429 = vshll.u32 %v2282, 16
        %v2431 = vrot.slane %v2429, 5
        %v2432 = vor.u32 %v2428, %v2431
        %v2433 = vrot.slane %v2432, 4
        %v2435 = vshll.u32 %v2283, 16
        %v2437 = vrot.slane %v2435, 5
        %v2438 = vsel %vm2376, %v2433, %v2437
        %v2439 = vshrl.u32 %v2283, 16
        %v2441 = vrot.slane %v2439, 4
        %v2442 = vor.u32 %v2441, %v2437
        %v2443 = vrot.slane %v2442, 4
        %v2445 = vshll.u32 %v2344, 16
        %v2447 = vrot.slane %v2445, 5
        %v2448 = vsel %vm2376, %v2443, %v2447
        %v2450 = vshrl.u32 %v2284, 16
        %v2452 = vrot.slane %v2450, 4
        %v2453 = vshll.u32 %v2284, 16
        %v2455 = vrot.slane %v2453, 5
        %v2456 = vor.u32 %v2452, %v2455
        %v2457 = vrot.slane %v2456, 4
        %v2459 = vshll.u32 %v2285, 16
        %v2461 = vrot.slane %v2459, 5
        %v2462 = vsel %vm2376, %v2457, %v2461
        %v2463 = vshrl.u32 %v2285, 16
        %v2465 = vrot.slane %v2463, 4
        %v2466 = vor.u32 %v2465, %v2461
        %v2467 = vrot.slane %v2466, 4
        %v2469 = vshll.u32 %v2345, 16
        %v2471 = vrot.slane %v2469, 5
        %v2472 = vsel %vm2376, %v2467, %v2471
        %v2474 = vshrl.u32 %v2286, 16
        %v2476 = vrot.slane %v2474, 4
        %v2477 = vshll.u32 %v2286, 16
        %v2479 = vrot.slane %v2477, 5
        %v2480 = vor.u32 %v2476, %v2479
        %v2481 = vrot.slane %v2480, 4
        %v2483 = vshll.u32 %v2287, 16
        %v2485 = vrot.slane %v2483, 5
        %v2486 = vsel %vm2376, %v2481, %v2485
        %v2487 = vshrl.u32 %v2287, 16
        %v2489 = vrot.slane %v2487, 4
        %v2490 = vor.u32 %v2489, %v2485
        %v2491 = vrot.slane %v2490, 4
        %v2493 = vshll.u32 %v2346, 16
        %v2495 = vrot.slane %v2493, 5
        %v2496 = vsel %vm2376, %v2491, %v2495
        %v2498 = vshrl.u32 %v2288, 16
        %v2500 = vrot.slane %v2498, 4
        %v2501 = vshll.u32 %v2288, 16
        %v2503 = vrot.slane %v2501, 5
        %v2504 = vor.u32 %v2500, %v2503
        %v2505 = vrot.slane %v2504, 4
        %v2507 = vshll.u32 %v2289, 16
        %v2509 = vrot.slane %v2507, 5
        %v2510 = vsel %vm2376, %v2505, %v2509
        %v2511 = vshrl.u32 %v2289, 16
        %v2513 = vrot.slane %v2511, 4
        %v2514 = vor.u32 %v2513, %v2509
        %v2515 = vrot.slane %v2514, 4
        %v2517 = vshll.u32 %v2347, 16
        %v2519 = vrot.slane %v2517, 5
        %v2520 = vsel %vm2376, %v2515, %v2519
        %v2522 = vshrl.u32 %v2290, 16
        %v2524 = vrot.slane %v2522, 4
        %v2525 = vshll.u32 %v2290, 16
        %v2527 = vrot.slane %v2525, 5
        %v2528 = vor.u32 %v2524, %v2527
        %v2529 = vrot.slane %v2528, 4
        %v2531 = vshll.u32 %v2291, 16
        %v2533 = vrot.slane %v2531, 5
        %v2534 = vsel %vm2376, %v2529, %v2533
        %v2535 = vshrl.u32 %v2291, 16
        %v2537 = vrot.slane %v2535, 4
        %v2538 = vor.u32 %v2537, %v2533
        %v2539 = vrot.slane %v2538, 4
        %v2541 = vshll.u32 %v2348, 16
        %v2543 = vrot.slane %v2541, 5
        %v2544 = vsel %vm2376, %v2539, %v2543
        %v2546 = vshrl.u32 %v2292, 16
        %v2548 = vrot.slane %v2546, 4
        %v2549 = vshll.u32 %v2292, 16
        %v2551 = vrot.slane %v2549, 5
        %v2552 = vor.u32 %v2548, %v2551
        %v2553 = vrot.slane %v2552, 4
        %v2555 = vshll.u32 %v2293, 16
        %v2557 = vrot.slane %v2555, 5
        %v2558 = vsel %vm2376, %v2553, %v2557
        %v2559 = vshrl.u32 %v2293, 16
        %v2561 = vrot.slane %v2559, 4
        %v2562 = vor.u32 %v2561, %v2557
        %v2563 = vrot.slane %v2562, 4
        %v2565 = vshll.u32 %v2349, 16
        %v2567 = vrot.slane %v2565, 5
        %v2568 = vsel %vm2376, %v2563, %v2567
        %v2570 = vshrl.u32 %v2294, 16
        %v2572 = vrot.slane %v2570, 4
        %v2573 = vshll.u32 %v2294, 16
        %v2575 = vrot.slane %v2573, 5
        %v2576 = vor.u32 %v2572, %v2575
        %v2577 = vrot.slane %v2576, 4
        %v2579 = vshll.u32 %v2295, 16
        %v2581 = vrot.slane %v2579, 5
        %v2582 = vsel %vm2376, %v2577, %v2581
        %v2583 = vshrl.u32 %v2295, 16
        %v2585 = vrot.slane %v2583, 4
        %v2586 = vor.u32 %v2585, %v2581
        %v2587 = vrot.slane %v2586, 4
        %v2589 = vshll.u32 %v2350, 16
        %v2591 = vrot.slane %v2589, 5
        %v2592 = vsel %vm2376, %v2587, %v2591
        %v2594 = vshrl.u32 %v2296, 16
        %v2596 = vrot.slane %v2594, 4
        %v2597 = vshll.u32 %v2296, 16
        %v2599 = vrot.slane %v2597, 5
        %v2600 = vor.u32 %v2596, %v2599
        %v2601 = vrot.slane %v2600, 4
        %v2603 = vshll.u32 %v2297, 16
        %v2605 = vrot.slane %v2603, 5
        %v2606 = vsel %vm2376, %v2601, %v2605
        %v2607 = vshrl.u32 %v2297, 16
        %v2609 = vrot.slane %v2607, 4
        %v2610 = vor.u32 %v2609, %v2605
        %v2611 = vrot.slane %v2610, 4
        %v2613 = vshll.u32 %v2351, 16
        %v2615 = vrot.slane %v2613, 5
        %v2616 = vsel %vm2376, %v2611, %v2615
        %v2618 = vshrl.u32 %v2298, 16
        %v2620 = vrot.slane %v2618, 4
        %v2621 = vshll.u32 %v2298, 16
        %v2623 = vrot.slane %v2621, 5
        %v2624 = vor.u32 %v2620, %v2623
        %v2625 = vrot.slane %v2624, 4
        %v2627 = vshll.u32 %v2299, 16
        %v2629 = vrot.slane %v2627, 5
        %v2630 = vsel %vm2376, %v2625, %v2629
        %v2631 = vshrl.u32 %v2299, 16
        %v2633 = vrot.slane %v2631, 4
        %v2634 = vor.u32 %v2633, %v2629
        %v2635 = vrot.slane %v2634, 4
        %v2637 = vshll.u32 %v2352, 16
        %v2639 = vrot.slane %v2637, 5
        %v2640 = vsel %vm2376, %v2635, %v2639
        %v2642 = vshrl.u32 %v2300, 16
        %v2644 = vrot.slane %v2642, 4
        %v2645 = vshll.u32 %v2300, 16
        %v2647 = vrot.slane %v2645, 5
        %v2648 = vor.u32 %v2644, %v2647
        %v2649 = vrot.slane %v2648, 4
        %v2651 = vshll.u32 %v2301, 16
        %v2653 = vrot.slane %v2651, 5
        %v2654 = vsel %vm2376, %v2649, %v2653
        %v2655 = vshrl.u32 %v2301, 16
        %v2657 = vrot.slane %v2655, 4
        %v2658 = vor.u32 %v2657, %v2653
        %v2659 = vrot.slane %v2658, 4
        %v2661 = vshll.u32 %v2353, 16
        %v2663 = vrot.slane %v2661, 5
        %v2664 = vsel %vm2376, %v2659, %v2663
        %v2666 = vshrl.u32 %v2302, 16
        %v2668 = vrot.slane %v2666, 4
        %v2669 = vshll.u32 %v2302, 16
        %v2671 = vrot.slane %v2669, 5
        %v2672 = vor.u32 %v2668, %v2671
        %v2673 = vrot.slane %v2672, 4
        %v2675 = vshll.u32 %v2303, 16
        %v2677 = vrot.slane %v2675, 5
        %v2678 = vsel %vm2376, %v2673, %v2677
        %v2679 = vshrl.u32 %v2303, 16
        %v2681 = vrot.slane %v2679, 4
        %v2682 = vor.u32 %v2681, %v2677
        %v2683 = vrot.slane %v2682, 4
        %v2685 = vshll.u32 %v2354, 16
        %v2687 = vrot.slane %v2685, 5
        %v2688 = vsel %vm2376, %v2683, %v2687
        %v2690 = vshrl.u32 %v2304, 16
        %v2692 = vrot.slane %v2690, 4
        %v2693 = vshll.u32 %v2304, 16
        %v2695 = vrot.slane %v2693, 5
        %v2696 = vor.u32 %v2692, %v2695
        %v2697 = vrot.slane %v2696, 4
        %v2699 = vshll.u32 %v2305, 16
        %v2701 = vrot.slane %v2699, 5
        %v2702 = vsel %vm2376, %v2697, %v2701
        %v2703 = vshrl.u32 %v2305, 16
        %v2705 = vrot.slane %v2703, 4
        %v2706 = vor.u32 %v2705, %v2701
        %v2707 = vrot.slane %v2706, 4
        %v2709 = vshll.u32 %v2355, 16
        %v2711 = vrot.slane %v2709, 5
        %v2712 = vsel %vm2376, %v2707, %v2711
        %v2714 = vshrl.u32 %v2306, 16
        %v2716 = vrot.slane %v2714, 4
        %v2717 = vshll.u32 %v2306, 16
        %v2719 = vrot.slane %v2717, 5
        %v2720 = vor.u32 %v2716, %v2719
        %v2721 = vrot.slane %v2720, 4
        %v2723 = vshll.u32 %v2307, 16
        %v2725 = vrot.slane %v2723, 5
        %v2726 = vsel %vm2376, %v2721, %v2725
        %v2727 = vshrl.u32 %v2307, 16
        %v2729 = vrot.slane %v2727, 4
        %v2730 = vor.u32 %v2729, %v2725
        %v2731 = vrot.slane %v2730, 4
        %v2733 = vshll.u32 %v2356, 16
        %v2735 = vrot.slane %v2733, 5
        %v2736 = vsel %vm2376, %v2731, %v2735
        %v2738 = vshrl.u32 %v2308, 16
        %v2740 = vrot.slane %v2738, 4
        %v2741 = vshll.u32 %v2308, 16
        %v2743 = vrot.slane %v2741, 5
        %v2744 = vor.u32 %v2740, %v2743
        %v2745 = vrot.slane %v2744, 4
        %v2747 = vshll.u32 %v2309, 16
        %v2749 = vrot.slane %v2747, 5
        %v2750 = vsel %vm2376, %v2745, %v2749
        %v2751 = vshrl.u32 %v2309, 16
        %v2753 = vrot.slane %v2751, 4
        %v2754 = vor.u32 %v2753, %v2749
        %v2755 = vrot.slane %v2754, 4
        %v2757 = vshll.u32 %v2357, 16
        %v2759 = vrot.slane %v2757, 5
        %v2760 = vsel %vm2376, %v2755, %v2759
        %v2762 = vshrl.u32 %v2310, 16
        %v2764 = vrot.slane %v2762, 4
        %v2765 = vshll.u32 %v2310, 16
        %v2767 = vrot.slane %v2765, 5
        %v2768 = vor.u32 %v2764, %v2767
        %v2769 = vrot.slane %v2768, 4
        %v2771 = vshll.u32 %v2311, 16
        %v2773 = vrot.slane %v2771, 5
        %v2774 = vsel %vm2376, %v2769, %v2773
        %v2775 = vshrl.u32 %v2311, 16
        %v2777 = vrot.slane %v2775, 4
        %v2778 = vor.u32 %v2777, %v2773
        %v2779 = vrot.slane %v2778, 4
        %v2781 = vshll.u32 %v2358, 16
        %v2783 = vrot.slane %v2781, 5
        %v2784 = vsel %vm2376, %v2779, %v2783
        %v2786 = vshrl.u32 %v2312, 16
        %v2788 = vrot.slane %v2786, 4
        %v2789 = vshll.u32 %v2312, 16
        %v2791 = vrot.slane %v2789, 5
        %v2792 = vor.u32 %v2788, %v2791
        %v2793 = vrot.slane %v2792, 4
        %v2795 = vshll.u32 %v2313, 16
        %v2797 = vrot.slane %v2795, 5
        %v2798 = vsel %vm2376, %v2793, %v2797
        %v2799 = vshrl.u32 %v2313, 16
        %v2801 = vrot.slane %v2799, 4
        %v2802 = vor.u32 %v2801, %v2797
        %v2803 = vrot.slane %v2802, 4
        %v2805 = vshll.u32 %v2359, 16
        %v2807 = vrot.slane %v2805, 5
        %v2808 = vsel %vm2376, %v2803, %v2807
        %v2810 = vshrl.u32 %v2314, 16
        %v2812 = vrot.slane %v2810, 4
        %v2813 = vshll.u32 %v2314, 16
        %v2815 = vrot.slane %v2813, 5
        %v2816 = vor.u32 %v2812, %v2815
        %v2817 = vrot.slane %v2816, 4
        %v2819 = vshll.u32 %v2315, 16
        %v2821 = vrot.slane %v2819, 5
        %v2822 = vsel %vm2376, %v2817, %v2821
        %v2823 = vshrl.u32 %v2315, 16
        %v2825 = vrot.slane %v2823, 4
        %v2826 = vor.u32 %v2825, %v2821
        %v2827 = vrot.slane %v2826, 4
        %v2829 = vshll.u32 %v2360, 16
        %v2831 = vrot.slane %v2829, 5
        %v2832 = vsel %vm2376, %v2827, %v2831
        %v2834 = vshrl.u32 %v2316, 16
        %v2836 = vrot.slane %v2834, 4
        %v2837 = vshll.u32 %v2316, 16
        %v2839 = vrot.slane %v2837, 5
        %v2840 = vor.u32 %v2836, %v2839
        %v2841 = vrot.slane %v2840, 4
        %v2843 = vshll.u32 %v2317, 16
        %v2845 = vrot.slane %v2843, 5
        %v2846 = vsel %vm2376, %v2841, %v2845
        %v2847 = vshrl.u32 %v2317, 16
        %v2849 = vrot.slane %v2847, 4
        %v2850 = vor.u32 %v2849, %v2845
        %v2851 = vrot.slane %v2850, 4
        %v2853 = vshll.u32 %v2361, 16
        %v2855 = vrot.slane %v2853, 5
        %v2856 = vsel %vm2376, %v2851, %v2855
        %v2858 = vshrl.u32 %v2318, 16
        %v2860 = vrot.slane %v2858, 4
        %v2861 = vshll.u32 %v2318, 16
        %v2863 = vrot.slane %v2861, 5
        %v2864 = vor.u32 %v2860, %v2863
        %v2865 = vrot.slane %v2864, 4
        %v2867 = vshll.u32 %v2319, 16
        %v2869 = vrot.slane %v2867, 5
        %v2870 = vsel %vm2376, %v2865, %v2869
        %v2871 = vshrl.u32 %v2319, 16
        %v2873 = vrot.slane %v2871, 4
        %v2874 = vor.u32 %v2873, %v2869
        %v2875 = vrot.slane %v2874, 4
        %v2877 = vshll.u32 %v2362, 16
        %v2879 = vrot.slane %v2877, 5
        %v2880 = vsel %vm2376, %v2875, %v2879
        %v2882 = vshrl.u32 %v2320, 16
        %v2884 = vrot.slane %v2882, 4
        %v2885 = vshll.u32 %v2320, 16
        %v2887 = vrot.slane %v2885, 5
        %v2888 = vor.u32 %v2884, %v2887
        %v2889 = vrot.slane %v2888, 4
        %v2891 = vshll.u32 %v2321, 16
        %v2893 = vrot.slane %v2891, 5
        %v2894 = vsel %vm2376, %v2889, %v2893
        %v2895 = vshrl.u32 %v2321, 16
        %v2897 = vrot.slane %v2895, 4
        %v2898 = vor.u32 %v2897, %v2893
        %v2899 = vrot.slane %v2898, 4
        %v2901 = vshll.u32 %v2363, 16
        %v2903 = vrot.slane %v2901, 5
        %v2904 = vsel %vm2376, %v2899, %v2903
        %v2906 = vshrl.u32 %v2322, 16
        %v2908 = vrot.slane %v2906, 4
        %v2909 = vshll.u32 %v2322, 16
        %v2911 = vrot.slane %v2909, 5
        %v2912 = vor.u32 %v2908, %v2911
        %v2913 = vrot.slane %v2912, 4
        %v2915 = vshll.u32 %v2323, 16
        %v2917 = vrot.slane %v2915, 5
        %v2918 = vsel %vm2376, %v2913, %v2917
        %v2919 = vshrl.u32 %v2323, 16
        %v2921 = vrot.slane %v2919, 4
        %v2922 = vor.u32 %v2921, %v2917
        %v2923 = vrot.slane %v2922, 4
        %v2925 = vshll.u32 %v2364, 16
        %v2927 = vrot.slane %v2925, 5
        %v2928 = vsel %vm2376, %v2923, %v2927
        %v2930 = vshrl.u32 %v2324, 16
        %v2932 = vrot.slane %v2930, 4
        %v2933 = vshll.u32 %v2324, 16
        %v2935 = vrot.slane %v2933, 5
        %v2936 = vor.u32 %v2932, %v2935
        %v2937 = vrot.slane %v2936, 4
        %v2939 = vshll.u32 %v2325, 16
        %v2941 = vrot.slane %v2939, 5
        %v2942 = vsel %vm2376, %v2937, %v2941
        %v2943 = vshrl.u32 %v2325, 16
        %v2945 = vrot.slane %v2943, 4
        %v2946 = vor.u32 %v2945, %v2941
        %v2947 = vrot.slane %v2946, 4
        %v2949 = vshll.u32 %v2365, 16
        %v2951 = vrot.slane %v2949, 5
        %v2952 = vsel %vm2376, %v2947, %v2951
        %v2954 = vshrl.u32 %v2326, 16
        %v2956 = vrot.slane %v2954, 4
        %v2957 = vshll.u32 %v2326, 16
        %v2959 = vrot.slane %v2957, 5
        %v2960 = vor.u32 %v2956, %v2959
        %v2961 = vrot.slane %v2960, 4
        %v2963 = vshll.u32 %v2327, 16
        %v2965 = vrot.slane %v2963, 5
        %v2966 = vsel %vm2376, %v2961, %v2965
        %v2967 = vshrl.u32 %v2327, 16
        %v2969 = vrot.slane %v2967, 4
        %v2970 = vor.u32 %v2969, %v2965
        %v2971 = vrot.slane %v2970, 4
        %v2973 = vshll.u32 %v2366, 16
        %v2975 = vrot.slane %v2973, 5
        %v2976 = vsel %vm2376, %v2971, %v2975
        %v2978 = vshrl.u32 %v2328, 16
        %v2980 = vrot.slane %v2978, 4
        %v2981 = vshll.u32 %v2328, 16
        %v2983 = vrot.slane %v2981, 5
        %v2984 = vor.u32 %v2980, %v2983
        %v2985 = vrot.slane %v2984, 4
        %v2987 = vshll.u32 %v2329, 16
        %v2989 = vrot.slane %v2987, 5
        %v2990 = vsel %vm2376, %v2985, %v2989
        %v2991 = vshrl.u32 %v2329, 16
        %v2993 = vrot.slane %v2991, 4
        %v2994 = vor.u32 %v2993, %v2989
        %v2995 = vrot.slane %v2994, 4
        %v2997 = vshll.u32 %v2367, 16
        %v2999 = vrot.slane %v2997, 5
        %v3000 = vsel %vm2376, %v2995, %v2999
        %v3002 = vshrl.u32 %v2330, 16
        %v3004 = vrot.slane %v3002, 4
        %v3005 = vshll.u32 %v2330, 16
        %v3007 = vrot.slane %v3005, 5
        %v3008 = vor.u32 %v3004, %v3007
        %v3009 = vrot.slane %v3008, 4
        %v3011 = vshll.u32 %v2331, 16
        %v3013 = vrot.slane %v3011, 5
        %v3014 = vsel %vm2376, %v3009, %v3013
        %v3015 = vshrl.u32 %v2331, 16
        %v3017 = vrot.slane %v3015, 4
        %v3018 = vor.u32 %v3017, %v3013
        %v3019 = vrot.slane %v3018, 4
        %v3021 = vshll.u32 %v2368, 16
        %v3023 = vrot.slane %v3021, 5
        %v3024 = vsel %vm2376, %v3019, %v3023
        %v3026 = vshrl.u32 %v2332, 16
        %v3028 = vrot.slane %v3026, 4
        %v3029 = vshll.u32 %v2332, 16
        %v3031 = vrot.slane %v3029, 5
        %v3032 = vor.u32 %v3028, %v3031
        %v3033 = vrot.slane %v3032, 4
        %v3035 = vshll.u32 %v2333, 16
        %v3037 = vrot.slane %v3035, 5
        %v3038 = vsel %vm2376, %v3033, %v3037
        %v3039 = vshrl.u32 %v2333, 16
        %v3041 = vrot.slane %v3039, 4
        %v3042 = vor.u32 %v3041, %v3037
        %v3043 = vrot.slane %v3042, 4
        %v3045 = vshll.u32 %v2369, 16
        %v3047 = vrot.slane %v3045, 5
        %v3048 = vsel %vm2376, %v3043, %v3047
        %v3050 = vshrl.u32 %v2334, 16
        %v3052 = vrot.slane %v3050, 4
        %v3053 = vshll.u32 %v2334, 16
        %v3055 = vrot.slane %v3053, 5
        %v3056 = vor.u32 %v3052, %v3055
        %v3057 = vrot.slane %v3056, 4
        %v3059 = vshll.u32 %v2335, 16
        %v3061 = vrot.slane %v3059, 5
        %v3062 = vsel %vm2376, %v3057, %v3061
        %v3063 = vshrl.u32 %v2335, 16
        %v3065 = vrot.slane %v3063, 4
        %v3066 = vor.u32 %v3065, %v3061
        %v3067 = vrot.slane %v3066, 4
        %v3069 = vshll.u32 %v2370, 16
        %v3071 = vrot.slane %v3069, 5
        %v3072 = vsel %vm2376, %v3067, %v3071
        %v3074 = vshrl.u32 %v2336, 16
        %v3076 = vrot.slane %v3074, 4
        %v3077 = vshll.u32 %v2336, 16
        %v3079 = vrot.slane %v3077, 5
        %v3080 = vor.u32 %v3076, %v3079
        %v3081 = vrot.slane %v3080, 4
        %v3083 = vshll.u32 %v2337, 16
        %v3085 = vrot.slane %v3083, 5
        %v3086 = vsel %vm2376, %v3081, %v3085
        %v3087 = vshrl.u32 %v2337, 16
        %v3089 = vrot.slane %v3087, 4
        %v3090 = vor.u32 %v3089, %v3085
        %v3091 = vrot.slane %v3090, 4
        %v3093 = vshll.u32 %v2371, 16
        %v3095 = vrot.slane %v3093, 5
        %v3096 = vsel %vm2376, %v3091, %v3095
        %v3098 = vshrl.u32 %v2338, 16
        %v3100 = vrot.slane %v3098, 4
        %v3101 = vshll.u32 %v2338, 16
        %v3103 = vrot.slane %v3101, 5
        %v3104 = vor.u32 %v3100, %v3103
        %v3105 = vrot.slane %v3104, 4
        %v3107 = vshll.u32 %v2339, 16
        %v3109 = vrot.slane %v3107, 5
        %v3110 = vsel %vm2376, %v3105, %v3109
        %v3111 = vshrl.u32 %v2339, 16
        %v3113 = vrot.slane %v3111, 4
        %v3114 = vor.u32 %v3113, %v3109
        %v3115 = vrot.slane %v3114, 4
        %v3117 = vshll.u32 %v2372, 16
        %v3119 = vrot.slane %v3117, 5
        %v3120 = vsel %vm2376, %v3115, %v3119
        %v3122 = vshrl.u32 %v2340, 16
        %v3124 = vrot.slane %v3122, 4
        %v3125 = vshll.u32 %v2340, 16
        %v3127 = vrot.slane %v3125, 5
        %v3128 = vor.u32 %v3124, %v3127
        %v3129 = vrot.slane %v3128, 4
        %v3131 = vshll.u32 %v2341, 16
        %v3133 = vrot.slane %v3131, 5
        %v3134 = vsel %vm2376, %v3129, %v3133
        %v3135 = vshrl.u32 %v2341, 16
        %v3137 = vrot.slane %v3135, 4
        %v3138 = vor.u32 %v3137, %v3133
        %v3139 = vrot.slane %v3138, 4
        %v3141 = vshll.u32 %v2373, 16
        %v3143 = vrot.slane %v3141, 5
        %v3144 = vsel %vm2376, %v3139, %v3143
        %v3145 = vld [vmem:[#allocation2] sm:$0xe]
        %v3146 = vld [vmem:[#allocation2 + $0xc] sm:$0xe]
        %v3147 = vld [vmem:[#allocation2 + $0x18] sm:$0xe]
        %v3148 = vld [vmem:[#allocation2 + $0x24] sm:$0xe]
        %v3149 = vld [vmem:[#allocation2 + $0x30] sm:$0xe]
        %v3150 = vld [vmem:[#allocation2 + $0x3c] sm:$0xe]
        %v3151 = vld [vmem:[#allocation2 + $0x48] sm:$0xe]
        %v3152 = vld [vmem:[#allocation2 + $0x54] sm:$0xe]
        %v3153 = vld [vmem:[#allocation2 + $0x60] sm:$0xe]
        %v3154 = vld [vmem:[#allocation2 + $0x6c] sm:$0xe]
        %v3155 = vld [vmem:[#allocation2 + $0x78] sm:$0xe]
        %v3156 = vld [vmem:[#allocation2 + $0x84] sm:$0xe]
        %v3157 = vld [vmem:[#allocation2 + $0x90] sm:$0xe]
        %v3158 = vld [vmem:[#allocation2 + $0x9c] sm:$0xe]
        %v3159 = vld [vmem:[#allocation2 + $0xa8] sm:$0xe]
        %v3160 = vld [vmem:[#allocation2 + $0xb4] sm:$0xe]
        %v3161 = vld [vmem:[#allocation2 + $0xd8] sm:$0xe]
        %v3162 = vld [vmem:[#allocation2 + $0xe4] sm:$0xe]
        %v3163 = vld [vmem:[#allocation2 + $0xf0] sm:$0xe]
        %v3164 = vld [vmem:[#allocation2 + $0xfc] sm:$0xe]
        %v3165 = vld [vmem:[#allocation2 + $0x108] sm:$0xe]
        %v3166 = vld [vmem:[#allocation2 + $0x114] sm:$0xe]
        %v3167 = vld [vmem:[#allocation2 + $0x120] sm:$0xe]
        %v3168 = vld [vmem:[#allocation2 + $0x12c] sm:$0xe]
        %v3169 = vld [vmem:[#allocation2 + $0x138] sm:$0xe]
        %v3170 = vld [vmem:[#allocation2 + $0x144] sm:$0xe]
        %v3171 = vld [vmem:[#allocation2 + $0x150] sm:$0xe]
        %v3172 = vld [vmem:[#allocation2 + $0x15c] sm:$0xe]
        %v3173 = vld [vmem:[#allocation2 + $0x168] sm:$0xe]
        %v3174 = vld [vmem:[#allocation2 + $0x174] sm:$0xe]
        %v3175 = vld [vmem:[#allocation2 + $0x180] sm:$0xe]
        %v3176 = vld [vmem:[#allocation2 + $0x18c] sm:$0xe]
        %vm3273 = vcmask 1042432
        %vm3274 = vcmask 1046532
        %vm3275 = vmor %vm3273, %vm3274
        %v3276 = vrot.slane %v3145, 5
        %v3277 = vrot.slane %v3276, 4
        %v3278 = vrot.slane %v2279, 5
        %v3279 = vsel %vm3275, %v3277, %v3278
        %v3280 = vrot.slane %v3278, 4
        %v3281 = vrot.slane %v2342, 5
        %v3282 = vsel %vm3275, %v3280, %v3281
        %v3283 = vrot.slane %v3146, 5
        %v3284 = vrot.slane %v3283, 4
        %v3285 = vrot.slane %v2281, 5
        %v3286 = vsel %vm3275, %v3284, %v3285
        %v3287 = vrot.slane %v3285, 4
        %v3288 = vrot.slane %v2343, 5
        %v3289 = vsel %vm3275, %v3287, %v3288
        %v3290 = vrot.slane %v3147, 5
        %v3291 = vrot.slane %v3290, 4
        %v3292 = vrot.slane %v2283, 5
        %v3293 = vsel %vm3275, %v3291, %v3292
        %v3294 = vrot.slane %v3292, 4
        %v3295 = vrot.slane %v2344, 5
        %v3296 = vsel %vm3275, %v3294, %v3295
        %v3297 = vrot.slane %v3148, 5
        %v3298 = vrot.slane %v3297, 4
        %v3299 = vrot.slane %v2285, 5
        %v3300 = vsel %vm3275, %v3298, %v3299
        %v3301 = vrot.slane %v3299, 4
        %v3302 = vrot.slane %v2345, 5
        %v3303 = vsel %vm3275, %v3301, %v3302
        %v3304 = vrot.slane %v3149, 5
        %v3305 = vrot.slane %v3304, 4
        %v3306 = vrot.slane %v2287, 5
        %v3307 = vsel %vm3275, %v3305, %v3306
        %v3308 = vrot.slane %v3306, 4
        %v3309 = vrot.slane %v2346, 5
        %v3310 = vsel %vm3275, %v3308, %v3309
        %v3311 = vrot.slane %v3150, 5
        %v3312 = vrot.slane %v3311, 4
        %v3313 = vrot.slane %v2289, 5
        %v3314 = vsel %vm3275, %v3312, %v3313
        %v3315 = vrot.slane %v3313, 4
        %v3316 = vrot.slane %v2347, 5
        %v3317 = vsel %vm3275, %v3315, %v3316
        %v3318 = vrot.slane %v3151, 5
        %v3319 = vrot.slane %v3318, 4
        %v3320 = vrot.slane %v2291, 5
        %v3321 = vsel %vm3275, %v3319, %v3320
        %v3322 = vrot.slane %v3320, 4
        %v3323 = vrot.slane %v2348, 5
        %v3324 = vsel %vm3275, %v3322, %v3323
        %v3325 = vrot.slane %v3152, 5
        %v3326 = vrot.slane %v3325, 4
        %v3327 = vrot.slane %v2293, 5
        %v3328 = vsel %vm3275, %v3326, %v3327
        %v3329 = vrot.slane %v3327, 4
        %v3330 = vrot.slane %v2349, 5
        %v3331 = vsel %vm3275, %v3329, %v3330
        %v3332 = vrot.slane %v3153, 5
        %v3333 = vrot.slane %v3332, 4
        %v3334 = vrot.slane %v2295, 5
        %v3335 = vsel %vm3275, %v3333, %v3334
        %v3336 = vrot.slane %v3334, 4
        %v3337 = vrot.slane %v2350, 5
        %v3338 = vsel %vm3275, %v3336, %v3337
        %v3339 = vrot.slane %v3154, 5
        %v3340 = vrot.slane %v3339, 4
        %v3341 = vrot.slane %v2297, 5
        %v3342 = vsel %vm3275, %v3340, %v3341
        %v3343 = vrot.slane %v3341, 4
        %v3344 = vrot.slane %v2351, 5
        %v3345 = vsel %vm3275, %v3343, %v3344
        %v3346 = vrot.slane %v3155, 5
        %v3347 = vrot.slane %v3346, 4
        %v3348 = vrot.slane %v2299, 5
        %v3349 = vsel %vm3275, %v3347, %v3348
        %v3350 = vrot.slane %v3348, 4
        %v3351 = vrot.slane %v2352, 5
        %v3352 = vsel %vm3275, %v3350, %v3351
        %v3353 = vrot.slane %v3156, 5
        %v3354 = vrot.slane %v3353, 4
        %v3355 = vrot.slane %v2301, 5
        %v3356 = vsel %vm3275, %v3354, %v3355
        %v3357 = vrot.slane %v3355, 4
        %v3358 = vrot.slane %v2353, 5
        %v3359 = vsel %vm3275, %v3357, %v3358
        %v3360 = vrot.slane %v3157, 5
        %v3361 = vrot.slane %v3360, 4
        %v3362 = vrot.slane %v2303, 5
        %v3363 = vsel %vm3275, %v3361, %v3362
        %v3364 = vrot.slane %v3362, 4
        %v3365 = vrot.slane %v2354, 5
        %v3366 = vsel %vm3275, %v3364, %v3365
        %v3367 = vrot.slane %v3158, 5
        %v3368 = vrot.slane %v3367, 4
        %v3369 = vrot.slane %v2305, 5
        %v3370 = vsel %vm3275, %v3368, %v3369
        %v3371 = vrot.slane %v3369, 4
        %v3372 = vrot.slane %v2355, 5
        %v3373 = vsel %vm3275, %v3371, %v3372
        %v3374 = vrot.slane %v3159, 5
        %v3375 = vrot.slane %v3374, 4
        %v3376 = vrot.slane %v2307, 5
        %v3377 = vsel %vm3275, %v3375, %v3376
        %v3378 = vrot.slane %v3376, 4
        %v3379 = vrot.slane %v2356, 5
        %v3380 = vsel %vm3275, %v3378, %v3379
        %v3381 = vrot.slane %v3160, 5
        %v3382 = vrot.slane %v3381, 4
        %v3383 = vrot.slane %v2309, 5
        %v3384 = vsel %vm3275, %v3382, %v3383
        %v3385 = vrot.slane %v3383, 4
        %v3386 = vrot.slane %v2357, 5
        %v3387 = vsel %vm3275, %v3385, %v3386
        %v3388 = vrot.slane %v3161, 5
        %v3389 = vrot.slane %v3388, 4
        %v3390 = vrot.slane %v2311, 5
        %v3391 = vsel %vm3275, %v3389, %v3390
        %v3392 = vrot.slane %v3390, 4
        %v3393 = vrot.slane %v2358, 5
        %v3394 = vsel %vm3275, %v3392, %v3393
        %v3395 = vrot.slane %v3162, 5
        %v3396 = vrot.slane %v3395, 4
        %v3397 = vrot.slane %v2313, 5
        %v3398 = vsel %vm3275, %v3396, %v3397
        %v3399 = vrot.slane %v3397, 4
        %v3400 = vrot.slane %v2359, 5
        %v3401 = vsel %vm3275, %v3399, %v3400
        %v3402 = vrot.slane %v3163, 5
        %v3403 = vrot.slane %v3402, 4
        %v3404 = vrot.slane %v2315, 5
        %v3405 = vsel %vm3275, %v3403, %v3404
        %v3406 = vrot.slane %v3404, 4
        %v3407 = vrot.slane %v2360, 5
        %v3408 = vsel %vm3275, %v3406, %v3407
        %v3409 = vrot.slane %v3164, 5
        %v3410 = vrot.slane %v3409, 4
        %v3411 = vrot.slane %v2317, 5
        %v3412 = vsel %vm3275, %v3410, %v3411
        %v3413 = vrot.slane %v3411, 4
        %v3414 = vrot.slane %v2361, 5
        %v3415 = vsel %vm3275, %v3413, %v3414
        %v3416 = vrot.slane %v3165, 5
        %v3417 = vrot.slane %v3416, 4
        %v3418 = vrot.slane %v2319, 5
        %v3419 = vsel %vm3275, %v3417, %v3418
        %v3420 = vrot.slane %v3418, 4
        %v3421 = vrot.slane %v2362, 5
        %v3422 = vsel %vm3275, %v3420, %v3421
        %v3423 = vrot.slane %v3166, 5
        %v3424 = vrot.slane %v3423, 4
        %v3425 = vrot.slane %v2321, 5
        %v3426 = vsel %vm3275, %v3424, %v3425
        %v3427 = vrot.slane %v3425, 4
        %v3428 = vrot.slane %v2363, 5
        %v3429 = vsel %vm3275, %v3427, %v3428
        %v3430 = vrot.slane %v3167, 5
        %v3431 = vrot.slane %v3430, 4
        %v3432 = vrot.slane %v2323, 5
        %v3433 = vsel %vm3275, %v3431, %v3432
        %v3434 = vrot.slane %v3432, 4
        %v3435 = vrot.slane %v2364, 5
        %v3436 = vsel %vm3275, %v3434, %v3435
        %v3437 = vrot.slane %v3168, 5
        %v3438 = vrot.slane %v3437, 4
        %v3439 = vrot.slane %v2325, 5
        %v3440 = vsel %vm3275, %v3438, %v3439
        %v3441 = vrot.slane %v3439, 4
        %v3442 = vrot.slane %v2365, 5
        %v3443 = vsel %vm3275, %v3441, %v3442
        %v3444 = vrot.slane %v3169, 5
        %v3445 = vrot.slane %v3444, 4
        %v3446 = vrot.slane %v2327, 5
        %v3447 = vsel %vm3275, %v3445, %v3446
        %v3448 = vrot.slane %v3446, 4
        %v3449 = vrot.slane %v2366, 5
        %v3450 = vsel %vm3275, %v3448, %v3449
        %v3451 = vrot.slane %v3170, 5
        %v3452 = vrot.slane %v3451, 4
        %v3453 = vrot.slane %v2329, 5
        %v3454 = vsel %vm3275, %v3452, %v3453
        %v3455 = vrot.slane %v3453, 4
        %v3456 = vrot.slane %v2367, 5
        %v3457 = vsel %vm3275, %v3455, %v3456
        %v3458 = vrot.slane %v3171, 5
        %v3459 = vrot.slane %v3458, 4
        %v3460 = vrot.slane %v2331, 5
        %v3461 = vsel %vm3275, %v3459, %v3460
        %v3462 = vrot.slane %v3460, 4
        %v3463 = vrot.slane %v2368, 5
        %v3464 = vsel %vm3275, %v3462, %v3463
        %v3465 = vrot.slane %v3172, 5
        %v3466 = vrot.slane %v3465, 4
        %v3467 = vrot.slane %v2333, 5
        %v3468 = vsel %vm3275, %v3466, %v3467
        %v3469 = vrot.slane %v3467, 4
        %v3470 = vrot.slane %v2369, 5
        %v3471 = vsel %vm3275, %v3469, %v3470
        %v3472 = vrot.slane %v3173, 5
        %v3473 = vrot.slane %v3472, 4
        %v3474 = vrot.slane %v2335, 5
        %v3475 = vsel %vm3275, %v3473, %v3474
        %v3476 = vrot.slane %v3474, 4
        %v3477 = vrot.slane %v2370, 5
        %v3478 = vsel %vm3275, %v3476, %v3477
        %v3479 = vrot.slane %v3174, 5
        %v3480 = vrot.slane %v3479, 4
        %v3481 = vrot.slane %v2337, 5
        %v3482 = vsel %vm3275, %v3480, %v3481
        %v3483 = vrot.slane %v3481, 4
        %v3484 = vrot.slane %v2371, 5
        %v3485 = vsel %vm3275, %v3483, %v3484
        %v3486 = vrot.slane %v3175, 5
        %v3487 = vrot.slane %v3486, 4
        %v3488 = vrot.slane %v2339, 5
        %v3489 = vsel %vm3275, %v3487, %v3488
        %v3490 = vrot.slane %v3488, 4
        %v3491 = vrot.slane %v2372, 5
        %v3492 = vsel %vm3275, %v3490, %v3491
        %v3493 = vrot.slane %v3176, 5
        %v3494 = vrot.slane %v3493, 4
        %v3495 = vrot.slane %v2341, 5
        %v3496 = vsel %vm3275, %v3494, %v3495
        %v3497 = vrot.slane %v3495, 4
        %v3498 = vrot.slane %v2373, 5
        %v3499 = vsel %vm3275, %v3497, %v3498
        %v3500 = vld [vmem:[%s2051] sm:$0xf]
        %v3501 = vld [vmem:[%s2051 + $0x4] sm:$0xf]
        %v3502 = vld [vmem:[%s2051 + $0xc] sm:$0xf]
        %v3503 = vld [vmem:[%s2051 + $0x10] sm:$0xf]
        %v3504 = vld [vmem:[%s2051 + $0x18] sm:$0xf]
        %v3505 = vld [vmem:[%s2051 + $0x1c] sm:$0xf]
        %v3506 = vld [vmem:[%s2051 + $0x24] sm:$0xf]
        %v3507 = vld [vmem:[%s2051 + $0x28] sm:$0xf]
        %v3508 = vld [vmem:[%s2051 + $0x30] sm:$0xf]
        %v3509 = vld [vmem:[%s2051 + $0x34] sm:$0xf]
        %v3510 = vld [vmem:[%s2051 + $0x3c] sm:$0xf]
        %v3511 = vld [vmem:[%s2051 + $0x40] sm:$0xf]
        %v3512 = vld [vmem:[%s2051 + $0x48] sm:$0xf]
        %v3513 = vld [vmem:[%s2051 + $0x4c] sm:$0xf]
        %v3514 = vld [vmem:[%s2051 + $0x54] sm:$0xf]
        %v3515 = vld [vmem:[%s2051 + $0x58] sm:$0xf]
        %v3516 = vld [vmem:[%s2051 + $0x60] sm:$0xf]
        %v3517 = vld [vmem:[%s2051 + $0x64] sm:$0xf]
        %v3518 = vld [vmem:[%s2051 + $0x6c] sm:$0xf]
        %v3519 = vld [vmem:[%s2051 + $0x70] sm:$0xf]
        %v3520 = vld [vmem:[%s2051 + $0x78] sm:$0xf]
        %v3521 = vld [vmem:[%s2051 + $0x7c] sm:$0xf]
        %v3522 = vld [vmem:[%s2051 + $0x84] sm:$0xf]
        %v3523 = vld [vmem:[%s2051 + $0x88] sm:$0xf]
        %v3524 = vld [vmem:[%s2051 + $0x90] sm:$0xf]
        %v3525 = vld [vmem:[%s2051 + $0x94] sm:$0xf]
        %v3526 = vld [vmem:[%s2051 + $0x9c] sm:$0xf]
        %v3527 = vld [vmem:[%s2051 + $0xa0] sm:$0xf]
        %v3528 = vld [vmem:[%s2051 + $0xa8] sm:$0xf]
        %v3529 = vld [vmem:[%s2051 + $0xac] sm:$0xf]
        %v3530 = vld [vmem:[%s2051 + $0xb4] sm:$0xf]
        %v3531 = vld [vmem:[%s2051 + $0xb8] sm:$0xf]
        %v3532 = vld [vmem:[%s2051 + $0xd8] sm:$0xf]
        %v3533 = vld [vmem:[%s2051 + $0xdc] sm:$0xf]
        %v3534 = vld [vmem:[%s2051 + $0xe4] sm:$0xf]
        %v3535 = vld [vmem:[%s2051 + $0xe8] sm:$0xf]
        %v3536 = vld [vmem:[%s2051 + $0xf0] sm:$0xf]
        %v3537 = vld [vmem:[%s2051 + $0xf4] sm:$0xf]
        %v3538 = vld [vmem:[%s2051 + $0xfc] sm:$0xf]
        %v3539 = vld [vmem:[%s2051 + $0x100] sm:$0xf]
        %v3540 = vld [vmem:[%s2051 + $0x108] sm:$0xf]
        %v3541 = vld [vmem:[%s2051 + $0x10c] sm:$0xf]
        %v3542 = vld [vmem:[%s2051 + $0x114] sm:$0xf]
        %v3543 = vld [vmem:[%s2051 + $0x118] sm:$0xf]
        %v3544 = vld [vmem:[%s2051 + $0x120] sm:$0xf]
        %v3545 = vld [vmem:[%s2051 + $0x124] sm:$0xf]
        %v3546 = vld [vmem:[%s2051 + $0x12c] sm:$0xf]
        %v3547 = vld [vmem:[%s2051 + $0x130] sm:$0xf]
        %v3548 = vld [vmem:[%s2051 + $0x138] sm:$0xf]
        %v3549 = vld [vmem:[%s2051 + $0x13c] sm:$0xf]
        %v3550 = vld [vmem:[%s2051 + $0x144] sm:$0xf]
        %v3551 = vld [vmem:[%s2051 + $0x148] sm:$0xf]
        %v3552 = vld [vmem:[%s2051 + $0x150] sm:$0xf]
        %v3553 = vld [vmem:[%s2051 + $0x154] sm:$0xf]
        %v3554 = vld [vmem:[%s2051 + $0x15c] sm:$0xf]
        %v3555 = vld [vmem:[%s2051 + $0x160] sm:$0xf]
        %v3556 = vld [vmem:[%s2051 + $0x168] sm:$0xf]
        %v3557 = vld [vmem:[%s2051 + $0x16c] sm:$0xf]
        %v3558 = vld [vmem:[%s2051 + $0x174] sm:$0xf]
        %v3559 = vld [vmem:[%s2051 + $0x178] sm:$0xf]
        %v3560 = vld [vmem:[%s2051 + $0x180] sm:$0xf]
        %v3561 = vld [vmem:[%s2051 + $0x184] sm:$0xf]
        %v3562 = vld [vmem:[%s2051 + $0x18c] sm:$0xf]
        %v3563 = vld [vmem:[%s2051 + $0x190] sm:$0xf]
        %v3564 = vld [vmem:[%s2051 + $0x8] sm:$0x1]
        %v3565 = vld [vmem:[%s2051 + $0x14] sm:$0x1]
        %v3566 = vld [vmem:[%s2051 + $0x20] sm:$0x1]
        %v3567 = vld [vmem:[%s2051 + $0x2c] sm:$0x1]
        %v3568 = vld [vmem:[%s2051 + $0x38] sm:$0x1]
        %v3569 = vld [vmem:[%s2051 + $0x44] sm:$0x1]
        %v3570 = vld [vmem:[%s2051 + $0x50] sm:$0x1]
        %v3571 = vld [vmem:[%s2051 + $0x5c] sm:$0x1]
        %v3572 = vld [vmem:[%s2051 + $0x68] sm:$0x1]
        %v3573 = vld [vmem:[%s2051 + $0x74] sm:$0x1]
        %v3574 = vld [vmem:[%s2051 + $0x80] sm:$0x1]
        %v3575 = vld [vmem:[%s2051 + $0x8c] sm:$0x1]
        %v3576 = vld [vmem:[%s2051 + $0x98] sm:$0x1]
        %v3577 = vld [vmem:[%s2051 + $0xa4] sm:$0x1]
        %v3578 = vld [vmem:[%s2051 + $0xb0] sm:$0x1]
        %v3579 = vld [vmem:[%s2051 + $0xbc] sm:$0x1]
        %v3580 = vld [vmem:[%s2051 + $0xe0] sm:$0x1]
        %v3581 = vld [vmem:[%s2051 + $0xec] sm:$0x1]
        %v3582 = vld [vmem:[%s2051 + $0xf8] sm:$0x1]
        %v3583 = vld [vmem:[%s2051 + $0x104] sm:$0x1]
        %v3584 = vld [vmem:[%s2051 + $0x110] sm:$0x1]
        %v3585 = vld [vmem:[%s2051 + $0x11c] sm:$0x1]
        %v3586 = vld [vmem:[%s2051 + $0x128] sm:$0x1]
        %v3587 = vld [vmem:[%s2051 + $0x134] sm:$0x1]
        %v3588 = vld [vmem:[%s2051 + $0x140] sm:$0x1]
        %v3589 = vld [vmem:[%s2051 + $0x14c] sm:$0x1]
        %v3590 = vld [vmem:[%s2051 + $0x158] sm:$0x1]
        %v3591 = vld [vmem:[%s2051 + $0x164] sm:$0x1]
        %v3592 = vld [vmem:[%s2051 + $0x170] sm:$0x1]
        %v3593 = vld [vmem:[%s2051 + $0x17c] sm:$0x1]
        %v3594 = vld [vmem:[%s2051 + $0x188] sm:$0x1]
        %v3595 = vld [vmem:[%s2051 + $0x194] sm:$0x1]
        %v3597 = vshrl.u32 %v3500, 16
        %v3599 = vrot.slane %v3597, 4
        %v3600 = vshll.u32 %v3500, 16
        %v3602 = vrot.slane %v3600, 5
        %v3603 = vor.u32 %v3599, %v3602
        %v3604 = vrot.slane %v3603, 4
        %v3606 = vshll.u32 %v3501, 16
        %v3608 = vrot.slane %v3606, 5
        %v3609 = vsel %vm2376, %v3604, %v3608
        %v3610 = vshrl.u32 %v3501, 16
        %v3612 = vrot.slane %v3610, 4
        %v3613 = vor.u32 %v3612, %v3608
        %v3614 = vrot.slane %v3613, 4
        %v3616 = vshll.u32 %v3564, 16
        %v3618 = vrot.slane %v3616, 5
        %v3619 = vsel %vm2376, %v3614, %v3618
        %v3621 = vshrl.u32 %v3502, 16
        %v3623 = vrot.slane %v3621, 4
        %v3624 = vshll.u32 %v3502, 16
        %v3626 = vrot.slane %v3624, 5
        %v3627 = vor.u32 %v3623, %v3626
        %v3628 = vrot.slane %v3627, 4
        %v3630 = vshll.u32 %v3503, 16
        %v3632 = vrot.slane %v3630, 5
        %v3633 = vsel %vm2376, %v3628, %v3632
        %v3634 = vshrl.u32 %v3503, 16
        %v3636 = vrot.slane %v3634, 4
        %v3637 = vor.u32 %v3636, %v3632
        %v3638 = vrot.slane %v3637, 4
        %v3640 = vshll.u32 %v3565, 16
        %v3642 = vrot.slane %v3640, 5
        %v3643 = vsel %vm2376, %v3638, %v3642
        %v3645 = vshrl.u32 %v3504, 16
        %v3647 = vrot.slane %v3645, 4
        %v3648 = vshll.u32 %v3504, 16
        %v3650 = vrot.slane %v3648, 5
        %v3651 = vor.u32 %v3647, %v3650
        %v3652 = vrot.slane %v3651, 4
        %v3654 = vshll.u32 %v3505, 16
        %v3656 = vrot.slane %v3654, 5
        %v3657 = vsel %vm2376, %v3652, %v3656
        %v3658 = vshrl.u32 %v3505, 16
        %v3660 = vrot.slane %v3658, 4
        %v3661 = vor.u32 %v3660, %v3656
        %v3662 = vrot.slane %v3661, 4
        %v3664 = vshll.u32 %v3566, 16
        %v3666 = vrot.slane %v3664, 5
        %v3667 = vsel %vm2376, %v3662, %v3666
        %v3669 = vshrl.u32 %v3506, 16
        %v3671 = vrot.slane %v3669, 4
        %v3672 = vshll.u32 %v3506, 16
        %v3674 = vrot.slane %v3672, 5
        %v3675 = vor.u32 %v3671, %v3674
        %v3676 = vrot.slane %v3675, 4
        %v3678 = vshll.u32 %v3507, 16
        %v3680 = vrot.slane %v3678, 5
        %v3681 = vsel %vm2376, %v3676, %v3680
        %v3682 = vshrl.u32 %v3507, 16
        %v3684 = vrot.slane %v3682, 4
        %v3685 = vor.u32 %v3684, %v3680
        %v3686 = vrot.slane %v3685, 4
        %v3688 = vshll.u32 %v3567, 16
        %v3690 = vrot.slane %v3688, 5
        %v3691 = vsel %vm2376, %v3686, %v3690
        %v3693 = vshrl.u32 %v3508, 16
        %v3695 = vrot.slane %v3693, 4
        %v3696 = vshll.u32 %v3508, 16
        %v3698 = vrot.slane %v3696, 5
        %v3699 = vor.u32 %v3695, %v3698
        %v3700 = vrot.slane %v3699, 4
        %v3702 = vshll.u32 %v3509, 16
        %v3704 = vrot.slane %v3702, 5
        %v3705 = vsel %vm2376, %v3700, %v3704
        %v3706 = vshrl.u32 %v3509, 16
        %v3708 = vrot.slane %v3706, 4
        %v3709 = vor.u32 %v3708, %v3704
        %v3710 = vrot.slane %v3709, 4
        %v3712 = vshll.u32 %v3568, 16
        %v3714 = vrot.slane %v3712, 5
        %v3715 = vsel %vm2376, %v3710, %v3714
        %v3717 = vshrl.u32 %v3510, 16
        %v3719 = vrot.slane %v3717, 4
        %v3720 = vshll.u32 %v3510, 16
        %v3722 = vrot.slane %v3720, 5
        %v3723 = vor.u32 %v3719, %v3722
        %v3724 = vrot.slane %v3723, 4
        %v3726 = vshll.u32 %v3511, 16
        %v3728 = vrot.slane %v3726, 5
        %v3729 = vsel %vm2376, %v3724, %v3728
        %v3730 = vshrl.u32 %v3511, 16
        %v3732 = vrot.slane %v3730, 4
        %v3733 = vor.u32 %v3732, %v3728
        %v3734 = vrot.slane %v3733, 4
        %v3736 = vshll.u32 %v3569, 16
        %v3738 = vrot.slane %v3736, 5
        %v3739 = vsel %vm2376, %v3734, %v3738
        %v3741 = vshrl.u32 %v3512, 16
        %v3743 = vrot.slane %v3741, 4
        %v3744 = vshll.u32 %v3512, 16
        %v3746 = vrot.slane %v3744, 5
        %v3747 = vor.u32 %v3743, %v3746
        %v3748 = vrot.slane %v3747, 4
        %v3750 = vshll.u32 %v3513, 16
        %v3752 = vrot.slane %v3750, 5
        %v3753 = vsel %vm2376, %v3748, %v3752
        %v3754 = vshrl.u32 %v3513, 16
        %v3756 = vrot.slane %v3754, 4
        %v3757 = vor.u32 %v3756, %v3752
        %v3758 = vrot.slane %v3757, 4
        %v3760 = vshll.u32 %v3570, 16
        %v3762 = vrot.slane %v3760, 5
        %v3763 = vsel %vm2376, %v3758, %v3762
        %v3765 = vshrl.u32 %v3514, 16
        %v3767 = vrot.slane %v3765, 4
        %v3768 = vshll.u32 %v3514, 16
        %v3770 = vrot.slane %v3768, 5
        %v3771 = vor.u32 %v3767, %v3770
        %v3772 = vrot.slane %v3771, 4
        %v3774 = vshll.u32 %v3515, 16
        %v3776 = vrot.slane %v3774, 5
        %v3777 = vsel %vm2376, %v3772, %v3776
        %v3778 = vshrl.u32 %v3515, 16
        %v3780 = vrot.slane %v3778, 4
        %v3781 = vor.u32 %v3780, %v3776
        %v3782 = vrot.slane %v3781, 4
        %v3784 = vshll.u32 %v3571, 16
        %v3786 = vrot.slane %v3784, 5
        %v3787 = vsel %vm2376, %v3782, %v3786
        %v3789 = vshrl.u32 %v3516, 16
        %v3791 = vrot.slane %v3789, 4
        %v3792 = vshll.u32 %v3516, 16
        %v3794 = vrot.slane %v3792, 5
        %v3795 = vor.u32 %v3791, %v3794
        %v3796 = vrot.slane %v3795, 4
        %v3798 = vshll.u32 %v3517, 16
        %v3800 = vrot.slane %v3798, 5
        %v3801 = vsel %vm2376, %v3796, %v3800
        %v3802 = vshrl.u32 %v3517, 16
        %v3804 = vrot.slane %v3802, 4
        %v3805 = vor.u32 %v3804, %v3800
        %v3806 = vrot.slane %v3805, 4
        %v3808 = vshll.u32 %v3572, 16
        %v3810 = vrot.slane %v3808, 5
        %v3811 = vsel %vm2376, %v3806, %v3810
        %v3813 = vshrl.u32 %v3518, 16
        %v3815 = vrot.slane %v3813, 4
        %v3816 = vshll.u32 %v3518, 16
        %v3818 = vrot.slane %v3816, 5
        %v3819 = vor.u32 %v3815, %v3818
        %v3820 = vrot.slane %v3819, 4
        %v3822 = vshll.u32 %v3519, 16
        %v3824 = vrot.slane %v3822, 5
        %v3825 = vsel %vm2376, %v3820, %v3824
        %v3826 = vshrl.u32 %v3519, 16
        %v3828 = vrot.slane %v3826, 4
        %v3829 = vor.u32 %v3828, %v3824
        %v3830 = vrot.slane %v3829, 4
        %v3832 = vshll.u32 %v3573, 16
        %v3834 = vrot.slane %v3832, 5
        %v3835 = vsel %vm2376, %v3830, %v3834
        %v3837 = vshrl.u32 %v3520, 16
        %v3839 = vrot.slane %v3837, 4
        %v3840 = vshll.u32 %v3520, 16
        %v3842 = vrot.slane %v3840, 5
        %v3843 = vor.u32 %v3839, %v3842
        %v3844 = vrot.slane %v3843, 4
        %v3846 = vshll.u32 %v3521, 16
        %v3848 = vrot.slane %v3846, 5
        %v3849 = vsel %vm2376, %v3844, %v3848
        %v3850 = vshrl.u32 %v3521, 16
        %v3852 = vrot.slane %v3850, 4
        %v3853 = vor.u32 %v3852, %v3848
        %v3854 = vrot.slane %v3853, 4
        %v3856 = vshll.u32 %v3574, 16
        %v3858 = vrot.slane %v3856, 5
        %v3859 = vsel %vm2376, %v3854, %v3858
        %v3861 = vshrl.u32 %v3522, 16
        %v3863 = vrot.slane %v3861, 4
        %v3864 = vshll.u32 %v3522, 16
        %v3866 = vrot.slane %v3864, 5
        %v3867 = vor.u32 %v3863, %v3866
        %v3868 = vrot.slane %v3867, 4
        %v3870 = vshll.u32 %v3523, 16
        %v3872 = vrot.slane %v3870, 5
        %v3873 = vsel %vm2376, %v3868, %v3872
        %v3874 = vshrl.u32 %v3523, 16
        %v3876 = vrot.slane %v3874, 4
        %v3877 = vor.u32 %v3876, %v3872
        %v3878 = vrot.slane %v3877, 4
        %v3880 = vshll.u32 %v3575, 16
        %v3882 = vrot.slane %v3880, 5
        %v3883 = vsel %vm2376, %v3878, %v3882
        %v3885 = vshrl.u32 %v3524, 16
        %v3887 = vrot.slane %v3885, 4
        %v3888 = vshll.u32 %v3524, 16
        %v3890 = vrot.slane %v3888, 5
        %v3891 = vor.u32 %v3887, %v3890
        %v3892 = vrot.slane %v3891, 4
        %v3894 = vshll.u32 %v3525, 16
        %v3896 = vrot.slane %v3894, 5
        %v3897 = vsel %vm2376, %v3892, %v3896
        %v3898 = vshrl.u32 %v3525, 16
        %v3900 = vrot.slane %v3898, 4
        %v3901 = vor.u32 %v3900, %v3896
        %v3902 = vrot.slane %v3901, 4
        %v3904 = vshll.u32 %v3576, 16
        %v3906 = vrot.slane %v3904, 5
        %v3907 = vsel %vm2376, %v3902, %v3906
        %v3909 = vshrl.u32 %v3526, 16
        %v3911 = vrot.slane %v3909, 4
        %v3912 = vshll.u32 %v3526, 16
        %v3914 = vrot.slane %v3912, 5
        %v3915 = vor.u32 %v3911, %v3914
        %v3916 = vrot.slane %v3915, 4
        %v3918 = vshll.u32 %v3527, 16
        %v3920 = vrot.slane %v3918, 5
        %v3921 = vsel %vm2376, %v3916, %v3920
        %v3922 = vshrl.u32 %v3527, 16
        %v3924 = vrot.slane %v3922, 4
        %v3925 = vor.u32 %v3924, %v3920
        %v3926 = vrot.slane %v3925, 4
        %v3928 = vshll.u32 %v3577, 16
        %v3930 = vrot.slane %v3928, 5
        %v3931 = vsel %vm2376, %v3926, %v3930
        %v3933 = vshrl.u32 %v3528, 16
        %v3935 = vrot.slane %v3933, 4
        %v3936 = vshll.u32 %v3528, 16
        %v3938 = vrot.slane %v3936, 5
        %v3939 = vor.u32 %v3935, %v3938
        %v3940 = vrot.slane %v3939, 4
        %v3942 = vshll.u32 %v3529, 16
        %v3944 = vrot.slane %v3942, 5
        %v3945 = vsel %vm2376, %v3940, %v3944
        %v3946 = vshrl.u32 %v3529, 16
        %v3948 = vrot.slane %v3946, 4
        %v3949 = vor.u32 %v3948, %v3944
        %v3950 = vrot.slane %v3949, 4
        %v3952 = vshll.u32 %v3578, 16
        %v3954 = vrot.slane %v3952, 5
        %v3955 = vsel %vm2376, %v3950, %v3954
        %v3957 = vshrl.u32 %v3530, 16
        %v3959 = vrot.slane %v3957, 4
        %v3960 = vshll.u32 %v3530, 16
        %v3962 = vrot.slane %v3960, 5
        %v3963 = vor.u32 %v3959, %v3962
        %v3964 = vrot.slane %v3963, 4
        %v3966 = vshll.u32 %v3531, 16
        %v3968 = vrot.slane %v3966, 5
        %v3969 = vsel %vm2376, %v3964, %v3968
        %v3970 = vshrl.u32 %v3531, 16
        %v3972 = vrot.slane %v3970, 4
        %v3973 = vor.u32 %v3972, %v3968
        %v3974 = vrot.slane %v3973, 4
        %v3976 = vshll.u32 %v3579, 16
        %v3978 = vrot.slane %v3976, 5
        %v3979 = vsel %vm2376, %v3974, %v3978
        %v3981 = vshrl.u32 %v3532, 16
        %v3983 = vrot.slane %v3981, 4
        %v3984 = vshll.u32 %v3532, 16
        %v3986 = vrot.slane %v3984, 5
        %v3987 = vor.u32 %v3983, %v3986
        %v3988 = vrot.slane %v3987, 4
        %v3990 = vshll.u32 %v3533, 16
        %v3992 = vrot.slane %v3990, 5
        %v3993 = vsel %vm2376, %v3988, %v3992
        %v3994 = vshrl.u32 %v3533, 16
        %v3996 = vrot.slane %v3994, 4
        %v3997 = vor.u32 %v3996, %v3992
        %v3998 = vrot.slane %v3997, 4
        %v4000 = vshll.u32 %v3580, 16
        %v4002 = vrot.slane %v4000, 5
        %v4003 = vsel %vm2376, %v3998, %v4002
        %v4005 = vshrl.u32 %v3534, 16
        %v4007 = vrot.slane %v4005, 4
        %v4008 = vshll.u32 %v3534, 16
        %v4010 = vrot.slane %v4008, 5
        %v4011 = vor.u32 %v4007, %v4010
        %v4012 = vrot.slane %v4011, 4
        %v4014 = vshll.u32 %v3535, 16
        %v4016 = vrot.slane %v4014, 5
        %v4017 = vsel %vm2376, %v4012, %v4016
        %v4018 = vshrl.u32 %v3535, 16
        %v4020 = vrot.slane %v4018, 4
        %v4021 = vor.u32 %v4020, %v4016
        %v4022 = vrot.slane %v4021, 4
        %v4024 = vshll.u32 %v3581, 16
        %v4026 = vrot.slane %v4024, 5
        %v4027 = vsel %vm2376, %v4022, %v4026
        %v4029 = vshrl.u32 %v3536, 16
        %v4031 = vrot.slane %v4029, 4
        %v4032 = vshll.u32 %v3536, 16
        %v4034 = vrot.slane %v4032, 5
        %v4035 = vor.u32 %v4031, %v4034
        %v4036 = vrot.slane %v4035, 4
        %v4038 = vshll.u32 %v3537, 16
        %v4040 = vrot.slane %v4038, 5
        %v4041 = vsel %vm2376, %v4036, %v4040
        %v4042 = vshrl.u32 %v3537, 16
        %v4044 = vrot.slane %v4042, 4
        %v4045 = vor.u32 %v4044, %v4040
        %v4046 = vrot.slane %v4045, 4
        %v4048 = vshll.u32 %v3582, 16
        %v4050 = vrot.slane %v4048, 5
        %v4051 = vsel %vm2376, %v4046, %v4050
        %v4053 = vshrl.u32 %v3538, 16
        %v4055 = vrot.slane %v4053, 4
        %v4056 = vshll.u32 %v3538, 16
        %v4058 = vrot.slane %v4056, 5
        %v4059 = vor.u32 %v4055, %v4058
        %v4060 = vrot.slane %v4059, 4
        %v4062 = vshll.u32 %v3539, 16
        %v4064 = vrot.slane %v4062, 5
        %v4065 = vsel %vm2376, %v4060, %v4064
        %v4066 = vshrl.u32 %v3539, 16
        %v4068 = vrot.slane %v4066, 4
        %v4069 = vor.u32 %v4068, %v4064
        %v4070 = vrot.slane %v4069, 4
        %v4072 = vshll.u32 %v3583, 16
        %v4074 = vrot.slane %v4072, 5
        %v4075 = vsel %vm2376, %v4070, %v4074
        %v4077 = vshrl.u32 %v3540, 16
        %v4079 = vrot.slane %v4077, 4
        %v4080 = vshll.u32 %v3540, 16
        %v4082 = vrot.slane %v4080, 5
        %v4083 = vor.u32 %v4079, %v4082
        %v4084 = vrot.slane %v4083, 4
        %v4086 = vshll.u32 %v3541, 16
        %v4088 = vrot.slane %v4086, 5
        %v4089 = vsel %vm2376, %v4084, %v4088
        %v4090 = vshrl.u32 %v3541, 16
        %v4092 = vrot.slane %v4090, 4
        %v4093 = vor.u32 %v4092, %v4088
        %v4094 = vrot.slane %v4093, 4
        %v4096 = vshll.u32 %v3584, 16
        %v4098 = vrot.slane %v4096, 5
        %v4099 = vsel %vm2376, %v4094, %v4098
        %v4101 = vshrl.u32 %v3542, 16
        %v4103 = vrot.slane %v4101, 4
        %v4104 = vshll.u32 %v3542, 16
        %v4106 = vrot.slane %v4104, 5
        %v4107 = vor.u32 %v4103, %v4106
        %v4108 = vrot.slane %v4107, 4
        %v4110 = vshll.u32 %v3543, 16
        %v4112 = vrot.slane %v4110, 5
        %v4113 = vsel %vm2376, %v4108, %v4112
        %v4114 = vshrl.u32 %v3543, 16
        %v4116 = vrot.slane %v4114, 4
        %v4117 = vor.u32 %v4116, %v4112
        %v4118 = vrot.slane %v4117, 4
        %v4120 = vshll.u32 %v3585, 16
        %v4122 = vrot.slane %v4120, 5
        %v4123 = vsel %vm2376, %v4118, %v4122
        %v4125 = vshrl.u32 %v3544, 16
        %v4127 = vrot.slane %v4125, 4
        %v4128 = vshll.u32 %v3544, 16
        %v4130 = vrot.slane %v4128, 5
        %v4131 = vor.u32 %v4127, %v4130
        %v4132 = vrot.slane %v4131, 4
        %v4134 = vshll.u32 %v3545, 16
        %v4136 = vrot.slane %v4134, 5
        %v4137 = vsel %vm2376, %v4132, %v4136
        %v4138 = vshrl.u32 %v3545, 16
        %v4140 = vrot.slane %v4138, 4
        %v4141 = vor.u32 %v4140, %v4136
        %v4142 = vrot.slane %v4141, 4
        %v4144 = vshll.u32 %v3586, 16
        %v4146 = vrot.slane %v4144, 5
        %v4147 = vsel %vm2376, %v4142, %v4146
        %v4149 = vshrl.u32 %v3546, 16
        %v4151 = vrot.slane %v4149, 4
        %v4152 = vshll.u32 %v3546, 16
        %v4154 = vrot.slane %v4152, 5
        %v4155 = vor.u32 %v4151, %v4154
        %v4156 = vrot.slane %v4155, 4
        %v4158 = vshll.u32 %v3547, 16
        %v4160 = vrot.slane %v4158, 5
        %v4161 = vsel %vm2376, %v4156, %v4160
        %v4162 = vshrl.u32 %v3547, 16
        %v4164 = vrot.slane %v4162, 4
        %v4165 = vor.u32 %v4164, %v4160
        %v4166 = vrot.slane %v4165, 4
        %v4168 = vshll.u32 %v3587, 16
        %v4170 = vrot.slane %v4168, 5
        %v4171 = vsel %vm2376, %v4166, %v4170
        %v4173 = vshrl.u32 %v3548, 16
        %v4175 = vrot.slane %v4173, 4
        %v4176 = vshll.u32 %v3548, 16
        %v4178 = vrot.slane %v4176, 5
        %v4179 = vor.u32 %v4175, %v4178
        %v4180 = vrot.slane %v4179, 4
        %v4182 = vshll.u32 %v3549, 16
        %v4184 = vrot.slane %v4182, 5
        %v4185 = vsel %vm2376, %v4180, %v4184
        %v4186 = vshrl.u32 %v3549, 16
        %v4188 = vrot.slane %v4186, 4
        %v4189 = vor.u32 %v4188, %v4184
        %v4190 = vrot.slane %v4189, 4
        %v4192 = vshll.u32 %v3588, 16
        %v4194 = vrot.slane %v4192, 5
        %v4195 = vsel %vm2376, %v4190, %v4194
        %v4197 = vshrl.u32 %v3550, 16
        %v4199 = vrot.slane %v4197, 4
        %v4200 = vshll.u32 %v3550, 16
        %v4202 = vrot.slane %v4200, 5
        %v4203 = vor.u32 %v4199, %v4202
        %v4204 = vrot.slane %v4203, 4
        %v4206 = vshll.u32 %v3551, 16
        %v4208 = vrot.slane %v4206, 5
        %v4209 = vsel %vm2376, %v4204, %v4208
        %v4210 = vshrl.u32 %v3551, 16
        %v4212 = vrot.slane %v4210, 4
        %v4213 = vor.u32 %v4212, %v4208
        %v4214 = vrot.slane %v4213, 4
        %v4216 = vshll.u32 %v3589, 16
        %v4218 = vrot.slane %v4216, 5
        %v4219 = vsel %vm2376, %v4214, %v4218
        %v4221 = vshrl.u32 %v3552, 16
        %v4223 = vrot.slane %v4221, 4
        %v4224 = vshll.u32 %v3552, 16
        %v4226 = vrot.slane %v4224, 5
        %v4227 = vor.u32 %v4223, %v4226
        %v4228 = vrot.slane %v4227, 4
        %v4230 = vshll.u32 %v3553, 16
        %v4232 = vrot.slane %v4230, 5
        %v4233 = vsel %vm2376, %v4228, %v4232
        %v4234 = vshrl.u32 %v3553, 16
        %v4236 = vrot.slane %v4234, 4
        %v4237 = vor.u32 %v4236, %v4232
        %v4238 = vrot.slane %v4237, 4
        %v4240 = vshll.u32 %v3590, 16
        %v4242 = vrot.slane %v4240, 5
        %v4243 = vsel %vm2376, %v4238, %v4242
        %v4245 = vshrl.u32 %v3554, 16
        %v4247 = vrot.slane %v4245, 4
        %v4248 = vshll.u32 %v3554, 16
        %v4250 = vrot.slane %v4248, 5
        %v4251 = vor.u32 %v4247, %v4250
        %v4252 = vrot.slane %v4251, 4
        %v4254 = vshll.u32 %v3555, 16
        %v4256 = vrot.slane %v4254, 5
        %v4257 = vsel %vm2376, %v4252, %v4256
        %v4258 = vshrl.u32 %v3555, 16
        %v4260 = vrot.slane %v4258, 4
        %v4261 = vor.u32 %v4260, %v4256
        %v4262 = vrot.slane %v4261, 4
        %v4264 = vshll.u32 %v3591, 16
        %v4266 = vrot.slane %v4264, 5
        %v4267 = vsel %vm2376, %v4262, %v4266
        %v4269 = vshrl.u32 %v3556, 16
        %v4271 = vrot.slane %v4269, 4
        %v4272 = vshll.u32 %v3556, 16
        %v4274 = vrot.slane %v4272, 5
        %v4275 = vor.u32 %v4271, %v4274
        %v4276 = vrot.slane %v4275, 4
        %v4278 = vshll.u32 %v3557, 16
        %v4280 = vrot.slane %v4278, 5
        %v4281 = vsel %vm2376, %v4276, %v4280
        %v4282 = vshrl.u32 %v3557, 16
        %v4284 = vrot.slane %v4282, 4
        %v4285 = vor.u32 %v4284, %v4280
        %v4286 = vrot.slane %v4285, 4
        %v4288 = vshll.u32 %v3592, 16
        %v4290 = vrot.slane %v4288, 5
        %v4291 = vsel %vm2376, %v4286, %v4290
        %v4293 = vshrl.u32 %v3558, 16
        %v4295 = vrot.slane %v4293, 4
        %v4296 = vshll.u32 %v3558, 16
        %v4298 = vrot.slane %v4296, 5
        %v4299 = vor.u32 %v4295, %v4298
        %v4300 = vrot.slane %v4299, 4
        %v4302 = vshll.u32 %v3559, 16
        %v4304 = vrot.slane %v4302, 5
        %v4305 = vsel %vm2376, %v4300, %v4304
        %v4306 = vshrl.u32 %v3559, 16
        %v4308 = vrot.slane %v4306, 4
        %v4309 = vor.u32 %v4308, %v4304
        %v4310 = vrot.slane %v4309, 4
        %v4312 = vshll.u32 %v3593, 16
        %v4314 = vrot.slane %v4312, 5
        %v4315 = vsel %vm2376, %v4310, %v4314
        %v4317 = vshrl.u32 %v3560, 16
        %v4319 = vrot.slane %v4317, 4
        %v4320 = vshll.u32 %v3560, 16
        %v4322 = vrot.slane %v4320, 5
        %v4323 = vor.u32 %v4319, %v4322
        %v4324 = vrot.slane %v4323, 4
        %v4326 = vshll.u32 %v3561, 16
        %v4328 = vrot.slane %v4326, 5
        %v4329 = vsel %vm2376, %v4324, %v4328
        %v4330 = vshrl.u32 %v3561, 16
        %v4332 = vrot.slane %v4330, 4
        %v4333 = vor.u32 %v4332, %v4328
        %v4334 = vrot.slane %v4333, 4
        %v4336 = vshll.u32 %v3594, 16
        %v4338 = vrot.slane %v4336, 5
        %v4339 = vsel %vm2376, %v4334, %v4338
        %v4341 = vshrl.u32 %v3562, 16
        %v4343 = vrot.slane %v4341, 4
        %v4344 = vshll.u32 %v3562, 16
        %v4346 = vrot.slane %v4344, 5
        %v4347 = vor.u32 %v4343, %v4346
        %v4348 = vrot.slane %v4347, 4
        %v4350 = vshll.u32 %v3563, 16
        %v4352 = vrot.slane %v4350, 5
        %v4353 = vsel %vm2376, %v4348, %v4352
        %v4354 = vshrl.u32 %v3563, 16
        %v4356 = vrot.slane %v4354, 4
        %v4357 = vor.u32 %v4356, %v4352
        %v4358 = vrot.slane %v4357, 4
        %v4360 = vshll.u32 %v3595, 16
        %v4362 = vrot.slane %v4360, 5
        %v4363 = vsel %vm2376, %v4358, %v4362
        %v4364 = vld [vmem:[%s2051] sm:$0xe]
        %v4365 = vld [vmem:[%s2051 + $0xc] sm:$0xe]
        %v4366 = vld [vmem:[%s2051 + $0x18] sm:$0xe]
        %v4367 = vld [vmem:[%s2051 + $0x24] sm:$0xe]
        %v4368 = vld [vmem:[%s2051 + $0x30] sm:$0xe]
        %v4369 = vld [vmem:[%s2051 + $0x3c] sm:$0xe]
        %v4370 = vld [vmem:[%s2051 + $0x48] sm:$0xe]
        %v4371 = vld [vmem:[%s2051 + $0x54] sm:$0xe]
        %v4372 = vld [vmem:[%s2051 + $0x60] sm:$0xe]
        %v4373 = vld [vmem:[%s2051 + $0x6c] sm:$0xe]
        %v4374 = vld [vmem:[%s2051 + $0x78] sm:$0xe]
        %v4375 = vld [vmem:[%s2051 + $0x84] sm:$0xe]
        %v4376 = vld [vmem:[%s2051 + $0x90] sm:$0xe]
        %v4377 = vld [vmem:[%s2051 + $0x9c] sm:$0xe]
        %v4378 = vld [vmem:[%s2051 + $0xa8] sm:$0xe]
        %v4379 = vld [vmem:[%s2051 + $0xb4] sm:$0xe]
        %v4380 = vld [vmem:[%s2051 + $0xd8] sm:$0xe]
        %v4381 = vld [vmem:[%s2051 + $0xe4] sm:$0xe]
        %v4382 = vld [vmem:[%s2051 + $0xf0] sm:$0xe]
        %v4383 = vld [vmem:[%s2051 + $0xfc] sm:$0xe]
        %v4384 = vld [vmem:[%s2051 + $0x108] sm:$0xe]
        %v4385 = vld [vmem:[%s2051 + $0x114] sm:$0xe]
        %v4386 = vld [vmem:[%s2051 + $0x120] sm:$0xe]
        %v4387 = vld [vmem:[%s2051 + $0x12c] sm:$0xe]
        %v4388 = vld [vmem:[%s2051 + $0x138] sm:$0xe]
        %v4389 = vld [vmem:[%s2051 + $0x144] sm:$0xe]
        %v4390 = vld [vmem:[%s2051 + $0x150] sm:$0xe]
        %v4391 = vld [vmem:[%s2051 + $0x15c] sm:$0xe]
        %v4392 = vld [vmem:[%s2051 + $0x168] sm:$0xe]
        %v4393 = vld [vmem:[%s2051 + $0x174] sm:$0xe]
        %v4394 = vld [vmem:[%s2051 + $0x180] sm:$0xe]
        %v4395 = vld [vmem:[%s2051 + $0x18c] sm:$0xe]
        %v4492 = vrot.slane %v4364, 5
        %v4493 = vrot.slane %v4492, 4
        %v4494 = vrot.slane %v3501, 5
        %v4495 = vsel %vm3275, %v4493, %v4494
        %v4496 = vrot.slane %v4494, 4
        %v4497 = vrot.slane %v3564, 5
        %v4498 = vsel %vm3275, %v4496, %v4497
        %v4499 = vrot.slane %v4365, 5
        %v4500 = vrot.slane %v4499, 4
        %v4501 = vrot.slane %v3503, 5
        %v4502 = vsel %vm3275, %v4500, %v4501
        %v4503 = vrot.slane %v4501, 4
        %v4504 = vrot.slane %v3565, 5
        %v4505 = vsel %vm3275, %v4503, %v4504
        %v4506 = vrot.slane %v4366, 5
        %v4507 = vrot.slane %v4506, 4
        %v4508 = vrot.slane %v3505, 5
        %v4509 = vsel %vm3275, %v4507, %v4508
        %v4510 = vrot.slane %v4508, 4
        %v4511 = vrot.slane %v3566, 5
        %v4512 = vsel %vm3275, %v4510, %v4511
        %v4513 = vrot.slane %v4367, 5
        %v4514 = vrot.slane %v4513, 4
        %v4515 = vrot.slane %v3507, 5
        %v4516 = vsel %vm3275, %v4514, %v4515
        %v4517 = vrot.slane %v4515, 4
        %v4518 = vrot.slane %v3567, 5
        %v4519 = vsel %vm3275, %v4517, %v4518
        %v4520 = vrot.slane %v4368, 5
        %v4521 = vrot.slane %v4520, 4
        %v4522 = vrot.slane %v3509, 5
        %v4523 = vsel %vm3275, %v4521, %v4522
        %v4524 = vrot.slane %v4522, 4
        %v4525 = vrot.slane %v3568, 5
        %v4526 = vsel %vm3275, %v4524, %v4525
        %v4527 = vrot.slane %v4369, 5
        %v4528 = vrot.slane %v4527, 4
        %v4529 = vrot.slane %v3511, 5
        %v4530 = vsel %vm3275, %v4528, %v4529
        %v4531 = vrot.slane %v4529, 4
        %v4532 = vrot.slane %v3569, 5
        %v4533 = vsel %vm3275, %v4531, %v4532
        %v4534 = vrot.slane %v4370, 5
        %v4535 = vrot.slane %v4534, 4
        %v4536 = vrot.slane %v3513, 5
        %v4537 = vsel %vm3275, %v4535, %v4536
        %v4538 = vrot.slane %v4536, 4
        %v4539 = vrot.slane %v3570, 5
        %v4540 = vsel %vm3275, %v4538, %v4539
        %v4541 = vrot.slane %v4371, 5
        %v4542 = vrot.slane %v4541, 4
        %v4543 = vrot.slane %v3515, 5
        %v4544 = vsel %vm3275, %v4542, %v4543
        %v4545 = vrot.slane %v4543, 4
        %v4546 = vrot.slane %v3571, 5
        %v4547 = vsel %vm3275, %v4545, %v4546
        %v4548 = vrot.slane %v4372, 5
        %v4549 = vrot.slane %v4548, 4
        %v4550 = vrot.slane %v3517, 5
        %v4551 = vsel %vm3275, %v4549, %v4550
        %v4552 = vrot.slane %v4550, 4
        %v4553 = vrot.slane %v3572, 5
        %v4554 = vsel %vm3275, %v4552, %v4553
        %v4555 = vrot.slane %v4373, 5
        %v4556 = vrot.slane %v4555, 4
        %v4557 = vrot.slane %v3519, 5
        %v4558 = vsel %vm3275, %v4556, %v4557
        %v4559 = vrot.slane %v4557, 4
        %v4560 = vrot.slane %v3573, 5
        %v4561 = vsel %vm3275, %v4559, %v4560
        %v4562 = vrot.slane %v4374, 5
        %v4563 = vrot.slane %v4562, 4
        %v4564 = vrot.slane %v3521, 5
        %v4565 = vsel %vm3275, %v4563, %v4564
        %v4566 = vrot.slane %v4564, 4
        %v4567 = vrot.slane %v3574, 5
        %v4568 = vsel %vm3275, %v4566, %v4567
        %v4569 = vrot.slane %v4375, 5
        %v4570 = vrot.slane %v4569, 4
        %v4571 = vrot.slane %v3523, 5
        %v4572 = vsel %vm3275, %v4570, %v4571
        %v4573 = vrot.slane %v4571, 4
        %v4574 = vrot.slane %v3575, 5
        %v4575 = vsel %vm3275, %v4573, %v4574
        %v4576 = vrot.slane %v4376, 5
        %v4577 = vrot.slane %v4576, 4
        %v4578 = vrot.slane %v3525, 5
        %v4579 = vsel %vm3275, %v4577, %v4578
        %v4580 = vrot.slane %v4578, 4
        %v4581 = vrot.slane %v3576, 5
        %v4582 = vsel %vm3275, %v4580, %v4581
        %v4583 = vrot.slane %v4377, 5
        %v4584 = vrot.slane %v4583, 4
        %v4585 = vrot.slane %v3527, 5
        %v4586 = vsel %vm3275, %v4584, %v4585
        %v4587 = vrot.slane %v4585, 4
        %v4588 = vrot.slane %v3577, 5
        %v4589 = vsel %vm3275, %v4587, %v4588
        %v4590 = vrot.slane %v4378, 5
        %v4591 = vrot.slane %v4590, 4
        %v4592 = vrot.slane %v3529, 5
        %v4593 = vsel %vm3275, %v4591, %v4592
        %v4594 = vrot.slane %v4592, 4
        %v4595 = vrot.slane %v3578, 5
        %v4596 = vsel %vm3275, %v4594, %v4595
        %v4597 = vrot.slane %v4379, 5
        %v4598 = vrot.slane %v4597, 4
        %v4599 = vrot.slane %v3531, 5
        %v4600 = vsel %vm3275, %v4598, %v4599
        %v4601 = vrot.slane %v4599, 4
        %v4602 = vrot.slane %v3579, 5
        %v4603 = vsel %vm3275, %v4601, %v4602
        %v4604 = vrot.slane %v4380, 5
        %v4605 = vrot.slane %v4604, 4
        %v4606 = vrot.slane %v3533, 5
        %v4607 = vsel %vm3275, %v4605, %v4606
        %v4608 = vrot.slane %v4606, 4
        %v4609 = vrot.slane %v3580, 5
        %v4610 = vsel %vm3275, %v4608, %v4609
        %v4611 = vrot.slane %v4381, 5
        %v4612 = vrot.slane %v4611, 4
        %v4613 = vrot.slane %v3535, 5
        %v4614 = vsel %vm3275, %v4612, %v4613
        %v4615 = vrot.slane %v4613, 4
        %v4616 = vrot.slane %v3581, 5
        %v4617 = vsel %vm3275, %v4615, %v4616
        %v4618 = vrot.slane %v4382, 5
        %v4619 = vrot.slane %v4618, 4
        %v4620 = vrot.slane %v3537, 5
        %v4621 = vsel %vm3275, %v4619, %v4620
        %v4622 = vrot.slane %v4620, 4
        %v4623 = vrot.slane %v3582, 5
        %v4624 = vsel %vm3275, %v4622, %v4623
        %v4625 = vrot.slane %v4383, 5
        %v4626 = vrot.slane %v4625, 4
        %v4627 = vrot.slane %v3539, 5
        %v4628 = vsel %vm3275, %v4626, %v4627
        %v4629 = vrot.slane %v4627, 4
        %v4630 = vrot.slane %v3583, 5
        %v4631 = vsel %vm3275, %v4629, %v4630
        %v4632 = vrot.slane %v4384, 5
        %v4633 = vrot.slane %v4632, 4
        %v4634 = vrot.slane %v3541, 5
        %v4635 = vsel %vm3275, %v4633, %v4634
        %v4636 = vrot.slane %v4634, 4
        %v4637 = vrot.slane %v3584, 5
        %v4638 = vsel %vm3275, %v4636, %v4637
        %v4639 = vrot.slane %v4385, 5
        %v4640 = vrot.slane %v4639, 4
        %v4641 = vrot.slane %v3543, 5
        %v4642 = vsel %vm3275, %v4640, %v4641
        %v4643 = vrot.slane %v4641, 4
        %v4644 = vrot.slane %v3585, 5
        %v4645 = vsel %vm3275, %v4643, %v4644
        %v4646 = vrot.slane %v4386, 5
        %v4647 = vrot.slane %v4646, 4
        %v4648 = vrot.slane %v3545, 5
        %v4649 = vsel %vm3275, %v4647, %v4648
        %v4650 = vrot.slane %v4648, 4
        %v4651 = vrot.slane %v3586, 5
        %v4652 = vsel %vm3275, %v4650, %v4651
        %v4653 = vrot.slane %v4387, 5
        %v4654 = vrot.slane %v4653, 4
        %v4655 = vrot.slane %v3547, 5
        %v4656 = vsel %vm3275, %v4654, %v4655
        %v4657 = vrot.slane %v4655, 4
        %v4658 = vrot.slane %v3587, 5
        %v4659 = vsel %vm3275, %v4657, %v4658
        %v4660 = vrot.slane %v4388, 5
        %v4661 = vrot.slane %v4660, 4
        %v4662 = vrot.slane %v3549, 5
        %v4663 = vsel %vm3275, %v4661, %v4662
        %v4664 = vrot.slane %v4662, 4
        %v4665 = vrot.slane %v3588, 5
        %v4666 = vsel %vm3275, %v4664, %v4665
        %v4667 = vrot.slane %v4389, 5
        %v4668 = vrot.slane %v4667, 4
        %v4669 = vrot.slane %v3551, 5
        %v4670 = vsel %vm3275, %v4668, %v4669
        %v4671 = vrot.slane %v4669, 4
        %v4672 = vrot.slane %v3589, 5
        %v4673 = vsel %vm3275, %v4671, %v4672
        %v4674 = vrot.slane %v4390, 5
        %v4675 = vrot.slane %v4674, 4
        %v4676 = vrot.slane %v3553, 5
        %v4677 = vsel %vm3275, %v4675, %v4676
        %v4678 = vrot.slane %v4676, 4
        %v4679 = vrot.slane %v3590, 5
        %v4680 = vsel %vm3275, %v4678, %v4679
        %v4681 = vrot.slane %v4391, 5
        %v4682 = vrot.slane %v4681, 4
        %v4683 = vrot.slane %v3555, 5
        %v4684 = vsel %vm3275, %v4682, %v4683
        %v4685 = vrot.slane %v4683, 4
        %v4686 = vrot.slane %v3591, 5
        %v4687 = vsel %vm3275, %v4685, %v4686
        %v4688 = vrot.slane %v4392, 5
        %v4689 = vrot.slane %v4688, 4
        %v4690 = vrot.slane %v3557, 5
        %v4691 = vsel %vm3275, %v4689, %v4690
        %v4692 = vrot.slane %v4690, 4
        %v4693 = vrot.slane %v3592, 5
        %v4694 = vsel %vm3275, %v4692, %v4693
        %v4695 = vrot.slane %v4393, 5
        %v4696 = vrot.slane %v4695, 4
        %v4697 = vrot.slane %v3559, 5
        %v4698 = vsel %vm3275, %v4696, %v4697
        %v4699 = vrot.slane %v4697, 4
        %v4700 = vrot.slane %v3593, 5
        %v4701 = vsel %vm3275, %v4699, %v4700
        %v4702 = vrot.slane %v4394, 5
        %v4703 = vrot.slane %v4702, 4
        %v4704 = vrot.slane %v3561, 5
        %v4705 = vsel %vm3275, %v4703, %v4704
        %v4706 = vrot.slane %v4704, 4
        %v4707 = vrot.slane %v3594, 5
        %v4708 = vsel %vm3275, %v4706, %v4707
        %v4709 = vrot.slane %v4395, 5
        %v4710 = vrot.slane %v4709, 4
        %v4711 = vrot.slane %v3563, 5
        %v4712 = vsel %vm3275, %v4710, %v4711
        %v4713 = vrot.slane %v4711, 4
        %v4714 = vrot.slane %v3595, 5
        %v4715 = vsel %vm3275, %v4713, %v4714
        %s4716 = scalar_lea.vmem [#allocation2], 24
        %v4717 = vld [vmem:[%s4716] sm:$0xf]
        %v4718 = vld [vmem:[%s4716 + $0x4] sm:$0xf]
        %v4719 = vld [vmem:[%s4716 + $0xc] sm:$0xf]
        %v4720 = vld [vmem:[%s4716 + $0x10] sm:$0xf]
        %v4721 = vld [vmem:[%s4716 + $0x18] sm:$0xf]
        %v4722 = vld [vmem:[%s4716 + $0x1c] sm:$0xf]
        %v4723 = vld [vmem:[%s4716 + $0x24] sm:$0xf]
        %v4724 = vld [vmem:[%s4716 + $0x28] sm:$0xf]
        %v4725 = vld [vmem:[%s4716 + $0x30] sm:$0xf]
        %v4726 = vld [vmem:[%s4716 + $0x34] sm:$0xf]
        %v4727 = vld [vmem:[%s4716 + $0x3c] sm:$0xf]
        %v4728 = vld [vmem:[%s4716 + $0x40] sm:$0xf]
        %v4729 = vld [vmem:[%s4716 + $0x48] sm:$0xf]
        %v4730 = vld [vmem:[%s4716 + $0x4c] sm:$0xf]
        %v4731 = vld [vmem:[%s4716 + $0x54] sm:$0xf]
        %v4732 = vld [vmem:[%s4716 + $0x58] sm:$0xf]
        %v4733 = vld [vmem:[%s4716 + $0x60] sm:$0xf]
        %v4734 = vld [vmem:[%s4716 + $0x64] sm:$0xf]
        %v4735 = vld [vmem:[%s4716 + $0x6c] sm:$0xf]
        %v4736 = vld [vmem:[%s4716 + $0x70] sm:$0xf]
        %v4737 = vld [vmem:[%s4716 + $0x78] sm:$0xf]
        %v4738 = vld [vmem:[%s4716 + $0x7c] sm:$0xf]
        %v4739 = vld [vmem:[%s4716 + $0x84] sm:$0xf]
        %v4740 = vld [vmem:[%s4716 + $0x88] sm:$0xf]
        %v4741 = vld [vmem:[%s4716 + $0x90] sm:$0xf]
        %v4742 = vld [vmem:[%s4716 + $0x94] sm:$0xf]
        %v4743 = vld [vmem:[%s4716 + $0x9c] sm:$0xf]
        %v4744 = vld [vmem:[%s4716 + $0xa0] sm:$0xf]
        %v4745 = vld [vmem:[%s4716 + $0xa8] sm:$0xf]
        %v4746 = vld [vmem:[%s4716 + $0xac] sm:$0xf]
        %v4747 = vld [vmem:[%s4716 + $0xb4] sm:$0xf]
        %v4748 = vld [vmem:[%s4716 + $0xb8] sm:$0xf]
        %v4749 = vld [vmem:[%s4716 + $0xd8] sm:$0xf]
        %v4750 = vld [vmem:[%s4716 + $0xdc] sm:$0xf]
        %v4751 = vld [vmem:[%s4716 + $0xe4] sm:$0xf]
        %v4752 = vld [vmem:[%s4716 + $0xe8] sm:$0xf]
        %v4753 = vld [vmem:[%s4716 + $0xf0] sm:$0xf]
        %v4754 = vld [vmem:[%s4716 + $0xf4] sm:$0xf]
        %v4755 = vld [vmem:[%s4716 + $0xfc] sm:$0xf]
        %v4756 = vld [vmem:[%s4716 + $0x100] sm:$0xf]
        %v4757 = vld [vmem:[%s4716 + $0x108] sm:$0xf]
        %v4758 = vld [vmem:[%s4716 + $0x10c] sm:$0xf]
        %v4759 = vld [vmem:[%s4716 + $0x114] sm:$0xf]
        %v4760 = vld [vmem:[%s4716 + $0x118] sm:$0xf]
        %v4761 = vld [vmem:[%s4716 + $0x120] sm:$0xf]
        %v4762 = vld [vmem:[%s4716 + $0x124] sm:$0xf]
        %v4763 = vld [vmem:[%s4716 + $0x12c] sm:$0xf]
        %v4764 = vld [vmem:[%s4716 + $0x130] sm:$0xf]
        %v4765 = vld [vmem:[%s4716 + $0x138] sm:$0xf]
        %v4766 = vld [vmem:[%s4716 + $0x13c] sm:$0xf]
        %v4767 = vld [vmem:[%s4716 + $0x144] sm:$0xf]
        %v4768 = vld [vmem:[%s4716 + $0x148] sm:$0xf]
        %v4769 = vld [vmem:[%s4716 + $0x150] sm:$0xf]
        %v4770 = vld [vmem:[%s4716 + $0x154] sm:$0xf]
        %v4771 = vld [vmem:[%s4716 + $0x15c] sm:$0xf]
        %v4772 = vld [vmem:[%s4716 + $0x160] sm:$0xf]
        %v4773 = vld [vmem:[%s4716 + $0x168] sm:$0xf]
        %v4774 = vld [vmem:[%s4716 + $0x16c] sm:$0xf]
        %v4775 = vld [vmem:[%s4716 + $0x174] sm:$0xf]
        %v4776 = vld [vmem:[%s4716 + $0x178] sm:$0xf]
        %v4777 = vld [vmem:[%s4716 + $0x180] sm:$0xf]
        %v4778 = vld [vmem:[%s4716 + $0x184] sm:$0xf]
        %v4779 = vld [vmem:[%s4716 + $0x18c] sm:$0xf]
        %v4780 = vld [vmem:[%s4716 + $0x190] sm:$0xf]
        %v4781 = vld [vmem:[%s4716 + $0x8] sm:$0x1]
        %v4782 = vld [vmem:[%s4716 + $0x14] sm:$0x1]
        %v4783 = vld [vmem:[%s4716 + $0x20] sm:$0x1]
        %v4784 = vld [vmem:[%s4716 + $0x2c] sm:$0x1]
        %v4785 = vld [vmem:[%s4716 + $0x38] sm:$0x1]
        %v4786 = vld [vmem:[%s4716 + $0x44] sm:$0x1]
        %v4787 = vld [vmem:[%s4716 + $0x50] sm:$0x1]
        %v4788 = vld [vmem:[%s4716 + $0x5c] sm:$0x1]
        %v4789 = vld [vmem:[%s4716 + $0x68] sm:$0x1]
        %v4790 = vld [vmem:[%s4716 + $0x74] sm:$0x1]
        %v4791 = vld [vmem:[%s4716 + $0x80] sm:$0x1]
        %v4792 = vld [vmem:[%s4716 + $0x8c] sm:$0x1]
        %v4793 = vld [vmem:[%s4716 + $0x98] sm:$0x1]
        %v4794 = vld [vmem:[%s4716 + $0xa4] sm:$0x1]
        %v4795 = vld [vmem:[%s4716 + $0xb0] sm:$0x1]
        %v4796 = vld [vmem:[%s4716 + $0xbc] sm:$0x1]
        %v4797 = vld [vmem:[%s4716 + $0xe0] sm:$0x1]
        %v4798 = vld [vmem:[%s4716 + $0xec] sm:$0x1]
        %v4799 = vld [vmem:[%s4716 + $0xf8] sm:$0x1]
        %v4800 = vld [vmem:[%s4716 + $0x104] sm:$0x1]
        %v4801 = vld [vmem:[%s4716 + $0x110] sm:$0x1]
        %v4802 = vld [vmem:[%s4716 + $0x11c] sm:$0x1]
        %v4803 = vld [vmem:[%s4716 + $0x128] sm:$0x1]
        %v4804 = vld [vmem:[%s4716 + $0x134] sm:$0x1]
        %v4805 = vld [vmem:[%s4716 + $0x140] sm:$0x1]
        %v4806 = vld [vmem:[%s4716 + $0x14c] sm:$0x1]
        %v4807 = vld [vmem:[%s4716 + $0x158] sm:$0x1]
        %v4808 = vld [vmem:[%s4716 + $0x164] sm:$0x1]
        %v4809 = vld [vmem:[%s4716 + $0x170] sm:$0x1]
        %v4810 = vld [vmem:[%s4716 + $0x17c] sm:$0x1]
        %v4811 = vld [vmem:[%s4716 + $0x188] sm:$0x1]
        %v4812 = vld [vmem:[%s4716 + $0x194] sm:$0x1]
        %v4814 = vshrl.u32 %v4717, 16
        %v4816 = vrot.slane %v4814, 4
        %v4817 = vshll.u32 %v4717, 16
        %v4819 = vrot.slane %v4817, 5
        %v4820 = vor.u32 %v4816, %v4819
        %v4821 = vrot.slane %v4820, 4
        %v4823 = vshll.u32 %v4718, 16
        %v4825 = vrot.slane %v4823, 5
        %v4826 = vsel %vm2376, %v4821, %v4825
        %v4827 = vshrl.u32 %v4718, 16
        %v4829 = vrot.slane %v4827, 4
        %v4830 = vor.u32 %v4829, %v4825
        %v4831 = vrot.slane %v4830, 4
        %v4833 = vshll.u32 %v4781, 16
        %v4835 = vrot.slane %v4833, 5
        %v4836 = vsel %vm2376, %v4831, %v4835
        %v4838 = vshrl.u32 %v4719, 16
        %v4840 = vrot.slane %v4838, 4
        %v4841 = vshll.u32 %v4719, 16
        %v4843 = vrot.slane %v4841, 5
        %v4844 = vor.u32 %v4840, %v4843
        %v4845 = vrot.slane %v4844, 4
        %v4847 = vshll.u32 %v4720, 16
        %v4849 = vrot.slane %v4847, 5
        %v4850 = vsel %vm2376, %v4845, %v4849
        %v4851 = vshrl.u32 %v4720, 16
        %v4853 = vrot.slane %v4851, 4
        %v4854 = vor.u32 %v4853, %v4849
        %v4855 = vrot.slane %v4854, 4
        %v4857 = vshll.u32 %v4782, 16
        %v4859 = vrot.slane %v4857, 5
        %v4860 = vsel %vm2376, %v4855, %v4859
        %v4862 = vshrl.u32 %v4721, 16
        %v4864 = vrot.slane %v4862, 4
        %v4865 = vshll.u32 %v4721, 16
        %v4867 = vrot.slane %v4865, 5
        %v4868 = vor.u32 %v4864, %v4867
        %v4869 = vrot.slane %v4868, 4
        %v4871 = vshll.u32 %v4722, 16
        %v4873 = vrot.slane %v4871, 5
        %v4874 = vsel %vm2376, %v4869, %v4873
        %v4875 = vshrl.u32 %v4722, 16
        %v4877 = vrot.slane %v4875, 4
        %v4878 = vor.u32 %v4877, %v4873
        %v4879 = vrot.slane %v4878, 4
        %v4881 = vshll.u32 %v4783, 16
        %v4883 = vrot.slane %v4881, 5
        %v4884 = vsel %vm2376, %v4879, %v4883
        %v4886 = vshrl.u32 %v4723, 16
        %v4888 = vrot.slane %v4886, 4
        %v4889 = vshll.u32 %v4723, 16
        %v4891 = vrot.slane %v4889, 5
        %v4892 = vor.u32 %v4888, %v4891
        %v4893 = vrot.slane %v4892, 4
        %v4895 = vshll.u32 %v4724, 16
        %v4897 = vrot.slane %v4895, 5
        %v4898 = vsel %vm2376, %v4893, %v4897
        %v4899 = vshrl.u32 %v4724, 16
        %v4901 = vrot.slane %v4899, 4
        %v4902 = vor.u32 %v4901, %v4897
        %v4903 = vrot.slane %v4902, 4
        %v4905 = vshll.u32 %v4784, 16
        %v4907 = vrot.slane %v4905, 5
        %v4908 = vsel %vm2376, %v4903, %v4907
        %v4910 = vshrl.u32 %v4725, 16
        %v4912 = vrot.slane %v4910, 4
        %v4913 = vshll.u32 %v4725, 16
        %v4915 = vrot.slane %v4913, 5
        %v4916 = vor.u32 %v4912, %v4915
        %v4917 = vrot.slane %v4916, 4
        %v4919 = vshll.u32 %v4726, 16
        %v4921 = vrot.slane %v4919, 5
        %v4922 = vsel %vm2376, %v4917, %v4921
        %v4923 = vshrl.u32 %v4726, 16
        %v4925 = vrot.slane %v4923, 4
        %v4926 = vor.u32 %v4925, %v4921
        %v4927 = vrot.slane %v4926, 4
        %v4929 = vshll.u32 %v4785, 16
        %v4931 = vrot.slane %v4929, 5
        %v4932 = vsel %vm2376, %v4927, %v4931
        %v4934 = vshrl.u32 %v4727, 16
        %v4936 = vrot.slane %v4934, 4
        %v4937 = vshll.u32 %v4727, 16
        %v4939 = vrot.slane %v4937, 5
        %v4940 = vor.u32 %v4936, %v4939
        %v4941 = vrot.slane %v4940, 4
        %v4943 = vshll.u32 %v4728, 16
        %v4945 = vrot.slane %v4943, 5
        %v4946 = vsel %vm2376, %v4941, %v4945
        %v4947 = vshrl.u32 %v4728, 16
        %v4949 = vrot.slane %v4947, 4
        %v4950 = vor.u32 %v4949, %v4945
        %v4951 = vrot.slane %v4950, 4
        %v4953 = vshll.u32 %v4786, 16
        %v4955 = vrot.slane %v4953, 5
        %v4956 = vsel %vm2376, %v4951, %v4955
        %v4958 = vshrl.u32 %v4729, 16
        %v4960 = vrot.slane %v4958, 4
        %v4961 = vshll.u32 %v4729, 16
        %v4963 = vrot.slane %v4961, 5
        %v4964 = vor.u32 %v4960, %v4963
        %v4965 = vrot.slane %v4964, 4
        %v4967 = vshll.u32 %v4730, 16
        %v4969 = vrot.slane %v4967, 5
        %v4970 = vsel %vm2376, %v4965, %v4969
        %v4971 = vshrl.u32 %v4730, 16
        %v4973 = vrot.slane %v4971, 4
        %v4974 = vor.u32 %v4973, %v4969
        %v4975 = vrot.slane %v4974, 4
        %v4977 = vshll.u32 %v4787, 16
        %v4979 = vrot.slane %v4977, 5
        %v4980 = vsel %vm2376, %v4975, %v4979
        %v4982 = vshrl.u32 %v4731, 16
        %v4984 = vrot.slane %v4982, 4
        %v4985 = vshll.u32 %v4731, 16
        %v4987 = vrot.slane %v4985, 5
        %v4988 = vor.u32 %v4984, %v4987
        %v4989 = vrot.slane %v4988, 4
        %v4991 = vshll.u32 %v4732, 16
        %v4993 = vrot.slane %v4991, 5
        %v4994 = vsel %vm2376, %v4989, %v4993
        %v4995 = vshrl.u32 %v4732, 16
        %v4997 = vrot.slane %v4995, 4
        %v4998 = vor.u32 %v4997, %v4993
        %v4999 = vrot.slane %v4998, 4
        %v5001 = vshll.u32 %v4788, 16
        %v5003 = vrot.slane %v5001, 5
        %v5004 = vsel %vm2376, %v4999, %v5003
        %v5006 = vshrl.u32 %v4733, 16
        %v5008 = vrot.slane %v5006, 4
        %v5009 = vshll.u32 %v4733, 16
        %v5011 = vrot.slane %v5009, 5
        %v5012 = vor.u32 %v5008, %v5011
        %v5013 = vrot.slane %v5012, 4
        %v5015 = vshll.u32 %v4734, 16
        %v5017 = vrot.slane %v5015, 5
        %v5018 = vsel %vm2376, %v5013, %v5017
        %v5019 = vshrl.u32 %v4734, 16
        %v5021 = vrot.slane %v5019, 4
        %v5022 = vor.u32 %v5021, %v5017
        %v5023 = vrot.slane %v5022, 4
        %v5025 = vshll.u32 %v4789, 16
        %v5027 = vrot.slane %v5025, 5
        %v5028 = vsel %vm2376, %v5023, %v5027
        %v5030 = vshrl.u32 %v4735, 16
        %v5032 = vrot.slane %v5030, 4
        %v5033 = vshll.u32 %v4735, 16
        %v5035 = vrot.slane %v5033, 5
        %v5036 = vor.u32 %v5032, %v5035
        %v5037 = vrot.slane %v5036, 4
        %v5039 = vshll.u32 %v4736, 16
        %v5041 = vrot.slane %v5039, 5
        %v5042 = vsel %vm2376, %v5037, %v5041
        %v5043 = vshrl.u32 %v4736, 16
        %v5045 = vrot.slane %v5043, 4
        %v5046 = vor.u32 %v5045, %v5041
        %v5047 = vrot.slane %v5046, 4
        %v5049 = vshll.u32 %v4790, 16
        %v5051 = vrot.slane %v5049, 5
        %v5052 = vsel %vm2376, %v5047, %v5051
        %v5054 = vshrl.u32 %v4737, 16
        %v5056 = vrot.slane %v5054, 4
        %v5057 = vshll.u32 %v4737, 16
        %v5059 = vrot.slane %v5057, 5
        %v5060 = vor.u32 %v5056, %v5059
        %v5061 = vrot.slane %v5060, 4
        %v5063 = vshll.u32 %v4738, 16
        %v5065 = vrot.slane %v5063, 5
        %v5066 = vsel %vm2376, %v5061, %v5065
        %v5067 = vshrl.u32 %v4738, 16
        %v5069 = vrot.slane %v5067, 4
        %v5070 = vor.u32 %v5069, %v5065
        %v5071 = vrot.slane %v5070, 4
        %v5073 = vshll.u32 %v4791, 16
        %v5075 = vrot.slane %v5073, 5
        %v5076 = vsel %vm2376, %v5071, %v5075
        %v5078 = vshrl.u32 %v4739, 16
        %v5080 = vrot.slane %v5078, 4
        %v5081 = vshll.u32 %v4739, 16
        %v5083 = vrot.slane %v5081, 5
        %v5084 = vor.u32 %v5080, %v5083
        %v5085 = vrot.slane %v5084, 4
        %v5087 = vshll.u32 %v4740, 16
        %v5089 = vrot.slane %v5087, 5
        %v5090 = vsel %vm2376, %v5085, %v5089
        %v5091 = vshrl.u32 %v4740, 16
        %v5093 = vrot.slane %v5091, 4
        %v5094 = vor.u32 %v5093, %v5089
        %v5095 = vrot.slane %v5094, 4
        %v5097 = vshll.u32 %v4792, 16
        %v5099 = vrot.slane %v5097, 5
        %v5100 = vsel %vm2376, %v5095, %v5099
        %v5102 = vshrl.u32 %v4741, 16
        %v5104 = vrot.slane %v5102, 4
        %v5105 = vshll.u32 %v4741, 16
        %v5107 = vrot.slane %v5105, 5
        %v5108 = vor.u32 %v5104, %v5107
        %v5109 = vrot.slane %v5108, 4
        %v5111 = vshll.u32 %v4742, 16
        %v5113 = vrot.slane %v5111, 5
        %v5114 = vsel %vm2376, %v5109, %v5113
        %v5115 = vshrl.u32 %v4742, 16
        %v5117 = vrot.slane %v5115, 4
        %v5118 = vor.u32 %v5117, %v5113
        %v5119 = vrot.slane %v5118, 4
        %v5121 = vshll.u32 %v4793, 16
        %v5123 = vrot.slane %v5121, 5
        %v5124 = vsel %vm2376, %v5119, %v5123
        %v5126 = vshrl.u32 %v4743, 16
        %v5128 = vrot.slane %v5126, 4
        %v5129 = vshll.u32 %v4743, 16
        %v5131 = vrot.slane %v5129, 5
        %v5132 = vor.u32 %v5128, %v5131
        %v5133 = vrot.slane %v5132, 4
        %v5135 = vshll.u32 %v4744, 16
        %v5137 = vrot.slane %v5135, 5
        %v5138 = vsel %vm2376, %v5133, %v5137
        %v5139 = vshrl.u32 %v4744, 16
        %v5141 = vrot.slane %v5139, 4
        %v5142 = vor.u32 %v5141, %v5137
        %v5143 = vrot.slane %v5142, 4
        %v5145 = vshll.u32 %v4794, 16
        %v5147 = vrot.slane %v5145, 5
        %v5148 = vsel %vm2376, %v5143, %v5147
        %v5150 = vshrl.u32 %v4745, 16
        %v5152 = vrot.slane %v5150, 4
        %v5153 = vshll.u32 %v4745, 16
        %v5155 = vrot.slane %v5153, 5
        %v5156 = vor.u32 %v5152, %v5155
        %v5157 = vrot.slane %v5156, 4
        %v5159 = vshll.u32 %v4746, 16
        %v5161 = vrot.slane %v5159, 5
        %v5162 = vsel %vm2376, %v5157, %v5161
        %v5163 = vshrl.u32 %v4746, 16
        %v5165 = vrot.slane %v5163, 4
        %v5166 = vor.u32 %v5165, %v5161
        %v5167 = vrot.slane %v5166, 4
        %v5169 = vshll.u32 %v4795, 16
        %v5171 = vrot.slane %v5169, 5
        %v5172 = vsel %vm2376, %v5167, %v5171
        %v5174 = vshrl.u32 %v4747, 16
        %v5176 = vrot.slane %v5174, 4
        %v5177 = vshll.u32 %v4747, 16
        %v5179 = vrot.slane %v5177, 5
        %v5180 = vor.u32 %v5176, %v5179
        %v5181 = vrot.slane %v5180, 4
        %v5183 = vshll.u32 %v4748, 16
        %v5185 = vrot.slane %v5183, 5
        %v5186 = vsel %vm2376, %v5181, %v5185
        %v5187 = vshrl.u32 %v4748, 16
        %v5189 = vrot.slane %v5187, 4
        %v5190 = vor.u32 %v5189, %v5185
        %v5191 = vrot.slane %v5190, 4
        %v5193 = vshll.u32 %v4796, 16
        %v5195 = vrot.slane %v5193, 5
        %v5196 = vsel %vm2376, %v5191, %v5195
        %v5198 = vshrl.u32 %v4749, 16
        %v5200 = vrot.slane %v5198, 4
        %v5201 = vshll.u32 %v4749, 16
        %v5203 = vrot.slane %v5201, 5
        %v5204 = vor.u32 %v5200, %v5203
        %v5205 = vrot.slane %v5204, 4
        %v5207 = vshll.u32 %v4750, 16
        %v5209 = vrot.slane %v5207, 5
        %v5210 = vsel %vm2376, %v5205, %v5209
        %v5211 = vshrl.u32 %v4750, 16
        %v5213 = vrot.slane %v5211, 4
        %v5214 = vor.u32 %v5213, %v5209
        %v5215 = vrot.slane %v5214, 4
        %v5217 = vshll.u32 %v4797, 16
        %v5219 = vrot.slane %v5217, 5
        %v5220 = vsel %vm2376, %v5215, %v5219
        %v5222 = vshrl.u32 %v4751, 16
        %v5224 = vrot.slane %v5222, 4
        %v5225 = vshll.u32 %v4751, 16
        %v5227 = vrot.slane %v5225, 5
        %v5228 = vor.u32 %v5224, %v5227
        %v5229 = vrot.slane %v5228, 4
        %v5231 = vshll.u32 %v4752, 16
        %v5233 = vrot.slane %v5231, 5
        %v5234 = vsel %vm2376, %v5229, %v5233
        %v5235 = vshrl.u32 %v4752, 16
        %v5237 = vrot.slane %v5235, 4
        %v5238 = vor.u32 %v5237, %v5233
        %v5239 = vrot.slane %v5238, 4
        %v5241 = vshll.u32 %v4798, 16
        %v5243 = vrot.slane %v5241, 5
        %v5244 = vsel %vm2376, %v5239, %v5243
        %v5246 = vshrl.u32 %v4753, 16
        %v5248 = vrot.slane %v5246, 4
        %v5249 = vshll.u32 %v4753, 16
        %v5251 = vrot.slane %v5249, 5
        %v5252 = vor.u32 %v5248, %v5251
        %v5253 = vrot.slane %v5252, 4
        %v5255 = vshll.u32 %v4754, 16
        %v5257 = vrot.slane %v5255, 5
        %v5258 = vsel %vm2376, %v5253, %v5257
        %v5259 = vshrl.u32 %v4754, 16
        %v5261 = vrot.slane %v5259, 4
        %v5262 = vor.u32 %v5261, %v5257
        %v5263 = vrot.slane %v5262, 4
        %v5265 = vshll.u32 %v4799, 16
        %v5267 = vrot.slane %v5265, 5
        %v5268 = vsel %vm2376, %v5263, %v5267
        %v5270 = vshrl.u32 %v4755, 16
        %v5272 = vrot.slane %v5270, 4
        %v5273 = vshll.u32 %v4755, 16
        %v5275 = vrot.slane %v5273, 5
        %v5276 = vor.u32 %v5272, %v5275
        %v5277 = vrot.slane %v5276, 4
        %v5279 = vshll.u32 %v4756, 16
        %v5281 = vrot.slane %v5279, 5
        %v5282 = vsel %vm2376, %v5277, %v5281
        %v5283 = vshrl.u32 %v4756, 16
        %v5285 = vrot.slane %v5283, 4
        %v5286 = vor.u32 %v5285, %v5281
        %v5287 = vrot.slane %v5286, 4
        %v5289 = vshll.u32 %v4800, 16
        %v5291 = vrot.slane %v5289, 5
        %v5292 = vsel %vm2376, %v5287, %v5291
        %v5294 = vshrl.u32 %v4757, 16
        %v5296 = vrot.slane %v5294, 4
        %v5297 = vshll.u32 %v4757, 16
        %v5299 = vrot.slane %v5297, 5
        %v5300 = vor.u32 %v5296, %v5299
        %v5301 = vrot.slane %v5300, 4
        %v5303 = vshll.u32 %v4758, 16
        %v5305 = vrot.slane %v5303, 5
        %v5306 = vsel %vm2376, %v5301, %v5305
        %v5307 = vshrl.u32 %v4758, 16
        %v5309 = vrot.slane %v5307, 4
        %v5310 = vor.u32 %v5309, %v5305
        %v5311 = vrot.slane %v5310, 4
        %v5313 = vshll.u32 %v4801, 16
        %v5315 = vrot.slane %v5313, 5
        %v5316 = vsel %vm2376, %v5311, %v5315
        %v5318 = vshrl.u32 %v4759, 16
        %v5320 = vrot.slane %v5318, 4
        %v5321 = vshll.u32 %v4759, 16
        %v5323 = vrot.slane %v5321, 5
        %v5324 = vor.u32 %v5320, %v5323
        %v5325 = vrot.slane %v5324, 4
        %v5327 = vshll.u32 %v4760, 16
        %v5329 = vrot.slane %v5327, 5
        %v5330 = vsel %vm2376, %v5325, %v5329
        %v5331 = vshrl.u32 %v4760, 16
        %v5333 = vrot.slane %v5331, 4
        %v5334 = vor.u32 %v5333, %v5329
        %v5335 = vrot.slane %v5334, 4
        %v5337 = vshll.u32 %v4802, 16
        %v5339 = vrot.slane %v5337, 5
        %v5340 = vsel %vm2376, %v5335, %v5339
        %v5342 = vshrl.u32 %v4761, 16
        %v5344 = vrot.slane %v5342, 4
        %v5345 = vshll.u32 %v4761, 16
        %v5347 = vrot.slane %v5345, 5
        %v5348 = vor.u32 %v5344, %v5347
        %v5349 = vrot.slane %v5348, 4
        %v5351 = vshll.u32 %v4762, 16
        %v5353 = vrot.slane %v5351, 5
        %v5354 = vsel %vm2376, %v5349, %v5353
        %v5355 = vshrl.u32 %v4762, 16
        %v5357 = vrot.slane %v5355, 4
        %v5358 = vor.u32 %v5357, %v5353
        %v5359 = vrot.slane %v5358, 4
        %v5361 = vshll.u32 %v4803, 16
        %v5363 = vrot.slane %v5361, 5
        %v5364 = vsel %vm2376, %v5359, %v5363
        %v5366 = vshrl.u32 %v4763, 16
        %v5368 = vrot.slane %v5366, 4
        %v5369 = vshll.u32 %v4763, 16
        %v5371 = vrot.slane %v5369, 5
        %v5372 = vor.u32 %v5368, %v5371
        %v5373 = vrot.slane %v5372, 4
        %v5375 = vshll.u32 %v4764, 16
        %v5377 = vrot.slane %v5375, 5
        %v5378 = vsel %vm2376, %v5373, %v5377
        %v5379 = vshrl.u32 %v4764, 16
        %v5381 = vrot.slane %v5379, 4
        %v5382 = vor.u32 %v5381, %v5377
        %v5383 = vrot.slane %v5382, 4
        %v5385 = vshll.u32 %v4804, 16
        %v5387 = vrot.slane %v5385, 5
        %v5388 = vsel %vm2376, %v5383, %v5387
        %v5390 = vshrl.u32 %v4765, 16
        %v5392 = vrot.slane %v5390, 4
        %v5393 = vshll.u32 %v4765, 16
        %v5395 = vrot.slane %v5393, 5
        %v5396 = vor.u32 %v5392, %v5395
        %v5397 = vrot.slane %v5396, 4
        %v5399 = vshll.u32 %v4766, 16
        %v5401 = vrot.slane %v5399, 5
        %v5402 = vsel %vm2376, %v5397, %v5401
        %v5403 = vshrl.u32 %v4766, 16
        %v5405 = vrot.slane %v5403, 4
        %v5406 = vor.u32 %v5405, %v5401
        %v5407 = vrot.slane %v5406, 4
        %v5409 = vshll.u32 %v4805, 16
        %v5411 = vrot.slane %v5409, 5
        %v5412 = vsel %vm2376, %v5407, %v5411
        %v5414 = vshrl.u32 %v4767, 16
        %v5416 = vrot.slane %v5414, 4
        %v5417 = vshll.u32 %v4767, 16
        %v5419 = vrot.slane %v5417, 5
        %v5420 = vor.u32 %v5416, %v5419
        %v5421 = vrot.slane %v5420, 4
        %v5423 = vshll.u32 %v4768, 16
        %v5425 = vrot.slane %v5423, 5
        %v5426 = vsel %vm2376, %v5421, %v5425
        %v5427 = vshrl.u32 %v4768, 16
        %v5429 = vrot.slane %v5427, 4
        %v5430 = vor.u32 %v5429, %v5425
        %v5431 = vrot.slane %v5430, 4
        %v5433 = vshll.u32 %v4806, 16
        %v5435 = vrot.slane %v5433, 5
        %v5436 = vsel %vm2376, %v5431, %v5435
        %v5438 = vshrl.u32 %v4769, 16
        %v5440 = vrot.slane %v5438, 4
        %v5441 = vshll.u32 %v4769, 16
        %v5443 = vrot.slane %v5441, 5
        %v5444 = vor.u32 %v5440, %v5443
        %v5445 = vrot.slane %v5444, 4
        %v5447 = vshll.u32 %v4770, 16
        %v5449 = vrot.slane %v5447, 5
        %v5450 = vsel %vm2376, %v5445, %v5449
        %v5451 = vshrl.u32 %v4770, 16
        %v5453 = vrot.slane %v5451, 4
        %v5454 = vor.u32 %v5453, %v5449
        %v5455 = vrot.slane %v5454, 4
        %v5457 = vshll.u32 %v4807, 16
        %v5459 = vrot.slane %v5457, 5
        %v5460 = vsel %vm2376, %v5455, %v5459
        %v5462 = vshrl.u32 %v4771, 16
        %v5464 = vrot.slane %v5462, 4
        %v5465 = vshll.u32 %v4771, 16
        %v5467 = vrot.slane %v5465, 5
        %v5468 = vor.u32 %v5464, %v5467
        %v5469 = vrot.slane %v5468, 4
        %v5471 = vshll.u32 %v4772, 16
        %v5473 = vrot.slane %v5471, 5
        %v5474 = vsel %vm2376, %v5469, %v5473
        %v5475 = vshrl.u32 %v4772, 16
        %v5477 = vrot.slane %v5475, 4
        %v5478 = vor.u32 %v5477, %v5473
        %v5479 = vrot.slane %v5478, 4
        %v5481 = vshll.u32 %v4808, 16
        %v5483 = vrot.slane %v5481, 5
        %v5484 = vsel %vm2376, %v5479, %v5483
        %v5486 = vshrl.u32 %v4773, 16
        %v5488 = vrot.slane %v5486, 4
        %v5489 = vshll.u32 %v4773, 16
        %v5491 = vrot.slane %v5489, 5
        %v5492 = vor.u32 %v5488, %v5491
        %v5493 = vrot.slane %v5492, 4
        %v5495 = vshll.u32 %v4774, 16
        %v5497 = vrot.slane %v5495, 5
        %v5498 = vsel %vm2376, %v5493, %v5497
        %v5499 = vshrl.u32 %v4774, 16
        %v5501 = vrot.slane %v5499, 4
        %v5502 = vor.u32 %v5501, %v5497
        %v5503 = vrot.slane %v5502, 4
        %v5505 = vshll.u32 %v4809, 16
        %v5507 = vrot.slane %v5505, 5
        %v5508 = vsel %vm2376, %v5503, %v5507
        %v5510 = vshrl.u32 %v4775, 16
        %v5512 = vrot.slane %v5510, 4
        %v5513 = vshll.u32 %v4775, 16
        %v5515 = vrot.slane %v5513, 5
        %v5516 = vor.u32 %v5512, %v5515
        %v5517 = vrot.slane %v5516, 4
        %v5519 = vshll.u32 %v4776, 16
        %v5521 = vrot.slane %v5519, 5
        %v5522 = vsel %vm2376, %v5517, %v5521
        %v5523 = vshrl.u32 %v4776, 16
        %v5525 = vrot.slane %v5523, 4
        %v5526 = vor.u32 %v5525, %v5521
        %v5527 = vrot.slane %v5526, 4
        %v5529 = vshll.u32 %v4810, 16
        %v5531 = vrot.slane %v5529, 5
        %v5532 = vsel %vm2376, %v5527, %v5531
        %v5534 = vshrl.u32 %v4777, 16
        %v5536 = vrot.slane %v5534, 4
        %v5537 = vshll.u32 %v4777, 16
        %v5539 = vrot.slane %v5537, 5
        %v5540 = vor.u32 %v5536, %v5539
        %v5541 = vrot.slane %v5540, 4
        %v5543 = vshll.u32 %v4778, 16
        %v5545 = vrot.slane %v5543, 5
        %v5546 = vsel %vm2376, %v5541, %v5545
        %v5547 = vshrl.u32 %v4778, 16
        %v5549 = vrot.slane %v5547, 4
        %v5550 = vor.u32 %v5549, %v5545
        %v5551 = vrot.slane %v5550, 4
        %v5553 = vshll.u32 %v4811, 16
        %v5555 = vrot.slane %v5553, 5
        %v5556 = vsel %vm2376, %v5551, %v5555
        %v5558 = vshrl.u32 %v4779, 16
        %v5560 = vrot.slane %v5558, 4
        %v5561 = vshll.u32 %v4779, 16
        %v5563 = vrot.slane %v5561, 5
        %v5564 = vor.u32 %v5560, %v5563
        %v5565 = vrot.slane %v5564, 4
        %v5567 = vshll.u32 %v4780, 16
        %v5569 = vrot.slane %v5567, 5
        %v5570 = vsel %vm2376, %v5565, %v5569
        %v5571 = vshrl.u32 %v4780, 16
        %v5573 = vrot.slane %v5571, 4
        %v5574 = vor.u32 %v5573, %v5569
        %v5575 = vrot.slane %v5574, 4
        %v5577 = vshll.u32 %v4812, 16
        %v5579 = vrot.slane %v5577, 5
        %v5580 = vsel %vm2376, %v5575, %v5579
        %v5581 = vld [vmem:[%s4716] sm:$0xe]
        %v5582 = vld [vmem:[%s4716 + $0xc] sm:$0xe]
        %v5583 = vld [vmem:[%s4716 + $0x18] sm:$0xe]
        %v5584 = vld [vmem:[%s4716 + $0x24] sm:$0xe]
        %v5585 = vld [vmem:[%s4716 + $0x30] sm:$0xe]
        %v5586 = vld [vmem:[%s4716 + $0x3c] sm:$0xe]
        %v5587 = vld [vmem:[%s4716 + $0x48] sm:$0xe]
        %v5588 = vld [vmem:[%s4716 + $0x54] sm:$0xe]
        %v5589 = vld [vmem:[%s4716 + $0x60] sm:$0xe]
        %v5590 = vld [vmem:[%s4716 + $0x6c] sm:$0xe]
        %v5591 = vld [vmem:[%s4716 + $0x78] sm:$0xe]
        %v5592 = vld [vmem:[%s4716 + $0x84] sm:$0xe]
        %v5593 = vld [vmem:[%s4716 + $0x90] sm:$0xe]
        %v5594 = vld [vmem:[%s4716 + $0x9c] sm:$0xe]
        %v5595 = vld [vmem:[%s4716 + $0xa8] sm:$0xe]
        %v5596 = vld [vmem:[%s4716 + $0xb4] sm:$0xe]
        %v5597 = vld [vmem:[%s4716 + $0xd8] sm:$0xe]
        %v5598 = vld [vmem:[%s4716 + $0xe4] sm:$0xe]
        %v5599 = vld [vmem:[%s4716 + $0xf0] sm:$0xe]
        %v5600 = vld [vmem:[%s4716 + $0xfc] sm:$0xe]
        %v5601 = vld [vmem:[%s4716 + $0x108] sm:$0xe]
        %v5602 = vld [vmem:[%s4716 + $0x114] sm:$0xe]
        %v5603 = vld [vmem:[%s4716 + $0x120] sm:$0xe]
        %v5604 = vld [vmem:[%s4716 + $0x12c] sm:$0xe]
        %v5605 = vld [vmem:[%s4716 + $0x138] sm:$0xe]
        %v5606 = vld [vmem:[%s4716 + $0x144] sm:$0xe]
        %v5607 = vld [vmem:[%s4716 + $0x150] sm:$0xe]
        %v5608 = vld [vmem:[%s4716 + $0x15c] sm:$0xe]
        %v5609 = vld [vmem:[%s4716 + $0x168] sm:$0xe]
        %v5610 = vld [vmem:[%s4716 + $0x174] sm:$0xe]
        %v5611 = vld [vmem:[%s4716 + $0x180] sm:$0xe]
        %v5612 = vld [vmem:[%s4716 + $0x18c] sm:$0xe]
        %v5709 = vrot.slane %v5581, 5
        %v5710 = vrot.slane %v5709, 4
        %v5711 = vrot.slane %v4718, 5
        %v5712 = vsel %vm3275, %v5710, %v5711
        %v5713 = vrot.slane %v5711, 4
        %v5714 = vrot.slane %v4781, 5
        %v5715 = vsel %vm3275, %v5713, %v5714
        %v5716 = vrot.slane %v5582, 5
        %v5717 = vrot.slane %v5716, 4
        %v5718 = vrot.slane %v4720, 5
        %v5719 = vsel %vm3275, %v5717, %v5718
        %v5720 = vrot.slane %v5718, 4
        %v5721 = vrot.slane %v4782, 5
        %v5722 = vsel %vm3275, %v5720, %v5721
        %v5723 = vrot.slane %v5583, 5
        %v5724 = vrot.slane %v5723, 4
        %v5725 = vrot.slane %v4722, 5
        %v5726 = vsel %vm3275, %v5724, %v5725
        %v5727 = vrot.slane %v5725, 4
        %v5728 = vrot.slane %v4783, 5
        %v5729 = vsel %vm3275, %v5727, %v5728
        %v5730 = vrot.slane %v5584, 5
        %v5731 = vrot.slane %v5730, 4
        %v5732 = vrot.slane %v4724, 5
        %v5733 = vsel %vm3275, %v5731, %v5732
        %v5734 = vrot.slane %v5732, 4
        %v5735 = vrot.slane %v4784, 5
        %v5736 = vsel %vm3275, %v5734, %v5735
        %v5737 = vrot.slane %v5585, 5
        %v5738 = vrot.slane %v5737, 4
        %v5739 = vrot.slane %v4726, 5
        %v5740 = vsel %vm3275, %v5738, %v5739
        %v5741 = vrot.slane %v5739, 4
        %v5742 = vrot.slane %v4785, 5
        %v5743 = vsel %vm3275, %v5741, %v5742
        %v5744 = vrot.slane %v5586, 5
        %v5745 = vrot.slane %v5744, 4
        %v5746 = vrot.slane %v4728, 5
        %v5747 = vsel %vm3275, %v5745, %v5746
        %v5748 = vrot.slane %v5746, 4
        %v5749 = vrot.slane %v4786, 5
        %v5750 = vsel %vm3275, %v5748, %v5749
        %v5751 = vrot.slane %v5587, 5
        %v5752 = vrot.slane %v5751, 4
        %v5753 = vrot.slane %v4730, 5
        %v5754 = vsel %vm3275, %v5752, %v5753
        %v5755 = vrot.slane %v5753, 4
        %v5756 = vrot.slane %v4787, 5
        %v5757 = vsel %vm3275, %v5755, %v5756
        %v5758 = vrot.slane %v5588, 5
        %v5759 = vrot.slane %v5758, 4
        %v5760 = vrot.slane %v4732, 5
        %v5761 = vsel %vm3275, %v5759, %v5760
        %v5762 = vrot.slane %v5760, 4
        %v5763 = vrot.slane %v4788, 5
        %v5764 = vsel %vm3275, %v5762, %v5763
        %v5765 = vrot.slane %v5589, 5
        %v5766 = vrot.slane %v5765, 4
        %v5767 = vrot.slane %v4734, 5
        %v5768 = vsel %vm3275, %v5766, %v5767
        %v5769 = vrot.slane %v5767, 4
        %v5770 = vrot.slane %v4789, 5
        %v5771 = vsel %vm3275, %v5769, %v5770
        %v5772 = vrot.slane %v5590, 5
        %v5773 = vrot.slane %v5772, 4
        %v5774 = vrot.slane %v4736, 5
        %v5775 = vsel %vm3275, %v5773, %v5774
        %v5776 = vrot.slane %v5774, 4
        %v5777 = vrot.slane %v4790, 5
        %v5778 = vsel %vm3275, %v5776, %v5777
        %v5779 = vrot.slane %v5591, 5
        %v5780 = vrot.slane %v5779, 4
        %v5781 = vrot.slane %v4738, 5
        %v5782 = vsel %vm3275, %v5780, %v5781
        %v5783 = vrot.slane %v5781, 4
        %v5784 = vrot.slane %v4791, 5
        %v5785 = vsel %vm3275, %v5783, %v5784
        %v5786 = vrot.slane %v5592, 5
        %v5787 = vrot.slane %v5786, 4
        %v5788 = vrot.slane %v4740, 5
        %v5789 = vsel %vm3275, %v5787, %v5788
        %v5790 = vrot.slane %v5788, 4
        %v5791 = vrot.slane %v4792, 5
        %v5792 = vsel %vm3275, %v5790, %v5791
        %v5793 = vrot.slane %v5593, 5
        %v5794 = vrot.slane %v5793, 4
        %v5795 = vrot.slane %v4742, 5
        %v5796 = vsel %vm3275, %v5794, %v5795
        %v5797 = vrot.slane %v5795, 4
        %v5798 = vrot.slane %v4793, 5
        %v5799 = vsel %vm3275, %v5797, %v5798
        %v5800 = vrot.slane %v5594, 5
        %v5801 = vrot.slane %v5800, 4
        %v5802 = vrot.slane %v4744, 5
        %v5803 = vsel %vm3275, %v5801, %v5802
        %v5804 = vrot.slane %v5802, 4
        %v5805 = vrot.slane %v4794, 5
        %v5806 = vsel %vm3275, %v5804, %v5805
        %v5807 = vrot.slane %v5595, 5
        %v5808 = vrot.slane %v5807, 4
        %v5809 = vrot.slane %v4746, 5
        %v5810 = vsel %vm3275, %v5808, %v5809
        %v5811 = vrot.slane %v5809, 4
        %v5812 = vrot.slane %v4795, 5
        %v5813 = vsel %vm3275, %v5811, %v5812
        %v5814 = vrot.slane %v5596, 5
        %v5815 = vrot.slane %v5814, 4
        %v5816 = vrot.slane %v4748, 5
        %v5817 = vsel %vm3275, %v5815, %v5816
        %v5818 = vrot.slane %v5816, 4
        %v5819 = vrot.slane %v4796, 5
        %v5820 = vsel %vm3275, %v5818, %v5819
        %v5821 = vrot.slane %v5597, 5
        %v5822 = vrot.slane %v5821, 4
        %v5823 = vrot.slane %v4750, 5
        %v5824 = vsel %vm3275, %v5822, %v5823
        %v5825 = vrot.slane %v5823, 4
        %v5826 = vrot.slane %v4797, 5
        %v5827 = vsel %vm3275, %v5825, %v5826
        %v5828 = vrot.slane %v5598, 5
        %v5829 = vrot.slane %v5828, 4
        %v5830 = vrot.slane %v4752, 5
        %v5831 = vsel %vm3275, %v5829, %v5830
        %v5832 = vrot.slane %v5830, 4
        %v5833 = vrot.slane %v4798, 5
        %v5834 = vsel %vm3275, %v5832, %v5833
        %v5835 = vrot.slane %v5599, 5
        %v5836 = vrot.slane %v5835, 4
        %v5837 = vrot.slane %v4754, 5
        %v5838 = vsel %vm3275, %v5836, %v5837
        %v5839 = vrot.slane %v5837, 4
        %v5840 = vrot.slane %v4799, 5
        %v5841 = vsel %vm3275, %v5839, %v5840
        %v5842 = vrot.slane %v5600, 5
        %v5843 = vrot.slane %v5842, 4
        %v5844 = vrot.slane %v4756, 5
        %v5845 = vsel %vm3275, %v5843, %v5844
        %v5846 = vrot.slane %v5844, 4
        %v5847 = vrot.slane %v4800, 5
        %v5848 = vsel %vm3275, %v5846, %v5847
        %v5849 = vrot.slane %v5601, 5
        %v5850 = vrot.slane %v5849, 4
        %v5851 = vrot.slane %v4758, 5
        %v5852 = vsel %vm3275, %v5850, %v5851
        %v5853 = vrot.slane %v5851, 4
        %v5854 = vrot.slane %v4801, 5
        %v5855 = vsel %vm3275, %v5853, %v5854
        %v5856 = vrot.slane %v5602, 5
        %v5857 = vrot.slane %v5856, 4
        %v5858 = vrot.slane %v4760, 5
        %v5859 = vsel %vm3275, %v5857, %v5858
        %v5860 = vrot.slane %v5858, 4
        %v5861 = vrot.slane %v4802, 5
        %v5862 = vsel %vm3275, %v5860, %v5861
        %v5863 = vrot.slane %v5603, 5
        %v5864 = vrot.slane %v5863, 4
        %v5865 = vrot.slane %v4762, 5
        %v5866 = vsel %vm3275, %v5864, %v5865
        %v5867 = vrot.slane %v5865, 4
        %v5868 = vrot.slane %v4803, 5
        %v5869 = vsel %vm3275, %v5867, %v5868
        %v5870 = vrot.slane %v5604, 5
        %v5871 = vrot.slane %v5870, 4
        %v5872 = vrot.slane %v4764, 5
        %v5873 = vsel %vm3275, %v5871, %v5872
        %v5874 = vrot.slane %v5872, 4
        %v5875 = vrot.slane %v4804, 5
        %v5876 = vsel %vm3275, %v5874, %v5875
        %v5877 = vrot.slane %v5605, 5
        %v5878 = vrot.slane %v5877, 4
        %v5879 = vrot.slane %v4766, 5
        %v5880 = vsel %vm3275, %v5878, %v5879
        %v5881 = vrot.slane %v5879, 4
        %v5882 = vrot.slane %v4805, 5
        %v5883 = vsel %vm3275, %v5881, %v5882
        %v5884 = vrot.slane %v5606, 5
        %v5885 = vrot.slane %v5884, 4
        %v5886 = vrot.slane %v4768, 5
        %v5887 = vsel %vm3275, %v5885, %v5886
        %v5888 = vrot.slane %v5886, 4
        %v5889 = vrot.slane %v4806, 5
        %v5890 = vsel %vm3275, %v5888, %v5889
        %v5891 = vrot.slane %v5607, 5
        %v5892 = vrot.slane %v5891, 4
        %v5893 = vrot.slane %v4770, 5
        %v5894 = vsel %vm3275, %v5892, %v5893
        %v5895 = vrot.slane %v5893, 4
        %v5896 = vrot.slane %v4807, 5
        %v5897 = vsel %vm3275, %v5895, %v5896
        %v5898 = vrot.slane %v5608, 5
        %v5899 = vrot.slane %v5898, 4
        %v5900 = vrot.slane %v4772, 5
        %v5901 = vsel %vm3275, %v5899, %v5900
        %v5902 = vrot.slane %v5900, 4
        %v5903 = vrot.slane %v4808, 5
        %v5904 = vsel %vm3275, %v5902, %v5903
        %v5905 = vrot.slane %v5609, 5
        %v5906 = vrot.slane %v5905, 4
        %v5907 = vrot.slane %v4774, 5
        %v5908 = vsel %vm3275, %v5906, %v5907
        %v5909 = vrot.slane %v5907, 4
        %v5910 = vrot.slane %v4809, 5
        %v5911 = vsel %vm3275, %v5909, %v5910
        %v5912 = vrot.slane %v5610, 5
        %v5913 = vrot.slane %v5912, 4
        %v5914 = vrot.slane %v4776, 5
        %v5915 = vsel %vm3275, %v5913, %v5914
        %v5916 = vrot.slane %v5914, 4
        %v5917 = vrot.slane %v4810, 5
        %v5918 = vsel %vm3275, %v5916, %v5917
        %v5919 = vrot.slane %v5611, 5
        %v5920 = vrot.slane %v5919, 4
        %v5921 = vrot.slane %v4778, 5
        %v5922 = vsel %vm3275, %v5920, %v5921
        %v5923 = vrot.slane %v5921, 4
        %v5924 = vrot.slane %v4811, 5
        %v5925 = vsel %vm3275, %v5923, %v5924
        %v5926 = vrot.slane %v5612, 5
        %v5927 = vrot.slane %v5926, 4
        %v5928 = vrot.slane %v4780, 5
        %v5929 = vsel %vm3275, %v5927, %v5928
        %v5930 = vrot.slane %v5928, 4
        %v5931 = vrot.slane %v4812, 5
        %v5932 = vsel %vm3275, %v5930, %v5931
        %v5965 = vunpack.c.l.b16 %v2278
        %v5966 = vunpack.c.l.b16 %v2279
        %v5967 = vunpack.c.l.b16 %v2280
        %v5968 = vunpack.c.l.b16 %v2281
        %v5969 = vunpack.c.l.b16 %v2282
        %v5970 = vunpack.c.l.b16 %v2283
        %v5971 = vunpack.c.l.b16 %v2284
        %v5972 = vunpack.c.l.b16 %v2285
        %v5973 = vunpack.c.l.b16 %v2286
        %v5974 = vunpack.c.l.b16 %v2287
        %v5975 = vunpack.c.l.b16 %v2288
        %v5976 = vunpack.c.l.b16 %v2289
        %v5977 = vunpack.c.l.b16 %v2290
        %v5978 = vunpack.c.l.b16 %v2291
        %v5979 = vunpack.c.l.b16 %v2292
        %v5980 = vunpack.c.l.b16 %v2293
        %v5981 = vunpack.c.l.b16 %v2294
        %v5982 = vunpack.c.l.b16 %v2295
        %v5983 = vunpack.c.l.b16 %v2296
        %v5984 = vunpack.c.l.b16 %v2297
        %v5985 = vunpack.c.l.b16 %v2298
        %v5986 = vunpack.c.l.b16 %v2299
        %v5987 = vunpack.c.l.b16 %v2300
        %v5988 = vunpack.c.l.b16 %v2301
        %v5989 = vunpack.c.l.b16 %v2302
        %v5990 = vunpack.c.l.b16 %v2303
        %v5991 = vunpack.c.l.b16 %v2304
        %v5992 = vunpack.c.l.b16 %v2305
        %v5993 = vunpack.c.l.b16 %v2306
        %v5994 = vunpack.c.l.b16 %v2307
        %v5995 = vunpack.c.l.b16 %v2308
        %v5996 = vunpack.c.l.b16 %v2309
        %v5997 = vunpack.c.l.b16 %v2310
        %v5998 = vunpack.c.l.b16 %v2311
        %v5999 = vunpack.c.l.b16 %v2312
        %v6000 = vunpack.c.l.b16 %v2313
        %v6001 = vunpack.c.l.b16 %v2314
        %v6002 = vunpack.c.l.b16 %v2315
        %v6003 = vunpack.c.l.b16 %v2316
        %v6004 = vunpack.c.l.b16 %v2317
        %v6005 = vunpack.c.l.b16 %v2318
        %v6006 = vunpack.c.l.b16 %v2319
        %v6007 = vunpack.c.l.b16 %v2320
        %v6008 = vunpack.c.l.b16 %v2321
        %v6009 = vunpack.c.l.b16 %v2322
        %v6010 = vunpack.c.l.b16 %v2323
        %v6011 = vunpack.c.l.b16 %v2324
        %v6012 = vunpack.c.l.b16 %v2325
        %v6013 = vunpack.c.l.b16 %v2326
        %v6014 = vunpack.c.l.b16 %v2327
        %v6015 = vunpack.c.l.b16 %v2328
        %v6016 = vunpack.c.l.b16 %v2329
        %v6017 = vunpack.c.l.b16 %v2330
        %v6018 = vunpack.c.l.b16 %v2331
        %v6019 = vunpack.c.l.b16 %v2332
        %v6020 = vunpack.c.l.b16 %v2333
        %v6021 = vunpack.c.l.b16 %v2334
        %v6022 = vunpack.c.l.b16 %v2335
        %v6023 = vunpack.c.l.b16 %v2336
        %v6024 = vunpack.c.l.b16 %v2337
        %v6025 = vunpack.c.l.b16 %v2338
        %v6026 = vunpack.c.l.b16 %v2339
        %v6027 = vunpack.c.l.b16 %v2340
        %v6028 = vunpack.c.l.b16 %v2341
        %v6029 = vpack.c.b16 %v5966, %v5965
        %v6030 = vpack.c.b16 %v5968, %v5967
        %v6031 = vpack.c.b16 %v5970, %v5969
        %v6032 = vpack.c.b16 %v5972, %v5971
        %v6033 = vpack.c.b16 %v5974, %v5973
        %v6034 = vpack.c.b16 %v5976, %v5975
        %v6035 = vpack.c.b16 %v5978, %v5977
        %v6036 = vpack.c.b16 %v5980, %v5979
        %v6037 = vpack.c.b16 %v5982, %v5981
        %v6038 = vpack.c.b16 %v5984, %v5983
        %v6039 = vpack.c.b16 %v5986, %v5985
        %v6040 = vpack.c.b16 %v5988, %v5987
        %v6041 = vpack.c.b16 %v5990, %v5989
        %v6042 = vpack.c.b16 %v5992, %v5991
        %v6043 = vpack.c.b16 %v5994, %v5993
        %v6044 = vpack.c.b16 %v5996, %v5995
        %v6045 = vpack.c.b16 %v5998, %v5997
        %v6046 = vpack.c.b16 %v6000, %v5999
        %v6047 = vpack.c.b16 %v6002, %v6001
        %v6048 = vpack.c.b16 %v6004, %v6003
        %v6049 = vpack.c.b16 %v6006, %v6005
        %v6050 = vpack.c.b16 %v6008, %v6007
        %v6051 = vpack.c.b16 %v6010, %v6009
        %v6052 = vpack.c.b16 %v6012, %v6011
        %v6053 = vpack.c.b16 %v6014, %v6013
        %v6054 = vpack.c.b16 %v6016, %v6015
        %v6055 = vpack.c.b16 %v6018, %v6017
        %v6056 = vpack.c.b16 %v6020, %v6019
        %v6057 = vpack.c.b16 %v6022, %v6021
        %v6058 = vpack.c.b16 %v6024, %v6023
        %v6059 = vpack.c.b16 %v6026, %v6025
        %v6060 = vpack.c.b16 %v6028, %v6027
        %v6061 = vunpack.c.l.b16 %v2390
        %v6062 = vunpack.c.l.b16 %v2400
        %v6063 = vunpack.c.l.b16 %v2414
        %v6064 = vunpack.c.l.b16 %v2424
        %v6065 = vunpack.c.l.b16 %v2438
        %v6066 = vunpack.c.l.b16 %v2448
        %v6067 = vunpack.c.l.b16 %v2462
        %v6068 = vunpack.c.l.b16 %v2472
        %v6069 = vunpack.c.l.b16 %v2486
        %v6070 = vunpack.c.l.b16 %v2496
        %v6071 = vunpack.c.l.b16 %v2510
        %v6072 = vunpack.c.l.b16 %v2520
        %v6073 = vunpack.c.l.b16 %v2534
        %v6074 = vunpack.c.l.b16 %v2544
        %v6075 = vunpack.c.l.b16 %v2558
        %v6076 = vunpack.c.l.b16 %v2568
        %v6077 = vunpack.c.l.b16 %v2582
        %v6078 = vunpack.c.l.b16 %v2592
        %v6079 = vunpack.c.l.b16 %v2606
        %v6080 = vunpack.c.l.b16 %v2616
        %v6081 = vunpack.c.l.b16 %v2630
        %v6082 = vunpack.c.l.b16 %v2640
        %v6083 = vunpack.c.l.b16 %v2654
        %v6084 = vunpack.c.l.b16 %v2664
        %v6085 = vunpack.c.l.b16 %v2678
        %v6086 = vunpack.c.l.b16 %v2688
        %v6087 = vunpack.c.l.b16 %v2702
        %v6088 = vunpack.c.l.b16 %v2712
        %v6089 = vunpack.c.l.b16 %v2726
        %v6090 = vunpack.c.l.b16 %v2736
        %v6091 = vunpack.c.l.b16 %v2750
        %v6092 = vunpack.c.l.b16 %v2760
        %v6093 = vunpack.c.l.b16 %v2774
        %v6094 = vunpack.c.l.b16 %v2784
        %v6095 = vunpack.c.l.b16 %v2798
        %v6096 = vunpack.c.l.b16 %v2808
        %v6097 = vunpack.c.l.b16 %v2822
        %v6098 = vunpack.c.l.b16 %v2832
        %v6099 = vunpack.c.l.b16 %v2846
        %v6100 = vunpack.c.l.b16 %v2856
        %v6101 = vunpack.c.l.b16 %v2870
        %v6102 = vunpack.c.l.b16 %v2880
        %v6103 = vunpack.c.l.b16 %v2894
        %v6104 = vunpack.c.l.b16 %v2904
        %v6105 = vunpack.c.l.b16 %v2918
        %v6106 = vunpack.c.l.b16 %v2928
        %v6107 = vunpack.c.l.b16 %v2942
        %v6108 = vunpack.c.l.b16 %v2952
        %v6109 = vunpack.c.l.b16 %v2966
        %v6110 = vunpack.c.l.b16 %v2976
        %v6111 = vunpack.c.l.b16 %v2990
        %v6112 = vunpack.c.l.b16 %v3000
        %v6113 = vunpack.c.l.b16 %v3014
        %v6114 = vunpack.c.l.b16 %v3024
        %v6115 = vunpack.c.l.b16 %v3038
        %v6116 = vunpack.c.l.b16 %v3048
        %v6117 = vunpack.c.l.b16 %v3062
        %v6118 = vunpack.c.l.b16 %v3072
        %v6119 = vunpack.c.l.b16 %v3086
        %v6120 = vunpack.c.l.b16 %v3096
        %v6121 = vunpack.c.l.b16 %v3110
        %v6122 = vunpack.c.l.b16 %v3120
        %v6123 = vunpack.c.l.b16 %v3134
        %v6124 = vunpack.c.l.b16 %v3144
        %v6125 = vpack.c.b16 %v6062, %v6061
        %v6126 = vpack.c.b16 %v6064, %v6063
        %v6127 = vpack.c.b16 %v6066, %v6065
        %v6128 = vpack.c.b16 %v6068, %v6067
        %v6129 = vpack.c.b16 %v6070, %v6069
        %v6130 = vpack.c.b16 %v6072, %v6071
        %v6131 = vpack.c.b16 %v6074, %v6073
        %v6132 = vpack.c.b16 %v6076, %v6075
        %v6133 = vpack.c.b16 %v6078, %v6077
        %v6134 = vpack.c.b16 %v6080, %v6079
        %v6135 = vpack.c.b16 %v6082, %v6081
        %v6136 = vpack.c.b16 %v6084, %v6083
        %v6137 = vpack.c.b16 %v6086, %v6085
        %v6138 = vpack.c.b16 %v6088, %v6087
        %v6139 = vpack.c.b16 %v6090, %v6089
        %v6140 = vpack.c.b16 %v6092, %v6091
        %v6141 = vpack.c.b16 %v6094, %v6093
        %v6142 = vpack.c.b16 %v6096, %v6095
        %v6143 = vpack.c.b16 %v6098, %v6097
        %v6144 = vpack.c.b16 %v6100, %v6099
        %v6145 = vpack.c.b16 %v6102, %v6101
        %v6146 = vpack.c.b16 %v6104, %v6103
        %v6147 = vpack.c.b16 %v6106, %v6105
        %v6148 = vpack.c.b16 %v6108, %v6107
        %v6149 = vpack.c.b16 %v6110, %v6109
        %v6150 = vpack.c.b16 %v6112, %v6111
        %v6151 = vpack.c.b16 %v6114, %v6113
        %v6152 = vpack.c.b16 %v6116, %v6115
        %v6153 = vpack.c.b16 %v6118, %v6117
        %v6154 = vpack.c.b16 %v6120, %v6119
        %v6155 = vpack.c.b16 %v6122, %v6121
        %v6156 = vpack.c.b16 %v6124, %v6123
        %6157 = vrot.lane.b32.xlu0 %v6125, 32
        %v6158 = vpop.permute.xlu0 %6157
        %6159 = vrot.lane.b32.xlu0 %v6126, 32
        %v6160 = vpop.permute.xlu0 %6159
        %6161 = vrot.lane.b32.xlu0 %v6127, 32
        %v6162 = vpop.permute.xlu0 %6161
        %6163 = vrot.lane.b32.xlu0 %v6128, 32
        %v6164 = vpop.permute.xlu0 %6163
        %6165 = vrot.lane.b32.xlu0 %v6129, 32
        %v6166 = vpop.permute.xlu0 %6165
        %6167 = vrot.lane.b32.xlu0 %v6130, 32
        %v6168 = vpop.permute.xlu0 %6167
        %6169 = vrot.lane.b32.xlu0 %v6131, 32
        %v6170 = vpop.permute.xlu0 %6169
        %6171 = vrot.lane.b32.xlu0 %v6132, 32
        %v6172 = vpop.permute.xlu0 %6171
        %6173 = vrot.lane.b32.xlu0 %v6133, 32
        %v6174 = vpop.permute.xlu0 %6173
        %6175 = vrot.lane.b32.xlu0 %v6134, 32
        %v6176 = vpop.permute.xlu0 %6175
        %6177 = vrot.lane.b32.xlu0 %v6135, 32
        %v6178 = vpop.permute.xlu0 %6177
        %6179 = vrot.lane.b32.xlu0 %v6136, 32
        %v6180 = vpop.permute.xlu0 %6179
        %6181 = vrot.lane.b32.xlu0 %v6137, 32
        %v6182 = vpop.permute.xlu0 %6181
        %6183 = vrot.lane.b32.xlu0 %v6138, 32
        %v6184 = vpop.permute.xlu0 %6183
        %6185 = vrot.lane.b32.xlu0 %v6139, 32
        %v6186 = vpop.permute.xlu0 %6185
        %6187 = vrot.lane.b32.xlu0 %v6140, 32
        %v6188 = vpop.permute.xlu0 %6187
        %6189 = vrot.lane.b32.xlu0 %v6141, 32
        %v6190 = vpop.permute.xlu0 %6189
        %6191 = vrot.lane.b32.xlu0 %v6142, 32
        %v6192 = vpop.permute.xlu0 %6191
        %6193 = vrot.lane.b32.xlu0 %v6143, 32
        %v6194 = vpop.permute.xlu0 %6193
        %6195 = vrot.lane.b32.xlu0 %v6144, 32
        %v6196 = vpop.permute.xlu0 %6195
        %6197 = vrot.lane.b32.xlu0 %v6145, 32
        %v6198 = vpop.permute.xlu0 %6197
        %6199 = vrot.lane.b32.xlu0 %v6146, 32
        %v6200 = vpop.permute.xlu0 %6199
        %6201 = vrot.lane.b32.xlu0 %v6147, 32
        %v6202 = vpop.permute.xlu0 %6201
        %6203 = vrot.lane.b32.xlu0 %v6148, 32
        %v6204 = vpop.permute.xlu0 %6203
        %6205 = vrot.lane.b32.xlu0 %v6149, 32
        %v6206 = vpop.permute.xlu0 %6205
        %6207 = vrot.lane.b32.xlu0 %v6150, 32
        %v6208 = vpop.permute.xlu0 %6207
        %6209 = vrot.lane.b32.xlu0 %v6151, 32
        %v6210 = vpop.permute.xlu0 %6209
        %6211 = vrot.lane.b32.xlu0 %v6152, 32
        %v6212 = vpop.permute.xlu0 %6211
        %6213 = vrot.lane.b32.xlu0 %v6153, 32
        %v6214 = vpop.permute.xlu0 %6213
        %6215 = vrot.lane.b32.xlu0 %v6154, 32
        %v6216 = vpop.permute.xlu0 %6215
        %6217 = vrot.lane.b32.xlu0 %v6155, 32
        %v6218 = vpop.permute.xlu0 %6217
        %6219 = vrot.lane.b32.xlu0 %v6156, 32
        %v6220 = vpop.permute.xlu0 %6219
        %v6221 = vunpack.c.l.b16 %v3279
        %v6222 = vunpack.c.l.b16 %v3282
        %v6223 = vunpack.c.l.b16 %v3286
        %v6224 = vunpack.c.l.b16 %v3289
        %v6225 = vunpack.c.l.b16 %v3293
        %v6226 = vunpack.c.l.b16 %v3296
        %v6227 = vunpack.c.l.b16 %v3300
        %v6228 = vunpack.c.l.b16 %v3303
        %v6229 = vunpack.c.l.b16 %v3307
        %v6230 = vunpack.c.l.b16 %v3310
        %v6231 = vunpack.c.l.b16 %v3314
        %v6232 = vunpack.c.l.b16 %v3317
        %v6233 = vunpack.c.l.b16 %v3321
        %v6234 = vunpack.c.l.b16 %v3324
        %v6235 = vunpack.c.l.b16 %v3328
        %v6236 = vunpack.c.l.b16 %v3331
        %v6237 = vunpack.c.l.b16 %v3335
        %v6238 = vunpack.c.l.b16 %v3338
        %v6239 = vunpack.c.l.b16 %v3342
        %v6240 = vunpack.c.l.b16 %v3345
        %v6241 = vunpack.c.l.b16 %v3349
        %v6242 = vunpack.c.l.b16 %v3352
        %v6243 = vunpack.c.l.b16 %v3356
        %v6244 = vunpack.c.l.b16 %v3359
        %v6245 = vunpack.c.l.b16 %v3363
        %v6246 = vunpack.c.l.b16 %v3366
        %v6247 = vunpack.c.l.b16 %v3370
        %v6248 = vunpack.c.l.b16 %v3373
        %v6249 = vunpack.c.l.b16 %v3377
        %v6250 = vunpack.c.l.b16 %v3380
        %v6251 = vunpack.c.l.b16 %v3384
        %v6252 = vunpack.c.l.b16 %v3387
        %v6253 = vunpack.c.l.b16 %v3391
        %v6254 = vunpack.c.l.b16 %v3394
        %v6255 = vunpack.c.l.b16 %v3398
        %v6256 = vunpack.c.l.b16 %v3401
        %v6257 = vunpack.c.l.b16 %v3405
        %v6258 = vunpack.c.l.b16 %v3408
        %v6259 = vunpack.c.l.b16 %v3412
        %v6260 = vunpack.c.l.b16 %v3415
        %v6261 = vunpack.c.l.b16 %v3419
        %v6262 = vunpack.c.l.b16 %v3422
        %v6263 = vunpack.c.l.b16 %v3426
        %v6264 = vunpack.c.l.b16 %v3429
        %v6265 = vunpack.c.l.b16 %v3433
        %v6266 = vunpack.c.l.b16 %v3436
        %v6267 = vunpack.c.l.b16 %v3440
        %v6268 = vunpack.c.l.b16 %v3443
        %v6269 = vunpack.c.l.b16 %v3447
        %v6270 = vunpack.c.l.b16 %v3450
        %v6271 = vunpack.c.l.b16 %v3454
        %v6272 = vunpack.c.l.b16 %v3457
        %v6273 = vunpack.c.l.b16 %v3461
        %v6274 = vunpack.c.l.b16 %v3464
        %v6275 = vunpack.c.l.b16 %v3468
        %v6276 = vunpack.c.l.b16 %v3471
        %v6277 = vunpack.c.l.b16 %v3475
        %v6278 = vunpack.c.l.b16 %v3478
        %v6279 = vunpack.c.l.b16 %v3482
        %v6280 = vunpack.c.l.b16 %v3485
        %v6281 = vunpack.c.l.b16 %v3489
        %v6282 = vunpack.c.l.b16 %v3492
        %v6283 = vunpack.c.l.b16 %v3496
        %v6284 = vunpack.c.l.b16 %v3499
        %v6285 = vpack.c.b16 %v6222, %v6221
        %v6286 = vpack.c.b16 %v6224, %v6223
        %v6287 = vpack.c.b16 %v6226, %v6225
        %v6288 = vpack.c.b16 %v6228, %v6227
        %v6289 = vpack.c.b16 %v6230, %v6229
        %v6290 = vpack.c.b16 %v6232, %v6231
        %v6291 = vpack.c.b16 %v6234, %v6233
        %v6292 = vpack.c.b16 %v6236, %v6235
        %v6293 = vpack.c.b16 %v6238, %v6237
        %v6294 = vpack.c.b16 %v6240, %v6239
        %v6295 = vpack.c.b16 %v6242, %v6241
        %v6296 = vpack.c.b16 %v6244, %v6243
        %v6297 = vpack.c.b16 %v6246, %v6245
        %v6298 = vpack.c.b16 %v6248, %v6247
        %v6299 = vpack.c.b16 %v6250, %v6249
        %v6300 = vpack.c.b16 %v6252, %v6251
        %v6301 = vpack.c.b16 %v6254, %v6253
        %v6302 = vpack.c.b16 %v6256, %v6255
        %v6303 = vpack.c.b16 %v6258, %v6257
        %v6304 = vpack.c.b16 %v6260, %v6259
        %v6305 = vpack.c.b16 %v6262, %v6261
        %v6306 = vpack.c.b16 %v6264, %v6263
        %v6307 = vpack.c.b16 %v6266, %v6265
        %v6308 = vpack.c.b16 %v6268, %v6267
        %v6309 = vpack.c.b16 %v6270, %v6269
        %v6310 = vpack.c.b16 %v6272, %v6271
        %v6311 = vpack.c.b16 %v6274, %v6273
        %v6312 = vpack.c.b16 %v6276, %v6275
        %v6313 = vpack.c.b16 %v6278, %v6277
        %v6314 = vpack.c.b16 %v6280, %v6279
        %v6315 = vpack.c.b16 %v6282, %v6281
        %v6316 = vpack.c.b16 %v6284, %v6283
        %6317 = vrot.lane.b32.xlu0 %v6285, 64
        %v6318 = vpop.permute.xlu0 %6317
        %6319 = vrot.lane.b32.xlu0 %v6286, 64
        %v6320 = vpop.permute.xlu0 %6319
        %6321 = vrot.lane.b32.xlu0 %v6287, 64
        %v6322 = vpop.permute.xlu0 %6321
        %6323 = vrot.lane.b32.xlu0 %v6288, 64
        %v6324 = vpop.permute.xlu0 %6323
        %6325 = vrot.lane.b32.xlu0 %v6289, 64
        %v6326 = vpop.permute.xlu0 %6325
        %6327 = vrot.lane.b32.xlu0 %v6290, 64
        %v6328 = vpop.permute.xlu0 %6327
        %6329 = vrot.lane.b32.xlu0 %v6291, 64
        %v6330 = vpop.permute.xlu0 %6329
        %6331 = vrot.lane.b32.xlu0 %v6292, 64
        %v6332 = vpop.permute.xlu0 %6331
        %6333 = vrot.lane.b32.xlu0 %v6293, 64
        %v6334 = vpop.permute.xlu0 %6333
        %6335 = vrot.lane.b32.xlu0 %v6294, 64
        %v6336 = vpop.permute.xlu0 %6335
        %6337 = vrot.lane.b32.xlu0 %v6295, 64
        %v6338 = vpop.permute.xlu0 %6337
        %6339 = vrot.lane.b32.xlu0 %v6296, 64
        %v6340 = vpop.permute.xlu0 %6339
        %6341 = vrot.lane.b32.xlu0 %v6297, 64
        %v6342 = vpop.permute.xlu0 %6341
        %6343 = vrot.lane.b32.xlu0 %v6298, 64
        %v6344 = vpop.permute.xlu0 %6343
        %6345 = vrot.lane.b32.xlu0 %v6299, 64
        %v6346 = vpop.permute.xlu0 %6345
        %6347 = vrot.lane.b32.xlu0 %v6300, 64
        %v6348 = vpop.permute.xlu0 %6347
        %6349 = vrot.lane.b32.xlu0 %v6301, 64
        %v6350 = vpop.permute.xlu0 %6349
        %6351 = vrot.lane.b32.xlu0 %v6302, 64
        %v6352 = vpop.permute.xlu0 %6351
        %6353 = vrot.lane.b32.xlu0 %v6303, 64
        %v6354 = vpop.permute.xlu0 %6353
        %6355 = vrot.lane.b32.xlu0 %v6304, 64
        %v6356 = vpop.permute.xlu0 %6355
        %6357 = vrot.lane.b32.xlu0 %v6305, 64
        %v6358 = vpop.permute.xlu0 %6357
        %6359 = vrot.lane.b32.xlu0 %v6306, 64
        %v6360 = vpop.permute.xlu0 %6359
        %6361 = vrot.lane.b32.xlu0 %v6307, 64
        %v6362 = vpop.permute.xlu0 %6361
        %6363 = vrot.lane.b32.xlu0 %v6308, 64
        %v6364 = vpop.permute.xlu0 %6363
        %6365 = vrot.lane.b32.xlu0 %v6309, 64
        %v6366 = vpop.permute.xlu0 %6365
        %6367 = vrot.lane.b32.xlu0 %v6310, 64
        %v6368 = vpop.permute.xlu0 %6367
        %6369 = vrot.lane.b32.xlu0 %v6311, 64
        %v6370 = vpop.permute.xlu0 %6369
        %6371 = vrot.lane.b32.xlu0 %v6312, 64
        %v6372 = vpop.permute.xlu0 %6371
        %6373 = vrot.lane.b32.xlu0 %v6313, 64
        %v6374 = vpop.permute.xlu0 %6373
        %6375 = vrot.lane.b32.xlu0 %v6314, 64
        %v6376 = vpop.permute.xlu0 %6375
        %6377 = vrot.lane.b32.xlu0 %v6315, 64
        %v6378 = vpop.permute.xlu0 %6377
        %6379 = vrot.lane.b32.xlu0 %v6316, 64
        %v6380 = vpop.permute.xlu0 %6379
        %v6413 = vunpack.c.l.b16 %v3500
        %v6414 = vunpack.c.l.b16 %v3501
        %v6415 = vunpack.c.l.b16 %v3502
        %v6416 = vunpack.c.l.b16 %v3503
        %v6417 = vunpack.c.l.b16 %v3504
        %v6418 = vunpack.c.l.b16 %v3505
        %v6419 = vunpack.c.l.b16 %v3506
        %v6420 = vunpack.c.l.b16 %v3507
        %v6421 = vunpack.c.l.b16 %v3508
        %v6422 = vunpack.c.l.b16 %v3509
        %v6423 = vunpack.c.l.b16 %v3510
        %v6424 = vunpack.c.l.b16 %v3511
        %v6425 = vunpack.c.l.b16 %v3512
        %v6426 = vunpack.c.l.b16 %v3513
        %v6427 = vunpack.c.l.b16 %v3514
        %v6428 = vunpack.c.l.b16 %v3515
        %v6429 = vunpack.c.l.b16 %v3516
        %v6430 = vunpack.c.l.b16 %v3517
        %v6431 = vunpack.c.l.b16 %v3518
        %v6432 = vunpack.c.l.b16 %v3519
        %v6433 = vunpack.c.l.b16 %v3520
        %v6434 = vunpack.c.l.b16 %v3521
        %v6435 = vunpack.c.l.b16 %v3522
        %v6436 = vunpack.c.l.b16 %v3523
        %v6437 = vunpack.c.l.b16 %v3524
        %v6438 = vunpack.c.l.b16 %v3525
        %v6439 = vunpack.c.l.b16 %v3526
        %v6440 = vunpack.c.l.b16 %v3527
        %v6441 = vunpack.c.l.b16 %v3528
        %v6442 = vunpack.c.l.b16 %v3529
        %v6443 = vunpack.c.l.b16 %v3530
        %v6444 = vunpack.c.l.b16 %v3531
        %v6445 = vunpack.c.l.b16 %v3532
        %v6446 = vunpack.c.l.b16 %v3533
        %v6447 = vunpack.c.l.b16 %v3534
        %v6448 = vunpack.c.l.b16 %v3535
        %v6449 = vunpack.c.l.b16 %v3536
        %v6450 = vunpack.c.l.b16 %v3537
        %v6451 = vunpack.c.l.b16 %v3538
        %v6452 = vunpack.c.l.b16 %v3539
        %v6453 = vunpack.c.l.b16 %v3540
        %v6454 = vunpack.c.l.b16 %v3541
        %v6455 = vunpack.c.l.b16 %v3542
        %v6456 = vunpack.c.l.b16 %v3543
        %v6457 = vunpack.c.l.b16 %v3544
        %v6458 = vunpack.c.l.b16 %v3545
        %v6459 = vunpack.c.l.b16 %v3546
        %v6460 = vunpack.c.l.b16 %v3547
        %v6461 = vunpack.c.l.b16 %v3548
        %v6462 = vunpack.c.l.b16 %v3549
        %v6463 = vunpack.c.l.b16 %v3550
        %v6464 = vunpack.c.l.b16 %v3551
        %v6465 = vunpack.c.l.b16 %v3552
        %v6466 = vunpack.c.l.b16 %v3553
        %v6467 = vunpack.c.l.b16 %v3554
        %v6468 = vunpack.c.l.b16 %v3555
        %v6469 = vunpack.c.l.b16 %v3556
        %v6470 = vunpack.c.l.b16 %v3557
        %v6471 = vunpack.c.l.b16 %v3558
        %v6472 = vunpack.c.l.b16 %v3559
        %v6473 = vunpack.c.l.b16 %v3560
        %v6474 = vunpack.c.l.b16 %v3561
        %v6475 = vunpack.c.l.b16 %v3562
        %v6476 = vunpack.c.l.b16 %v3563
        %v6477 = vpack.c.b16 %v6414, %v6413
        %v6478 = vpack.c.b16 %v6416, %v6415
        %v6479 = vpack.c.b16 %v6418, %v6417
        %v6480 = vpack.c.b16 %v6420, %v6419
        %v6481 = vpack.c.b16 %v6422, %v6421
        %v6482 = vpack.c.b16 %v6424, %v6423
        %v6483 = vpack.c.b16 %v6426, %v6425
        %v6484 = vpack.c.b16 %v6428, %v6427
        %v6485 = vpack.c.b16 %v6430, %v6429
        %v6486 = vpack.c.b16 %v6432, %v6431
        %v6487 = vpack.c.b16 %v6434, %v6433
        %v6488 = vpack.c.b16 %v6436, %v6435
        %v6489 = vpack.c.b16 %v6438, %v6437
        %v6490 = vpack.c.b16 %v6440, %v6439
        %v6491 = vpack.c.b16 %v6442, %v6441
        %v6492 = vpack.c.b16 %v6444, %v6443
        %v6493 = vpack.c.b16 %v6446, %v6445
        %v6494 = vpack.c.b16 %v6448, %v6447
        %v6495 = vpack.c.b16 %v6450, %v6449
        %v6496 = vpack.c.b16 %v6452, %v6451
        %v6497 = vpack.c.b16 %v6454, %v6453
        %v6498 = vpack.c.b16 %v6456, %v6455
        %v6499 = vpack.c.b16 %v6458, %v6457
        %v6500 = vpack.c.b16 %v6460, %v6459
        %v6501 = vpack.c.b16 %v6462, %v6461
        %v6502 = vpack.c.b16 %v6464, %v6463
        %v6503 = vpack.c.b16 %v6466, %v6465
        %v6504 = vpack.c.b16 %v6468, %v6467
        %v6505 = vpack.c.b16 %v6470, %v6469
        %v6506 = vpack.c.b16 %v6472, %v6471
        %v6507 = vpack.c.b16 %v6474, %v6473
        %v6508 = vpack.c.b16 %v6476, %v6475
        %6509 = vrot.lane.b32.xlu0 %v6477, 96
        %v6510 = vpop.permute.xlu0 %6509
        %6511 = vrot.lane.b32.xlu0 %v6478, 96
        %v6512 = vpop.permute.xlu0 %6511
        %6513 = vrot.lane.b32.xlu0 %v6479, 96
        %v6514 = vpop.permute.xlu0 %6513
        %6515 = vrot.lane.b32.xlu0 %v6480, 96
        %v6516 = vpop.permute.xlu0 %6515
        %6517 = vrot.lane.b32.xlu0 %v6481, 96
        %v6518 = vpop.permute.xlu0 %6517
        %6519 = vrot.lane.b32.xlu0 %v6482, 96
        %v6520 = vpop.permute.xlu0 %6519
        %6521 = vrot.lane.b32.xlu0 %v6483, 96
        %v6522 = vpop.permute.xlu0 %6521
        %6523 = vrot.lane.b32.xlu0 %v6484, 96
        %v6524 = vpop.permute.xlu0 %6523
        %6525 = vrot.lane.b32.xlu0 %v6485, 96
        %v6526 = vpop.permute.xlu0 %6525
        %6527 = vrot.lane.b32.xlu0 %v6486, 96
        %v6528 = vpop.permute.xlu0 %6527
        %6529 = vrot.lane.b32.xlu0 %v6487, 96
        %v6530 = vpop.permute.xlu0 %6529
        %6531 = vrot.lane.b32.xlu0 %v6488, 96
        %v6532 = vpop.permute.xlu0 %6531
        %6533 = vrot.lane.b32.xlu0 %v6489, 96
        %v6534 = vpop.permute.xlu0 %6533
        %6535 = vrot.lane.b32.xlu0 %v6490, 96
        %v6536 = vpop.permute.xlu0 %6535
        %6537 = vrot.lane.b32.xlu0 %v6491, 96
        %v6538 = vpop.permute.xlu0 %6537
        %6539 = vrot.lane.b32.xlu0 %v6492, 96
        %v6540 = vpop.permute.xlu0 %6539
        %6541 = vrot.lane.b32.xlu0 %v6493, 96
        %v6542 = vpop.permute.xlu0 %6541
        %6543 = vrot.lane.b32.xlu0 %v6494, 96
        %v6544 = vpop.permute.xlu0 %6543
        %6545 = vrot.lane.b32.xlu0 %v6495, 96
        %v6546 = vpop.permute.xlu0 %6545
        %6547 = vrot.lane.b32.xlu0 %v6496, 96
        %v6548 = vpop.permute.xlu0 %6547
        %6549 = vrot.lane.b32.xlu0 %v6497, 96
        %v6550 = vpop.permute.xlu0 %6549
        %6551 = vrot.lane.b32.xlu0 %v6498, 96
        %v6552 = vpop.permute.xlu0 %6551
        %6553 = vrot.lane.b32.xlu0 %v6499, 96
        %v6554 = vpop.permute.xlu0 %6553
        %6555 = vrot.lane.b32.xlu0 %v6500, 96
        %v6556 = vpop.permute.xlu0 %6555
        %6557 = vrot.lane.b32.xlu0 %v6501, 96
        %v6558 = vpop.permute.xlu0 %6557
        %6559 = vrot.lane.b32.xlu0 %v6502, 96
        %v6560 = vpop.permute.xlu0 %6559
        %6561 = vrot.lane.b32.xlu0 %v6503, 96
        %v6562 = vpop.permute.xlu0 %6561
        %6563 = vrot.lane.b32.xlu0 %v6504, 96
        %v6564 = vpop.permute.xlu0 %6563
        %6565 = vrot.lane.b32.xlu0 %v6505, 96
        %v6566 = vpop.permute.xlu0 %6565
        %6567 = vrot.lane.b32.xlu0 %v6506, 96
        %v6568 = vpop.permute.xlu0 %6567
        %6569 = vrot.lane.b32.xlu0 %v6507, 96
        %v6570 = vpop.permute.xlu0 %6569
        %6571 = vrot.lane.b32.xlu0 %v6508, 96
        %v6572 = vpop.permute.xlu0 %6571
        %v6573 = vunpack.c.l.b16 %v3609
        %v6574 = vunpack.c.l.b16 %v3619
        %v6575 = vunpack.c.l.b16 %v3633
        %v6576 = vunpack.c.l.b16 %v3643
        %v6577 = vunpack.c.l.b16 %v3657
        %v6578 = vunpack.c.l.b16 %v3667
        %v6579 = vunpack.c.l.b16 %v3681
        %v6580 = vunpack.c.l.b16 %v3691
        %v6581 = vunpack.c.l.b16 %v3705
        %v6582 = vunpack.c.l.b16 %v3715
        %v6583 = vunpack.c.l.b16 %v3729
        %v6584 = vunpack.c.l.b16 %v3739
        %v6585 = vunpack.c.l.b16 %v3753
        %v6586 = vunpack.c.l.b16 %v3763
        %v6587 = vunpack.c.l.b16 %v3777
        %v6588 = vunpack.c.l.b16 %v3787
        %v6589 = vunpack.c.l.b16 %v3801
        %v6590 = vunpack.c.l.b16 %v3811
        %v6591 = vunpack.c.l.b16 %v3825
        %v6592 = vunpack.c.l.b16 %v3835
        %v6593 = vunpack.c.l.b16 %v3849
        %v6594 = vunpack.c.l.b16 %v3859
        %v6595 = vunpack.c.l.b16 %v3873
        %v6596 = vunpack.c.l.b16 %v3883
        %v6597 = vunpack.c.l.b16 %v3897
        %v6598 = vunpack.c.l.b16 %v3907
        %v6599 = vunpack.c.l.b16 %v3921
        %v6600 = vunpack.c.l.b16 %v3931
        %v6601 = vunpack.c.l.b16 %v3945
        %v6602 = vunpack.c.l.b16 %v3955
        %v6603 = vunpack.c.l.b16 %v3969
        %v6604 = vunpack.c.l.b16 %v3979
        %v6605 = vunpack.c.l.b16 %v3993
        %v6606 = vunpack.c.l.b16 %v4003
        %v6607 = vunpack.c.l.b16 %v4017
        %v6608 = vunpack.c.l.b16 %v4027
        %v6609 = vunpack.c.l.b16 %v4041
        %v6610 = vunpack.c.l.b16 %v4051
        %v6611 = vunpack.c.l.b16 %v4065
        %v6612 = vunpack.c.l.b16 %v4075
        %v6613 = vunpack.c.l.b16 %v4089
        %v6614 = vunpack.c.l.b16 %v4099
        %v6615 = vunpack.c.l.b16 %v4113
        %v6616 = vunpack.c.l.b16 %v4123
        %v6617 = vunpack.c.l.b16 %v4137
        %v6618 = vunpack.c.l.b16 %v4147
        %v6619 = vunpack.c.l.b16 %v4161
        %v6620 = vunpack.c.l.b16 %v4171
        %v6621 = vunpack.c.l.b16 %v4185
        %v6622 = vunpack.c.l.b16 %v4195
        %v6623 = vunpack.c.l.b16 %v4209
        %v6624 = vunpack.c.l.b16 %v4219
        %v6625 = vunpack.c.l.b16 %v4233
        %v6626 = vunpack.c.l.b16 %v4243
        %v6627 = vunpack.c.l.b16 %v4257
        %v6628 = vunpack.c.l.b16 %v4267
        %v6629 = vunpack.c.l.b16 %v4281
        %v6630 = vunpack.c.l.b16 %v4291
        %v6631 = vunpack.c.l.b16 %v4305
        %v6632 = vunpack.c.l.b16 %v4315
        %v6633 = vunpack.c.l.b16 %v4329
        %v6634 = vunpack.c.l.b16 %v4339
        %v6635 = vunpack.c.l.b16 %v4353
        %v6636 = vunpack.c.l.b16 %v4363
        %v6637 = vpack.c.b16 %v6574, %v6573
        %v6638 = vpack.c.b16 %v6576, %v6575
        %v6639 = vpack.c.b16 %v6578, %v6577
        %v6640 = vpack.c.b16 %v6580, %v6579
        %v6641 = vpack.c.b16 %v6582, %v6581
        %v6642 = vpack.c.b16 %v6584, %v6583
        %v6643 = vpack.c.b16 %v6586, %v6585
        %v6644 = vpack.c.b16 %v6588, %v6587
        %v6645 = vpack.c.b16 %v6590, %v6589
        %v6646 = vpack.c.b16 %v6592, %v6591
        %v6647 = vpack.c.b16 %v6594, %v6593
        %v6648 = vpack.c.b16 %v6596, %v6595
        %v6649 = vpack.c.b16 %v6598, %v6597
        %v6650 = vpack.c.b16 %v6600, %v6599
        %v6651 = vpack.c.b16 %v6602, %v6601
        %v6652 = vpack.c.b16 %v6604, %v6603
        %v6653 = vpack.c.b16 %v6606, %v6605
        %v6654 = vpack.c.b16 %v6608, %v6607
        %v6655 = vpack.c.b16 %v6610, %v6609
        %v6656 = vpack.c.b16 %v6612, %v6611
        %v6657 = vpack.c.b16 %v6614, %v6613
        %v6658 = vpack.c.b16 %v6616, %v6615
        %v6659 = vpack.c.b16 %v6618, %v6617
        %v6660 = vpack.c.b16 %v6620, %v6619
        %v6661 = vpack.c.b16 %v6622, %v6621
        %v6662 = vpack.c.b16 %v6624, %v6623
        %v6663 = vpack.c.b16 %v6626, %v6625
        %v6664 = vpack.c.b16 %v6628, %v6627
        %v6665 = vpack.c.b16 %v6630, %v6629
        %v6666 = vpack.c.b16 %v6632, %v6631
        %v6667 = vpack.c.b16 %v6634, %v6633
        %v6668 = vpack.c.b16 %v6636, %v6635
        %v6669 = vunpack.c.l.b16 %v4495
        %v6670 = vunpack.c.l.b16 %v4498
        %v6671 = vunpack.c.l.b16 %v4502
        %v6672 = vunpack.c.l.b16 %v4505
        %v6673 = vunpack.c.l.b16 %v4509
        %v6674 = vunpack.c.l.b16 %v4512
        %v6675 = vunpack.c.l.b16 %v4516
        %v6676 = vunpack.c.l.b16 %v4519
        %v6677 = vunpack.c.l.b16 %v4523
        %v6678 = vunpack.c.l.b16 %v4526
        %v6679 = vunpack.c.l.b16 %v4530
        %v6680 = vunpack.c.l.b16 %v4533
        %v6681 = vunpack.c.l.b16 %v4537
        %v6682 = vunpack.c.l.b16 %v4540
        %v6683 = vunpack.c.l.b16 %v4544
        %v6684 = vunpack.c.l.b16 %v4547
        %v6685 = vunpack.c.l.b16 %v4551
        %v6686 = vunpack.c.l.b16 %v4554
        %v6687 = vunpack.c.l.b16 %v4558
        %v6688 = vunpack.c.l.b16 %v4561
        %v6689 = vunpack.c.l.b16 %v4565
        %v6690 = vunpack.c.l.b16 %v4568
        %v6691 = vunpack.c.l.b16 %v4572
        %v6692 = vunpack.c.l.b16 %v4575
        %v6693 = vunpack.c.l.b16 %v4579
        %v6694 = vunpack.c.l.b16 %v4582
        %v6695 = vunpack.c.l.b16 %v4586
        %v6696 = vunpack.c.l.b16 %v4589
        %v6697 = vunpack.c.l.b16 %v4593
        %v6698 = vunpack.c.l.b16 %v4596
        %v6699 = vunpack.c.l.b16 %v4600
        %v6700 = vunpack.c.l.b16 %v4603
        %v6701 = vunpack.c.l.b16 %v4607
        %v6702 = vunpack.c.l.b16 %v4610
        %v6703 = vunpack.c.l.b16 %v4614
        %v6704 = vunpack.c.l.b16 %v4617
        %v6705 = vunpack.c.l.b16 %v4621
        %v6706 = vunpack.c.l.b16 %v4624
        %v6707 = vunpack.c.l.b16 %v4628
        %v6708 = vunpack.c.l.b16 %v4631
        %v6709 = vunpack.c.l.b16 %v4635
        %v6710 = vunpack.c.l.b16 %v4638
        %v6711 = vunpack.c.l.b16 %v4642
        %v6712 = vunpack.c.l.b16 %v4645
        %v6713 = vunpack.c.l.b16 %v4649
        %v6714 = vunpack.c.l.b16 %v4652
        %v6715 = vunpack.c.l.b16 %v4656
        %v6716 = vunpack.c.l.b16 %v4659
        %v6717 = vunpack.c.l.b16 %v4663
        %v6718 = vunpack.c.l.b16 %v4666
        %v6719 = vunpack.c.l.b16 %v4670
        %v6720 = vunpack.c.l.b16 %v4673
        %v6721 = vunpack.c.l.b16 %v4677
        %v6722 = vunpack.c.l.b16 %v4680
        %v6723 = vunpack.c.l.b16 %v4684
        %v6724 = vunpack.c.l.b16 %v4687
        %v6725 = vunpack.c.l.b16 %v4691
        %v6726 = vunpack.c.l.b16 %v4694
        %v6727 = vunpack.c.l.b16 %v4698
        %v6728 = vunpack.c.l.b16 %v4701
        %v6729 = vunpack.c.l.b16 %v4705
        %v6730 = vunpack.c.l.b16 %v4708
        %v6731 = vunpack.c.l.b16 %v4712
        %v6732 = vunpack.c.l.b16 %v4715
        %v6733 = vpack.c.b16 %v6670, %v6669
        %v6734 = vpack.c.b16 %v6672, %v6671
        %v6735 = vpack.c.b16 %v6674, %v6673
        %v6736 = vpack.c.b16 %v6676, %v6675
        %v6737 = vpack.c.b16 %v6678, %v6677
        %v6738 = vpack.c.b16 %v6680, %v6679
        %v6739 = vpack.c.b16 %v6682, %v6681
        %v6740 = vpack.c.b16 %v6684, %v6683
        %v6741 = vpack.c.b16 %v6686, %v6685
        %v6742 = vpack.c.b16 %v6688, %v6687
        %v6743 = vpack.c.b16 %v6690, %v6689
        %v6744 = vpack.c.b16 %v6692, %v6691
        %v6745 = vpack.c.b16 %v6694, %v6693
        %v6746 = vpack.c.b16 %v6696, %v6695
        %v6747 = vpack.c.b16 %v6698, %v6697
        %v6748 = vpack.c.b16 %v6700, %v6699
        %v6749 = vpack.c.b16 %v6702, %v6701
        %v6750 = vpack.c.b16 %v6704, %v6703
        %v6751 = vpack.c.b16 %v6706, %v6705
        %v6752 = vpack.c.b16 %v6708, %v6707
        %v6753 = vpack.c.b16 %v6710, %v6709
        %v6754 = vpack.c.b16 %v6712, %v6711
        %v6755 = vpack.c.b16 %v6714, %v6713
        %v6756 = vpack.c.b16 %v6716, %v6715
        %v6757 = vpack.c.b16 %v6718, %v6717
        %v6758 = vpack.c.b16 %v6720, %v6719
        %v6759 = vpack.c.b16 %v6722, %v6721
        %v6760 = vpack.c.b16 %v6724, %v6723
        %v6761 = vpack.c.b16 %v6726, %v6725
        %v6762 = vpack.c.b16 %v6728, %v6727
        %v6763 = vpack.c.b16 %v6730, %v6729
        %v6764 = vpack.c.b16 %v6732, %v6731
        %6765 = vrot.lane.b32.xlu0 %v6733, 32
        %v6766 = vpop.permute.xlu0 %6765
        %6767 = vrot.lane.b32.xlu0 %v6734, 32
        %v6768 = vpop.permute.xlu0 %6767
        %6769 = vrot.lane.b32.xlu0 %v6735, 32
        %v6770 = vpop.permute.xlu0 %6769
        %6771 = vrot.lane.b32.xlu0 %v6736, 32
        %v6772 = vpop.permute.xlu0 %6771
        %6773 = vrot.lane.b32.xlu0 %v6737, 32
        %v6774 = vpop.permute.xlu0 %6773
        %6775 = vrot.lane.b32.xlu0 %v6738, 32
        %v6776 = vpop.permute.xlu0 %6775
        %6777 = vrot.lane.b32.xlu0 %v6739, 32
        %v6778 = vpop.permute.xlu0 %6777
        %6779 = vrot.lane.b32.xlu0 %v6740, 32
        %v6780 = vpop.permute.xlu0 %6779
        %6781 = vrot.lane.b32.xlu0 %v6741, 32
        %v6782 = vpop.permute.xlu0 %6781
        %6783 = vrot.lane.b32.xlu0 %v6742, 32
        %v6784 = vpop.permute.xlu0 %6783
        %6785 = vrot.lane.b32.xlu0 %v6743, 32
        %v6786 = vpop.permute.xlu0 %6785
        %6787 = vrot.lane.b32.xlu0 %v6744, 32
        %v6788 = vpop.permute.xlu0 %6787
        %6789 = vrot.lane.b32.xlu0 %v6745, 32
        %v6790 = vpop.permute.xlu0 %6789
        %6791 = vrot.lane.b32.xlu0 %v6746, 32
        %v6792 = vpop.permute.xlu0 %6791
        %6793 = vrot.lane.b32.xlu0 %v6747, 32
        %v6794 = vpop.permute.xlu0 %6793
        %6795 = vrot.lane.b32.xlu0 %v6748, 32
        %v6796 = vpop.permute.xlu0 %6795
        %6797 = vrot.lane.b32.xlu0 %v6749, 32
        %v6798 = vpop.permute.xlu0 %6797
        %6799 = vrot.lane.b32.xlu0 %v6750, 32
        %v6800 = vpop.permute.xlu0 %6799
        %6801 = vrot.lane.b32.xlu0 %v6751, 32
        %v6802 = vpop.permute.xlu0 %6801
        %6803 = vrot.lane.b32.xlu0 %v6752, 32
        %v6804 = vpop.permute.xlu0 %6803
        %6805 = vrot.lane.b32.xlu0 %v6753, 32
        %v6806 = vpop.permute.xlu0 %6805
        %6807 = vrot.lane.b32.xlu0 %v6754, 32
        %v6808 = vpop.permute.xlu0 %6807
        %6809 = vrot.lane.b32.xlu0 %v6755, 32
        %v6810 = vpop.permute.xlu0 %6809
        %6811 = vrot.lane.b32.xlu0 %v6756, 32
        %v6812 = vpop.permute.xlu0 %6811
        %6813 = vrot.lane.b32.xlu0 %v6757, 32
        %v6814 = vpop.permute.xlu0 %6813
        %6815 = vrot.lane.b32.xlu0 %v6758, 32
        %v6816 = vpop.permute.xlu0 %6815
        %6817 = vrot.lane.b32.xlu0 %v6759, 32
        %v6818 = vpop.permute.xlu0 %6817
        %6819 = vrot.lane.b32.xlu0 %v6760, 32
        %v6820 = vpop.permute.xlu0 %6819
        %6821 = vrot.lane.b32.xlu0 %v6761, 32
        %v6822 = vpop.permute.xlu0 %6821
        %6823 = vrot.lane.b32.xlu0 %v6762, 32
        %v6824 = vpop.permute.xlu0 %6823
        %6825 = vrot.lane.b32.xlu0 %v6763, 32
        %v6826 = vpop.permute.xlu0 %6825
        %6827 = vrot.lane.b32.xlu0 %v6764, 32
        %v6828 = vpop.permute.xlu0 %6827
        %v6861 = vunpack.c.l.b16 %v4717
        %v6862 = vunpack.c.l.b16 %v4718
        %v6863 = vunpack.c.l.b16 %v4719
        %v6864 = vunpack.c.l.b16 %v4720
        %v6865 = vunpack.c.l.b16 %v4721
        %v6866 = vunpack.c.l.b16 %v4722
        %v6867 = vunpack.c.l.b16 %v4723
        %v6868 = vunpack.c.l.b16 %v4724
        %v6869 = vunpack.c.l.b16 %v4725
        %v6870 = vunpack.c.l.b16 %v4726
        %v6871 = vunpack.c.l.b16 %v4727
        %v6872 = vunpack.c.l.b16 %v4728
        %v6873 = vunpack.c.l.b16 %v4729
        %v6874 = vunpack.c.l.b16 %v4730
        %v6875 = vunpack.c.l.b16 %v4731
        %v6876 = vunpack.c.l.b16 %v4732
        %v6877 = vunpack.c.l.b16 %v4733
        %v6878 = vunpack.c.l.b16 %v4734
        %v6879 = vunpack.c.l.b16 %v4735
        %v6880 = vunpack.c.l.b16 %v4736
        %v6881 = vunpack.c.l.b16 %v4737
        %v6882 = vunpack.c.l.b16 %v4738
        %v6883 = vunpack.c.l.b16 %v4739
        %v6884 = vunpack.c.l.b16 %v4740
        %v6885 = vunpack.c.l.b16 %v4741
        %v6886 = vunpack.c.l.b16 %v4742
        %v6887 = vunpack.c.l.b16 %v4743
        %v6888 = vunpack.c.l.b16 %v4744
        %v6889 = vunpack.c.l.b16 %v4745
        %v6890 = vunpack.c.l.b16 %v4746
        %v6891 = vunpack.c.l.b16 %v4747
        %v6892 = vunpack.c.l.b16 %v4748
        %v6893 = vunpack.c.l.b16 %v4749
        %v6894 = vunpack.c.l.b16 %v4750
        %v6895 = vunpack.c.l.b16 %v4751
        %v6896 = vunpack.c.l.b16 %v4752
        %v6897 = vunpack.c.l.b16 %v4753
        %v6898 = vunpack.c.l.b16 %v4754
        %v6899 = vunpack.c.l.b16 %v4755
        %v6900 = vunpack.c.l.b16 %v4756
        %v6901 = vunpack.c.l.b16 %v4757
        %v6902 = vunpack.c.l.b16 %v4758
        %v6903 = vunpack.c.l.b16 %v4759
        %v6904 = vunpack.c.l.b16 %v4760
        %v6905 = vunpack.c.l.b16 %v4761
        %v6906 = vunpack.c.l.b16 %v4762
        %v6907 = vunpack.c.l.b16 %v4763
        %v6908 = vunpack.c.l.b16 %v4764
        %v6909 = vunpack.c.l.b16 %v4765
        %v6910 = vunpack.c.l.b16 %v4766
        %v6911 = vunpack.c.l.b16 %v4767
        %v6912 = vunpack.c.l.b16 %v4768
        %v6913 = vunpack.c.l.b16 %v4769
        %v6914 = vunpack.c.l.b16 %v4770
        %v6915 = vunpack.c.l.b16 %v4771
        %v6916 = vunpack.c.l.b16 %v4772
        %v6917 = vunpack.c.l.b16 %v4773
        %v6918 = vunpack.c.l.b16 %v4774
        %v6919 = vunpack.c.l.b16 %v4775
        %v6920 = vunpack.c.l.b16 %v4776
        %v6921 = vunpack.c.l.b16 %v4777
        %v6922 = vunpack.c.l.b16 %v4778
        %v6923 = vunpack.c.l.b16 %v4779
        %v6924 = vunpack.c.l.b16 %v4780
        %v6925 = vpack.c.b16 %v6862, %v6861
        %v6926 = vpack.c.b16 %v6864, %v6863
        %v6927 = vpack.c.b16 %v6866, %v6865
        %v6928 = vpack.c.b16 %v6868, %v6867
        %v6929 = vpack.c.b16 %v6870, %v6869
        %v6930 = vpack.c.b16 %v6872, %v6871
        %v6931 = vpack.c.b16 %v6874, %v6873
        %v6932 = vpack.c.b16 %v6876, %v6875
        %v6933 = vpack.c.b16 %v6878, %v6877
        %v6934 = vpack.c.b16 %v6880, %v6879
        %v6935 = vpack.c.b16 %v6882, %v6881
        %v6936 = vpack.c.b16 %v6884, %v6883
        %v6937 = vpack.c.b16 %v6886, %v6885
        %v6938 = vpack.c.b16 %v6888, %v6887
        %v6939 = vpack.c.b16 %v6890, %v6889
        %v6940 = vpack.c.b16 %v6892, %v6891
        %v6941 = vpack.c.b16 %v6894, %v6893
        %v6942 = vpack.c.b16 %v6896, %v6895
        %v6943 = vpack.c.b16 %v6898, %v6897
        %v6944 = vpack.c.b16 %v6900, %v6899
        %v6945 = vpack.c.b16 %v6902, %v6901
        %v6946 = vpack.c.b16 %v6904, %v6903
        %v6947 = vpack.c.b16 %v6906, %v6905
        %v6948 = vpack.c.b16 %v6908, %v6907
        %v6949 = vpack.c.b16 %v6910, %v6909
        %v6950 = vpack.c.b16 %v6912, %v6911
        %v6951 = vpack.c.b16 %v6914, %v6913
        %v6952 = vpack.c.b16 %v6916, %v6915
        %v6953 = vpack.c.b16 %v6918, %v6917
        %v6954 = vpack.c.b16 %v6920, %v6919
        %v6955 = vpack.c.b16 %v6922, %v6921
        %v6956 = vpack.c.b16 %v6924, %v6923
        %6957 = vrot.lane.b32.xlu0 %v6925, 64
        %v6958 = vpop.permute.xlu0 %6957
        %6959 = vrot.lane.b32.xlu0 %v6926, 64
        %v6960 = vpop.permute.xlu0 %6959
        %6961 = vrot.lane.b32.xlu0 %v6927, 64
        %v6962 = vpop.permute.xlu0 %6961
        %6963 = vrot.lane.b32.xlu0 %v6928, 64
        %v6964 = vpop.permute.xlu0 %6963
        %6965 = vrot.lane.b32.xlu0 %v6929, 64
        %v6966 = vpop.permute.xlu0 %6965
        %6967 = vrot.lane.b32.xlu0 %v6930, 64
        %v6968 = vpop.permute.xlu0 %6967
        %6969 = vrot.lane.b32.xlu0 %v6931, 64
        %v6970 = vpop.permute.xlu0 %6969
        %6971 = vrot.lane.b32.xlu0 %v6932, 64
        %v6972 = vpop.permute.xlu0 %6971
        %6973 = vrot.lane.b32.xlu0 %v6933, 64
        %v6974 = vpop.permute.xlu0 %6973
        %6975 = vrot.lane.b32.xlu0 %v6934, 64
        %v6976 = vpop.permute.xlu0 %6975
        %6977 = vrot.lane.b32.xlu0 %v6935, 64
        %v6978 = vpop.permute.xlu0 %6977
        %6979 = vrot.lane.b32.xlu0 %v6936, 64
        %v6980 = vpop.permute.xlu0 %6979
        %6981 = vrot.lane.b32.xlu0 %v6937, 64
        %v6982 = vpop.permute.xlu0 %6981
        %6983 = vrot.lane.b32.xlu0 %v6938, 64
        %v6984 = vpop.permute.xlu0 %6983
        %6985 = vrot.lane.b32.xlu0 %v6939, 64
        %v6986 = vpop.permute.xlu0 %6985
        %6987 = vrot.lane.b32.xlu0 %v6940, 64
        %v6988 = vpop.permute.xlu0 %6987
        %6989 = vrot.lane.b32.xlu0 %v6941, 64
        %v6990 = vpop.permute.xlu0 %6989
        %6991 = vrot.lane.b32.xlu0 %v6942, 64
        %v6992 = vpop.permute.xlu0 %6991
        %6993 = vrot.lane.b32.xlu0 %v6943, 64
        %v6994 = vpop.permute.xlu0 %6993
        %6995 = vrot.lane.b32.xlu0 %v6944, 64
        %v6996 = vpop.permute.xlu0 %6995
        %6997 = vrot.lane.b32.xlu0 %v6945, 64
        %v6998 = vpop.permute.xlu0 %6997
        %6999 = vrot.lane.b32.xlu0 %v6946, 64
        %v7000 = vpop.permute.xlu0 %6999
        %7001 = vrot.lane.b32.xlu0 %v6947, 64
        %v7002 = vpop.permute.xlu0 %7001
        %7003 = vrot.lane.b32.xlu0 %v6948, 64
        %v7004 = vpop.permute.xlu0 %7003
        %7005 = vrot.lane.b32.xlu0 %v6949, 64
        %v7006 = vpop.permute.xlu0 %7005
        %7007 = vrot.lane.b32.xlu0 %v6950, 64
        %v7008 = vpop.permute.xlu0 %7007
        %7009 = vrot.lane.b32.xlu0 %v6951, 64
        %v7010 = vpop.permute.xlu0 %7009
        %7011 = vrot.lane.b32.xlu0 %v6952, 64
        %v7012 = vpop.permute.xlu0 %7011
        %7013 = vrot.lane.b32.xlu0 %v6953, 64
        %v7014 = vpop.permute.xlu0 %7013
        %7015 = vrot.lane.b32.xlu0 %v6954, 64
        %v7016 = vpop.permute.xlu0 %7015
        %7017 = vrot.lane.b32.xlu0 %v6955, 64
        %v7018 = vpop.permute.xlu0 %7017
        %7019 = vrot.lane.b32.xlu0 %v6956, 64
        %v7020 = vpop.permute.xlu0 %7019
        %v7021 = vunpack.c.l.b16 %v4826
        %v7022 = vunpack.c.l.b16 %v4836
        %v7023 = vunpack.c.l.b16 %v4850
        %v7024 = vunpack.c.l.b16 %v4860
        %v7025 = vunpack.c.l.b16 %v4874
        %v7026 = vunpack.c.l.b16 %v4884
        %v7027 = vunpack.c.l.b16 %v4898
        %v7028 = vunpack.c.l.b16 %v4908
        %v7029 = vunpack.c.l.b16 %v4922
        %v7030 = vunpack.c.l.b16 %v4932
        %v7031 = vunpack.c.l.b16 %v4946
        %v7032 = vunpack.c.l.b16 %v4956
        %v7033 = vunpack.c.l.b16 %v4970
        %v7034 = vunpack.c.l.b16 %v4980
        %v7035 = vunpack.c.l.b16 %v4994
        %v7036 = vunpack.c.l.b16 %v5004
        %v7037 = vunpack.c.l.b16 %v5018
        %v7038 = vunpack.c.l.b16 %v5028
        %v7039 = vunpack.c.l.b16 %v5042
        %v7040 = vunpack.c.l.b16 %v5052
        %v7041 = vunpack.c.l.b16 %v5066
        %v7042 = vunpack.c.l.b16 %v5076
        %v7043 = vunpack.c.l.b16 %v5090
        %v7044 = vunpack.c.l.b16 %v5100
        %v7045 = vunpack.c.l.b16 %v5114
        %v7046 = vunpack.c.l.b16 %v5124
        %v7047 = vunpack.c.l.b16 %v5138
        %v7048 = vunpack.c.l.b16 %v5148
        %v7049 = vunpack.c.l.b16 %v5162
        %v7050 = vunpack.c.l.b16 %v5172
        %v7051 = vunpack.c.l.b16 %v5186
        %v7052 = vunpack.c.l.b16 %v5196
        %v7053 = vunpack.c.l.b16 %v5210
        %v7054 = vunpack.c.l.b16 %v5220
        %v7055 = vunpack.c.l.b16 %v5234
        %v7056 = vunpack.c.l.b16 %v5244
        %v7057 = vunpack.c.l.b16 %v5258
        %v7058 = vunpack.c.l.b16 %v5268
        %v7059 = vunpack.c.l.b16 %v5282
        %v7060 = vunpack.c.l.b16 %v5292
        %v7061 = vunpack.c.l.b16 %v5306
        %v7062 = vunpack.c.l.b16 %v5316
        %v7063 = vunpack.c.l.b16 %v5330
        %v7064 = vunpack.c.l.b16 %v5340
        %v7065 = vunpack.c.l.b16 %v5354
        %v7066 = vunpack.c.l.b16 %v5364
        %v7067 = vunpack.c.l.b16 %v5378
        %v7068 = vunpack.c.l.b16 %v5388
        %v7069 = vunpack.c.l.b16 %v5402
        %v7070 = vunpack.c.l.b16 %v5412
        %v7071 = vunpack.c.l.b16 %v5426
        %v7072 = vunpack.c.l.b16 %v5436
        %v7073 = vunpack.c.l.b16 %v5450
        %v7074 = vunpack.c.l.b16 %v5460
        %v7075 = vunpack.c.l.b16 %v5474
        %v7076 = vunpack.c.l.b16 %v5484
        %v7077 = vunpack.c.l.b16 %v5498
        %v7078 = vunpack.c.l.b16 %v5508
        %v7079 = vunpack.c.l.b16 %v5522
        %v7080 = vunpack.c.l.b16 %v5532
        %v7081 = vunpack.c.l.b16 %v5546
        %v7082 = vunpack.c.l.b16 %v5556
        %v7083 = vunpack.c.l.b16 %v5570
        %v7084 = vunpack.c.l.b16 %v5580
        %v7085 = vpack.c.b16 %v7022, %v7021
        %v7086 = vpack.c.b16 %v7024, %v7023
        %v7087 = vpack.c.b16 %v7026, %v7025
        %v7088 = vpack.c.b16 %v7028, %v7027
        %v7089 = vpack.c.b16 %v7030, %v7029
        %v7090 = vpack.c.b16 %v7032, %v7031
        %v7091 = vpack.c.b16 %v7034, %v7033
        %v7092 = vpack.c.b16 %v7036, %v7035
        %v7093 = vpack.c.b16 %v7038, %v7037
        %v7094 = vpack.c.b16 %v7040, %v7039
        %v7095 = vpack.c.b16 %v7042, %v7041
        %v7096 = vpack.c.b16 %v7044, %v7043
        %v7097 = vpack.c.b16 %v7046, %v7045
        %v7098 = vpack.c.b16 %v7048, %v7047
        %v7099 = vpack.c.b16 %v7050, %v7049
        %v7100 = vpack.c.b16 %v7052, %v7051
        %v7101 = vpack.c.b16 %v7054, %v7053
        %v7102 = vpack.c.b16 %v7056, %v7055
        %v7103 = vpack.c.b16 %v7058, %v7057
        %v7104 = vpack.c.b16 %v7060, %v7059
        %v7105 = vpack.c.b16 %v7062, %v7061
        %v7106 = vpack.c.b16 %v7064, %v7063
        %v7107 = vpack.c.b16 %v7066, %v7065
        %v7108 = vpack.c.b16 %v7068, %v7067
        %v7109 = vpack.c.b16 %v7070, %v7069
        %v7110 = vpack.c.b16 %v7072, %v7071
        %v7111 = vpack.c.b16 %v7074, %v7073
        %v7112 = vpack.c.b16 %v7076, %v7075
        %v7113 = vpack.c.b16 %v7078, %v7077
        %v7114 = vpack.c.b16 %v7080, %v7079
        %v7115 = vpack.c.b16 %v7082, %v7081
        %v7116 = vpack.c.b16 %v7084, %v7083
        %7117 = vrot.lane.b32.xlu0 %v7085, 96
        %v7118 = vpop.permute.xlu0 %7117
        %7119 = vrot.lane.b32.xlu0 %v7086, 96
        %v7120 = vpop.permute.xlu0 %7119
        %7121 = vrot.lane.b32.xlu0 %v7087, 96
        %v7122 = vpop.permute.xlu0 %7121
        %7123 = vrot.lane.b32.xlu0 %v7088, 96
        %v7124 = vpop.permute.xlu0 %7123
        %7125 = vrot.lane.b32.xlu0 %v7089, 96
        %v7126 = vpop.permute.xlu0 %7125
        %7127 = vrot.lane.b32.xlu0 %v7090, 96
        %v7128 = vpop.permute.xlu0 %7127
        %7129 = vrot.lane.b32.xlu0 %v7091, 96
        %v7130 = vpop.permute.xlu0 %7129
        %7131 = vrot.lane.b32.xlu0 %v7092, 96
        %v7132 = vpop.permute.xlu0 %7131
        %7133 = vrot.lane.b32.xlu0 %v7093, 96
        %v7134 = vpop.permute.xlu0 %7133
        %7135 = vrot.lane.b32.xlu0 %v7094, 96
        %v7136 = vpop.permute.xlu0 %7135
        %7137 = vrot.lane.b32.xlu0 %v7095, 96
        %v7138 = vpop.permute.xlu0 %7137
        %7139 = vrot.lane.b32.xlu0 %v7096, 96
        %v7140 = vpop.permute.xlu0 %7139
        %7141 = vrot.lane.b32.xlu0 %v7097, 96
        %v7142 = vpop.permute.xlu0 %7141
        %7143 = vrot.lane.b32.xlu0 %v7098, 96
        %v7144 = vpop.permute.xlu0 %7143
        %7145 = vrot.lane.b32.xlu0 %v7099, 96
        %v7146 = vpop.permute.xlu0 %7145
        %7147 = vrot.lane.b32.xlu0 %v7100, 96
        %v7148 = vpop.permute.xlu0 %7147
        %7149 = vrot.lane.b32.xlu0 %v7101, 96
        %v7150 = vpop.permute.xlu0 %7149
        %7151 = vrot.lane.b32.xlu0 %v7102, 96
        %v7152 = vpop.permute.xlu0 %7151
        %7153 = vrot.lane.b32.xlu0 %v7103, 96
        %v7154 = vpop.permute.xlu0 %7153
        %7155 = vrot.lane.b32.xlu0 %v7104, 96
        %v7156 = vpop.permute.xlu0 %7155
        %7157 = vrot.lane.b32.xlu0 %v7105, 96
        %v7158 = vpop.permute.xlu0 %7157
        %7159 = vrot.lane.b32.xlu0 %v7106, 96
        %v7160 = vpop.permute.xlu0 %7159
        %7161 = vrot.lane.b32.xlu0 %v7107, 96
        %v7162 = vpop.permute.xlu0 %7161
        %7163 = vrot.lane.b32.xlu0 %v7108, 96
        %v7164 = vpop.permute.xlu0 %7163
        %7165 = vrot.lane.b32.xlu0 %v7109, 96
        %v7166 = vpop.permute.xlu0 %7165
        %7167 = vrot.lane.b32.xlu0 %v7110, 96
        %v7168 = vpop.permute.xlu0 %7167
        %7169 = vrot.lane.b32.xlu0 %v7111, 96
        %v7170 = vpop.permute.xlu0 %7169
        %7171 = vrot.lane.b32.xlu0 %v7112, 96
        %v7172 = vpop.permute.xlu0 %7171
        %7173 = vrot.lane.b32.xlu0 %v7113, 96
        %v7174 = vpop.permute.xlu0 %7173
        %7175 = vrot.lane.b32.xlu0 %v7114, 96
        %v7176 = vpop.permute.xlu0 %7175
        %7177 = vrot.lane.b32.xlu0 %v7115, 96
        %v7178 = vpop.permute.xlu0 %7177
        %7179 = vrot.lane.b32.xlu0 %v7116, 96
        %v7180 = vpop.permute.xlu0 %7179
        %v7181 = vunpack.c.l.b16 %v5712
        %v7182 = vunpack.c.l.b16 %v5715
        %v7183 = vunpack.c.l.b16 %v5719
        %v7184 = vunpack.c.l.b16 %v5722
        %v7185 = vunpack.c.l.b16 %v5726
        %v7186 = vunpack.c.l.b16 %v5729
        %v7187 = vunpack.c.l.b16 %v5733
        %v7188 = vunpack.c.l.b16 %v5736
        %v7189 = vunpack.c.l.b16 %v5740
        %v7190 = vunpack.c.l.b16 %v5743
        %v7191 = vunpack.c.l.b16 %v5747
        %v7192 = vunpack.c.l.b16 %v5750
        %v7193 = vunpack.c.l.b16 %v5754
        %v7194 = vunpack.c.l.b16 %v5757
        %v7195 = vunpack.c.l.b16 %v5761
        %v7196 = vunpack.c.l.b16 %v5764
        %v7197 = vunpack.c.l.b16 %v5768
        %v7198 = vunpack.c.l.b16 %v5771
        %v7199 = vunpack.c.l.b16 %v5775
        %v7200 = vunpack.c.l.b16 %v5778
        %v7201 = vunpack.c.l.b16 %v5782
        %v7202 = vunpack.c.l.b16 %v5785
        %v7203 = vunpack.c.l.b16 %v5789
        %v7204 = vunpack.c.l.b16 %v5792
        %v7205 = vunpack.c.l.b16 %v5796
        %v7206 = vunpack.c.l.b16 %v5799
        %v7207 = vunpack.c.l.b16 %v5803
        %v7208 = vunpack.c.l.b16 %v5806
        %v7209 = vunpack.c.l.b16 %v5810
        %v7210 = vunpack.c.l.b16 %v5813
        %v7211 = vunpack.c.l.b16 %v5817
        %v7212 = vunpack.c.l.b16 %v5820
        %v7213 = vunpack.c.l.b16 %v5824
        %v7214 = vunpack.c.l.b16 %v5827
        %v7215 = vunpack.c.l.b16 %v5831
        %v7216 = vunpack.c.l.b16 %v5834
        %v7217 = vunpack.c.l.b16 %v5838
        %v7218 = vunpack.c.l.b16 %v5841
        %v7219 = vunpack.c.l.b16 %v5845
        %v7220 = vunpack.c.l.b16 %v5848
        %v7221 = vunpack.c.l.b16 %v5852
        %v7222 = vunpack.c.l.b16 %v5855
        %v7223 = vunpack.c.l.b16 %v5859
        %v7224 = vunpack.c.l.b16 %v5862
        %v7225 = vunpack.c.l.b16 %v5866
        %v7226 = vunpack.c.l.b16 %v5869
        %v7227 = vunpack.c.l.b16 %v5873
        %v7228 = vunpack.c.l.b16 %v5876
        %v7229 = vunpack.c.l.b16 %v5880
        %v7230 = vunpack.c.l.b16 %v5883
        %v7231 = vunpack.c.l.b16 %v5887
        %v7232 = vunpack.c.l.b16 %v5890
        %v7233 = vunpack.c.l.b16 %v5894
        %v7234 = vunpack.c.l.b16 %v5897
        %v7235 = vunpack.c.l.b16 %v5901
        %v7236 = vunpack.c.l.b16 %v5904
        %v7237 = vunpack.c.l.b16 %v5908
        %v7238 = vunpack.c.l.b16 %v5911
        %v7239 = vunpack.c.l.b16 %v5915
        %v7240 = vunpack.c.l.b16 %v5918
        %v7241 = vunpack.c.l.b16 %v5922
        %v7242 = vunpack.c.l.b16 %v5925
        %v7243 = vunpack.c.l.b16 %v5929
        %v7244 = vunpack.c.l.b16 %v5932
        %v7245 = vpack.c.b16 %v7182, %v7181
        %v7246 = vpack.c.b16 %v7184, %v7183
        %v7247 = vpack.c.b16 %v7186, %v7185
        %v7248 = vpack.c.b16 %v7188, %v7187
        %v7249 = vpack.c.b16 %v7190, %v7189
        %v7250 = vpack.c.b16 %v7192, %v7191
        %v7251 = vpack.c.b16 %v7194, %v7193
        %v7252 = vpack.c.b16 %v7196, %v7195
        %v7253 = vpack.c.b16 %v7198, %v7197
        %v7254 = vpack.c.b16 %v7200, %v7199
        %v7255 = vpack.c.b16 %v7202, %v7201
        %v7256 = vpack.c.b16 %v7204, %v7203
        %v7257 = vpack.c.b16 %v7206, %v7205
        %v7258 = vpack.c.b16 %v7208, %v7207
        %v7259 = vpack.c.b16 %v7210, %v7209
        %v7260 = vpack.c.b16 %v7212, %v7211
        %v7261 = vpack.c.b16 %v7214, %v7213
        %v7262 = vpack.c.b16 %v7216, %v7215
        %v7263 = vpack.c.b16 %v7218, %v7217
        %v7264 = vpack.c.b16 %v7220, %v7219
        %v7265 = vpack.c.b16 %v7222, %v7221
        %v7266 = vpack.c.b16 %v7224, %v7223
        %v7267 = vpack.c.b16 %v7226, %v7225
        %v7268 = vpack.c.b16 %v7228, %v7227
        %v7269 = vpack.c.b16 %v7230, %v7229
        %v7270 = vpack.c.b16 %v7232, %v7231
        %v7271 = vpack.c.b16 %v7234, %v7233
        %v7272 = vpack.c.b16 %v7236, %v7235
        %v7273 = vpack.c.b16 %v7238, %v7237
        %v7274 = vpack.c.b16 %v7240, %v7239
        %v7275 = vpack.c.b16 %v7242, %v7241
        %v7276 = vpack.c.b16 %v7244, %v7243
        %vm7277 = vcmask 261120
        %v7280 = vsel %vm7277, %v6029, %v6158
        %v7283 = vsel %vm7277, %v6030, %v6160
        %v7286 = vsel %vm7277, %v6031, %v6162
        %v7289 = vsel %vm7277, %v6032, %v6164
        %v7292 = vsel %vm7277, %v6033, %v6166
        %v7295 = vsel %vm7277, %v6034, %v6168
        %v7298 = vsel %vm7277, %v6035, %v6170
        %v7301 = vsel %vm7277, %v6036, %v6172
        %v7304 = vsel %vm7277, %v6037, %v6174
        %v7307 = vsel %vm7277, %v6038, %v6176
        %v7310 = vsel %vm7277, %v6039, %v6178
        %v7313 = vsel %vm7277, %v6040, %v6180
        %v7316 = vsel %vm7277, %v6041, %v6182
        %v7319 = vsel %vm7277, %v6042, %v6184
        %v7322 = vsel %vm7277, %v6043, %v6186
        %v7325 = vsel %vm7277, %v6044, %v6188
        %v7328 = vsel %vm7277, %v6045, %v6190
        %v7331 = vsel %vm7277, %v6046, %v6192
        %v7334 = vsel %vm7277, %v6047, %v6194
        %v7337 = vsel %vm7277, %v6048, %v6196
        %v7340 = vsel %vm7277, %v6049, %v6198
        %v7343 = vsel %vm7277, %v6050, %v6200
        %v7346 = vsel %vm7277, %v6051, %v6202
        %v7349 = vsel %vm7277, %v6052, %v6204
        %v7352 = vsel %vm7277, %v6053, %v6206
        %v7355 = vsel %vm7277, %v6054, %v6208
        %v7358 = vsel %vm7277, %v6055, %v6210
        %v7361 = vsel %vm7277, %v6056, %v6212
        %v7364 = vsel %vm7277, %v6057, %v6214
        %v7367 = vsel %vm7277, %v6058, %v6216
        %v7370 = vsel %vm7277, %v6059, %v6218
        %v7373 = vsel %vm7277, %v6060, %v6220
        %vm7374 = vcmask 523264
        %v7376 = vsel %vm7374, %v7280, %v6318
        %v7378 = vsel %vm7374, %v7283, %v6320
        %v7380 = vsel %vm7374, %v7286, %v6322
        %v7382 = vsel %vm7374, %v7289, %v6324
        %v7384 = vsel %vm7374, %v7292, %v6326
        %v7386 = vsel %vm7374, %v7295, %v6328
        %v7388 = vsel %vm7374, %v7298, %v6330
        %v7390 = vsel %vm7374, %v7301, %v6332
        %v7392 = vsel %vm7374, %v7304, %v6334
        %v7394 = vsel %vm7374, %v7307, %v6336
        %v7396 = vsel %vm7374, %v7310, %v6338
        %v7398 = vsel %vm7374, %v7313, %v6340
        %v7400 = vsel %vm7374, %v7316, %v6342
        %v7402 = vsel %vm7374, %v7319, %v6344
        %v7404 = vsel %vm7374, %v7322, %v6346
        %v7406 = vsel %vm7374, %v7325, %v6348
        %v7408 = vsel %vm7374, %v7328, %v6350
        %v7410 = vsel %vm7374, %v7331, %v6352
        %v7412 = vsel %vm7374, %v7334, %v6354
        %v7414 = vsel %vm7374, %v7337, %v6356
        %v7416 = vsel %vm7374, %v7340, %v6358
        %v7418 = vsel %vm7374, %v7343, %v6360
        %v7420 = vsel %vm7374, %v7346, %v6362
        %v7422 = vsel %vm7374, %v7349, %v6364
        %v7424 = vsel %vm7374, %v7352, %v6366
        %v7426 = vsel %vm7374, %v7355, %v6368
        %v7428 = vsel %vm7374, %v7358, %v6370
        %v7430 = vsel %vm7374, %v7361, %v6372
        %v7432 = vsel %vm7374, %v7364, %v6374
        %v7434 = vsel %vm7374, %v7367, %v6376
        %v7436 = vsel %vm7374, %v7370, %v6378
        %v7438 = vsel %vm7374, %v7373, %v6380
        %vm7439 = vcmask 785408
        %v7441 = vsel %vm7439, %v7376, %v6510
        %v7444 = vsel %vm7439, %v7378, %v6512
        %v7447 = vsel %vm7439, %v7380, %v6514
        %v7450 = vsel %vm7439, %v7382, %v6516
        %v7453 = vsel %vm7439, %v7384, %v6518
        %v7456 = vsel %vm7439, %v7386, %v6520
        %v7459 = vsel %vm7439, %v7388, %v6522
        %v7462 = vsel %vm7439, %v7390, %v6524
        %v7465 = vsel %vm7439, %v7392, %v6526
        %v7468 = vsel %vm7439, %v7394, %v6528
        %v7471 = vsel %vm7439, %v7396, %v6530
        %v7474 = vsel %vm7439, %v7398, %v6532
        %v7477 = vsel %vm7439, %v7400, %v6534
        %v7480 = vsel %vm7439, %v7402, %v6536
        %v7483 = vsel %vm7439, %v7404, %v6538
        %v7486 = vsel %vm7439, %v7406, %v6540
        %v7489 = vsel %vm7439, %v7408, %v6542
        %v7492 = vsel %vm7439, %v7410, %v6544
        %v7495 = vsel %vm7439, %v7412, %v6546
        %v7498 = vsel %vm7439, %v7414, %v6548
        %v7501 = vsel %vm7439, %v7416, %v6550
        %v7504 = vsel %vm7439, %v7418, %v6552
        %v7507 = vsel %vm7439, %v7420, %v6554
        %v7510 = vsel %vm7439, %v7422, %v6556
        %v7513 = vsel %vm7439, %v7424, %v6558
        %v7516 = vsel %vm7439, %v7426, %v6560
        %v7519 = vsel %vm7439, %v7428, %v6562
        %v7522 = vsel %vm7439, %v7430, %v6564
        %v7525 = vsel %vm7439, %v7432, %v6566
        %v7528 = vsel %vm7439, %v7434, %v6568
        %v7531 = vsel %vm7439, %v7436, %v6570
        %v7534 = vsel %vm7439, %v7438, %v6572
        %v7538 = vsel %vm7277, %v6637, %v6766
        %v7541 = vsel %vm7277, %v6638, %v6768
        %v7544 = vsel %vm7277, %v6639, %v6770
        %v7547 = vsel %vm7277, %v6640, %v6772
        %v7550 = vsel %vm7277, %v6641, %v6774
        %v7553 = vsel %vm7277, %v6642, %v6776
        %v7556 = vsel %vm7277, %v6643, %v6778
        %v7559 = vsel %vm7277, %v6644, %v6780
        %v7562 = vsel %vm7277, %v6645, %v6782
        %v7565 = vsel %vm7277, %v6646, %v6784
        %v7568 = vsel %vm7277, %v6647, %v6786
        %v7571 = vsel %vm7277, %v6648, %v6788
        %v7574 = vsel %vm7277, %v6649, %v6790
        %v7577 = vsel %vm7277, %v6650, %v6792
        %v7580 = vsel %vm7277, %v6651, %v6794
        %v7583 = vsel %vm7277, %v6652, %v6796
        %v7586 = vsel %vm7277, %v6653, %v6798
        %v7589 = vsel %vm7277, %v6654, %v6800
        %v7592 = vsel %vm7277, %v6655, %v6802
        %v7595 = vsel %vm7277, %v6656, %v6804
        %v7598 = vsel %vm7277, %v6657, %v6806
        %v7601 = vsel %vm7277, %v6658, %v6808
        %v7604 = vsel %vm7277, %v6659, %v6810
        %v7607 = vsel %vm7277, %v6660, %v6812
        %v7610 = vsel %vm7277, %v6661, %v6814
        %v7613 = vsel %vm7277, %v6662, %v6816
        %v7616 = vsel %vm7277, %v6663, %v6818
        %v7619 = vsel %vm7277, %v6664, %v6820
        %v7622 = vsel %vm7277, %v6665, %v6822
        %v7625 = vsel %vm7277, %v6666, %v6824
        %v7628 = vsel %vm7277, %v6667, %v6826
        %v7631 = vsel %vm7277, %v6668, %v6828
        %v7633 = vsel %vm7374, %v7538, %v6958
        %v7635 = vsel %vm7374, %v7541, %v6960
        %v7637 = vsel %vm7374, %v7544, %v6962
        %v7639 = vsel %vm7374, %v7547, %v6964
        %v7641 = vsel %vm7374, %v7550, %v6966
        %v7643 = vsel %vm7374, %v7553, %v6968
        %v7645 = vsel %vm7374, %v7556, %v6970
        %v7647 = vsel %vm7374, %v7559, %v6972
        %v7649 = vsel %vm7374, %v7562, %v6974
        %v7651 = vsel %vm7374, %v7565, %v6976
        %v7653 = vsel %vm7374, %v7568, %v6978
        %v7655 = vsel %vm7374, %v7571, %v6980
        %v7657 = vsel %vm7374, %v7574, %v6982
        %v7659 = vsel %vm7374, %v7577, %v6984
        %v7661 = vsel %vm7374, %v7580, %v6986
        %v7663 = vsel %vm7374, %v7583, %v6988
        %v7665 = vsel %vm7374, %v7586, %v6990
        %v7667 = vsel %vm7374, %v7589, %v6992
        %v7669 = vsel %vm7374, %v7592, %v6994
        %v7671 = vsel %vm7374, %v7595, %v6996
        %v7673 = vsel %vm7374, %v7598, %v6998
        %v7675 = vsel %vm7374, %v7601, %v7000
        %v7677 = vsel %vm7374, %v7604, %v7002
        %v7679 = vsel %vm7374, %v7607, %v7004
        %v7681 = vsel %vm7374, %v7610, %v7006
        %v7683 = vsel %vm7374, %v7613, %v7008
        %v7685 = vsel %vm7374, %v7616, %v7010
        %v7687 = vsel %vm7374, %v7619, %v7012
        %v7689 = vsel %vm7374, %v7622, %v7014
        %v7691 = vsel %vm7374, %v7625, %v7016
        %v7693 = vsel %vm7374, %v7628, %v7018
        %v7695 = vsel %vm7374, %v7631, %v7020
        %v7697 = vsel %vm7439, %v7633, %v7118
        %v7700 = vsel %vm7439, %v7635, %v7120
        %v7703 = vsel %vm7439, %v7637, %v7122
        %v7706 = vsel %vm7439, %v7639, %v7124
        %v7709 = vsel %vm7439, %v7641, %v7126
        %v7712 = vsel %vm7439, %v7643, %v7128
        %v7715 = vsel %vm7439, %v7645, %v7130
        %v7718 = vsel %vm7439, %v7647, %v7132
        %v7721 = vsel %vm7439, %v7649, %v7134
        %v7724 = vsel %vm7439, %v7651, %v7136
        %v7727 = vsel %vm7439, %v7653, %v7138
        %v7730 = vsel %vm7439, %v7655, %v7140
        %v7733 = vsel %vm7439, %v7657, %v7142
        %v7736 = vsel %vm7439, %v7659, %v7144
        %v7739 = vsel %vm7439, %v7661, %v7146
        %v7742 = vsel %vm7439, %v7663, %v7148
        %v7745 = vsel %vm7439, %v7665, %v7150
        %v7748 = vsel %vm7439, %v7667, %v7152
        %v7751 = vsel %vm7439, %v7669, %v7154
        %v7754 = vsel %vm7439, %v7671, %v7156
        %v7757 = vsel %vm7439, %v7673, %v7158
        %v7760 = vsel %vm7439, %v7675, %v7160
        %v7763 = vsel %vm7439, %v7677, %v7162
        %v7766 = vsel %vm7439, %v7679, %v7164
        %v7769 = vsel %vm7439, %v7681, %v7166
        %v7772 = vsel %vm7439, %v7683, %v7168
        %v7775 = vsel %vm7439, %v7685, %v7170
        %v7778 = vsel %vm7439, %v7687, %v7172
        %v7781 = vsel %vm7439, %v7689, %v7174
        %v7784 = vsel %vm7439, %v7691, %v7176
        %v7787 = vsel %vm7439, %v7693, %v7178
        %v7790 = vsel %vm7439, %v7695, %v7180
        %v7792 = vld [vmem:[%s3] sm:$0xf]
        %v7793 = vld [vmem:[%s3 + $0x4] sm:$0xf]
        %v7794 = vld [vmem:[%s3 + $0x8] sm:$0xf]
        %v7795 = vld [vmem:[%s3 + $0xc] sm:$0xf]
        %v7796 = vld [vmem:[%s3 + $0x10] sm:$0xf]
        %v7797 = vld [vmem:[%s3 + $0x14] sm:$0xf]
        %v7798 = vld [vmem:[%s3 + $0x18] sm:$0xf]
        %v7799 = vld [vmem:[%s3 + $0x1c] sm:$0xf]
        %v7800 = vld [vmem:[%s3 + $0x20] sm:$0xf]
        %v7801 = vld [vmem:[%s3 + $0x24] sm:$0xf]
        %v7802 = vld [vmem:[%s3 + $0x28] sm:$0xf]
        %v7803 = vld [vmem:[%s3 + $0x2c] sm:$0xf]
        %v7804 = vld [vmem:[%s3 + $0x30] sm:$0xf]
        %v7805 = vld [vmem:[%s3 + $0x34] sm:$0xf]
        %v7806 = vld [vmem:[%s3 + $0x38] sm:$0xf]
        %v7807 = vld [vmem:[%s3 + $0x3c] sm:$0xf]
        %v7808 = vld [vmem:[%s3 + $0x40] sm:$0xf]
        %v7809 = vld [vmem:[%s3 + $0x44] sm:$0xf]
        %v7810 = vld [vmem:[%s3 + $0x48] sm:$0xf]
        %v7811 = vld [vmem:[%s3 + $0x4c] sm:$0xf]
        %v7812 = vld [vmem:[%s3 + $0x50] sm:$0xf]
        %v7813 = vld [vmem:[%s3 + $0x54] sm:$0xf]
        %v7814 = vld [vmem:[%s3 + $0x58] sm:$0xf]
        %v7815 = vld [vmem:[%s3 + $0x5c] sm:$0xf]
        %v7816 = vld [vmem:[%s3 + $0x60] sm:$0xf]
        %v7817 = vld [vmem:[%s3 + $0x64] sm:$0xf]
        %v7818 = vld [vmem:[%s3 + $0x68] sm:$0xf]
        %v7819 = vld [vmem:[%s3 + $0x6c] sm:$0xf]
        %v7820 = vld [vmem:[%s3 + $0x70] sm:$0xf]
        %v7821 = vld [vmem:[%s3 + $0x74] sm:$0xf]
        %v7822 = vld [vmem:[%s3 + $0x78] sm:$0xf]
        %v7823 = vld [vmem:[%s3 + $0x7c] sm:$0xf]
        %v7824 = vld [vmem:[%s3 + $0x80] sm:$0xf]
        %v7825 = vld [vmem:[%s3 + $0x84] sm:$0xf]
        %v7826 = vld [vmem:[%s3 + $0x88] sm:$0xf]
        %v7827 = vld [vmem:[%s3 + $0x8c] sm:$0xf]
        %v7828 = vld [vmem:[%s4] sm:$0x1]
        %v7830 = vlaneseq
        %v7831 = vshrl.u32 %v7830, 7
        %v7832 = vsub.s32 0, %v7831
        %v7833 = vrot.slane %v7828, %v7832
        %v7871 = vunpack.c.l.b16 %v7792
        %v7872 = vunpack.c.l.b16 %v7793
        %v7873 = vunpack.c.l.b16 %v7794
        %v7874 = vunpack.c.l.b16 %v7795
        %v7875 = vunpack.c.l.b16 %v7796
        %v7876 = vunpack.c.l.b16 %v7797
        %v7877 = vunpack.c.l.b16 %v7798
        %v7878 = vunpack.c.l.b16 %v7799
        %v7879 = vunpack.c.l.b16 %v7800
        %v7880 = vunpack.c.l.b16 %v7801
        %v7881 = vunpack.c.l.b16 %v7802
        %v7882 = vunpack.c.l.b16 %v7803
        %v7883 = vunpack.c.l.b16 %v7804
        %v7884 = vunpack.c.l.b16 %v7805
        %v7885 = vunpack.c.l.b16 %v7806
        %v7886 = vunpack.c.l.b16 %v7807
        %v7887 = vunpack.c.l.b16 %v7808
        %v7888 = vunpack.c.l.b16 %v7809
        %v7889 = vunpack.c.l.b16 %v7810
        %v7890 = vunpack.c.l.b16 %v7811
        %v7891 = vunpack.c.l.b16 %v7812
        %v7892 = vunpack.c.l.b16 %v7813
        %v7893 = vunpack.c.l.b16 %v7814
        %v7894 = vunpack.c.l.b16 %v7815
        %v7895 = vunpack.c.l.b16 %v7816
        %v7896 = vunpack.c.l.b16 %v7817
        %v7897 = vunpack.c.l.b16 %v7818
        %v7898 = vunpack.c.l.b16 %v7819
        %v7899 = vunpack.c.l.b16 %v7820
        %v7900 = vunpack.c.l.b16 %v7821
        %v7901 = vunpack.c.l.b16 %v7822
        %v7902 = vunpack.c.l.b16 %v7823
        %v7903 = vunpack.c.l.b16 %v7824
        %v7904 = vunpack.c.l.b16 %v7825
        %v7905 = vunpack.c.l.b16 %v7826
        %v7906 = vunpack.c.l.b16 %v7827
        %v7907 = vpack.c.b16 %v7872, %v7871
        %v7908 = vpack.c.b16 %v7874, %v7873
        %v7909 = vpack.c.b16 %v7876, %v7875
        %v7910 = vpack.c.b16 %v7878, %v7877
        %v7911 = vpack.c.b16 %v7880, %v7879
        %v7912 = vpack.c.b16 %v7882, %v7881
        %v7913 = vpack.c.b16 %v7884, %v7883
        %v7914 = vpack.c.b16 %v7886, %v7885
        %v7915 = vpack.c.b16 %v7888, %v7887
        %v7916 = vpack.c.b16 %v7890, %v7889
        %v7917 = vpack.c.b16 %v7892, %v7891
        %v7918 = vpack.c.b16 %v7894, %v7893
        %v7919 = vpack.c.b16 %v7896, %v7895
        %v7920 = vpack.c.b16 %v7898, %v7897
        %v7921 = vpack.c.b16 %v7900, %v7899
        %v7922 = vpack.c.b16 %v7902, %v7901
        %v7923 = vpack.c.b16 %v7904, %v7903
        %v7924 = vpack.c.b16 %v7906, %v7905
        %v7944 = vsel %vm7277, %v7245, 0
        %v7947 = vsel %vm7277, %v7246, 0
        %v7950 = vsel %vm7277, %v7247, 0
        %v7953 = vsel %vm7277, %v7248, 0
        %v7956 = vsel %vm7277, %v7249, 0
        %v7959 = vsel %vm7277, %v7250, 0
        %v7962 = vsel %vm7277, %v7251, 0
        %v7965 = vsel %vm7277, %v7252, 0
        %v7968 = vsel %vm7277, %v7253, 0
        %v7971 = vsel %vm7277, %v7254, 0
        %v7974 = vsel %vm7277, %v7255, 0
        %v7977 = vsel %vm7277, %v7256, 0
        %v7980 = vsel %vm7277, %v7257, 0
        %v7983 = vsel %vm7277, %v7258, 0
        %v7986 = vsel %vm7277, %v7259, 0
        %v7989 = vsel %vm7277, %v7260, 0
        %v7992 = vsel %vm7277, %v7261, 0
        %v7995 = vsel %vm7277, %v7262, 0
        %v7998 = vsel %vm7277, %v7263, 0
        %v8001 = vsel %vm7277, %v7264, 0
        %v8004 = vsel %vm7277, %v7265, 0
        %v8007 = vsel %vm7277, %v7266, 0
        %v8010 = vsel %vm7277, %v7267, 0
        %v8013 = vsel %vm7277, %v7268, 0
        %v8016 = vsel %vm7277, %v7269, 0
        %v8019 = vsel %vm7277, %v7270, 0
        %v8022 = vsel %vm7277, %v7271, 0
        %v8025 = vsel %vm7277, %v7272, 0
        %v8028 = vsel %vm7277, %v7273, 0
        %v8031 = vsel %vm7277, %v7274, 0
        %v8034 = vsel %vm7277, %v7275, 0
        %v8037 = vsel %vm7277, %v7276, 0
        %8039 = vmatprep.subr.bf16.mxu0 0
        %8040 = vmatpush1.bf16.msra.mxu0 %v7907
        %8041 = vmatprep.subr.bf16.mxu0 0
        %8042 = vmatpush1.bf16.msra.mxu0 %v7908
        %8043 = vmatprep.subr.bf16.mxu0 0
        %8044 = vmatpush1.bf16.msra.mxu0 %v7909
        %8045 = vmatprep.subr.bf16.mxu0 0
        %8046 = vmatpush1.bf16.msra.mxu0 %v7910
        %8047 = vmatprep.subr.bf16.mxu0 0
        %8048 = vmatpush1.bf16.msra.mxu0 %v7911
        %8049 = vmatprep.subr.bf16.mxu0 0
        %8050 = vmatpush1.bf16.msra.mxu0 %v7912
        %8051 = vmatprep.subr.bf16.mxu0 0
        %8052 = vmatpush1.bf16.msra.mxu0 %v7913
        %8053 = vmatprep.subr.bf16.mxu0 0
        %8054 = vmatpush1.bf16.msra.mxu0 %v7914
        %8055 = vmatprep.subr.bf16.mxu0 0
        %8056 = vmatpush1.bf16.msra.mxu0 %v7915
        %8057 = vmatprep.subr.bf16.mxu0 0
        %8058 = vmatpush1.bf16.msra.mxu0 %v7916
        %8059 = vmatprep.subr.bf16.mxu0 0
        %8060 = vmatpush1.bf16.msra.mxu0 %v7917
        %8061 = vmatprep.subr.bf16.mxu0 0
        %8062 = vmatpush1.bf16.msra.mxu0 %v7918
        %8063 = vmatprep.subr.bf16.mxu0 0
        %8064 = vmatpush1.bf16.msra.mxu0 %v7919
        %8065 = vmatprep.subr.bf16.mxu0 0
        %8066 = vmatpush1.bf16.msra.mxu0 %v7920
        %8067 = vmatprep.subr.bf16.mxu0 0
        %8068 = vmatpush1.bf16.msra.mxu0 %v7921
        %8069 = vmatprep.subr.bf16.mxu0 0
        %8070 = vmatpush1.bf16.msra.mxu0 %v7922
        %8071 = vmatprep.mubr.bf16.mxu0 %v7697
        %8072 = vmatmul.mubr.bf16.gmra.mrb[0].mxu0 %v7441
        %v8073 = vpop.f32.mrb[0].mxu0
        %v8074 = vadd.f32 %v7833, %v8073
        %v8075 = vpop.f32.mrb[0].mxu0
        %v8076 = vpop.f32.mrb[0].mxu0
        %v8077 = vadd.f32 %v7833, %v8076
        %v8078 = vpop.f32.mrb[0].mxu0
        %8079 = vmatprep.mubr.bf16.mxu0 %v7700
        %8080 = vmatmul.mubr.bf16.gmra.mrb[0].mxu0 %v7444
        %v8081 = vpop.f32.mrb[0].mxu0
        %v8082 = vadd.f32 %v7833, %v8081
        %v8083 = vpop.f32.mrb[0].mxu0
        %v8084 = vpop.f32.mrb[0].mxu0
        %v8085 = vadd.f32 %v7833, %v8084
        %v8086 = vpop.f32.mrb[0].mxu0
        %8087 = vmatprep.mubr.bf16.mxu0 %v7703
        %8088 = vmatmul.mubr.bf16.gmra.mrb[0].mxu0 %v7447
        %v8089 = vpop.f32.mrb[0].mxu0
        %v8090 = vadd.f32 %v7833, %v8089
        %v8091 = vpop.f32.mrb[0].mxu0
        %v8092 = vpop.f32.mrb[0].mxu0
        %v8093 = vadd.f32 %v7833, %v8092
        %v8094 = vpop.f32.mrb[0].mxu0
        %8095 = vmatprep.mubr.bf16.mxu0 %v7706
        %8096 = vmatmul.mubr.bf16.gmra.mrb[0].mxu0 %v7450
        %v8097 = vpop.f32.mrb[0].mxu0
        %v8098 = vadd.f32 %v7833, %v8097
        %v8099 = vpop.f32.mrb[0].mxu0
        %v8100 = vpop.f32.mrb[0].mxu0
        %v8101 = vadd.f32 %v7833, %v8100
        %v8102 = vpop.f32.mrb[0].mxu0
        %8103 = vmatprep.mubr.bf16.mxu0 %v7709
        %8104 = vmatmul.mubr.bf16.gmra.mrb[0].mxu0 %v7453
        %v8105 = vpop.f32.mrb[0].mxu0
        %v8106 = vadd.f32 %v7833, %v8105
        %v8107 = vpop.f32.mrb[0].mxu0
        %v8108 = vpop.f32.mrb[0].mxu0
        %v8109 = vadd.f32 %v7833, %v8108
        %v8110 = vpop.f32.mrb[0].mxu0
        %8111 = vmatprep.mubr.bf16.mxu0 %v7712
        %8112 = vmatmul.mubr.bf16.gmra.mrb[0].mxu0 %v7456
        %v8113 = vpop.f32.mrb[0].mxu0
        %v8114 = vadd.f32 %v7833, %v8113
        %v8115 = vpop.f32.mrb[0].mxu0
        %v8116 = vpop.f32.mrb[0].mxu0
        %v8117 = vadd.f32 %v7833, %v8116
        %v8118 = vpop.f32.mrb[0].mxu0
        %8119 = vmatprep.mubr.bf16.mxu0 %v7715
        %8120 = vmatmul.mubr.bf16.gmra.mrb[0].mxu0 %v7459
        %v8121 = vpop.f32.mrb[0].mxu0
        %v8122 = vadd.f32 %v7833, %v8121
        %v8123 = vpop.f32.mrb[0].mxu0
        %v8124 = vpop.f32.mrb[0].mxu0
        %v8125 = vadd.f32 %v7833, %v8124
        %v8126 = vpop.f32.mrb[0].mxu0
        %8127 = vmatprep.mubr.bf16.mxu0 %v7718
        %8128 = vmatmul.mubr.bf16.gmra.mrb[0].mxu0 %v7462
        %v8129 = vpop.f32.mrb[0].mxu0
        %v8130 = vadd.f32 %v7833, %v8129
        %v8131 = vpop.f32.mrb[0].mxu0
        %v8132 = vpop.f32.mrb[0].mxu0
        %v8133 = vadd.f32 %v7833, %v8132
        %v8134 = vpop.f32.mrb[0].mxu0
        %8135 = vmatprep.mubr.bf16.mxu0 %v7721
        %8136 = vmatmul.mubr.bf16.gmra.mrb[0].mxu0 %v7465
        %v8137 = vpop.f32.mrb[0].mxu0
        %v8138 = vadd.f32 %v7833, %v8137
        %v8139 = vpop.f32.mrb[0].mxu0
        %v8140 = vpop.f32.mrb[0].mxu0
        %v8141 = vadd.f32 %v7833, %v8140
        %v8142 = vpop.f32.mrb[0].mxu0
        %8143 = vmatprep.mubr.bf16.mxu0 %v7724
        %8144 = vmatmul.mubr.bf16.gmra.mrb[0].mxu0 %v7468
        %v8145 = vpop.f32.mrb[0].mxu0
        %v8146 = vadd.f32 %v7833, %v8145
        %v8147 = vpop.f32.mrb[0].mxu0
        %v8148 = vpop.f32.mrb[0].mxu0
        %v8149 = vadd.f32 %v7833, %v8148
        %v8150 = vpop.f32.mrb[0].mxu0
        %8151 = vmatprep.mubr.bf16.mxu0 %v7727
        %8152 = vmatmul.mubr.bf16.gmra.mrb[0].mxu0 %v7471
        %v8153 = vpop.f32.mrb[0].mxu0
        %v8154 = vadd.f32 %v7833, %v8153
        %v8155 = vpop.f32.mrb[0].mxu0
        %v8156 = vpop.f32.mrb[0].mxu0
        %v8157 = vadd.f32 %v7833, %v8156
        %v8158 = vpop.f32.mrb[0].mxu0
        %8159 = vmatprep.mubr.bf16.mxu0 %v7730
        %8160 = vmatmul.mubr.bf16.gmra.mrb[0].mxu0 %v7474
        %v8161 = vpop.f32.mrb[0].mxu0
        %v8162 = vadd.f32 %v7833, %v8161
        %v8163 = vpop.f32.mrb[0].mxu0
        %v8164 = vpop.f32.mrb[0].mxu0
        %v8165 = vadd.f32 %v7833, %v8164
        %v8166 = vpop.f32.mrb[0].mxu0
        %8167 = vmatprep.mubr.bf16.mxu0 %v7733
        %8168 = vmatmul.mubr.bf16.gmra.mrb[0].mxu0 %v7477
        %v8169 = vpop.f32.mrb[0].mxu0
        %v8170 = vadd.f32 %v7833, %v8169
        %v8171 = vpop.f32.mrb[0].mxu0
        %v8172 = vpop.f32.mrb[0].mxu0
        %v8173 = vadd.f32 %v7833, %v8172
        %v8174 = vpop.f32.mrb[0].mxu0
        %8175 = vmatprep.mubr.bf16.mxu0 %v7736
        %8176 = vmatmul.mubr.bf16.gmra.mrb[0].mxu0 %v7480
        %v8177 = vpop.f32.mrb[0].mxu0
        %v8178 = vadd.f32 %v7833, %v8177
        %v8179 = vpop.f32.mrb[0].mxu0
        %v8180 = vpop.f32.mrb[0].mxu0
        %v8181 = vadd.f32 %v7833, %v8180
        %v8182 = vpop.f32.mrb[0].mxu0
        %8183 = vmatprep.mubr.bf16.mxu0 %v7739
        %8184 = vmatmul.mubr.bf16.gmra.mrb[0].mxu0 %v7483
        %v8185 = vpop.f32.mrb[0].mxu0
        %v8186 = vadd.f32 %v7833, %v8185
        %v8187 = vpop.f32.mrb[0].mxu0
        %v8188 = vpop.f32.mrb[0].mxu0
        %v8189 = vadd.f32 %v7833, %v8188
        %v8190 = vpop.f32.mrb[0].mxu0
        %8191 = vmatprep.mubr.bf16.mxu0 %v7742
        %8192 = vmatmul.mubr.bf16.gmra.mrb[0].mxu0 %v7486
        %v8193 = vpop.f32.mrb[0].mxu0
        %v8194 = vadd.f32 %v7833, %v8193
        %v8195 = vpop.f32.mrb[0].mxu0
        %v8196 = vpop.f32.mrb[0].mxu0
        %v8197 = vadd.f32 %v7833, %v8196
        %v8198 = vpop.f32.mrb[0].mxu0
        %8199 = vmatprep.mubr.bf16.mxu0 %v7745
        %8200 = vmatmul.mubr.bf16.gmra.mrb[0].mxu0 %v7489
        %v8201 = vpop.f32.mrb[0].mxu0
        %v8202 = vadd.f32 %v7833, %v8201
        %v8203 = vpop.f32.mrb[0].mxu0
        %v8204 = vpop.f32.mrb[0].mxu0
        %v8205 = vadd.f32 %v7833, %v8204
        %v8206 = vpop.f32.mrb[0].mxu0
        %8207 = vmatprep.mubr.bf16.mxu0 %v7748
        %8208 = vmatmul.mubr.bf16.gmra.mrb[0].mxu0 %v7492
        %v8209 = vpop.f32.mrb[0].mxu0
        %v8210 = vadd.f32 %v7833, %v8209
        %v8211 = vpop.f32.mrb[0].mxu0
        %v8212 = vpop.f32.mrb[0].mxu0
        %v8213 = vadd.f32 %v7833, %v8212
        %v8214 = vpop.f32.mrb[0].mxu0
        %8215 = vmatprep.mubr.bf16.mxu0 %v7751
        %8216 = vmatmul.mubr.bf16.gmra.mrb[0].mxu0 %v7495
        %v8217 = vpop.f32.mrb[0].mxu0
        %v8218 = vadd.f32 %v7833, %v8217
        %v8219 = vpop.f32.mrb[0].mxu0
        %v8220 = vpop.f32.mrb[0].mxu0
        %v8221 = vadd.f32 %v7833, %v8220
        %v8222 = vpop.f32.mrb[0].mxu0
        %8223 = vmatprep.mubr.bf16.mxu0 %v7754
        %8224 = vmatmul.mubr.bf16.gmra.mrb[0].mxu0 %v7498
        %v8225 = vpop.f32.mrb[0].mxu0
        %v8226 = vadd.f32 %v7833, %v8225
        %v8227 = vpop.f32.mrb[0].mxu0
        %v8228 = vpop.f32.mrb[0].mxu0
        %v8229 = vadd.f32 %v7833, %v8228
        %v8230 = vpop.f32.mrb[0].mxu0
        %8231 = vmatprep.mubr.bf16.mxu0 %v7757
        %8232 = vmatmul.mubr.bf16.gmra.mrb[0].mxu0 %v7501
        %v8233 = vpop.f32.mrb[0].mxu0
        %v8234 = vadd.f32 %v7833, %v8233
        %v8235 = vpop.f32.mrb[0].mxu0
        %v8236 = vpop.f32.mrb[0].mxu0
        %v8237 = vadd.f32 %v7833, %v8236
        %v8238 = vpop.f32.mrb[0].mxu0
        %8239 = vmatprep.mubr.bf16.mxu0 %v7760
        %8240 = vmatmul.mubr.bf16.gmra.mrb[0].mxu0 %v7504
        %v8241 = vpop.f32.mrb[0].mxu0
        %v8242 = vadd.f32 %v7833, %v8241
        %v8243 = vpop.f32.mrb[0].mxu0
        %v8244 = vpop.f32.mrb[0].mxu0
        %v8245 = vadd.f32 %v7833, %v8244
        %v8246 = vpop.f32.mrb[0].mxu0
        %8247 = vmatprep.mubr.bf16.mxu0 %v7763
        %8248 = vmatmul.mubr.bf16.gmra.mrb[0].mxu0 %v7507
        %v8249 = vpop.f32.mrb[0].mxu0
        %v8250 = vadd.f32 %v7833, %v8249
        %v8251 = vpop.f32.mrb[0].mxu0
        %v8252 = vpop.f32.mrb[0].mxu0
        %v8253 = vadd.f32 %v7833, %v8252
        %v8254 = vpop.f32.mrb[0].mxu0
        %8255 = vmatprep.mubr.bf16.mxu0 %v7766
        %8256 = vmatmul.mubr.bf16.gmra.mrb[0].mxu0 %v7510
        %v8257 = vpop.f32.mrb[0].mxu0
        %v8258 = vadd.f32 %v7833, %v8257
        %v8259 = vpop.f32.mrb[0].mxu0
        %v8260 = vpop.f32.mrb[0].mxu0
        %v8261 = vadd.f32 %v7833, %v8260
        %v8262 = vpop.f32.mrb[0].mxu0
        %8263 = vmatprep.mubr.bf16.mxu0 %v7769
        %8264 = vmatmul.mubr.bf16.gmra.mrb[0].mxu0 %v7513
        %v8265 = vpop.f32.mrb[0].mxu0
        %v8266 = vadd.f32 %v7833, %v8265
        %v8267 = vpop.f32.mrb[0].mxu0
        %v8268 = vpop.f32.mrb[0].mxu0
        %v8269 = vadd.f32 %v7833, %v8268
        %v8270 = vpop.f32.mrb[0].mxu0
        %8271 = vmatprep.mubr.bf16.mxu0 %v7772
        %8272 = vmatmul.mubr.bf16.gmra.mrb[0].mxu0 %v7516
        %v8273 = vpop.f32.mrb[0].mxu0
        %v8274 = vadd.f32 %v7833, %v8273
        %v8275 = vpop.f32.mrb[0].mxu0
        %v8276 = vpop.f32.mrb[0].mxu0
        %v8277 = vadd.f32 %v7833, %v8276
        %v8278 = vpop.f32.mrb[0].mxu0
        %8279 = vmatprep.mubr.bf16.mxu0 %v7775
        %8280 = vmatmul.mubr.bf16.gmra.mrb[0].mxu0 %v7519
        %v8281 = vpop.f32.mrb[0].mxu0
        %v8282 = vadd.f32 %v7833, %v8281
        %v8283 = vpop.f32.mrb[0].mxu0
        %v8284 = vpop.f32.mrb[0].mxu0
        %v8285 = vadd.f32 %v7833, %v8284
        %v8286 = vpop.f32.mrb[0].mxu0
        %8287 = vmatprep.mubr.bf16.mxu0 %v7778
        %8288 = vmatmul.mubr.bf16.gmra.mrb[0].mxu0 %v7522
        %v8289 = vpop.f32.mrb[0].mxu0
        %v8290 = vadd.f32 %v7833, %v8289
        %v8291 = vpop.f32.mrb[0].mxu0
        %v8292 = vpop.f32.mrb[0].mxu0
        %v8293 = vadd.f32 %v7833, %v8292
        %v8294 = vpop.f32.mrb[0].mxu0
        %8295 = vmatprep.mubr.bf16.mxu0 %v7781
        %8296 = vmatmul.mubr.bf16.gmra.mrb[0].mxu0 %v7525
        %v8297 = vpop.f32.mrb[0].mxu0
        %v8298 = vadd.f32 %v7833, %v8297
        %v8299 = vpop.f32.mrb[0].mxu0
        %v8300 = vpop.f32.mrb[0].mxu0
        %v8301 = vadd.f32 %v7833, %v8300
        %v8302 = vpop.f32.mrb[0].mxu0
        %8303 = vmatprep.mubr.bf16.mxu0 %v7784
        %8304 = vmatmul.mubr.bf16.gmra.mrb[0].mxu0 %v7528
        %v8305 = vpop.f32.mrb[0].mxu0
        %v8306 = vadd.f32 %v7833, %v8305
        %v8307 = vpop.f32.mrb[0].mxu0
        %v8308 = vpop.f32.mrb[0].mxu0
        %v8309 = vadd.f32 %v7833, %v8308
        %v8310 = vpop.f32.mrb[0].mxu0
        %8311 = vmatprep.mubr.bf16.mxu0 %v7787
        %8312 = vmatmul.mubr.bf16.gmra.mrb[0].mxu0 %v7531
        %v8313 = vpop.f32.mrb[0].mxu0
        %v8314 = vadd.f32 %v7833, %v8313
        %v8315 = vpop.f32.mrb[0].mxu0
        %v8316 = vpop.f32.mrb[0].mxu0
        %v8317 = vadd.f32 %v7833, %v8316
        %v8318 = vpop.f32.mrb[0].mxu0
        %8319 = vmatprep.mubr.bf16.mxu0 %v7790
        %8320 = vmatmul.mubr.bf16.gmra.mrb[0].mxu0 %v7534
        %v8321 = vpop.f32.mrb[0].mxu0
        %v8322 = vadd.f32 %v7833, %v8321
        %v8323 = vpop.f32.mrb[0].mxu0
        %v8324 = vpop.f32.mrb[0].mxu0
        %v8325 = vadd.f32 %v7833, %v8324
        %v8326 = vpop.f32.mrb[0].mxu0
        %8327 = vdwg.mxu0
        %8328 = vmatprep.subr.bf16.mxu0 0
        %8329 = vmatpush1.bf16.msra.mxu0 %v7923
        %8330 = vmatprep.subr.bf16.mxu0 0
        %8331 = vmatpush1.bf16.msra.mxu0 %v7924
        %8332 = vmatprep.subr.bf16.mxu0 0
        %8333 = vmatpush1.bf16.msra.mxu0 0
        %8334 = vmatprep.subr.bf16.mxu0 0
        %8335 = vmatpush1.bf16.msra.mxu0 0
        %8336 = vmatprep.subr.bf16.mxu0 0
        %8337 = vmatpush1.bf16.msra.mxu0 0
        %8338 = vmatprep.subr.bf16.mxu0 0
        %8339 = vmatpush1.bf16.msra.mxu0 0
        %8340 = vmatprep.subr.bf16.mxu0 0
        %8341 = vmatpush1.bf16.msra.mxu0 0
        %8342 = vmatprep.subr.bf16.mxu0 0
        %8343 = vmatpush1.bf16.msra.mxu0 0
        %8344 = vmatprep.subr.bf16.mxu0 0
        %8345 = vmatpush1.bf16.msra.mxu0 0
        %8346 = vmatprep.subr.bf16.mxu0 0
        %8347 = vmatpush1.bf16.msra.mxu0 0
        %8348 = vmatprep.subr.bf16.mxu0 0
        %8349 = vmatpush1.bf16.msra.mxu0 0
        %8350 = vmatprep.subr.bf16.mxu0 0
        %8351 = vmatpush1.bf16.msra.mxu0 0
        %8352 = vmatprep.subr.bf16.mxu0 0
        %8353 = vmatpush1.bf16.msra.mxu0 0
        %8354 = vmatprep.subr.bf16.mxu0 0
        %8355 = vmatpush1.bf16.msra.mxu0 0
        %8356 = vmatprep.subr.bf16.mxu0 0
        %8357 = vmatpush1.bf16.msra.mxu0 0
        %8358 = vmatprep.subr.bf16.mxu0 0
        %8359 = vmatpush1.bf16.msra.mxu0 0
        %8360 = vmatprep.mubr.bf16.mxu0 0
        %8361 = vmatmul.mubr.bf16.gmra.mrb[0].mxu0 %v7944
        %v8362 = vpop.f32.mrb[0].mxu0
        %v8363 = vadd.f32 %v8074, %v8362
        %v8364 = vpop.f32.mrb[0].mxu0
        %v8365 = vpop.f32.mrb[0].mxu0
        %v8366 = vadd.f32 %v8077, %v8365
        %v8367 = vpop.f32.mrb[0].mxu0
        %8368 = vmatprep.mubr.bf16.mxu0 0
        %8369 = vmatmul.mubr.bf16.gmra.mrb[0].mxu0 %v7947
        %v8370 = vpop.f32.mrb[0].mxu0
        %v8371 = vadd.f32 %v8082, %v8370
        %v8372 = vpop.f32.mrb[0].mxu0
        %v8373 = vpop.f32.mrb[0].mxu0
        %v8374 = vadd.f32 %v8085, %v8373
        %v8375 = vpop.f32.mrb[0].mxu0
        %8376 = vmatprep.mubr.bf16.mxu0 0
        %8377 = vmatmul.mubr.bf16.gmra.mrb[0].mxu0 %v7950
        %v8378 = vpop.f32.mrb[0].mxu0
        %v8379 = vadd.f32 %v8090, %v8378
        %v8380 = vpop.f32.mrb[0].mxu0
        %v8381 = vpop.f32.mrb[0].mxu0
        %v8382 = vadd.f32 %v8093, %v8381
        %v8383 = vpop.f32.mrb[0].mxu0
        %8384 = vmatprep.mubr.bf16.mxu0 0
        %8385 = vmatmul.mubr.bf16.gmra.mrb[0].mxu0 %v7953
        %v8386 = vpop.f32.mrb[0].mxu0
        %v8387 = vadd.f32 %v8098, %v8386
        %v8388 = vpop.f32.mrb[0].mxu0
        %v8389 = vpop.f32.mrb[0].mxu0
        %v8390 = vadd.f32 %v8101, %v8389
        %v8391 = vpop.f32.mrb[0].mxu0
        %8392 = vmatprep.mubr.bf16.mxu0 0
        %8393 = vmatmul.mubr.bf16.gmra.mrb[0].mxu0 %v7956
        %v8394 = vpop.f32.mrb[0].mxu0
        %v8395 = vadd.f32 %v8106, %v8394
        %v8396 = vpop.f32.mrb[0].mxu0
        %v8397 = vpop.f32.mrb[0].mxu0
        %v8398 = vadd.f32 %v8109, %v8397
        %v8399 = vpop.f32.mrb[0].mxu0
        %8400 = vmatprep.mubr.bf16.mxu0 0
        %8401 = vmatmul.mubr.bf16.gmra.mrb[0].mxu0 %v7959
        %v8402 = vpop.f32.mrb[0].mxu0
        %v8403 = vadd.f32 %v8114, %v8402
        %v8404 = vpop.f32.mrb[0].mxu0
        %v8405 = vpop.f32.mrb[0].mxu0
        %v8406 = vadd.f32 %v8117, %v8405
        %v8407 = vpop.f32.mrb[0].mxu0
        %8408 = vmatprep.mubr.bf16.mxu0 0
        %8409 = vmatmul.mubr.bf16.gmra.mrb[0].mxu0 %v7962
        %v8410 = vpop.f32.mrb[0].mxu0
        %v8411 = vadd.f32 %v8122, %v8410
        %v8412 = vpop.f32.mrb[0].mxu0
        %v8413 = vpop.f32.mrb[0].mxu0
        %v8414 = vadd.f32 %v8125, %v8413
        %v8415 = vpop.f32.mrb[0].mxu0
        %8416 = vmatprep.mubr.bf16.mxu0 0
        %8417 = vmatmul.mubr.bf16.gmra.mrb[0].mxu0 %v7965
        %v8418 = vpop.f32.mrb[0].mxu0
        %v8419 = vadd.f32 %v8130, %v8418
        %v8420 = vpop.f32.mrb[0].mxu0
        %v8421 = vpop.f32.mrb[0].mxu0
        %v8422 = vadd.f32 %v8133, %v8421
        %v8423 = vpop.f32.mrb[0].mxu0
        %8424 = vmatprep.mubr.bf16.mxu0 0
        %8425 = vmatmul.mubr.bf16.gmra.mrb[0].mxu0 %v7968
        %v8426 = vpop.f32.mrb[0].mxu0
        %v8427 = vadd.f32 %v8138, %v8426
        %v8428 = vpop.f32.mrb[0].mxu0
        %v8429 = vpop.f32.mrb[0].mxu0
        %v8430 = vadd.f32 %v8141, %v8429
        %v8431 = vpop.f32.mrb[0].mxu0
        %8432 = vmatprep.mubr.bf16.mxu0 0
        %8433 = vmatmul.mubr.bf16.gmra.mrb[0].mxu0 %v7971
        %v8434 = vpop.f32.mrb[0].mxu0
        %v8435 = vadd.f32 %v8146, %v8434
        %v8436 = vpop.f32.mrb[0].mxu0
        %v8437 = vpop.f32.mrb[0].mxu0
        %v8438 = vadd.f32 %v8149, %v8437
        %v8439 = vpop.f32.mrb[0].mxu0
        %8440 = vmatprep.mubr.bf16.mxu0 0
        %8441 = vmatmul.mubr.bf16.gmra.mrb[0].mxu0 %v7974
        %v8442 = vpop.f32.mrb[0].mxu0
        %v8443 = vadd.f32 %v8154, %v8442
        %v8444 = vpop.f32.mrb[0].mxu0
        %v8445 = vpop.f32.mrb[0].mxu0
        %v8446 = vadd.f32 %v8157, %v8445
        %v8447 = vpop.f32.mrb[0].mxu0
        %8448 = vmatprep.mubr.bf16.mxu0 0
        %8449 = vmatmul.mubr.bf16.gmra.mrb[0].mxu0 %v7977
        %v8450 = vpop.f32.mrb[0].mxu0
        %v8451 = vadd.f32 %v8162, %v8450
        %v8452 = vpop.f32.mrb[0].mxu0
        %v8453 = vpop.f32.mrb[0].mxu0
        %v8454 = vadd.f32 %v8165, %v8453
        %v8455 = vpop.f32.mrb[0].mxu0
        %8456 = vmatprep.mubr.bf16.mxu0 0
        %8457 = vmatmul.mubr.bf16.gmra.mrb[0].mxu0 %v7980
        %v8458 = vpop.f32.mrb[0].mxu0
        %v8459 = vadd.f32 %v8170, %v8458
        %v8460 = vpop.f32.mrb[0].mxu0
        %v8461 = vpop.f32.mrb[0].mxu0
        %v8462 = vadd.f32 %v8173, %v8461
        %v8463 = vpop.f32.mrb[0].mxu0
        %8464 = vmatprep.mubr.bf16.mxu0 0
        %8465 = vmatmul.mubr.bf16.gmra.mrb[0].mxu0 %v7983
        %v8466 = vpop.f32.mrb[0].mxu0
        %v8467 = vadd.f32 %v8178, %v8466
        %v8468 = vpop.f32.mrb[0].mxu0
        %v8469 = vpop.f32.mrb[0].mxu0
        %v8470 = vadd.f32 %v8181, %v8469
        %v8471 = vpop.f32.mrb[0].mxu0
        %8472 = vmatprep.mubr.bf16.mxu0 0
        %8473 = vmatmul.mubr.bf16.gmra.mrb[0].mxu0 %v7986
        %v8474 = vpop.f32.mrb[0].mxu0
        %v8475 = vadd.f32 %v8186, %v8474
        %v8476 = vpop.f32.mrb[0].mxu0
        %v8477 = vpop.f32.mrb[0].mxu0
        %v8478 = vadd.f32 %v8189, %v8477
        %v8479 = vpop.f32.mrb[0].mxu0
        %8480 = vmatprep.mubr.bf16.mxu0 0
        %8481 = vmatmul.mubr.bf16.gmra.mrb[0].mxu0 %v7989
        %v8482 = vpop.f32.mrb[0].mxu0
        %v8483 = vadd.f32 %v8194, %v8482
        %v8484 = vpop.f32.mrb[0].mxu0
        %v8485 = vpop.f32.mrb[0].mxu0
        %v8486 = vadd.f32 %v8197, %v8485
        %v8487 = vpop.f32.mrb[0].mxu0
        %8488 = vmatprep.mubr.bf16.mxu0 0
        %8489 = vmatmul.mubr.bf16.gmra.mrb[0].mxu0 %v7992
        %v8490 = vpop.f32.mrb[0].mxu0
        %v8491 = vadd.f32 %v8202, %v8490
        %v8492 = vpop.f32.mrb[0].mxu0
        %v8493 = vpop.f32.mrb[0].mxu0
        %v8494 = vadd.f32 %v8205, %v8493
        %v8495 = vpop.f32.mrb[0].mxu0
        %8496 = vmatprep.mubr.bf16.mxu0 0
        %8497 = vmatmul.mubr.bf16.gmra.mrb[0].mxu0 %v7995
        %v8498 = vpop.f32.mrb[0].mxu0
        %v8499 = vadd.f32 %v8210, %v8498
        %v8500 = vpop.f32.mrb[0].mxu0
        %v8501 = vpop.f32.mrb[0].mxu0
        %v8502 = vadd.f32 %v8213, %v8501
        %v8503 = vpop.f32.mrb[0].mxu0
        %8504 = vmatprep.mubr.bf16.mxu0 0
        %8505 = vmatmul.mubr.bf16.gmra.mrb[0].mxu0 %v7998
        %v8506 = vpop.f32.mrb[0].mxu0
        %v8507 = vadd.f32 %v8218, %v8506
        %v8508 = vpop.f32.mrb[0].mxu0
        %v8509 = vpop.f32.mrb[0].mxu0
        %v8510 = vadd.f32 %v8221, %v8509
        %v8511 = vpop.f32.mrb[0].mxu0
        %8512 = vmatprep.mubr.bf16.mxu0 0
        %8513 = vmatmul.mubr.bf16.gmra.mrb[0].mxu0 %v8001
        %v8514 = vpop.f32.mrb[0].mxu0
        %v8515 = vadd.f32 %v8226, %v8514
        %v8516 = vpop.f32.mrb[0].mxu0
        %v8517 = vpop.f32.mrb[0].mxu0
        %v8518 = vadd.f32 %v8229, %v8517
        %v8519 = vpop.f32.mrb[0].mxu0
        %8520 = vmatprep.mubr.bf16.mxu0 0
        %8521 = vmatmul.mubr.bf16.gmra.mrb[0].mxu0 %v8004
        %v8522 = vpop.f32.mrb[0].mxu0
        %v8523 = vadd.f32 %v8234, %v8522
        %v8524 = vpop.f32.mrb[0].mxu0
        %v8525 = vpop.f32.mrb[0].mxu0
        %v8526 = vadd.f32 %v8237, %v8525
        %v8527 = vpop.f32.mrb[0].mxu0
        %8528 = vmatprep.mubr.bf16.mxu0 0
        %8529 = vmatmul.mubr.bf16.gmra.mrb[0].mxu0 %v8007
        %v8530 = vpop.f32.mrb[0].mxu0
        %v8531 = vadd.f32 %v8242, %v8530
        %v8532 = vpop.f32.mrb[0].mxu0
        %v8533 = vpop.f32.mrb[0].mxu0
        %v8534 = vadd.f32 %v8245, %v8533
        %v8535 = vpop.f32.mrb[0].mxu0
        %8536 = vmatprep.mubr.bf16.mxu0 0
        %8537 = vmatmul.mubr.bf16.gmra.mrb[0].mxu0 %v8010
        %v8538 = vpop.f32.mrb[0].mxu0
        %v8539 = vadd.f32 %v8250, %v8538
        %v8540 = vpop.f32.mrb[0].mxu0
        %v8541 = vpop.f32.mrb[0].mxu0
        %v8542 = vadd.f32 %v8253, %v8541
        %v8543 = vpop.f32.mrb[0].mxu0
        %8544 = vmatprep.mubr.bf16.mxu0 0
        %8545 = vmatmul.mubr.bf16.gmra.mrb[0].mxu0 %v8013
        %v8546 = vpop.f32.mrb[0].mxu0
        %v8547 = vadd.f32 %v8258, %v8546
        %v8548 = vpop.f32.mrb[0].mxu0
        %v8549 = vpop.f32.mrb[0].mxu0
        %v8550 = vadd.f32 %v8261, %v8549
        %v8551 = vpop.f32.mrb[0].mxu0
        %8552 = vmatprep.mubr.bf16.mxu0 0
        %8553 = vmatmul.mubr.bf16.gmra.mrb[0].mxu0 %v8016
        %v8554 = vpop.f32.mrb[0].mxu0
        %v8555 = vadd.f32 %v8266, %v8554
        %v8556 = vpop.f32.mrb[0].mxu0
        %v8557 = vpop.f32.mrb[0].mxu0
        %v8558 = vadd.f32 %v8269, %v8557
        %v8559 = vpop.f32.mrb[0].mxu0
        %8560 = vmatprep.mubr.bf16.mxu0 0
        %8561 = vmatmul.mubr.bf16.gmra.mrb[0].mxu0 %v8019
        %v8562 = vpop.f32.mrb[0].mxu0
        %v8563 = vadd.f32 %v8274, %v8562
        %v8564 = vpop.f32.mrb[0].mxu0
        %v8565 = vpop.f32.mrb[0].mxu0
        %v8566 = vadd.f32 %v8277, %v8565
        %v8567 = vpop.f32.mrb[0].mxu0
        %8568 = vmatprep.mubr.bf16.mxu0 0
        %8569 = vmatmul.mubr.bf16.gmra.mrb[0].mxu0 %v8022
        %v8570 = vpop.f32.mrb[0].mxu0
        %v8571 = vadd.f32 %v8282, %v8570
        %v8572 = vpop.f32.mrb[0].mxu0
        %v8573 = vpop.f32.mrb[0].mxu0
        %v8574 = vadd.f32 %v8285, %v8573
        %v8575 = vpop.f32.mrb[0].mxu0
        %8576 = vmatprep.mubr.bf16.mxu0 0
        %8577 = vmatmul.mubr.bf16.gmra.mrb[0].mxu0 %v8025
        %v8578 = vpop.f32.mrb[0].mxu0
        %v8579 = vadd.f32 %v8290, %v8578
        %v8580 = vpop.f32.mrb[0].mxu0
        %v8581 = vpop.f32.mrb[0].mxu0
        %v8582 = vadd.f32 %v8293, %v8581
        %v8583 = vpop.f32.mrb[0].mxu0
        %8584 = vmatprep.mubr.bf16.mxu0 0
        %8585 = vmatmul.mubr.bf16.gmra.mrb[0].mxu0 %v8028
        %v8586 = vpop.f32.mrb[0].mxu0
        %v8587 = vadd.f32 %v8298, %v8586
        %v8588 = vpop.f32.mrb[0].mxu0
        %v8589 = vpop.f32.mrb[0].mxu0
        %v8590 = vadd.f32 %v8301, %v8589
        %v8591 = vpop.f32.mrb[0].mxu0
        %8592 = vmatprep.mubr.bf16.mxu0 0
        %8593 = vmatmul.mubr.bf16.gmra.mrb[0].mxu0 %v8031
        %v8594 = vpop.f32.mrb[0].mxu0
        %v8595 = vadd.f32 %v8306, %v8594
        %v8596 = vpop.f32.mrb[0].mxu0
        %v8597 = vpop.f32.mrb[0].mxu0
        %v8598 = vadd.f32 %v8309, %v8597
        %v8599 = vpop.f32.mrb[0].mxu0
        %8600 = vmatprep.mubr.bf16.mxu0 0
        %8601 = vmatmul.mubr.bf16.gmra.mrb[0].mxu0 %v8034
        %v8602 = vpop.f32.mrb[0].mxu0
        %v8603 = vadd.f32 %v8314, %v8602
        %v8604 = vpop.f32.mrb[0].mxu0
        %v8605 = vpop.f32.mrb[0].mxu0
        %v8606 = vadd.f32 %v8317, %v8605
        %v8607 = vpop.f32.mrb[0].mxu0
        %8608 = vmatprep.mubr.bf16.mxu0 0
        %8609 = vmatmul.mubr.bf16.gmra.mrb[0].mxu0 %v8037
        %v8610 = vpop.f32.mrb[0].mxu0
        %v8611 = vadd.f32 %v8322, %v8610
        %v8612 = vpop.f32.mrb[0].mxu0
        %v8613 = vpop.f32.mrb[0].mxu0
        %v8614 = vadd.f32 %v8325, %v8613
        %v8615 = vpop.f32.mrb[0].mxu0
        %8616 = vdwg.mxu0
        %v8617 = vmax.f32 %v8363, 0.0
        %v8618 = vmax.f32 %v8366, 0.0
        %v8619 = vmax.f32 %v8371, 0.0
        %v8620 = vmax.f32 %v8374, 0.0
        %v8621 = vmax.f32 %v8379, 0.0
        %v8622 = vmax.f32 %v8382, 0.0
        %v8623 = vmax.f32 %v8387, 0.0
        %v8624 = vmax.f32 %v8390, 0.0
        %v8625 = vmax.f32 %v8395, 0.0
        %v8626 = vmax.f32 %v8398, 0.0
        %v8627 = vmax.f32 %v8403, 0.0
        %v8628 = vmax.f32 %v8406, 0.0
        %v8629 = vmax.f32 %v8411, 0.0
        %v8630 = vmax.f32 %v8414, 0.0
        %v8631 = vmax.f32 %v8419, 0.0
        %v8632 = vmax.f32 %v8422, 0.0
        %v8633 = vmax.f32 %v8427, 0.0
        %v8634 = vmax.f32 %v8430, 0.0
        %v8635 = vmax.f32 %v8435, 0.0
        %v8636 = vmax.f32 %v8438, 0.0
        %v8637 = vmax.f32 %v8443, 0.0
        %v8638 = vmax.f32 %v8446, 0.0
        %v8639 = vmax.f32 %v8451, 0.0
        %v8640 = vmax.f32 %v8454, 0.0
        %v8641 = vmax.f32 %v8459, 0.0
        %v8642 = vmax.f32 %v8462, 0.0
        %v8643 = vmax.f32 %v8467, 0.0
        %v8644 = vmax.f32 %v8470, 0.0
        %v8645 = vmax.f32 %v8475, 0.0
        %v8646 = vmax.f32 %v8478, 0.0
        %v8647 = vmax.f32 %v8483, 0.0
        %v8648 = vmax.f32 %v8486, 0.0
        %v8649 = vmax.f32 %v8491, 0.0
        %v8650 = vmax.f32 %v8494, 0.0
        %v8651 = vmax.f32 %v8499, 0.0
        %v8652 = vmax.f32 %v8502, 0.0
        %v8653 = vmax.f32 %v8507, 0.0
        %v8654 = vmax.f32 %v8510, 0.0
        %v8655 = vmax.f32 %v8515, 0.0
        %v8656 = vmax.f32 %v8518, 0.0
        %v8657 = vmax.f32 %v8523, 0.0
        %v8658 = vmax.f32 %v8526, 0.0
        %v8659 = vmax.f32 %v8531, 0.0
        %v8660 = vmax.f32 %v8534, 0.0
        %v8661 = vmax.f32 %v8539, 0.0
        %v8662 = vmax.f32 %v8542, 0.0
        %v8663 = vmax.f32 %v8547, 0.0
        %v8664 = vmax.f32 %v8550, 0.0
        %v8665 = vmax.f32 %v8555, 0.0
        %v8666 = vmax.f32 %v8558, 0.0
        %v8667 = vmax.f32 %v8563, 0.0
        %v8668 = vmax.f32 %v8566, 0.0
        %v8669 = vmax.f32 %v8571, 0.0
        %v8670 = vmax.f32 %v8574, 0.0
        %v8671 = vmax.f32 %v8579, 0.0
        %v8672 = vmax.f32 %v8582, 0.0
        %v8673 = vmax.f32 %v8587, 0.0
        %v8674 = vmax.f32 %v8590, 0.0
        %v8675 = vmax.f32 %v8595, 0.0
        %v8676 = vmax.f32 %v8598, 0.0
        %v8677 = vmax.f32 %v8603, 0.0
        %v8678 = vmax.f32 %v8606, 0.0
        %v8679 = vmax.f32 %v8611, 0.0
        %v8680 = vmax.f32 %v8614, 0.0
        %v8681 = vpack.c.bf16 %v8618, %v8617
        %v8682 = vpack.c.bf16 %v8620, %v8619
        %v8683 = vpack.c.bf16 %v8622, %v8621
        %v8684 = vpack.c.bf16 %v8624, %v8623
        %v8685 = vpack.c.bf16 %v8626, %v8625
        %v8686 = vpack.c.bf16 %v8628, %v8627
        %v8687 = vpack.c.bf16 %v8630, %v8629
        %v8688 = vpack.c.bf16 %v8632, %v8631
        %v8689 = vpack.c.bf16 %v8634, %v8633
        %v8690 = vpack.c.bf16 %v8636, %v8635
        %v8691 = vpack.c.bf16 %v8638, %v8637
        %v8692 = vpack.c.bf16 %v8640, %v8639
        %v8693 = vpack.c.bf16 %v8642, %v8641
        %v8694 = vpack.c.bf16 %v8644, %v8643
        %v8695 = vpack.c.bf16 %v8646, %v8645
        %v8696 = vpack.c.bf16 %v8648, %v8647
        %v8697 = vpack.c.bf16 %v8650, %v8649
        %v8698 = vpack.c.bf16 %v8652, %v8651
        %v8699 = vpack.c.bf16 %v8654, %v8653
        %v8700 = vpack.c.bf16 %v8656, %v8655
        %v8701 = vpack.c.bf16 %v8658, %v8657
        %v8702 = vpack.c.bf16 %v8660, %v8659
        %v8703 = vpack.c.bf16 %v8662, %v8661
        %v8704 = vpack.c.bf16 %v8664, %v8663
        %v8705 = vpack.c.bf16 %v8666, %v8665
        %v8706 = vpack.c.bf16 %v8668, %v8667
        %v8707 = vpack.c.bf16 %v8670, %v8669
        %v8708 = vpack.c.bf16 %v8672, %v8671
        %v8709 = vpack.c.bf16 %v8674, %v8673
        %v8710 = vpack.c.bf16 %v8676, %v8675
        %v8711 = vpack.c.bf16 %v8678, %v8677
        %v8712 = vpack.c.bf16 %v8680, %v8679
        %v8713 = vld [vmem:[%s5] sm:$0xf]
        %v8714 = vld [vmem:[%s5 + $0x4] sm:$0xf]
        %v8715 = vld [vmem:[%s5 + $0x8] sm:$0xf]
        %v8716 = vld [vmem:[%s5 + $0xc] sm:$0xf]
        %v8717 = vld [vmem:[%s267] sm:$0xf]
        %v8718 = vld [vmem:[%s267 + $0x4] sm:$0xf]
        %v8719 = vld [vmem:[%s267 + $0x8] sm:$0xf]
        %v8720 = vld [vmem:[%s267 + $0xc] sm:$0xf]
        %v8721 = vld [vmem:[%s267 + $0x10] sm:$0xf]
        %v8722 = vld [vmem:[%s267 + $0x14] sm:$0xf]
        %v8723 = vld [vmem:[%s267 + $0x18] sm:$0xf]
        %v8724 = vld [vmem:[%s267 + $0x1c] sm:$0xf]
        %v8725 = vld [vmem:[%s267 + $0x20] sm:$0xf]
        %v8726 = vld [vmem:[%s267 + $0x24] sm:$0xf]
        %v8727 = vld [vmem:[%s267 + $0x28] sm:$0xf]
        %v8728 = vld [vmem:[%s267 + $0x2c] sm:$0xf]
        %v8729 = vld [vmem:[%s267 + $0x30] sm:$0xf]
        %v8730 = vld [vmem:[%s267 + $0x34] sm:$0xf]
        %v8731 = vld [vmem:[%s267 + $0x38] sm:$0xf]
        %v8732 = vld [vmem:[%s267 + $0x3c] sm:$0xf]
        %v8733 = vld [vmem:[%s267 + $0x40] sm:$0xf]
        %v8734 = vld [vmem:[%s267 + $0x44] sm:$0xf]
        %v8735 = vld [vmem:[%s267 + $0x48] sm:$0xf]
        %v8736 = vld [vmem:[%s267 + $0x4c] sm:$0xf]
        %v8737 = vld [vmem:[%s267 + $0x50] sm:$0xf]
        %v8738 = vld [vmem:[%s267 + $0x54] sm:$0xf]
        %v8739 = vld [vmem:[%s267 + $0x58] sm:$0xf]
        %v8740 = vld [vmem:[%s267 + $0x5c] sm:$0xf]
        %v8741 = vld [vmem:[%s267 + $0x60] sm:$0xf]
        %v8742 = vld [vmem:[%s267 + $0x64] sm:$0xf]
        %v8743 = vld [vmem:[%s267 + $0x68] sm:$0xf]
        %v8744 = vld [vmem:[%s267 + $0x6c] sm:$0xf]
        %v8745 = vld [vmem:[%s267 + $0x70] sm:$0xf]
        %v8746 = vld [vmem:[%s267 + $0x74] sm:$0xf]
        %v8747 = vld [vmem:[%s267 + $0x78] sm:$0xf]
        %v8748 = vld [vmem:[%s267 + $0x7c] sm:$0xf]
        %v8749 = vld [vmem:[%s267 + $0x80] sm:$0xf]
        %v8750 = vld [vmem:[%s267 + $0x84] sm:$0xf]
        %v8751 = vld [vmem:[%s267 + $0x88] sm:$0xf]
        %v8752 = vld [vmem:[%s267 + $0x8c] sm:$0xf]
        %v8753 = vld [vmem:[%s267 + $0x90] sm:$0xf]
        %v8754 = vld [vmem:[%s267 + $0x94] sm:$0xf]
        %v8755 = vld [vmem:[%s267 + $0x98] sm:$0xf]
        %v8756 = vld [vmem:[%s267 + $0x9c] sm:$0xf]
        %v8757 = vld [vmem:[%s267 + $0xa0] sm:$0xf]
        %v8758 = vld [vmem:[%s267 + $0xa4] sm:$0xf]
        %v8759 = vld [vmem:[%s267 + $0xa8] sm:$0xf]
        %v8760 = vld [vmem:[%s267 + $0xac] sm:$0xf]
        %v8761 = vld [vmem:[%s267 + $0xb0] sm:$0xf]
        %v8762 = vld [vmem:[%s267 + $0xb4] sm:$0xf]
        %v8763 = vld [vmem:[%s267 + $0xb8] sm:$0xf]
        %v8764 = vld [vmem:[%s267 + $0xbc] sm:$0xf]
        %v8765 = vld [vmem:[%s267 + $0xc0] sm:$0xf]
        %v8766 = vld [vmem:[%s267 + $0xc4] sm:$0xf]
        %v8767 = vld [vmem:[%s267 + $0xc8] sm:$0xf]
        %v8768 = vld [vmem:[%s267 + $0xcc] sm:$0xf]
        %v8769 = vld [vmem:[%s267 + $0xd0] sm:$0xf]
        %v8770 = vld [vmem:[%s267 + $0xd4] sm:$0xf]
        %v8771 = vld [vmem:[%s267 + $0xd8] sm:$0xf]
        %v8772 = vld [vmem:[%s267 + $0xdc] sm:$0xf]
        %v8773 = vld [vmem:[%s267 + $0xe0] sm:$0xf]
        %v8774 = vld [vmem:[%s267 + $0xe4] sm:$0xf]
        %v8775 = vld [vmem:[%s267 + $0xe8] sm:$0xf]
        %v8776 = vld [vmem:[%s267 + $0xec] sm:$0xf]
        %v8777 = vld [vmem:[%s267 + $0xf0] sm:$0xf]
        %v8778 = vld [vmem:[%s267 + $0xf4] sm:$0xf]
        %v8779 = vld [vmem:[%s267 + $0xf8] sm:$0xf]
        %v8780 = vld [vmem:[%s267 + $0xfc] sm:$0xf]
        %v8781 = vunpack.c.l.bf16 %v8717
        %v8782 = vunpack.c.l.bf16 %v8718
        %v8783 = vunpack.c.l.bf16 %v8719
        %v8784 = vunpack.c.l.bf16 %v8720
        %v8785 = vunpack.c.l.bf16 %v8721
        %v8786 = vunpack.c.l.bf16 %v8722
        %v8787 = vunpack.c.l.bf16 %v8723
        %v8788 = vunpack.c.l.bf16 %v8724
        %v8789 = vunpack.c.l.bf16 %v8725
        %v8790 = vunpack.c.l.bf16 %v8726
        %v8791 = vunpack.c.l.bf16 %v8727
        %v8792 = vunpack.c.l.bf16 %v8728
        %v8793 = vunpack.c.l.bf16 %v8729
        %v8794 = vunpack.c.l.bf16 %v8730
        %v8795 = vunpack.c.l.bf16 %v8731
        %v8796 = vunpack.c.l.bf16 %v8732
        %v8797 = vunpack.c.l.bf16 %v8733
        %v8798 = vunpack.c.l.bf16 %v8734
        %v8799 = vunpack.c.l.bf16 %v8735
        %v8800 = vunpack.c.l.bf16 %v8736
        %v8801 = vunpack.c.l.bf16 %v8737
        %v8802 = vunpack.c.l.bf16 %v8738
        %v8803 = vunpack.c.l.bf16 %v8739
        %v8804 = vunpack.c.l.bf16 %v8740
        %v8805 = vunpack.c.l.bf16 %v8741
        %v8806 = vunpack.c.l.bf16 %v8742
        %v8807 = vunpack.c.l.bf16 %v8743
        %v8808 = vunpack.c.l.bf16 %v8744
        %v8809 = vunpack.c.l.bf16 %v8745
        %v8810 = vunpack.c.l.bf16 %v8746
        %v8811 = vunpack.c.l.bf16 %v8747
        %v8812 = vunpack.c.l.bf16 %v8748
        %v8813 = vunpack.c.l.bf16 %v8749
        %v8814 = vunpack.c.l.bf16 %v8750
        %v8815 = vunpack.c.l.bf16 %v8751
        %v8816 = vunpack.c.l.bf16 %v8752
        %v8817 = vunpack.c.l.bf16 %v8753
        %v8818 = vunpack.c.l.bf16 %v8754
        %v8819 = vunpack.c.l.bf16 %v8755
        %v8820 = vunpack.c.l.bf16 %v8756
        %v8821 = vunpack.c.l.bf16 %v8757
        %v8822 = vunpack.c.l.bf16 %v8758
        %v8823 = vunpack.c.l.bf16 %v8759
        %v8824 = vunpack.c.l.bf16 %v8760
        %v8825 = vunpack.c.l.bf16 %v8761
        %v8826 = vunpack.c.l.bf16 %v8762
        %v8827 = vunpack.c.l.bf16 %v8763
        %v8828 = vunpack.c.l.bf16 %v8764
        %v8829 = vunpack.c.l.bf16 %v8765
        %v8830 = vunpack.c.l.bf16 %v8766
        %v8831 = vunpack.c.l.bf16 %v8767
        %v8832 = vunpack.c.l.bf16 %v8768
        %v8833 = vunpack.c.l.bf16 %v8769
        %v8834 = vunpack.c.l.bf16 %v8770
        %v8835 = vunpack.c.l.bf16 %v8771
        %v8836 = vunpack.c.l.bf16 %v8772
        %v8837 = vunpack.c.l.bf16 %v8773
        %v8838 = vunpack.c.l.bf16 %v8774
        %v8839 = vunpack.c.l.bf16 %v8775
        %v8840 = vunpack.c.l.bf16 %v8776
        %v8841 = vunpack.c.l.bf16 %v8777
        %v8842 = vunpack.c.l.bf16 %v8778
        %v8843 = vunpack.c.l.bf16 %v8779
        %v8844 = vunpack.c.l.bf16 %v8780
        %v8845 = vld [vmem:[%s6] sm:$0x1]
        %v8847 = vlaneseq
        %v8848 = vshrl.u32 %v8847, 7
        %v8849 = vsub.s32 0, %v8848
        %v8850 = vrot.slane %v8845, %v8849
        %v8856 = vunpack.c.l.b16 %v8713
        %v8857 = vunpack.c.l.b16 %v8714
        %v8858 = vunpack.c.l.b16 %v8715
        %v8859 = vunpack.c.l.b16 %v8716
        %v8860 = vpack.c.b16 %v8857, %v8856
        %v8861 = vpack.c.b16 %v8859, %v8858
        %v8865 = vsel %vm7277, %v8681, 0
        %v8868 = vsel %vm7277, %v8682, 0
        %v8871 = vsel %vm7277, %v8683, 0
        %v8874 = vsel %vm7277, %v8684, 0
        %v8877 = vsel %vm7277, %v8685, 0
        %v8880 = vsel %vm7277, %v8686, 0
        %v8883 = vsel %vm7277, %v8687, 0
        %v8886 = vsel %vm7277, %v8688, 0
        %v8889 = vsel %vm7277, %v8689, 0
        %v8892 = vsel %vm7277, %v8690, 0
        %v8895 = vsel %vm7277, %v8691, 0
        %v8898 = vsel %vm7277, %v8692, 0
        %v8901 = vsel %vm7277, %v8693, 0
        %v8904 = vsel %vm7277, %v8694, 0
        %v8907 = vsel %vm7277, %v8695, 0
        %v8910 = vsel %vm7277, %v8696, 0
        %v8913 = vsel %vm7277, %v8697, 0
        %v8916 = vsel %vm7277, %v8698, 0
        %v8919 = vsel %vm7277, %v8699, 0
        %v8922 = vsel %vm7277, %v8700, 0
        %v8925 = vsel %vm7277, %v8701, 0
        %v8928 = vsel %vm7277, %v8702, 0
        %v8931 = vsel %vm7277, %v8703, 0
        %v8934 = vsel %vm7277, %v8704, 0
        %v8937 = vsel %vm7277, %v8705, 0
        %v8940 = vsel %vm7277, %v8706, 0
        %v8943 = vsel %vm7277, %v8707, 0
        %v8946 = vsel %vm7277, %v8708, 0
        %v8949 = vsel %vm7277, %v8709, 0
        %v8952 = vsel %vm7277, %v8710, 0
        %v8955 = vsel %vm7277, %v8711, 0
        %v8958 = vsel %vm7277, %v8712, 0
        %8960 = vmatprep.subr.bf16.mxu0 0
        %8961 = vmatpush1.bf16.msra.mxu0 %v8860
        %8962 = vmatprep.subr.bf16.mxu0 0
        %8963 = vmatpush1.bf16.msra.mxu0 %v8861
        %8964 = vmatprep.subr.bf16.mxu0 0
        %8965 = vmatpush1.bf16.msra.mxu0 0
        %8966 = vmatprep.subr.bf16.mxu0 0
        %8967 = vmatpush1.bf16.msra.mxu0 0
        %8968 = vmatprep.subr.bf16.mxu0 0
        %8969 = vmatpush1.bf16.msra.mxu0 0
        %8970 = vmatprep.subr.bf16.mxu0 0
        %8971 = vmatpush1.bf16.msra.mxu0 0
        %8972 = vmatprep.subr.bf16.mxu0 0
        %8973 = vmatpush1.bf16.msra.mxu0 0
        %8974 = vmatprep.subr.bf16.mxu0 0
        %8975 = vmatpush1.bf16.msra.mxu0 0
        %8976 = vmatprep.subr.bf16.mxu0 0
        %8977 = vmatpush1.bf16.msra.mxu0 0
        %8978 = vmatprep.subr.bf16.mxu0 0
        %8979 = vmatpush1.bf16.msra.mxu0 0
        %8980 = vmatprep.subr.bf16.mxu0 0
        %8981 = vmatpush1.bf16.msra.mxu0 0
        %8982 = vmatprep.subr.bf16.mxu0 0
        %8983 = vmatpush1.bf16.msra.mxu0 0
        %8984 = vmatprep.subr.bf16.mxu0 0
        %8985 = vmatpush1.bf16.msra.mxu0 0
        %8986 = vmatprep.subr.bf16.mxu0 0
        %8987 = vmatpush1.bf16.msra.mxu0 0
        %8988 = vmatprep.subr.bf16.mxu0 0
        %8989 = vmatpush1.bf16.msra.mxu0 0
        %8990 = vmatprep.subr.bf16.mxu0 0
        %8991 = vmatpush1.bf16.msra.mxu0 0
        %8992 = vmatprep.mubr.bf16.mxu0 0
        %8993 = vmatmul.mubr.bf16.gmra.mrb[0].mxu0 %v8865
        %v8994 = vpop.f32.mrb[0].mxu0
        %v8995 = vadd.f32 %v8850, %v8994
        %v8996 = vpop.f32.mrb[0].mxu0
        %v8997 = vpop.f32.mrb[0].mxu0
        %v8998 = vadd.f32 %v8850, %v8997
        %v8999 = vpop.f32.mrb[0].mxu0
        %9000 = vmatprep.mubr.bf16.mxu0 0
        %9001 = vmatmul.mubr.bf16.gmra.mrb[0].mxu0 %v8868
        %v9002 = vpop.f32.mrb[0].mxu0
        %v9003 = vadd.f32 %v8850, %v9002
        %v9004 = vpop.f32.mrb[0].mxu0
        %v9005 = vpop.f32.mrb[0].mxu0
        %v9006 = vadd.f32 %v8850, %v9005
        %v9007 = vpop.f32.mrb[0].mxu0
        %9008 = vmatprep.mubr.bf16.mxu0 0
        %9009 = vmatmul.mubr.bf16.gmra.mrb[0].mxu0 %v8871
        %v9010 = vpop.f32.mrb[0].mxu0
        %v9011 = vadd.f32 %v8850, %v9010
        %v9012 = vpop.f32.mrb[0].mxu0
        %v9013 = vpop.f32.mrb[0].mxu0
        %v9014 = vadd.f32 %v8850, %v9013
        %v9015 = vpop.f32.mrb[0].mxu0
        %9016 = vmatprep.mubr.bf16.mxu0 0
        %9017 = vmatmul.mubr.bf16.gmra.mrb[0].mxu0 %v8874
        %v9018 = vpop.f32.mrb[0].mxu0
        %v9019 = vadd.f32 %v8850, %v9018
        %v9020 = vpop.f32.mrb[0].mxu0
        %v9021 = vpop.f32.mrb[0].mxu0
        %v9022 = vadd.f32 %v8850, %v9021
        %v9023 = vpop.f32.mrb[0].mxu0
        %9024 = vmatprep.mubr.bf16.mxu0 0
        %9025 = vmatmul.mubr.bf16.gmra.mrb[0].mxu0 %v8877
        %v9026 = vpop.f32.mrb[0].mxu0
        %v9027 = vadd.f32 %v8850, %v9026
        %v9028 = vpop.f32.mrb[0].mxu0
        %v9029 = vpop.f32.mrb[0].mxu0
        %v9030 = vadd.f32 %v8850, %v9029
        %v9031 = vpop.f32.mrb[0].mxu0
        %9032 = vmatprep.mubr.bf16.mxu0 0
        %9033 = vmatmul.mubr.bf16.gmra.mrb[0].mxu0 %v8880
        %v9034 = vpop.f32.mrb[0].mxu0
        %v9035 = vadd.f32 %v8850, %v9034
        %v9036 = vpop.f32.mrb[0].mxu0
        %v9037 = vpop.f32.mrb[0].mxu0
        %v9038 = vadd.f32 %v8850, %v9037
        %v9039 = vpop.f32.mrb[0].mxu0
        %9040 = vmatprep.mubr.bf16.mxu0 0
        %9041 = vmatmul.mubr.bf16.gmra.mrb[0].mxu0 %v8883
        %v9042 = vpop.f32.mrb[0].mxu0
        %v9043 = vadd.f32 %v8850, %v9042
        %v9044 = vpop.f32.mrb[0].mxu0
        %v9045 = vpop.f32.mrb[0].mxu0
        %v9046 = vadd.f32 %v8850, %v9045
        %v9047 = vpop.f32.mrb[0].mxu0
        %9048 = vmatprep.mubr.bf16.mxu0 0
        %9049 = vmatmul.mubr.bf16.gmra.mrb[0].mxu0 %v8886
        %v9050 = vpop.f32.mrb[0].mxu0
        %v9051 = vadd.f32 %v8850, %v9050
        %v9052 = vpop.f32.mrb[0].mxu0
        %v9053 = vpop.f32.mrb[0].mxu0
        %v9054 = vadd.f32 %v8850, %v9053
        %v9055 = vpop.f32.mrb[0].mxu0
        %9056 = vmatprep.mubr.bf16.mxu0 0
        %9057 = vmatmul.mubr.bf16.gmra.mrb[0].mxu0 %v8889
        %v9058 = vpop.f32.mrb[0].mxu0
        %v9059 = vadd.f32 %v8850, %v9058
        %v9060 = vpop.f32.mrb[0].mxu0
        %v9061 = vpop.f32.mrb[0].mxu0
        %v9062 = vadd.f32 %v8850, %v9061
        %v9063 = vpop.f32.mrb[0].mxu0
        %9064 = vmatprep.mubr.bf16.mxu0 0
        %9065 = vmatmul.mubr.bf16.gmra.mrb[0].mxu0 %v8892
        %v9066 = vpop.f32.mrb[0].mxu0
        %v9067 = vadd.f32 %v8850, %v9066
        %v9068 = vpop.f32.mrb[0].mxu0
        %v9069 = vpop.f32.mrb[0].mxu0
        %v9070 = vadd.f32 %v8850, %v9069
        %v9071 = vpop.f32.mrb[0].mxu0
        %9072 = vmatprep.mubr.bf16.mxu0 0
        %9073 = vmatmul.mubr.bf16.gmra.mrb[0].mxu0 %v8895
        %v9074 = vpop.f32.mrb[0].mxu0
        %v9075 = vadd.f32 %v8850, %v9074
        %v9076 = vpop.f32.mrb[0].mxu0
        %v9077 = vpop.f32.mrb[0].mxu0
        %v9078 = vadd.f32 %v8850, %v9077
        %v9079 = vpop.f32.mrb[0].mxu0
        %9080 = vmatprep.mubr.bf16.mxu0 0
        %9081 = vmatmul.mubr.bf16.gmra.mrb[0].mxu0 %v8898
        %v9082 = vpop.f32.mrb[0].mxu0
        %v9083 = vadd.f32 %v8850, %v9082
        %v9084 = vpop.f32.mrb[0].mxu0
        %v9085 = vpop.f32.mrb[0].mxu0
        %v9086 = vadd.f32 %v8850, %v9085
        %v9087 = vpop.f32.mrb[0].mxu0
        %9088 = vmatprep.mubr.bf16.mxu0 0
        %9089 = vmatmul.mubr.bf16.gmra.mrb[0].mxu0 %v8901
        %v9090 = vpop.f32.mrb[0].mxu0
        %v9091 = vadd.f32 %v8850, %v9090
        %v9092 = vpop.f32.mrb[0].mxu0
        %v9093 = vpop.f32.mrb[0].mxu0
        %v9094 = vadd.f32 %v8850, %v9093
        %v9095 = vpop.f32.mrb[0].mxu0
        %9096 = vmatprep.mubr.bf16.mxu0 0
        %9097 = vmatmul.mubr.bf16.gmra.mrb[0].mxu0 %v8904
        %v9098 = vpop.f32.mrb[0].mxu0
        %v9099 = vadd.f32 %v8850, %v9098
        %v9100 = vpop.f32.mrb[0].mxu0
        %v9101 = vpop.f32.mrb[0].mxu0
        %v9102 = vadd.f32 %v8850, %v9101
        %v9103 = vpop.f32.mrb[0].mxu0
        %9104 = vmatprep.mubr.bf16.mxu0 0
        %9105 = vmatmul.mubr.bf16.gmra.mrb[0].mxu0 %v8907
        %v9106 = vpop.f32.mrb[0].mxu0
        %v9107 = vadd.f32 %v8850, %v9106
        %v9108 = vpop.f32.mrb[0].mxu0
        %v9109 = vpop.f32.mrb[0].mxu0
        %v9110 = vadd.f32 %v8850, %v9109
        %v9111 = vpop.f32.mrb[0].mxu0
        %9112 = vmatprep.mubr.bf16.mxu0 0
        %9113 = vmatmul.mubr.bf16.gmra.mrb[0].mxu0 %v8910
        %v9114 = vpop.f32.mrb[0].mxu0
        %v9115 = vadd.f32 %v8850, %v9114
        %v9116 = vpop.f32.mrb[0].mxu0
        %v9117 = vpop.f32.mrb[0].mxu0
        %v9118 = vadd.f32 %v8850, %v9117
        %v9119 = vpop.f32.mrb[0].mxu0
        %9120 = vmatprep.mubr.bf16.mxu0 0
        %9121 = vmatmul.mubr.bf16.gmra.mrb[0].mxu0 %v8913
        %v9122 = vpop.f32.mrb[0].mxu0
        %v9123 = vadd.f32 %v8850, %v9122
        %v9124 = vpop.f32.mrb[0].mxu0
        %v9125 = vpop.f32.mrb[0].mxu0
        %v9126 = vadd.f32 %v8850, %v9125
        %v9127 = vpop.f32.mrb[0].mxu0
        %9128 = vmatprep.mubr.bf16.mxu0 0
        %9129 = vmatmul.mubr.bf16.gmra.mrb[0].mxu0 %v8916
        %v9130 = vpop.f32.mrb[0].mxu0
        %v9131 = vadd.f32 %v8850, %v9130
        %v9132 = vpop.f32.mrb[0].mxu0
        %v9133 = vpop.f32.mrb[0].mxu0
        %v9134 = vadd.f32 %v8850, %v9133
        %v9135 = vpop.f32.mrb[0].mxu0
        %9136 = vmatprep.mubr.bf16.mxu0 0
        %9137 = vmatmul.mubr.bf16.gmra.mrb[0].mxu0 %v8919
        %v9138 = vpop.f32.mrb[0].mxu0
        %v9139 = vadd.f32 %v8850, %v9138
        %v9140 = vpop.f32.mrb[0].mxu0
        %v9141 = vpop.f32.mrb[0].mxu0
        %v9142 = vadd.f32 %v8850, %v9141
        %v9143 = vpop.f32.mrb[0].mxu0
        %9144 = vmatprep.mubr.bf16.mxu0 0
        %9145 = vmatmul.mubr.bf16.gmra.mrb[0].mxu0 %v8922
        %v9146 = vpop.f32.mrb[0].mxu0
        %v9147 = vadd.f32 %v8850, %v9146
        %v9148 = vpop.f32.mrb[0].mxu0
        %v9149 = vpop.f32.mrb[0].mxu0
        %v9150 = vadd.f32 %v8850, %v9149
        %v9151 = vpop.f32.mrb[0].mxu0
        %9152 = vmatprep.mubr.bf16.mxu0 0
        %9153 = vmatmul.mubr.bf16.gmra.mrb[0].mxu0 %v8925
        %v9154 = vpop.f32.mrb[0].mxu0
        %v9155 = vadd.f32 %v8850, %v9154
        %v9156 = vpop.f32.mrb[0].mxu0
        %v9157 = vpop.f32.mrb[0].mxu0
        %v9158 = vadd.f32 %v8850, %v9157
        %v9159 = vpop.f32.mrb[0].mxu0
        %9160 = vmatprep.mubr.bf16.mxu0 0
        %9161 = vmatmul.mubr.bf16.gmra.mrb[0].mxu0 %v8928
        %v9162 = vpop.f32.mrb[0].mxu0
        %v9163 = vadd.f32 %v8850, %v9162
        %v9164 = vpop.f32.mrb[0].mxu0
        %v9165 = vpop.f32.mrb[0].mxu0
        %v9166 = vadd.f32 %v8850, %v9165
        %v9167 = vpop.f32.mrb[0].mxu0
        %9168 = vmatprep.mubr.bf16.mxu0 0
        %9169 = vmatmul.mubr.bf16.gmra.mrb[0].mxu0 %v8931
        %v9170 = vpop.f32.mrb[0].mxu0
        %v9171 = vadd.f32 %v8850, %v9170
        %v9172 = vpop.f32.mrb[0].mxu0
        %v9173 = vpop.f32.mrb[0].mxu0
        %v9174 = vadd.f32 %v8850, %v9173
        %v9175 = vpop.f32.mrb[0].mxu0
        %9176 = vmatprep.mubr.bf16.mxu0 0
        %9177 = vmatmul.mubr.bf16.gmra.mrb[0].mxu0 %v8934
        %v9178 = vpop.f32.mrb[0].mxu0
        %v9179 = vadd.f32 %v8850, %v9178
        %v9180 = vpop.f32.mrb[0].mxu0
        %v9181 = vpop.f32.mrb[0].mxu0
        %v9182 = vadd.f32 %v8850, %v9181
        %v9183 = vpop.f32.mrb[0].mxu0
        %9184 = vmatprep.mubr.bf16.mxu0 0
        %9185 = vmatmul.mubr.bf16.gmra.mrb[0].mxu0 %v8937
        %v9186 = vpop.f32.mrb[0].mxu0
        %v9187 = vadd.f32 %v8850, %v9186
        %v9188 = vpop.f32.mrb[0].mxu0
        %v9189 = vpop.f32.mrb[0].mxu0
        %v9190 = vadd.f32 %v8850, %v9189
        %v9191 = vpop.f32.mrb[0].mxu0
        %9192 = vmatprep.mubr.bf16.mxu0 0
        %9193 = vmatmul.mubr.bf16.gmra.mrb[0].mxu0 %v8940
        %v9194 = vpop.f32.mrb[0].mxu0
        %v9195 = vadd.f32 %v8850, %v9194
        %v9196 = vpop.f32.mrb[0].mxu0
        %v9197 = vpop.f32.mrb[0].mxu0
        %v9198 = vadd.f32 %v8850, %v9197
        %v9199 = vpop.f32.mrb[0].mxu0
        %9200 = vmatprep.mubr.bf16.mxu0 0
        %9201 = vmatmul.mubr.bf16.gmra.mrb[0].mxu0 %v8943
        %v9202 = vpop.f32.mrb[0].mxu0
        %v9203 = vadd.f32 %v8850, %v9202
        %v9204 = vpop.f32.mrb[0].mxu0
        %v9205 = vpop.f32.mrb[0].mxu0
        %v9206 = vadd.f32 %v8850, %v9205
        %v9207 = vpop.f32.mrb[0].mxu0
        %9208 = vmatprep.mubr.bf16.mxu0 0
        %9209 = vmatmul.mubr.bf16.gmra.mrb[0].mxu0 %v8946
        %v9210 = vpop.f32.mrb[0].mxu0
        %v9211 = vadd.f32 %v8850, %v9210
        %v9212 = vpop.f32.mrb[0].mxu0
        %v9213 = vpop.f32.mrb[0].mxu0
        %v9214 = vadd.f32 %v8850, %v9213
        %v9215 = vpop.f32.mrb[0].mxu0
        %9216 = vmatprep.mubr.bf16.mxu0 0
        %9217 = vmatmul.mubr.bf16.gmra.mrb[0].mxu0 %v8949
        %v9218 = vpop.f32.mrb[0].mxu0
        %v9219 = vadd.f32 %v8850, %v9218
        %v9220 = vpop.f32.mrb[0].mxu0
        %v9221 = vpop.f32.mrb[0].mxu0
        %v9222 = vadd.f32 %v8850, %v9221
        %v9223 = vpop.f32.mrb[0].mxu0
        %9224 = vmatprep.mubr.bf16.mxu0 0
        %9225 = vmatmul.mubr.bf16.gmra.mrb[0].mxu0 %v8952
        %v9226 = vpop.f32.mrb[0].mxu0
        %v9227 = vadd.f32 %v8850, %v9226
        %v9228 = vpop.f32.mrb[0].mxu0
        %v9229 = vpop.f32.mrb[0].mxu0
        %v9230 = vadd.f32 %v8850, %v9229
        %v9231 = vpop.f32.mrb[0].mxu0
        %9232 = vmatprep.mubr.bf16.mxu0 0
        %9233 = vmatmul.mubr.bf16.gmra.mrb[0].mxu0 %v8955
        %v9234 = vpop.f32.mrb[0].mxu0
        %v9235 = vadd.f32 %v8850, %v9234
        %v9236 = vpop.f32.mrb[0].mxu0
        %v9237 = vpop.f32.mrb[0].mxu0
        %v9238 = vadd.f32 %v8850, %v9237
        %v9239 = vpop.f32.mrb[0].mxu0
        %9240 = vmatprep.mubr.bf16.mxu0 0
        %9241 = vmatmul.mubr.bf16.gmra.mrb[0].mxu0 %v8958
        %v9242 = vpop.f32.mrb[0].mxu0
        %v9243 = vadd.f32 %v8850, %v9242
        %v9244 = vpop.f32.mrb[0].mxu0
        %v9245 = vpop.f32.mrb[0].mxu0
        %v9246 = vadd.f32 %v8850, %v9245
        %v9247 = vpop.f32.mrb[0].mxu0
        %9248 = vdwg.mxu0
        %v9249 = vadd.f32 %v8995, %v8781
        %v9250 = vadd.f32 %v8998, %v8782
        %v9251 = vadd.f32 %v9003, %v8783
        %v9252 = vadd.f32 %v9006, %v8784
        %v9253 = vadd.f32 %v9011, %v8785
        %v9254 = vadd.f32 %v9014, %v8786
        %v9255 = vadd.f32 %v9019, %v8787
        %v9256 = vadd.f32 %v9022, %v8788
        %v9257 = vadd.f32 %v9027, %v8789
        %v9258 = vadd.f32 %v9030, %v8790
        %v9259 = vadd.f32 %v9035, %v8791
        %v9260 = vadd.f32 %v9038, %v8792
        %v9261 = vadd.f32 %v9043, %v8793
        %v9262 = vadd.f32 %v9046, %v8794
        %v9263 = vadd.f32 %v9051, %v8795
        %v9264 = vadd.f32 %v9054, %v8796
        %v9265 = vadd.f32 %v9059, %v8797
        %v9266 = vadd.f32 %v9062, %v8798
        %v9267 = vadd.f32 %v9067, %v8799
        %v9268 = vadd.f32 %v9070, %v8800
        %v9269 = vadd.f32 %v9075, %v8801
        %v9270 = vadd.f32 %v9078, %v8802
        %v9271 = vadd.f32 %v9083, %v8803
        %v9272 = vadd.f32 %v9086, %v8804
        %v9273 = vadd.f32 %v9091, %v8805
        %v9274 = vadd.f32 %v9094, %v8806
        %v9275 = vadd.f32 %v9099, %v8807
        %v9276 = vadd.f32 %v9102, %v8808
        %v9277 = vadd.f32 %v9107, %v8809
        %v9278 = vadd.f32 %v9110, %v8810
        %v9279 = vadd.f32 %v9115, %v8811
        %v9280 = vadd.f32 %v9118, %v8812
        %v9281 = vadd.f32 %v9123, %v8813
        %v9282 = vadd.f32 %v9126, %v8814
        %v9283 = vadd.f32 %v9131, %v8815
        %v9284 = vadd.f32 %v9134, %v8816
        %v9285 = vadd.f32 %v9139, %v8817
        %v9286 = vadd.f32 %v9142, %v8818
        %v9287 = vadd.f32 %v9147, %v8819
        %v9288 = vadd.f32 %v9150, %v8820
        %v9289 = vadd.f32 %v9155, %v8821
        %v9290 = vadd.f32 %v9158, %v8822
        %v9291 = vadd.f32 %v9163, %v8823
        %v9292 = vadd.f32 %v9166, %v8824
        %v9293 = vadd.f32 %v9171, %v8825
        %v9294 = vadd.f32 %v9174, %v8826
        %v9295 = vadd.f32 %v9179, %v8827
        %v9296 = vadd.f32 %v9182, %v8828
        %v9297 = vadd.f32 %v9187, %v8829
        %v9298 = vadd.f32 %v9190, %v8830
        %v9299 = vadd.f32 %v9195, %v8831
        %v9300 = vadd.f32 %v9198, %v8832
        %v9301 = vadd.f32 %v9203, %v8833
        %v9302 = vadd.f32 %v9206, %v8834
        %v9303 = vadd.f32 %v9211, %v8835
        %v9304 = vadd.f32 %v9214, %v8836
        %v9305 = vadd.f32 %v9219, %v8837
        %v9306 = vadd.f32 %v9222, %v8838
        %v9307 = vadd.f32 %v9227, %v8839
        %v9308 = vadd.f32 %v9230, %v8840
        %v9309 = vadd.f32 %v9235, %v8841
        %v9310 = vadd.f32 %v9238, %v8842
        %v9311 = vadd.f32 %v9243, %v8843
        %v9312 = vadd.f32 %v9246, %v8844
        %v9313 = vmax.f32 %v9249, 0.0
        %v9314 = vmax.f32 %v9250, 0.0
        %v9315 = vmax.f32 %v9251, 0.0
        %v9316 = vmax.f32 %v9252, 0.0
        %v9317 = vmax.f32 %v9253, 0.0
        %v9318 = vmax.f32 %v9254, 0.0
        %v9319 = vmax.f32 %v9255, 0.0
        %v9320 = vmax.f32 %v9256, 0.0
        %v9321 = vmax.f32 %v9257, 0.0
        %v9322 = vmax.f32 %v9258, 0.0
        %v9323 = vmax.f32 %v9259, 0.0
        %v9324 = vmax.f32 %v9260, 0.0
        %v9325 = vmax.f32 %v9261, 0.0
        %v9326 = vmax.f32 %v9262, 0.0
        %v9327 = vmax.f32 %v9263, 0.0
        %v9328 = vmax.f32 %v9264, 0.0
        %v9329 = vmax.f32 %v9265, 0.0
        %v9330 = vmax.f32 %v9266, 0.0
        %v9331 = vmax.f32 %v9267, 0.0
        %v9332 = vmax.f32 %v9268, 0.0
        %v9333 = vmax.f32 %v9269, 0.0
        %v9334 = vmax.f32 %v9270, 0.0
        %v9335 = vmax.f32 %v9271, 0.0
        %v9336 = vmax.f32 %v9272, 0.0
        %v9337 = vmax.f32 %v9273, 0.0
        %v9338 = vmax.f32 %v9274, 0.0
        %v9339 = vmax.f32 %v9275, 0.0
        %v9340 = vmax.f32 %v9276, 0.0
        %v9341 = vmax.f32 %v9277, 0.0
        %v9342 = vmax.f32 %v9278, 0.0
        %v9343 = vmax.f32 %v9279, 0.0
        %v9344 = vmax.f32 %v9280, 0.0
        %v9345 = vmax.f32 %v9281, 0.0
        %v9346 = vmax.f32 %v9282, 0.0
        %v9347 = vmax.f32 %v9283, 0.0
        %v9348 = vmax.f32 %v9284, 0.0
        %v9349 = vmax.f32 %v9285, 0.0
        %v9350 = vmax.f32 %v9286, 0.0
        %v9351 = vmax.f32 %v9287, 0.0
        %v9352 = vmax.f32 %v9288, 0.0
        %v9353 = vmax.f32 %v9289, 0.0
        %v9354 = vmax.f32 %v9290, 0.0
        %v9355 = vmax.f32 %v9291, 0.0
        %v9356 = vmax.f32 %v9292, 0.0
        %v9357 = vmax.f32 %v9293, 0.0
        %v9358 = vmax.f32 %v9294, 0.0
        %v9359 = vmax.f32 %v9295, 0.0
        %v9360 = vmax.f32 %v9296, 0.0
        %v9361 = vmax.f32 %v9297, 0.0
        %v9362 = vmax.f32 %v9298, 0.0
        %v9363 = vmax.f32 %v9299, 0.0
        %v9364 = vmax.f32 %v9300, 0.0
        %v9365 = vmax.f32 %v9301, 0.0
        %v9366 = vmax.f32 %v9302, 0.0
        %v9367 = vmax.f32 %v9303, 0.0
        %v9368 = vmax.f32 %v9304, 0.0
        %v9369 = vmax.f32 %v9305, 0.0
        %v9370 = vmax.f32 %v9306, 0.0
        %v9371 = vmax.f32 %v9307, 0.0
        %v9372 = vmax.f32 %v9308, 0.0
        %v9373 = vmax.f32 %v9309, 0.0
        %v9374 = vmax.f32 %v9310, 0.0
        %v9375 = vmax.f32 %v9311, 0.0
        %v9376 = vmax.f32 %v9312, 0.0
        %v9377 = vpack.c.bf16 %v9314, %v9313
        %v9378 = vpack.c.bf16 %v9316, %v9315
        %v9379 = vpack.c.bf16 %v9318, %v9317
        %v9380 = vpack.c.bf16 %v9320, %v9319
        %v9381 = vpack.c.bf16 %v9322, %v9321
        %v9382 = vpack.c.bf16 %v9324, %v9323
        %v9383 = vpack.c.bf16 %v9326, %v9325
        %v9384 = vpack.c.bf16 %v9328, %v9327
        %v9385 = vpack.c.bf16 %v9330, %v9329
        %v9386 = vpack.c.bf16 %v9332, %v9331
        %v9387 = vpack.c.bf16 %v9334, %v9333
        %v9388 = vpack.c.bf16 %v9336, %v9335
        %v9389 = vpack.c.bf16 %v9338, %v9337
        %v9390 = vpack.c.bf16 %v9340, %v9339
        %v9391 = vpack.c.bf16 %v9342, %v9341
        %v9392 = vpack.c.bf16 %v9344, %v9343
        %v9393 = vpack.c.bf16 %v9346, %v9345
        %v9394 = vpack.c.bf16 %v9348, %v9347
        %v9395 = vpack.c.bf16 %v9350, %v9349
        %v9396 = vpack.c.bf16 %v9352, %v9351
        %v9397 = vpack.c.bf16 %v9354, %v9353
        %v9398 = vpack.c.bf16 %v9356, %v9355
        %v9399 = vpack.c.bf16 %v9358, %v9357
        %v9400 = vpack.c.bf16 %v9360, %v9359
        %v9401 = vpack.c.bf16 %v9362, %v9361
        %v9402 = vpack.c.bf16 %v9364, %v9363
        %v9403 = vpack.c.bf16 %v9366, %v9365
        %v9404 = vpack.c.bf16 %v9368, %v9367
        %v9405 = vpack.c.bf16 %v9370, %v9369
        %v9406 = vpack.c.bf16 %v9372, %v9371
        %v9407 = vpack.c.bf16 %v9374, %v9373
        %v9408 = vpack.c.bf16 %v9376, %v9375
        %v9441 = vunpack.c.l.b16 %v9377
        %v9442 = vunpack.c.h.b16 %v9377
        %v9443 = vunpack.c.l.b16 %v9378
        %v9444 = vunpack.c.h.b16 %v9378
        %v9445 = vunpack.c.l.b16 %v9379
        %v9446 = vunpack.c.h.b16 %v9379
        %v9447 = vunpack.c.l.b16 %v9380
        %v9448 = vunpack.c.h.b16 %v9380
        %v9449 = vunpack.c.l.b16 %v9381
        %v9450 = vunpack.c.h.b16 %v9381
        %v9451 = vunpack.c.l.b16 %v9382
        %v9452 = vunpack.c.h.b16 %v9382
        %v9453 = vunpack.c.l.b16 %v9383
        %v9454 = vunpack.c.h.b16 %v9383
        %v9455 = vunpack.c.l.b16 %v9384
        %v9456 = vunpack.c.h.b16 %v9384
        %v9457 = vunpack.c.l.b16 %v9385
        %v9458 = vunpack.c.h.b16 %v9385
        %v9459 = vunpack.c.l.b16 %v9386
        %v9460 = vunpack.c.h.b16 %v9386
        %v9461 = vunpack.c.l.b16 %v9387
        %v9462 = vunpack.c.h.b16 %v9387
        %v9463 = vunpack.c.l.b16 %v9388
        %v9464 = vunpack.c.h.b16 %v9388
        %v9465 = vunpack.c.l.b16 %v9389
        %v9466 = vunpack.c.h.b16 %v9389
        %v9467 = vunpack.c.l.b16 %v9390
        %v9468 = vunpack.c.h.b16 %v9390
        %v9469 = vunpack.c.l.b16 %v9391
        %v9470 = vunpack.c.h.b16 %v9391
        %v9471 = vunpack.c.l.b16 %v9392
        %v9472 = vunpack.c.h.b16 %v9392
        %v9473 = vunpack.c.l.b16 %v9393
        %v9474 = vunpack.c.h.b16 %v9393
        %v9475 = vunpack.c.l.b16 %v9394
        %v9476 = vunpack.c.h.b16 %v9394
        %v9477 = vunpack.c.l.b16 %v9395
        %v9478 = vunpack.c.h.b16 %v9395
        %v9479 = vunpack.c.l.b16 %v9396
        %v9480 = vunpack.c.h.b16 %v9396
        %v9481 = vunpack.c.l.b16 %v9397
        %v9482 = vunpack.c.h.b16 %v9397
        %v9483 = vunpack.c.l.b16 %v9398
        %v9484 = vunpack.c.h.b16 %v9398
        %v9485 = vunpack.c.l.b16 %v9399
        %v9486 = vunpack.c.h.b16 %v9399
        %v9487 = vunpack.c.l.b16 %v9400
        %v9488 = vunpack.c.h.b16 %v9400
        %v9489 = vunpack.c.l.b16 %v9401
        %v9490 = vunpack.c.h.b16 %v9401
        %v9491 = vunpack.c.l.b16 %v9402
        %v9492 = vunpack.c.h.b16 %v9402
        %v9493 = vunpack.c.l.b16 %v9403
        %v9494 = vunpack.c.h.b16 %v9403
        %v9495 = vunpack.c.l.b16 %v9404
        %v9496 = vunpack.c.h.b16 %v9404
        %v9497 = vunpack.c.l.b16 %v9405
        %v9498 = vunpack.c.h.b16 %v9405
        %v9499 = vunpack.c.l.b16 %v9406
        %v9500 = vunpack.c.h.b16 %v9406
        %v9501 = vunpack.c.l.b16 %v9407
        %v9502 = vunpack.c.h.b16 %v9407
        %v9503 = vunpack.c.l.b16 %v9408
        %v9504 = vunpack.c.h.b16 %v9408
        %v9505 = vpack.c.b16 %v9441, %v9441
        %v9506 = vpack.c.b16 %v9442, %v9442
        %v9507 = vpack.c.b16 %v9443, %v9443
        %v9508 = vpack.c.b16 %v9444, %v9444
        %v9509 = vpack.c.b16 %v9445, %v9445
        %v9510 = vpack.c.b16 %v9446, %v9446
        %v9511 = vpack.c.b16 %v9447, %v9447
        %v9512 = vpack.c.b16 %v9448, %v9448
        %v9513 = vpack.c.b16 %v9449, %v9449
        %v9514 = vpack.c.b16 %v9450, %v9450
        %v9515 = vpack.c.b16 %v9451, %v9451
        %v9516 = vpack.c.b16 %v9452, %v9452
        %v9517 = vpack.c.b16 %v9453, %v9453
        %v9518 = vpack.c.b16 %v9454, %v9454
        %v9519 = vpack.c.b16 %v9455, %v9455
        %v9520 = vpack.c.b16 %v9456, %v9456
        %v9521 = vpack.c.b16 %v9457, %v9457
        %v9522 = vpack.c.b16 %v9458, %v9458
        %v9523 = vpack.c.b16 %v9459, %v9459
        %v9524 = vpack.c.b16 %v9460, %v9460
        %v9525 = vpack.c.b16 %v9461, %v9461
        %v9526 = vpack.c.b16 %v9462, %v9462
        %v9527 = vpack.c.b16 %v9463, %v9463
        %v9528 = vpack.c.b16 %v9464, %v9464
        %v9529 = vpack.c.b16 %v9465, %v9465
        %v9530 = vpack.c.b16 %v9466, %v9466
        %v9531 = vpack.c.b16 %v9467, %v9467
        %v9532 = vpack.c.b16 %v9468, %v9468
        %v9533 = vpack.c.b16 %v9469, %v9469
        %v9534 = vpack.c.b16 %v9470, %v9470
        %v9535 = vpack.c.b16 %v9471, %v9471
        %v9536 = vpack.c.b16 %v9472, %v9472
        %v9537 = vpack.c.b16 %v9473, %v9473
        %v9538 = vpack.c.b16 %v9474, %v9474
        %v9539 = vpack.c.b16 %v9475, %v9475
        %v9540 = vpack.c.b16 %v9476, %v9476
        %v9541 = vpack.c.b16 %v9477, %v9477
        %v9542 = vpack.c.b16 %v9478, %v9478
        %v9543 = vpack.c.b16 %v9479, %v9479
        %v9544 = vpack.c.b16 %v9480, %v9480
        %v9545 = vpack.c.b16 %v9481, %v9481
        %v9546 = vpack.c.b16 %v9482, %v9482
        %v9547 = vpack.c.b16 %v9483, %v9483
        %v9548 = vpack.c.b16 %v9484, %v9484
        %v9549 = vpack.c.b16 %v9485, %v9485
        %v9550 = vpack.c.b16 %v9486, %v9486
        %v9551 = vpack.c.b16 %v9487, %v9487
        %v9552 = vpack.c.b16 %v9488, %v9488
        %v9553 = vpack.c.b16 %v9489, %v9489
        %v9554 = vpack.c.b16 %v9490, %v9490
        %v9555 = vpack.c.b16 %v9491, %v9491
        %v9556 = vpack.c.b16 %v9492, %v9492
        %v9557 = vpack.c.b16 %v9493, %v9493
        %v9558 = vpack.c.b16 %v9494, %v9494
        %v9559 = vpack.c.b16 %v9495, %v9495
        %v9560 = vpack.c.b16 %v9496, %v9496
        %v9561 = vpack.c.b16 %v9497, %v9497
        %v9562 = vpack.c.b16 %v9498, %v9498
        %v9563 = vpack.c.b16 %v9499, %v9499
        %v9564 = vpack.c.b16 %v9500, %v9500
        %v9565 = vpack.c.b16 %v9501, %v9501
        %v9566 = vpack.c.b16 %v9502, %v9502
        %v9567 = vpack.c.b16 %v9503, %v9503
        %v9568 = vpack.c.b16 %v9504, %v9504
        %9633 = vst [vmem:[%s297] sm:$0xf] %v9505
        %9634 = vst [vmem:[%s297 + $0x4] sm:$0xf] %v9506
        %9635 = vst [vmem:[%s297 + $0x8] sm:$0xf] %v9507
        %9636 = vst [vmem:[%s297 + $0xc] sm:$0xf] %v9508
        %9637 = vst [vmem:[%s297 + $0x10] sm:$0xf] %v9509
        %9638 = vst [vmem:[%s297 + $0x14] sm:$0xf] %v9510
        %9639 = vst [vmem:[%s297 + $0x18] sm:$0xf] %v9511
        %9640 = vst [vmem:[%s297 + $0x1c] sm:$0xf] %v9512
        %9641 = vst [vmem:[%s297 + $0x20] sm:$0xf] %v9513
        %9642 = vst [vmem:[%s297 + $0x24] sm:$0xf] %v9514
        %9643 = vst [vmem:[%s297 + $0x28] sm:$0xf] %v9515
        %9644 = vst [vmem:[%s297 + $0x2c] sm:$0xf] %v9516
        %9645 = vst [vmem:[%s297 + $0x30] sm:$0xf] %v9517
        %9646 = vst [vmem:[%s297 + $0x34] sm:$0xf] %v9518
        %9647 = vst [vmem:[%s297 + $0x38] sm:$0xf] %v9519
        %9648 = vst [vmem:[%s297 + $0x3c] sm:$0xf] %v9520
        %9649 = vst [vmem:[%s297 + $0x40] sm:$0xf] %v9521
        %9650 = vst [vmem:[%s297 + $0x44] sm:$0xf] %v9522
        %9651 = vst [vmem:[%s297 + $0x48] sm:$0xf] %v9523
        %9652 = vst [vmem:[%s297 + $0x4c] sm:$0xf] %v9524
        %9653 = vst [vmem:[%s297 + $0x50] sm:$0xf] %v9525
        %9654 = vst [vmem:[%s297 + $0x54] sm:$0xf] %v9526
        %9655 = vst [vmem:[%s297 + $0x58] sm:$0xf] %v9527
        %9656 = vst [vmem:[%s297 + $0x5c] sm:$0xf] %v9528
        %9657 = vst [vmem:[%s297 + $0x60] sm:$0xf] %v9529
        %9658 = vst [vmem:[%s297 + $0x64] sm:$0xf] %v9530
        %9659 = vst [vmem:[%s297 + $0x68] sm:$0xf] %v9531
        %9660 = vst [vmem:[%s297 + $0x6c] sm:$0xf] %v9532
        %9661 = vst [vmem:[%s297 + $0x70] sm:$0xf] %v9533
        %9662 = vst [vmem:[%s297 + $0x74] sm:$0xf] %v9534
        %9663 = vst [vmem:[%s297 + $0x78] sm:$0xf] %v9535
        %9664 = vst [vmem:[%s297 + $0x7c] sm:$0xf] %v9536
        %9665 = vst [vmem:[%s297 + $0x80] sm:$0xf] %v9537
        %9666 = vst [vmem:[%s297 + $0x84] sm:$0xf] %v9538
        %9667 = vst [vmem:[%s297 + $0x88] sm:$0xf] %v9539
        %9668 = vst [vmem:[%s297 + $0x8c] sm:$0xf] %v9540
        %9669 = vst [vmem:[%s297 + $0x90] sm:$0xf] %v9541
        %9670 = vst [vmem:[%s297 + $0x94] sm:$0xf] %v9542
        %9671 = vst [vmem:[%s297 + $0x98] sm:$0xf] %v9543
        %9672 = vst [vmem:[%s297 + $0x9c] sm:$0xf] %v9544
        %9673 = vst [vmem:[%s297 + $0xa0] sm:$0xf] %v9545
        %9674 = vst [vmem:[%s297 + $0xa4] sm:$0xf] %v9546
        %9675 = vst [vmem:[%s297 + $0xa8] sm:$0xf] %v9547
        %9676 = vst [vmem:[%s297 + $0xac] sm:$0xf] %v9548
        %9677 = vst [vmem:[%s297 + $0xb0] sm:$0xf] %v9549
        %9678 = vst [vmem:[%s297 + $0xb4] sm:$0xf] %v9550
        %9679 = vst [vmem:[%s297 + $0xb8] sm:$0xf] %v9551
        %9680 = vst [vmem:[%s297 + $0xbc] sm:$0xf] %v9552
        %9681 = vst [vmem:[%s297 + $0xc0] sm:$0xf] %v9553
        %9682 = vst [vmem:[%s297 + $0xc4] sm:$0xf] %v9554
        %9683 = vst [vmem:[%s297 + $0xc8] sm:$0xf] %v9555
        %9684 = vst [vmem:[%s297 + $0xcc] sm:$0xf] %v9556
        %9685 = vst [vmem:[%s297 + $0xd0] sm:$0xf] %v9557
        %9686 = vst [vmem:[%s297 + $0xd4] sm:$0xf] %v9558
        %9687 = vst [vmem:[%s297 + $0xd8] sm:$0xf] %v9559
        %9688 = vst [vmem:[%s297 + $0xdc] sm:$0xf] %v9560
        %9689 = vst [vmem:[%s297 + $0xe0] sm:$0xf] %v9561
        %9690 = vst [vmem:[%s297 + $0xe4] sm:$0xf] %v9562
        %9691 = vst [vmem:[%s297 + $0xe8] sm:$0xf] %v9563
        %9692 = vst [vmem:[%s297 + $0xec] sm:$0xf] %v9564
        %9693 = vst [vmem:[%s297 + $0xf0] sm:$0xf] %v9565
        %9694 = vst [vmem:[%s297 + $0xf4] sm:$0xf] %v9566
        %9695 = vst [vmem:[%s297 + $0xf8] sm:$0xf] %v9567
        %9696 = vst [vmem:[%s297 + $0xfc] sm:$0xf] %v9568
        %s9697 = sand.u32 %s184, 1
        %s9698 = scalar_lea.sflag [#allocation5], %s9697
        %s9699 = sand.u32 %s184, 1
        %s9700 = smul.addr %s9699, 256
        %s9701 = scalar_lea.vmem [#allocation6], %s9700
        // Predicated region
        $region53: #{tpu_custom_call.1} parent=47 // pred_check
          %p9702 = pneg %p194
        $region54: #{tpu_custom_call.1} parent=47 // pred_check_branch
          %9704 = sbr.rel (%p9702) target = $region56
        $region55: #{tpu_custom_call.1} parent=47 // pred_region
          %s9705 = smul.u32 2, %s24
          %s9707 = ssub.s32 4096, 4096
          %9708 = vsyncadd %s9698, %s9707
          %s9709 = smul.addr %s9705, 32
          %s9710 = smul.addr %s9709, 64
          %s9711 = scalar_lea.hbm %s7, %s9710
          %s9712 = sshll.u32 %s9701, 4
          %s9713 = int_to_ptr.vmem [resolvable:$true] %s9712
          %9718 = dma.vmem_to_hbm [thread:$0]  %s9713, 4096, %s9711, %s9698, 64, 64, 4
        $region56: #{tpu_custom_call.1} parent=47 // pred_fallthru
          _
      $region48: #{tpu_custom_call.1} parent=5 // pred_fallthru
        _
      %p9719 = scmp.le.s32.totalorder 2, %s19
      // Predicated region
      $region57: #{tpu_custom_call.1} parent=5 // pred_check
        %p9720 = pneg %p9719
      $region58: #{tpu_custom_call.1} parent=5 // pred_check_branch
        %9722 = sbr.rel (%p9720) target = $region60
      $region59: #{tpu_custom_call.1} parent=5 // pred_region
        %s9723 = ssub.s32 %s19, 2
        // Predicated region
        $region61: #{tpu_custom_call.1} parent=59 // pred_check
          %p9724 = pneg %p200
        $region62: #{tpu_custom_call.1} parent=59 // pred_check_branch
          %9726 = sbr.rel (%p9724) target = $region64
        $region63: #{tpu_custom_call.1} parent=59 // pred_region
          %s9727 = sand.u32 %s185, 1
          %s9728 = scalar_lea.sflag [#allocation5], %s9727
          %s9729 = sand.u32 %s185, 1
          %s9730 = smul.addr %s9729, 256
          %s9731 = scalar_lea.vmem [#allocation6], %s9730
          %9732 = dma.done %s9728, 4096
        $region64: #{tpu_custom_call.1} parent=59 // pred_fallthru
          _
      $region60: #{tpu_custom_call.1} parent=5 // pred_fallthru
        _
    $region6: #{tpu_custom_call.1} parent=1 // loop_footer
      %s23 = sadd.s32 1, %s19
    $region7: #{tpu_custom_call.1} parent=1 // loop_footer_branch
      %18 = sbr.rel target = $region3
    $region8: #{tpu_custom_call.1} parent=1 // loop_exit
      _
    %9733 = vsyncpa [#allocation4], 1
    %s9734 = scalar_lea.sflag [#allocation4], 1
    %9735 = vsyncpa %s9734, 1
    %9736 = vsyncpa [#allocation5], 1
    %s9737 = scalar_lea.sflag [#allocation5], 1
    %9738 = vsyncpa %s9737, 1

</llo_original>
